<compile_context>
chip_gen: v6e
topology: v6e:2x2x1
jax: 0.10.0
libtpu: 0.0.40
codegen_flags: <defaults>
</compile_context>

<pallas_src>
import functools

import jax
import jax.numpy as jnp
from jax.experimental import pallas as pl
from jax.experimental.pallas import tpu as pltpu

_EPS = 1e-5
_INV_SQRT2 = 0.7071067811865475


def _erf_poly(x):
    # Abramowitz & Stegun 7.1.26 (|err| <= 1.5e-7): exp goes to the EUP slot and avoids
    # relying on an erf lowering inside the kernel, while staying numerically equivalent
    # to PyTorch's exact (erf-based) nn.GELU at the test tolerance.
    a1, a2, a3, a4, a5 = 0.254829592, -0.284496736, 1.421413741, -1.453152027, 1.061405429
    p = 0.3275911
    ax = jnp.abs(x)
    t = 1.0 / (1.0 + p * ax)
    poly = ((((a5 * t + a4) * t + a3) * t + a2) * t + a1) * t
    y = 1.0 - poly * jnp.exp(-(ax * ax))
    return jnp.where(x >= 0.0, y, -y)


def _gelu(x):
    return 0.5 * x * (1.0 + _erf_poly(x * _INV_SQRT2))


def _gelu_exact(x):
    # host-side reference only
    return 0.5 * x * (1.0 + jax.lax.erf(x * _INV_SQRT2))


def _dwsc_kernel(xp_ref, g1_ref, b1_ref, g2_ref, b2_ref,
                 wdw_ref, bdw_ref, wpw_ref, bpw_ref, out_ref,
                 *, cin, cout, side, wpad):
    """One batch element per grid step (stride = 1).

    xp_ref : (Cin, S+2, (S+2)^2)  padded input, H/W fused into lanes   [VMEM]
    g1/b1  : (Cin, S, S*S)        LayerNorm-1 affine                   [VMEM]
    g2/b2  : (Cout, S, S*S)       LayerNorm-2 affine                   [VMEM]
    wdw_ref: (27*Cin,)            depthwise weights, (tap, chan) flat  [SMEM scalars]
    bdw_ref: (Cin,)               depthwise bias                       [SMEM scalars]
    wpw_ref: (Cout*Cin,)          pointwise weights, (cout, cin) flat  [SMEM scalars]
    bpw_ref: (Cout,)              pointwise bias                       [SMEM scalars]
    out_ref: (Cout, S, S*S)       lane-dense output (256 lanes here)
    """
    S = side
    SS = S * S
    PW = (S - 1) * wpad + S   # fused-lane span covering every valid output column

    # ---- depthwise 3x3x3 conv (groups=Cin) + bias, one channel at a time ----
    comp = []
    for c in range(cin):
        xc = xp_ref[c]                                           # (S+2, (S+2)^2)
        acc = None
        for kh in range(3):
            for kw in range(3):
                sh = kh * wpad + kw
                xs = xc[:, sh:sh + PW]                           # one lane-shifted view / tap row
                for kd in range(3):
                    kidx = (kd * 3 + kh) * 3 + kw
                    term = xs[kd:kd + S, :] * wdw_ref[kidx * cin + c]
                    acc = term if acc is None else acc + term
        acc = acc + bdw_ref[c]                                   # (S, PW)
        # compact: drop the W-halo columns -> (S, S*S) with row-major (d, h*S + w) order
        comp.append(jnp.concatenate(
            [acc[:, h * wpad:h * wpad + S] for h in range(S)], axis=-1))
    h1 = jnp.stack(comp, axis=0)                                 # (Cin, S, S*S)

    # ---- LayerNorm over (C, D, H, W): single-pass sum / sum-of-squares ----
    inv_n1 = 1.0 / float(cin * S * SS)
    mu1 = jnp.sum(h1) * inv_n1
    var1 = jnp.sum(h1 * h1) * inv_n1 - mu1 * mu1
    h1 = (h1 - mu1) * jax.lax.rsqrt(var1 + _EPS) * g1_ref[...] + b1_ref[...]
    h1 = _gelu(h1)

    # ---- pointwise 1x1x1 conv: Cout*Cin full-width scalar FMAs on the VPU (no MXU) ----
    outs = []
    for co in range(cout):
        t = h1[0] * wpw_ref[co * cin]
        for ci in range(1, cin):
            t = t + h1[ci] * wpw_ref[co * cin + ci]
        outs.append(t + bpw_ref[co])
    h2 = jnp.stack(outs, axis=0)                                 # (Cout, S, S*S)

    # ---- second LayerNorm + affine + GELU, lane-dense store ----
    inv_n2 = 1.0 / float(cout * S * SS)
    mu2 = jnp.sum(h2) * inv_n2
    var2 = jnp.sum(h2 * h2) * inv_n2 - mu2 * mu2
    y = (h2 - mu2) * jax.lax.rsqrt(var2 + _EPS) * g2_ref[...] + b2_ref[...]
    out_ref[...] = _gelu(y)


def dwsc_forward(x, params, stride=1):
    """x: (N, Cin, D, H, W) float32 (NCDHW). Returns (N, Cout, D, H, W)."""
    if stride != 1:
        # TODO(synk): stride > 1 breaks the fused-lane shifted-window trick; not implemented.
        raise NotImplementedError("Pallas path implements stride=1 (decoder usage)")

    N, cin, D, H, W = x.shape
    assert D == H == W, "module assumes cubic volumes"
    S = D
    wpad = S + 2
    hpwp = wpad * wpad
    SS = S * S
    cout = params["w_pw"].shape[0]
    assert params["g1"].shape == (cin, S, S, S), "side_length must match conv output size"

    # single spatial pad + free metadata reshape (no transposes: kernel is channel-major).
    xp = jnp.pad(x, ((0, 0), (0, 0), (1, 1), (1, 1), (1, 1))).reshape(N, cin, wpad, hpwp)

    # parameters: pure reshapes / one tiny transpose, done once on the host side.
    wdw = jnp.transpose(params["w_dw"][:, 0], (1, 2, 3, 0)).reshape(27 * cin)  # (27*Cin,)
    bdw = params["b_dw"]                                                       # (Cin,)
    wpw = params["w_pw"][:, :, 0, 0, 0].reshape(cout * cin)                    # (Cout*Cin,)
    bpw = params["b_pw"]                                                       # (Cout,)
    g1 = params["g1"].reshape(cin, S, SS)
    b1 = params["b1"].reshape(cin, S, SS)
    g2 = params["g2"].reshape(cout, S, SS)
    b2 = params["b2"].reshape(cout, S, SS)

    smem = pl.BlockSpec(memory_space=pltpu.MemorySpace.SMEM)
    kernel = functools.partial(_dwsc_kernel, cin=cin, cout=cout, side=S, wpad=wpad)

    # NOTE: at production sizes (large Cin * S^3) tile the grid over D / channel groups to
    # stay inside v7x's 64 MiB VMEM; at these sizes the whole per-sample volume fits easily.
    out = pl.pallas_call(
        kernel,
        out_shape=jax.ShapeDtypeStruct((N, cout, S, SS), jnp.float32),
        grid=(N,),
        in_specs=[
            pl.BlockSpec((None, cin, wpad, hpwp), lambda n: (n, 0, 0, 0)),
            pl.BlockSpec((cin, S, SS), lambda n: (0, 0, 0)),
            pl.BlockSpec((cin, S, SS), lambda n: (0, 0, 0)),
            pl.BlockSpec((cout, S, SS), lambda n: (0, 0, 0)),
            pl.BlockSpec((cout, S, SS), lambda n: (0, 0, 0)),
            smem, smem, smem, smem,
        ],
        out_specs=pl.BlockSpec((None, cout, S, SS), lambda n: (n, 0, 0, 0)),
        compiler_params=pltpu.CompilerParams(dimension_semantics=("parallel",)),
    )(xp, g1, b1, g2, b2, wdw, bdw, wpw, bpw)

    # free metadata reshape back to NCDHW
    return out.reshape(N, cout, S, S, S)


# ------------------------ parameters & pure-JAX reference ------------------------

def init_params(key, cin, cout, s):
    ks = jax.random.split(key, 8)
    return {
        "w_dw": jax.random.normal(ks[0], (cin, 1, 3, 3, 3), jnp.float32) * 0.2,
        "b_dw": jax.random.normal(ks[1], (cin,), jnp.float32) * 0.1,
        "g1": 1.0 + 0.1 * jax.random.normal(ks[2], (cin, s, s, s), jnp.float32),
        "b1": 0.1 * jax.random.normal(ks[3], (cin, s, s, s), jnp.float32),
        "w_pw": jax.random.normal(ks[4], (cout, cin, 1, 1, 1), jnp.float32) * 0.3,
        "b_pw": jax.random.normal(ks[5], (cout,), jnp.float32) * 0.1,
        "g2": 1.0 + 0.1 * jax.random.normal(ks[6], (cout, s, s, s), jnp.float32),
        "b2": 0.1 * jax.random.normal(ks[7], (cout, s, s, s), jnp.float32),
    }


def _layernorm_ref(y, g, b):
    mu = jnp.mean(y, axis=(1, 2, 3, 4), keepdims=True)
    var = jnp.mean(jnp.square(y - mu), axis=(1, 2, 3, 4), keepdims=True)
    return (y - mu) * jax.lax.rsqrt(var + _EPS) * g[None] + b[None]


def reference_forward(x, params, stride=1):
    cin = x.shape[1]
    cout = params["w_pw"].shape[0]
    y = jax.lax.conv_general_dilated(
        x, params["w_dw"], window_strides=(stride,) * 3,
        padding=((1, 1), (1, 1), (1, 1)),
        dimension_numbers=("NCDHW", "OIDHW", "NCDHW"),
        feature_group_count=cin,
        precision=jax.lax.Precision.HIGHEST)
    y = y + params["b_dw"].reshape(1, cin, 1, 1, 1)
    y = _gelu_exact(_layernorm_ref(y, params["g1"], params["b1"]))
    w = params["w_pw"][:, :, 0, 0, 0]
    y = jnp.einsum("ncdhw,oc->nodhw", y, w, precision=jax.lax.Precision.HIGHEST)
    y = y + params["b_pw"].reshape(1, cout, 1, 1, 1)
    y = _gelu_exact(_layernorm_ref(y, params["g2"], params["b2"]))
    return y


if __name__ == "__main__":
    N, CIN, COUT, SIDE = 2, 4, 8, 16
    key = jax.random.PRNGKey(0)
    kx, kp = jax.random.split(key)
    x = jax.random.normal(kx, (N, CIN, SIDE, SIDE, SIDE), jnp.float32)
    params = init_params(kp, CIN, COUT, SIDE)

    out = dwsc_forward(x, params, stride=1)
    out = jax.block_until_ready(out)
    assert out.shape == (N, COUT, SIDE, SIDE, SIDE)

    ref = reference_forward(x, params, stride=1)
    max_err = float(jnp.max(jnp.abs(out - ref)))
    assert max_err < 3e-3, f"mismatch vs reference: max_err={max_err}"

    print("KERNEL_OK")
</pallas_src>

<mosaic_0001>
module attributes {stable_mosaic.version = 11 : i64} {
  func.func @_dwsc_kernel(%arg0: i32, %arg1: memref<1x4x18x324xf32, #tpu.memory_space<vmem>>, %arg2: memref<4x16x256xf32, #tpu.memory_space<vmem>>, %arg3: memref<4x16x256xf32, #tpu.memory_space<vmem>>, %arg4: memref<8x16x256xf32, #tpu.memory_space<vmem>>, %arg5: memref<8x16x256xf32, #tpu.memory_space<vmem>>, %arg6: memref<108xf32, #tpu.memory_space<smem>>, %arg7: memref<4xf32, #tpu.memory_space<smem>>, %arg8: memref<32xf32, #tpu.memory_space<smem>>, %arg9: memref<8xf32, #tpu.memory_space<smem>>, %arg10: memref<1x8x16x256xf32, #tpu.memory_space<vmem>>) attributes {dimension_semantics = [#tpu.dimension_semantics<parallel>], iteration_bounds = array<i64: 2>, scalar_prefetch = 0 : i64, scratch_operands = 0 : i64, tpu.core_type = #tpu.core_type<tc>, window_params = [{transform_indices = @transform_0, window_bounds = array<i64: 1, 4, 18, 324>}, {pipeline_mode = #tpu.pipeline_mode<synchronous>, transform_indices = @transform_1, window_bounds = array<i64: 4, 16, 256>}, {pipeline_mode = #tpu.pipeline_mode<synchronous>, transform_indices = @transform_2, window_bounds = array<i64: 4, 16, 256>}, {pipeline_mode = #tpu.pipeline_mode<synchronous>, transform_indices = @transform_3, window_bounds = array<i64: 8, 16, 256>}, {pipeline_mode = #tpu.pipeline_mode<synchronous>, transform_indices = @transform_4, window_bounds = array<i64: 8, 16, 256>}, {transform_indices = @transform_5, window_bounds = array<i64: 108>}, {transform_indices = @transform_6, window_bounds = array<i64: 4>}, {transform_indices = @transform_7, window_bounds = array<i64: 32>}, {transform_indices = @transform_8, window_bounds = array<i64: 8>}, {transform_indices = @transform_9, window_bounds = array<i64: 1, 8, 16, 256>}]} {
    %c0 = arith.constant 0 : index
    %c0_0 = arith.constant 0 : index
    %c0_1 = arith.constant 0 : index
    %c0_2 = arith.constant 0 : index
    %0 = vector.load %arg1[%c0, %c0_0, %c0_1, %c0_2] : memref<1x4x18x324xf32, #tpu.memory_space<vmem>>, vector<1x1x18x324xf32>
    %1 = vector.shape_cast %0 : vector<1x1x18x324xf32> to vector<18x324xf32>
    %2 = vector.extract_strided_slice %1 {offsets = [0, 0], sizes = [18, 286], strides = [1, 1]} : vector<18x324xf32> to vector<18x286xf32>
    %3 = vector.extract_strided_slice %2 {offsets = [0, 0], sizes = [16, 286], strides = [1, 1]} : vector<18x286xf32> to vector<16x286xf32>
    %c0_3 = arith.constant 0 : index
    %4 = memref.load %arg6[%c0_3] : memref<108xf32, #tpu.memory_space<smem>>
    %5 = vector.broadcast %4 : f32 to vector<16x286xf32>
    %6 = arith.mulf %3, %5 : vector<16x286xf32>
    %7 = vector.extract_strided_slice %2 {offsets = [1, 0], sizes = [16, 286], strides = [1, 1]} : vector<18x286xf32> to vector<16x286xf32>
    %c36 = arith.constant 36 : index
    %8 = memref.load %arg6[%c36] : memref<108xf32, #tpu.memory_space<smem>>
    %9 = vector.broadcast %8 : f32 to vector<16x286xf32>
    %10 = arith.mulf %7, %9 : vector<16x286xf32>
    %11 = arith.addf %6, %10 : vector<16x286xf32>
    %12 = vector.extract_strided_slice %2 {offsets = [2, 0], sizes = [16, 286], strides = [1, 1]} : vector<18x286xf32> to vector<16x286xf32>
    %c72 = arith.constant 72 : index
    %13 = memref.load %arg6[%c72] : memref<108xf32, #tpu.memory_space<smem>>
    %14 = vector.broadcast %13 : f32 to vector<16x286xf32>
    %15 = arith.mulf %12, %14 : vector<16x286xf32>
    %16 = arith.addf %11, %15 : vector<16x286xf32>
    %17 = vector.extract_strided_slice %1 {offsets = [0, 1], sizes = [18, 286], strides = [1, 1]} : vector<18x324xf32> to vector<18x286xf32>
    %18 = vector.extract_strided_slice %17 {offsets = [0, 0], sizes = [16, 286], strides = [1, 1]} : vector<18x286xf32> to vector<16x286xf32>
    %c4 = arith.constant 4 : index
    %19 = memref.load %arg6[%c4] : memref<108xf32, #tpu.memory_space<smem>>
    %20 = vector.broadcast %19 : f32 to vector<16x286xf32>
    %21 = arith.mulf %18, %20 : vector<16x286xf32>
    %22 = arith.addf %16, %21 : vector<16x286xf32>
    %23 = vector.extract_strided_slice %17 {offsets = [1, 0], sizes = [16, 286], strides = [1, 1]} : vector<18x286xf32> to vector<16x286xf32>
    %c40 = arith.constant 40 : index
    %24 = memref.load %arg6[%c40] : memref<108xf32, #tpu.memory_space<smem>>
    %25 = vector.broadcast %24 : f32 to vector<16x286xf32>
    %26 = arith.mulf %23, %25 : vector<16x286xf32>
    %27 = arith.addf %22, %26 : vector<16x286xf32>
    %28 = vector.extract_strided_slice %17 {offsets = [2, 0], sizes = [16, 286], strides = [1, 1]} : vector<18x286xf32> to vector<16x286xf32>
    %c76 = arith.constant 76 : index
    %29 = memref.load %arg6[%c76] : memref<108xf32, #tpu.memory_space<smem>>
    %30 = vector.broadcast %29 : f32 to vector<16x286xf32>
    %31 = arith.mulf %28, %30 : vector<16x286xf32>
    %32 = arith.addf %27, %31 : vector<16x286xf32>
    %33 = vector.extract_strided_slice %1 {offsets = [0, 2], sizes = [18, 286], strides = [1, 1]} : vector<18x324xf32> to vector<18x286xf32>
    %34 = vector.extract_strided_slice %33 {offsets = [0, 0], sizes = [16, 286], strides = [1, 1]} : vector<18x286xf32> to vector<16x286xf32>
    %c8 = arith.constant 8 : index
    %35 = memref.load %arg6[%c8] : memref<108xf32, #tpu.memory_space<smem>>
    %36 = vector.broadcast %35 : f32 to vector<16x286xf32>
    %37 = arith.mulf %34, %36 : vector<16x286xf32>
    %38 = arith.addf %32, %37 : vector<16x286xf32>
    %39 = vector.extract_strided_slice %33 {offsets = [1, 0], sizes = [16, 286], strides = [1, 1]} : vector<18x286xf32> to vector<16x286xf32>
    %c44 = arith.constant 44 : index
    %40 = memref.load %arg6[%c44] : memref<108xf32, #tpu.memory_space<smem>>
    %41 = vector.broadcast %40 : f32 to vector<16x286xf32>
    %42 = arith.mulf %39, %41 : vector<16x286xf32>
    %43 = arith.addf %38, %42 : vector<16x286xf32>
    %44 = vector.extract_strided_slice %33 {offsets = [2, 0], sizes = [16, 286], strides = [1, 1]} : vector<18x286xf32> to vector<16x286xf32>
    %c80 = arith.constant 80 : index
    %45 = memref.load %arg6[%c80] : memref<108xf32, #tpu.memory_space<smem>>
    %46 = vector.broadcast %45 : f32 to vector<16x286xf32>
    %47 = arith.mulf %44, %46 : vector<16x286xf32>
    %48 = arith.addf %43, %47 : vector<16x286xf32>
    %49 = vector.extract_strided_slice %1 {offsets = [0, 18], sizes = [18, 286], strides = [1, 1]} : vector<18x324xf32> to vector<18x286xf32>
    %50 = vector.extract_strided_slice %49 {offsets = [0, 0], sizes = [16, 286], strides = [1, 1]} : vector<18x286xf32> to vector<16x286xf32>
    %c12 = arith.constant 12 : index
    %51 = memref.load %arg6[%c12] : memref<108xf32, #tpu.memory_space<smem>>
    %52 = vector.broadcast %51 : f32 to vector<16x286xf32>
    %53 = arith.mulf %50, %52 : vector<16x286xf32>
    %54 = arith.addf %48, %53 : vector<16x286xf32>
    %55 = vector.extract_strided_slice %49 {offsets = [1, 0], sizes = [16, 286], strides = [1, 1]} : vector<18x286xf32> to vector<16x286xf32>
    %c48 = arith.constant 48 : index
    %56 = memref.load %arg6[%c48] : memref<108xf32, #tpu.memory_space<smem>>
    %57 = vector.broadcast %56 : f32 to vector<16x286xf32>
    %58 = arith.mulf %55, %57 : vector<16x286xf32>
    %59 = arith.addf %54, %58 : vector<16x286xf32>
    %60 = vector.extract_strided_slice %49 {offsets = [2, 0], sizes = [16, 286], strides = [1, 1]} : vector<18x286xf32> to vector<16x286xf32>
    %c84 = arith.constant 84 : index
    %61 = memref.load %arg6[%c84] : memref<108xf32, #tpu.memory_space<smem>>
    %62 = vector.broadcast %61 : f32 to vector<16x286xf32>
    %63 = arith.mulf %60, %62 : vector<16x286xf32>
    %64 = arith.addf %59, %63 : vector<16x286xf32>
    %65 = vector.extract_strided_slice %1 {offsets = [0, 19], sizes = [18, 286], strides = [1, 1]} : vector<18x324xf32> to vector<18x286xf32>
    %66 = vector.extract_strided_slice %65 {offsets = [0, 0], sizes = [16, 286], strides = [1, 1]} : vector<18x286xf32> to vector<16x286xf32>
    %c16 = arith.constant 16 : index
    %67 = memref.load %arg6[%c16] : memref<108xf32, #tpu.memory_space<smem>>
    %68 = vector.broadcast %67 : f32 to vector<16x286xf32>
    %69 = arith.mulf %66, %68 : vector<16x286xf32>
    %70 = arith.addf %64, %69 : vector<16x286xf32>
    %71 = vector.extract_strided_slice %65 {offsets = [1, 0], sizes = [16, 286], strides = [1, 1]} : vector<18x286xf32> to vector<16x286xf32>
    %c52 = arith.constant 52 : index
    %72 = memref.load %arg6[%c52] : memref<108xf32, #tpu.memory_space<smem>>
    %73 = vector.broadcast %72 : f32 to vector<16x286xf32>
    %74 = arith.mulf %71, %73 : vector<16x286xf32>
    %75 = arith.addf %70, %74 : vector<16x286xf32>
    %76 = vector.extract_strided_slice %65 {offsets = [2, 0], sizes = [16, 286], strides = [1, 1]} : vector<18x286xf32> to vector<16x286xf32>
    %c88 = arith.constant 88 : index
    %77 = memref.load %arg6[%c88] : memref<108xf32, #tpu.memory_space<smem>>
    %78 = vector.broadcast %77 : f32 to vector<16x286xf32>
    %79 = arith.mulf %76, %78 : vector<16x286xf32>
    %80 = arith.addf %75, %79 : vector<16x286xf32>
    %81 = vector.extract_strided_slice %1 {offsets = [0, 20], sizes = [18, 286], strides = [1, 1]} : vector<18x324xf32> to vector<18x286xf32>
    %82 = vector.extract_strided_slice %81 {offsets = [0, 0], sizes = [16, 286], strides = [1, 1]} : vector<18x286xf32> to vector<16x286xf32>
    %c20 = arith.constant 20 : index
    %83 = memref.load %arg6[%c20] : memref<108xf32, #tpu.memory_space<smem>>
    %84 = vector.broadcast %83 : f32 to vector<16x286xf32>
    %85 = arith.mulf %82, %84 : vector<16x286xf32>
    %86 = arith.addf %80, %85 : vector<16x286xf32>
    %87 = vector.extract_strided_slice %81 {offsets = [1, 0], sizes = [16, 286], strides = [1, 1]} : vector<18x286xf32> to vector<16x286xf32>
    %c56 = arith.constant 56 : index
    %88 = memref.load %arg6[%c56] : memref<108xf32, #tpu.memory_space<smem>>
    %89 = vector.broadcast %88 : f32 to vector<16x286xf32>
    %90 = arith.mulf %87, %89 : vector<16x286xf32>
    %91 = arith.addf %86, %90 : vector<16x286xf32>
    %92 = vector.extract_strided_slice %81 {offsets = [2, 0], sizes = [16, 286], strides = [1, 1]} : vector<18x286xf32> to vector<16x286xf32>
    %c92 = arith.constant 92 : index
    %93 = memref.load %arg6[%c92] : memref<108xf32, #tpu.memory_space<smem>>
    %94 = vector.broadcast %93 : f32 to vector<16x286xf32>
    %95 = arith.mulf %92, %94 : vector<16x286xf32>
    %96 = arith.addf %91, %95 : vector<16x286xf32>
    %97 = vector.extract_strided_slice %1 {offsets = [0, 36], sizes = [18, 286], strides = [1, 1]} : vector<18x324xf32> to vector<18x286xf32>
    %98 = vector.extract_strided_slice %97 {offsets = [0, 0], sizes = [16, 286], strides = [1, 1]} : vector<18x286xf32> to vector<16x286xf32>
    %c24 = arith.constant 24 : index
    %99 = memref.load %arg6[%c24] : memref<108xf32, #tpu.memory_space<smem>>
    %100 = vector.broadcast %99 : f32 to vector<16x286xf32>
    %101 = arith.mulf %98, %100 : vector<16x286xf32>
    %102 = arith.addf %96, %101 : vector<16x286xf32>
    %103 = vector.extract_strided_slice %97 {offsets = [1, 0], sizes = [16, 286], strides = [1, 1]} : vector<18x286xf32> to vector<16x286xf32>
    %c60 = arith.constant 60 : index
    %104 = memref.load %arg6[%c60] : memref<108xf32, #tpu.memory_space<smem>>
    %105 = vector.broadcast %104 : f32 to vector<16x286xf32>
    %106 = arith.mulf %103, %105 : vector<16x286xf32>
    %107 = arith.addf %102, %106 : vector<16x286xf32>
    %108 = vector.extract_strided_slice %97 {offsets = [2, 0], sizes = [16, 286], strides = [1, 1]} : vector<18x286xf32> to vector<16x286xf32>
    %c96 = arith.constant 96 : index
    %109 = memref.load %arg6[%c96] : memref<108xf32, #tpu.memory_space<smem>>
    %110 = vector.broadcast %109 : f32 to vector<16x286xf32>
    %111 = arith.mulf %108, %110 : vector<16x286xf32>
    %112 = arith.addf %107, %111 : vector<16x286xf32>
    %113 = vector.extract_strided_slice %1 {offsets = [0, 37], sizes = [18, 286], strides = [1, 1]} : vector<18x324xf32> to vector<18x286xf32>
    %114 = vector.extract_strided_slice %113 {offsets = [0, 0], sizes = [16, 286], strides = [1, 1]} : vector<18x286xf32> to vector<16x286xf32>
    %c28 = arith.constant 28 : index
    %115 = memref.load %arg6[%c28] : memref<108xf32, #tpu.memory_space<smem>>
    %116 = vector.broadcast %115 : f32 to vector<16x286xf32>
    %117 = arith.mulf %114, %116 : vector<16x286xf32>
    %118 = arith.addf %112, %117 : vector<16x286xf32>
    %119 = vector.extract_strided_slice %113 {offsets = [1, 0], sizes = [16, 286], strides = [1, 1]} : vector<18x286xf32> to vector<16x286xf32>
    %c64 = arith.constant 64 : index
    %120 = memref.load %arg6[%c64] : memref<108xf32, #tpu.memory_space<smem>>
    %121 = vector.broadcast %120 : f32 to vector<16x286xf32>
    %122 = arith.mulf %119, %121 : vector<16x286xf32>
    %123 = arith.addf %118, %122 : vector<16x286xf32>
    %124 = vector.extract_strided_slice %113 {offsets = [2, 0], sizes = [16, 286], strides = [1, 1]} : vector<18x286xf32> to vector<16x286xf32>
    %c100 = arith.constant 100 : index
    %125 = memref.load %arg6[%c100] : memref<108xf32, #tpu.memory_space<smem>>
    %126 = vector.broadcast %125 : f32 to vector<16x286xf32>
    %127 = arith.mulf %124, %126 : vector<16x286xf32>
    %128 = arith.addf %123, %127 : vector<16x286xf32>
    %129 = vector.extract_strided_slice %1 {offsets = [0, 38], sizes = [18, 286], strides = [1, 1]} : vector<18x324xf32> to vector<18x286xf32>
    %130 = vector.extract_strided_slice %129 {offsets = [0, 0], sizes = [16, 286], strides = [1, 1]} : vector<18x286xf32> to vector<16x286xf32>
    %c32 = arith.constant 32 : index
    %131 = memref.load %arg6[%c32] : memref<108xf32, #tpu.memory_space<smem>>
    %132 = vector.broadcast %131 : f32 to vector<16x286xf32>
    %133 = arith.mulf %130, %132 : vector<16x286xf32>
    %134 = arith.addf %128, %133 : vector<16x286xf32>
    %135 = vector.extract_strided_slice %129 {offsets = [1, 0], sizes = [16, 286], strides = [1, 1]} : vector<18x286xf32> to vector<16x286xf32>
    %c68 = arith.constant 68 : index
    %136 = memref.load %arg6[%c68] : memref<108xf32, #tpu.memory_space<smem>>
    %137 = vector.broadcast %136 : f32 to vector<16x286xf32>
    %138 = arith.mulf %135, %137 : vector<16x286xf32>
    %139 = arith.addf %134, %138 : vector<16x286xf32>
    %140 = vector.extract_strided_slice %129 {offsets = [2, 0], sizes = [16, 286], strides = [1, 1]} : vector<18x286xf32> to vector<16x286xf32>
    %c104 = arith.constant 104 : index
    %141 = memref.load %arg6[%c104] : memref<108xf32, #tpu.memory_space<smem>>
    %142 = vector.broadcast %141 : f32 to vector<16x286xf32>
    %143 = arith.mulf %140, %142 : vector<16x286xf32>
    %144 = arith.addf %139, %143 : vector<16x286xf32>
    %c0_4 = arith.constant 0 : index
    %145 = memref.load %arg7[%c0_4] : memref<4xf32, #tpu.memory_space<smem>>
    %146 = vector.broadcast %145 : f32 to vector<16x286xf32>
    %147 = arith.addf %144, %146 : vector<16x286xf32>
    %148 = vector.extract_strided_slice %147 {offsets = [0, 0], sizes = [16, 16], strides = [1, 1]} : vector<16x286xf32> to vector<16x16xf32>
    %149 = vector.extract_strided_slice %147 {offsets = [0, 18], sizes = [16, 16], strides = [1, 1]} : vector<16x286xf32> to vector<16x16xf32>
    %150 = vector.extract_strided_slice %147 {offsets = [0, 36], sizes = [16, 16], strides = [1, 1]} : vector<16x286xf32> to vector<16x16xf32>
    %151 = vector.extract_strided_slice %147 {offsets = [0, 54], sizes = [16, 16], strides = [1, 1]} : vector<16x286xf32> to vector<16x16xf32>
    %152 = vector.extract_strided_slice %147 {offsets = [0, 72], sizes = [16, 16], strides = [1, 1]} : vector<16x286xf32> to vector<16x16xf32>
    %153 = vector.extract_strided_slice %147 {offsets = [0, 90], sizes = [16, 16], strides = [1, 1]} : vector<16x286xf32> to vector<16x16xf32>
    %154 = vector.extract_strided_slice %147 {offsets = [0, 108], sizes = [16, 16], strides = [1, 1]} : vector<16x286xf32> to vector<16x16xf32>
    %155 = vector.extract_strided_slice %147 {offsets = [0, 126], sizes = [16, 16], strides = [1, 1]} : vector<16x286xf32> to vector<16x16xf32>
    %156 = vector.extract_strided_slice %147 {offsets = [0, 144], sizes = [16, 16], strides = [1, 1]} : vector<16x286xf32> to vector<16x16xf32>
    %157 = vector.extract_strided_slice %147 {offsets = [0, 162], sizes = [16, 16], strides = [1, 1]} : vector<16x286xf32> to vector<16x16xf32>
    %158 = vector.extract_strided_slice %147 {offsets = [0, 180], sizes = [16, 16], strides = [1, 1]} : vector<16x286xf32> to vector<16x16xf32>
    %159 = vector.extract_strided_slice %147 {offsets = [0, 198], sizes = [16, 16], strides = [1, 1]} : vector<16x286xf32> to vector<16x16xf32>
    %160 = vector.extract_strided_slice %147 {offsets = [0, 216], sizes = [16, 16], strides = [1, 1]} : vector<16x286xf32> to vector<16x16xf32>
    %161 = vector.extract_strided_slice %147 {offsets = [0, 234], sizes = [16, 16], strides = [1, 1]} : vector<16x286xf32> to vector<16x16xf32>
    %162 = vector.extract_strided_slice %147 {offsets = [0, 252], sizes = [16, 16], strides = [1, 1]} : vector<16x286xf32> to vector<16x16xf32>
    %163 = vector.extract_strided_slice %147 {offsets = [0, 270], sizes = [16, 16], strides = [1, 1]} : vector<16x286xf32> to vector<16x16xf32>
    %164 = tpu.concatenate %148, %149, %150, %151, %152, %153, %154, %155, %156, %157, %158, %159, %160, %161, %162, %163 in 1 : vector<16x16xf32>, vector<16x16xf32>, vector<16x16xf32>, vector<16x16xf32>, vector<16x16xf32>, vector<16x16xf32>, vector<16x16xf32>, vector<16x16xf32>, vector<16x16xf32>, vector<16x16xf32>, vector<16x16xf32>, vector<16x16xf32>, vector<16x16xf32>, vector<16x16xf32>, vector<16x16xf32>, vector<16x16xf32> -> vector<16x256xf32>
    %c0_5 = arith.constant 0 : index
    %c1 = arith.constant 1 : index
    %c0_6 = arith.constant 0 : index
    %c0_7 = arith.constant 0 : index
    %165 = vector.load %arg1[%c0_5, %c1, %c0_6, %c0_7] : memref<1x4x18x324xf32, #tpu.memory_space<vmem>>, vector<1x1x18x324xf32>
    %166 = vector.shape_cast %165 : vector<1x1x18x324xf32> to vector<18x324xf32>
    %167 = vector.extract_strided_slice %166 {offsets = [0, 0], sizes = [18, 286], strides = [1, 1]} : vector<18x324xf32> to vector<18x286xf32>
    %168 = vector.extract_strided_slice %167 {offsets = [0, 0], sizes = [16, 286], strides = [1, 1]} : vector<18x286xf32> to vector<16x286xf32>
    %c1_8 = arith.constant 1 : index
    %169 = memref.load %arg6[%c1_8] : memref<108xf32, #tpu.memory_space<smem>>
    %170 = vector.broadcast %169 : f32 to vector<16x286xf32>
    %171 = arith.mulf %168, %170 : vector<16x286xf32>
    %172 = vector.extract_strided_slice %167 {offsets = [1, 0], sizes = [16, 286], strides = [1, 1]} : vector<18x286xf32> to vector<16x286xf32>
    %c37 = arith.constant 37 : index
    %173 = memref.load %arg6[%c37] : memref<108xf32, #tpu.memory_space<smem>>
    %174 = vector.broadcast %173 : f32 to vector<16x286xf32>
    %175 = arith.mulf %172, %174 : vector<16x286xf32>
    %176 = arith.addf %171, %175 : vector<16x286xf32>
    %177 = vector.extract_strided_slice %167 {offsets = [2, 0], sizes = [16, 286], strides = [1, 1]} : vector<18x286xf32> to vector<16x286xf32>
    %c73 = arith.constant 73 : index
    %178 = memref.load %arg6[%c73] : memref<108xf32, #tpu.memory_space<smem>>
    %179 = vector.broadcast %178 : f32 to vector<16x286xf32>
    %180 = arith.mulf %177, %179 : vector<16x286xf32>
    %181 = arith.addf %176, %180 : vector<16x286xf32>
    %182 = vector.extract_strided_slice %166 {offsets = [0, 1], sizes = [18, 286], strides = [1, 1]} : vector<18x324xf32> to vector<18x286xf32>
    %183 = vector.extract_strided_slice %182 {offsets = [0, 0], sizes = [16, 286], strides = [1, 1]} : vector<18x286xf32> to vector<16x286xf32>
    %c5 = arith.constant 5 : index
    %184 = memref.load %arg6[%c5] : memref<108xf32, #tpu.memory_space<smem>>
    %185 = vector.broadcast %184 : f32 to vector<16x286xf32>
    %186 = arith.mulf %183, %185 : vector<16x286xf32>
    %187 = arith.addf %181, %186 : vector<16x286xf32>
    %188 = vector.extract_strided_slice %182 {offsets = [1, 0], sizes = [16, 286], strides = [1, 1]} : vector<18x286xf32> to vector<16x286xf32>
    %c41 = arith.constant 41 : index
    %189 = memref.load %arg6[%c41] : memref<108xf32, #tpu.memory_space<smem>>
    %190 = vector.broadcast %189 : f32 to vector<16x286xf32>
    %191 = arith.mulf %188, %190 : vector<16x286xf32>
    %192 = arith.addf %187, %191 : vector<16x286xf32>
    %193 = vector.extract_strided_slice %182 {offsets = [2, 0], sizes = [16, 286], strides = [1, 1]} : vector<18x286xf32> to vector<16x286xf32>
    %c77 = arith.constant 77 : index
    %194 = memref.load %arg6[%c77] : memref<108xf32, #tpu.memory_space<smem>>
    %195 = vector.broadcast %194 : f32 to vector<16x286xf32>
    %196 = arith.mulf %193, %195 : vector<16x286xf32>
    %197 = arith.addf %192, %196 : vector<16x286xf32>
    %198 = vector.extract_strided_slice %166 {offsets = [0, 2], sizes = [18, 286], strides = [1, 1]} : vector<18x324xf32> to vector<18x286xf32>
    %199 = vector.extract_strided_slice %198 {offsets = [0, 0], sizes = [16, 286], strides = [1, 1]} : vector<18x286xf32> to vector<16x286xf32>
    %c9 = arith.constant 9 : index
    %200 = memref.load %arg6[%c9] : memref<108xf32, #tpu.memory_space<smem>>
    %201 = vector.broadcast %200 : f32 to vector<16x286xf32>
    %202 = arith.mulf %199, %201 : vector<16x286xf32>
    %203 = arith.addf %197, %202 : vector<16x286xf32>
    %204 = vector.extract_strided_slice %198 {offsets = [1, 0], sizes = [16, 286], strides = [1, 1]} : vector<18x286xf32> to vector<16x286xf32>
    %c45 = arith.constant 45 : index
    %205 = memref.load %arg6[%c45] : memref<108xf32, #tpu.memory_space<smem>>
    %206 = vector.broadcast %205 : f32 to vector<16x286xf32>
    %207 = arith.mulf %204, %206 : vector<16x286xf32>
    %208 = arith.addf %203, %207 : vector<16x286xf32>
    %209 = vector.extract_strided_slice %198 {offsets = [2, 0], sizes = [16, 286], strides = [1, 1]} : vector<18x286xf32> to vector<16x286xf32>
    %c81 = arith.constant 81 : index
    %210 = memref.load %arg6[%c81] : memref<108xf32, #tpu.memory_space<smem>>
    %211 = vector.broadcast %210 : f32 to vector<16x286xf32>
    %212 = arith.mulf %209, %211 : vector<16x286xf32>
    %213 = arith.addf %208, %212 : vector<16x286xf32>
    %214 = vector.extract_strided_slice %166 {offsets = [0, 18], sizes = [18, 286], strides = [1, 1]} : vector<18x324xf32> to vector<18x286xf32>
    %215 = vector.extract_strided_slice %214 {offsets = [0, 0], sizes = [16, 286], strides = [1, 1]} : vector<18x286xf32> to vector<16x286xf32>
    %c13 = arith.constant 13 : index
    %216 = memref.load %arg6[%c13] : memref<108xf32, #tpu.memory_space<smem>>
    %217 = vector.broadcast %216 : f32 to vector<16x286xf32>
    %218 = arith.mulf %215, %217 : vector<16x286xf32>
    %219 = arith.addf %213, %218 : vector<16x286xf32>
    %220 = vector.extract_strided_slice %214 {offsets = [1, 0], sizes = [16, 286], strides = [1, 1]} : vector<18x286xf32> to vector<16x286xf32>
    %c49 = arith.constant 49 : index
    %221 = memref.load %arg6[%c49] : memref<108xf32, #tpu.memory_space<smem>>
    %222 = vector.broadcast %221 : f32 to vector<16x286xf32>
    %223 = arith.mulf %220, %222 : vector<16x286xf32>
    %224 = arith.addf %219, %223 : vector<16x286xf32>
    %225 = vector.extract_strided_slice %214 {offsets = [2, 0], sizes = [16, 286], strides = [1, 1]} : vector<18x286xf32> to vector<16x286xf32>
    %c85 = arith.constant 85 : index
    %226 = memref.load %arg6[%c85] : memref<108xf32, #tpu.memory_space<smem>>
    %227 = vector.broadcast %226 : f32 to vector<16x286xf32>
    %228 = arith.mulf %225, %227 : vector<16x286xf32>
    %229 = arith.addf %224, %228 : vector<16x286xf32>
    %230 = vector.extract_strided_slice %166 {offsets = [0, 19], sizes = [18, 286], strides = [1, 1]} : vector<18x324xf32> to vector<18x286xf32>
    %231 = vector.extract_strided_slice %230 {offsets = [0, 0], sizes = [16, 286], strides = [1, 1]} : vector<18x286xf32> to vector<16x286xf32>
    %c17 = arith.constant 17 : index
    %232 = memref.load %arg6[%c17] : memref<108xf32, #tpu.memory_space<smem>>
    %233 = vector.broadcast %232 : f32 to vector<16x286xf32>
    %234 = arith.mulf %231, %233 : vector<16x286xf32>
    %235 = arith.addf %229, %234 : vector<16x286xf32>
    %236 = vector.extract_strided_slice %230 {offsets = [1, 0], sizes = [16, 286], strides = [1, 1]} : vector<18x286xf32> to vector<16x286xf32>
    %c53 = arith.constant 53 : index
    %237 = memref.load %arg6[%c53] : memref<108xf32, #tpu.memory_space<smem>>
    %238 = vector.broadcast %237 : f32 to vector<16x286xf32>
    %239 = arith.mulf %236, %238 : vector<16x286xf32>
    %240 = arith.addf %235, %239 : vector<16x286xf32>
    %241 = vector.extract_strided_slice %230 {offsets = [2, 0], sizes = [16, 286], strides = [1, 1]} : vector<18x286xf32> to vector<16x286xf32>
    %c89 = arith.constant 89 : index
    %242 = memref.load %arg6[%c89] : memref<108xf32, #tpu.memory_space<smem>>
    %243 = vector.broadcast %242 : f32 to vector<16x286xf32>
    %244 = arith.mulf %241, %243 : vector<16x286xf32>
    %245 = arith.addf %240, %244 : vector<16x286xf32>
    %246 = vector.extract_strided_slice %166 {offsets = [0, 20], sizes = [18, 286], strides = [1, 1]} : vector<18x324xf32> to vector<18x286xf32>
    %247 = vector.extract_strided_slice %246 {offsets = [0, 0], sizes = [16, 286], strides = [1, 1]} : vector<18x286xf32> to vector<16x286xf32>
    %c21 = arith.constant 21 : index
    %248 = memref.load %arg6[%c21] : memref<108xf32, #tpu.memory_space<smem>>
    %249 = vector.broadcast %248 : f32 to vector<16x286xf32>
    %250 = arith.mulf %247, %249 : vector<16x286xf32>
    %251 = arith.addf %245, %250 : vector<16x286xf32>
    %252 = vector.extract_strided_slice %246 {offsets = [1, 0], sizes = [16, 286], strides = [1, 1]} : vector<18x286xf32> to vector<16x286xf32>
    %c57 = arith.constant 57 : index
    %253 = memref.load %arg6[%c57] : memref<108xf32, #tpu.memory_space<smem>>
    %254 = vector.broadcast %253 : f32 to vector<16x286xf32>
    %255 = arith.mulf %252, %254 : vector<16x286xf32>
    %256 = arith.addf %251, %255 : vector<16x286xf32>
    %257 = vector.extract_strided_slice %246 {offsets = [2, 0], sizes = [16, 286], strides = [1, 1]} : vector<18x286xf32> to vector<16x286xf32>
    %c93 = arith.constant 93 : index
    %258 = memref.load %arg6[%c93] : memref<108xf32, #tpu.memory_space<smem>>
    %259 = vector.broadcast %258 : f32 to vector<16x286xf32>
    %260 = arith.mulf %257, %259 : vector<16x286xf32>
    %261 = arith.addf %256, %260 : vector<16x286xf32>
    %262 = vector.extract_strided_slice %166 {offsets = [0, 36], sizes = [18, 286], strides = [1, 1]} : vector<18x324xf32> to vector<18x286xf32>
    %263 = vector.extract_strided_slice %262 {offsets = [0, 0], sizes = [16, 286], strides = [1, 1]} : vector<18x286xf32> to vector<16x286xf32>
    %c25 = arith.constant 25 : index
    %264 = memref.load %arg6[%c25] : memref<108xf32, #tpu.memory_space<smem>>
    %265 = vector.broadcast %264 : f32 to vector<16x286xf32>
    %266 = arith.mulf %263, %265 : vector<16x286xf32>
    %267 = arith.addf %261, %266 : vector<16x286xf32>
    %268 = vector.extract_strided_slice %262 {offsets = [1, 0], sizes = [16, 286], strides = [1, 1]} : vector<18x286xf32> to vector<16x286xf32>
    %c61 = arith.constant 61 : index
    %269 = memref.load %arg6[%c61] : memref<108xf32, #tpu.memory_space<smem>>
    %270 = vector.broadcast %269 : f32 to vector<16x286xf32>
    %271 = arith.mulf %268, %270 : vector<16x286xf32>
    %272 = arith.addf %267, %271 : vector<16x286xf32>
    %273 = vector.extract_strided_slice %262 {offsets = [2, 0], sizes = [16, 286], strides = [1, 1]} : vector<18x286xf32> to vector<16x286xf32>
    %c97 = arith.constant 97 : index
    %274 = memref.load %arg6[%c97] : memref<108xf32, #tpu.memory_space<smem>>
    %275 = vector.broadcast %274 : f32 to vector<16x286xf32>
    %276 = arith.mulf %273, %275 : vector<16x286xf32>
    %277 = arith.addf %272, %276 : vector<16x286xf32>
    %278 = vector.extract_strided_slice %166 {offsets = [0, 37], sizes = [18, 286], strides = [1, 1]} : vector<18x324xf32> to vector<18x286xf32>
    %279 = vector.extract_strided_slice %278 {offsets = [0, 0], sizes = [16, 286], strides = [1, 1]} : vector<18x286xf32> to vector<16x286xf32>
    %c29 = arith.constant 29 : index
    %280 = memref.load %arg6[%c29] : memref<108xf32, #tpu.memory_space<smem>>
    %281 = vector.broadcast %280 : f32 to vector<16x286xf32>
    %282 = arith.mulf %279, %281 : vector<16x286xf32>
    %283 = arith.addf %277, %282 : vector<16x286xf32>
    %284 = vector.extract_strided_slice %278 {offsets = [1, 0], sizes = [16, 286], strides = [1, 1]} : vector<18x286xf32> to vector<16x286xf32>
    %c65 = arith.constant 65 : index
    %285 = memref.load %arg6[%c65] : memref<108xf32, #tpu.memory_space<smem>>
    %286 = vector.broadcast %285 : f32 to vector<16x286xf32>
    %287 = arith.mulf %284, %286 : vector<16x286xf32>
    %288 = arith.addf %283, %287 : vector<16x286xf32>
    %289 = vector.extract_strided_slice %278 {offsets = [2, 0], sizes = [16, 286], strides = [1, 1]} : vector<18x286xf32> to vector<16x286xf32>
    %c101 = arith.constant 101 : index
    %290 = memref.load %arg6[%c101] : memref<108xf32, #tpu.memory_space<smem>>
    %291 = vector.broadcast %290 : f32 to vector<16x286xf32>
    %292 = arith.mulf %289, %291 : vector<16x286xf32>
    %293 = arith.addf %288, %292 : vector<16x286xf32>
    %294 = vector.extract_strided_slice %166 {offsets = [0, 38], sizes = [18, 286], strides = [1, 1]} : vector<18x324xf32> to vector<18x286xf32>
    %295 = vector.extract_strided_slice %294 {offsets = [0, 0], sizes = [16, 286], strides = [1, 1]} : vector<18x286xf32> to vector<16x286xf32>
    %c33 = arith.constant 33 : index
    %296 = memref.load %arg6[%c33] : memref<108xf32, #tpu.memory_space<smem>>
    %297 = vector.broadcast %296 : f32 to vector<16x286xf32>
    %298 = arith.mulf %295, %297 : vector<16x286xf32>
    %299 = arith.addf %293, %298 : vector<16x286xf32>
    %300 = vector.extract_strided_slice %294 {offsets = [1, 0], sizes = [16, 286], strides = [1, 1]} : vector<18x286xf32> to vector<16x286xf32>
    %c69 = arith.constant 69 : index
    %301 = memref.load %arg6[%c69] : memref<108xf32, #tpu.memory_space<smem>>
    %302 = vector.broadcast %301 : f32 to vector<16x286xf32>
    %303 = arith.mulf %300, %302 : vector<16x286xf32>
    %304 = arith.addf %299, %303 : vector<16x286xf32>
    %305 = vector.extract_strided_slice %294 {offsets = [2, 0], sizes = [16, 286], strides = [1, 1]} : vector<18x286xf32> to vector<16x286xf32>
    %c105 = arith.constant 105 : index
    %306 = memref.load %arg6[%c105] : memref<108xf32, #tpu.memory_space<smem>>
    %307 = vector.broadcast %306 : f32 to vector<16x286xf32>
    %308 = arith.mulf %305, %307 : vector<16x286xf32>
    %309 = arith.addf %304, %308 : vector<16x286xf32>
    %c1_9 = arith.constant 1 : index
    %310 = memref.load %arg7[%c1_9] : memref<4xf32, #tpu.memory_space<smem>>
    %311 = vector.broadcast %310 : f32 to vector<16x286xf32>
    %312 = arith.addf %309, %311 : vector<16x286xf32>
    %313 = vector.extract_strided_slice %312 {offsets = [0, 0], sizes = [16, 16], strides = [1, 1]} : vector<16x286xf32> to vector<16x16xf32>
    %314 = vector.extract_strided_slice %312 {offsets = [0, 18], sizes = [16, 16], strides = [1, 1]} : vector<16x286xf32> to vector<16x16xf32>
    %315 = vector.extract_strided_slice %312 {offsets = [0, 36], sizes = [16, 16], strides = [1, 1]} : vector<16x286xf32> to vector<16x16xf32>
    %316 = vector.extract_strided_slice %312 {offsets = [0, 54], sizes = [16, 16], strides = [1, 1]} : vector<16x286xf32> to vector<16x16xf32>
    %317 = vector.extract_strided_slice %312 {offsets = [0, 72], sizes = [16, 16], strides = [1, 1]} : vector<16x286xf32> to vector<16x16xf32>
    %318 = vector.extract_strided_slice %312 {offsets = [0, 90], sizes = [16, 16], strides = [1, 1]} : vector<16x286xf32> to vector<16x16xf32>
    %319 = vector.extract_strided_slice %312 {offsets = [0, 108], sizes = [16, 16], strides = [1, 1]} : vector<16x286xf32> to vector<16x16xf32>
    %320 = vector.extract_strided_slice %312 {offsets = [0, 126], sizes = [16, 16], strides = [1, 1]} : vector<16x286xf32> to vector<16x16xf32>
    %321 = vector.extract_strided_slice %312 {offsets = [0, 144], sizes = [16, 16], strides = [1, 1]} : vector<16x286xf32> to vector<16x16xf32>
    %322 = vector.extract_strided_slice %312 {offsets = [0, 162], sizes = [16, 16], strides = [1, 1]} : vector<16x286xf32> to vector<16x16xf32>
    %323 = vector.extract_strided_slice %312 {offsets = [0, 180], sizes = [16, 16], strides = [1, 1]} : vector<16x286xf32> to vector<16x16xf32>
    %324 = vector.extract_strided_slice %312 {offsets = [0, 198], sizes = [16, 16], strides = [1, 1]} : vector<16x286xf32> to vector<16x16xf32>
    %325 = vector.extract_strided_slice %312 {offsets = [0, 216], sizes = [16, 16], strides = [1, 1]} : vector<16x286xf32> to vector<16x16xf32>
    %326 = vector.extract_strided_slice %312 {offsets = [0, 234], sizes = [16, 16], strides = [1, 1]} : vector<16x286xf32> to vector<16x16xf32>
    %327 = vector.extract_strided_slice %312 {offsets = [0, 252], sizes = [16, 16], strides = [1, 1]} : vector<16x286xf32> to vector<16x16xf32>
    %328 = vector.extract_strided_slice %312 {offsets = [0, 270], sizes = [16, 16], strides = [1, 1]} : vector<16x286xf32> to vector<16x16xf32>
    %329 = tpu.concatenate %313, %314, %315, %316, %317, %318, %319, %320, %321, %322, %323, %324, %325, %326, %327, %328 in 1 : vector<16x16xf32>, vector<16x16xf32>, vector<16x16xf32>, vector<16x16xf32>, vector<16x16xf32>, vector<16x16xf32>, vector<16x16xf32>, vector<16x16xf32>, vector<16x16xf32>, vector<16x16xf32>, vector<16x16xf32>, vector<16x16xf32>, vector<16x16xf32>, vector<16x16xf32>, vector<16x16xf32>, vector<16x16xf32> -> vector<16x256xf32>
    %c0_10 = arith.constant 0 : index
    %c2 = arith.constant 2 : index
    %c0_11 = arith.constant 0 : index
    %c0_12 = arith.constant 0 : index
    %330 = vector.load %arg1[%c0_10, %c2, %c0_11, %c0_12] : memref<1x4x18x324xf32, #tpu.memory_space<vmem>>, vector<1x1x18x324xf32>
    %331 = vector.shape_cast %330 : vector<1x1x18x324xf32> to vector<18x324xf32>
    %332 = vector.extract_strided_slice %331 {offsets = [0, 0], sizes = [18, 286], strides = [1, 1]} : vector<18x324xf32> to vector<18x286xf32>
    %333 = vector.extract_strided_slice %332 {offsets = [0, 0], sizes = [16, 286], strides = [1, 1]} : vector<18x286xf32> to vector<16x286xf32>
    %c2_13 = arith.constant 2 : index
    %334 = memref.load %arg6[%c2_13] : memref<108xf32, #tpu.memory_space<smem>>
    %335 = vector.broadcast %334 : f32 to vector<16x286xf32>
    %336 = arith.mulf %333, %335 : vector<16x286xf32>
    %337 = vector.extract_strided_slice %332 {offsets = [1, 0], sizes = [16, 286], strides = [1, 1]} : vector<18x286xf32> to vector<16x286xf32>
    %c38 = arith.constant 38 : index
    %338 = memref.load %arg6[%c38] : memref<108xf32, #tpu.memory_space<smem>>
    %339 = vector.broadcast %338 : f32 to vector<16x286xf32>
    %340 = arith.mulf %337, %339 : vector<16x286xf32>
    %341 = arith.addf %336, %340 : vector<16x286xf32>
    %342 = vector.extract_strided_slice %332 {offsets = [2, 0], sizes = [16, 286], strides = [1, 1]} : vector<18x286xf32> to vector<16x286xf32>
    %c74 = arith.constant 74 : index
    %343 = memref.load %arg6[%c74] : memref<108xf32, #tpu.memory_space<smem>>
    %344 = vector.broadcast %343 : f32 to vector<16x286xf32>
    %345 = arith.mulf %342, %344 : vector<16x286xf32>
    %346 = arith.addf %341, %345 : vector<16x286xf32>
    %347 = vector.extract_strided_slice %331 {offsets = [0, 1], sizes = [18, 286], strides = [1, 1]} : vector<18x324xf32> to vector<18x286xf32>
    %348 = vector.extract_strided_slice %347 {offsets = [0, 0], sizes = [16, 286], strides = [1, 1]} : vector<18x286xf32> to vector<16x286xf32>
    %c6 = arith.constant 6 : index
    %349 = memref.load %arg6[%c6] : memref<108xf32, #tpu.memory_space<smem>>
    %350 = vector.broadcast %349 : f32 to vector<16x286xf32>
    %351 = arith.mulf %348, %350 : vector<16x286xf32>
    %352 = arith.addf %346, %351 : vector<16x286xf32>
    %353 = vector.extract_strided_slice %347 {offsets = [1, 0], sizes = [16, 286], strides = [1, 1]} : vector<18x286xf32> to vector<16x286xf32>
    %c42 = arith.constant 42 : index
    %354 = memref.load %arg6[%c42] : memref<108xf32, #tpu.memory_space<smem>>
    %355 = vector.broadcast %354 : f32 to vector<16x286xf32>
    %356 = arith.mulf %353, %355 : vector<16x286xf32>
    %357 = arith.addf %352, %356 : vector<16x286xf32>
    %358 = vector.extract_strided_slice %347 {offsets = [2, 0], sizes = [16, 286], strides = [1, 1]} : vector<18x286xf32> to vector<16x286xf32>
    %c78 = arith.constant 78 : index
    %359 = memref.load %arg6[%c78] : memref<108xf32, #tpu.memory_space<smem>>
    %360 = vector.broadcast %359 : f32 to vector<16x286xf32>
    %361 = arith.mulf %358, %360 : vector<16x286xf32>
    %362 = arith.addf %357, %361 : vector<16x286xf32>
    %363 = vector.extract_strided_slice %331 {offsets = [0, 2], sizes = [18, 286], strides = [1, 1]} : vector<18x324xf32> to vector<18x286xf32>
    %364 = vector.extract_strided_slice %363 {offsets = [0, 0], sizes = [16, 286], strides = [1, 1]} : vector<18x286xf32> to vector<16x286xf32>
    %c10 = arith.constant 10 : index
    %365 = memref.load %arg6[%c10] : memref<108xf32, #tpu.memory_space<smem>>
    %366 = vector.broadcast %365 : f32 to vector<16x286xf32>
    %367 = arith.mulf %364, %366 : vector<16x286xf32>
    %368 = arith.addf %362, %367 : vector<16x286xf32>
    %369 = vector.extract_strided_slice %363 {offsets = [1, 0], sizes = [16, 286], strides = [1, 1]} : vector<18x286xf32> to vector<16x286xf32>
    %c46 = arith.constant 46 : index
    %370 = memref.load %arg6[%c46] : memref<108xf32, #tpu.memory_space<smem>>
    %371 = vector.broadcast %370 : f32 to vector<16x286xf32>
    %372 = arith.mulf %369, %371 : vector<16x286xf32>
    %373 = arith.addf %368, %372 : vector<16x286xf32>
    %374 = vector.extract_strided_slice %363 {offsets = [2, 0], sizes = [16, 286], strides = [1, 1]} : vector<18x286xf32> to vector<16x286xf32>
    %c82 = arith.constant 82 : index
    %375 = memref.load %arg6[%c82] : memref<108xf32, #tpu.memory_space<smem>>
    %376 = vector.broadcast %375 : f32 to vector<16x286xf32>
    %377 = arith.mulf %374, %376 : vector<16x286xf32>
    %378 = arith.addf %373, %377 : vector<16x286xf32>
    %379 = vector.extract_strided_slice %331 {offsets = [0, 18], sizes = [18, 286], strides = [1, 1]} : vector<18x324xf32> to vector<18x286xf32>
    %380 = vector.extract_strided_slice %379 {offsets = [0, 0], sizes = [16, 286], strides = [1, 1]} : vector<18x286xf32> to vector<16x286xf32>
    %c14 = arith.constant 14 : index
    %381 = memref.load %arg6[%c14] : memref<108xf32, #tpu.memory_space<smem>>
    %382 = vector.broadcast %381 : f32 to vector<16x286xf32>
    %383 = arith.mulf %380, %382 : vector<16x286xf32>
    %384 = arith.addf %378, %383 : vector<16x286xf32>
    %385 = vector.extract_strided_slice %379 {offsets = [1, 0], sizes = [16, 286], strides = [1, 1]} : vector<18x286xf32> to vector<16x286xf32>
    %c50 = arith.constant 50 : index
    %386 = memref.load %arg6[%c50] : memref<108xf32, #tpu.memory_space<smem>>
    %387 = vector.broadcast %386 : f32 to vector<16x286xf32>
    %388 = arith.mulf %385, %387 : vector<16x286xf32>
    %389 = arith.addf %384, %388 : vector<16x286xf32>
    %390 = vector.extract_strided_slice %379 {offsets = [2, 0], sizes = [16, 286], strides = [1, 1]} : vector<18x286xf32> to vector<16x286xf32>
    %c86 = arith.constant 86 : index
    %391 = memref.load %arg6[%c86] : memref<108xf32, #tpu.memory_space<smem>>
    %392 = vector.broadcast %391 : f32 to vector<16x286xf32>
    %393 = arith.mulf %390, %392 : vector<16x286xf32>
    %394 = arith.addf %389, %393 : vector<16x286xf32>
    %395 = vector.extract_strided_slice %331 {offsets = [0, 19], sizes = [18, 286], strides = [1, 1]} : vector<18x324xf32> to vector<18x286xf32>
    %396 = vector.extract_strided_slice %395 {offsets = [0, 0], sizes = [16, 286], strides = [1, 1]} : vector<18x286xf32> to vector<16x286xf32>
    %c18 = arith.constant 18 : index
    %397 = memref.load %arg6[%c18] : memref<108xf32, #tpu.memory_space<smem>>
    %398 = vector.broadcast %397 : f32 to vector<16x286xf32>
    %399 = arith.mulf %396, %398 : vector<16x286xf32>
    %400 = arith.addf %394, %399 : vector<16x286xf32>
    %401 = vector.extract_strided_slice %395 {offsets = [1, 0], sizes = [16, 286], strides = [1, 1]} : vector<18x286xf32> to vector<16x286xf32>
    %c54 = arith.constant 54 : index
    %402 = memref.load %arg6[%c54] : memref<108xf32, #tpu.memory_space<smem>>
    %403 = vector.broadcast %402 : f32 to vector<16x286xf32>
    %404 = arith.mulf %401, %403 : vector<16x286xf32>
    %405 = arith.addf %400, %404 : vector<16x286xf32>
    %406 = vector.extract_strided_slice %395 {offsets = [2, 0], sizes = [16, 286], strides = [1, 1]} : vector<18x286xf32> to vector<16x286xf32>
    %c90 = arith.constant 90 : index
    %407 = memref.load %arg6[%c90] : memref<108xf32, #tpu.memory_space<smem>>
    %408 = vector.broadcast %407 : f32 to vector<16x286xf32>
    %409 = arith.mulf %406, %408 : vector<16x286xf32>
    %410 = arith.addf %405, %409 : vector<16x286xf32>
    %411 = vector.extract_strided_slice %331 {offsets = [0, 20], sizes = [18, 286], strides = [1, 1]} : vector<18x324xf32> to vector<18x286xf32>
    %412 = vector.extract_strided_slice %411 {offsets = [0, 0], sizes = [16, 286], strides = [1, 1]} : vector<18x286xf32> to vector<16x286xf32>
    %c22 = arith.constant 22 : index
    %413 = memref.load %arg6[%c22] : memref<108xf32, #tpu.memory_space<smem>>
    %414 = vector.broadcast %413 : f32 to vector<16x286xf32>
    %415 = arith.mulf %412, %414 : vector<16x286xf32>
    %416 = arith.addf %410, %415 : vector<16x286xf32>
    %417 = vector.extract_strided_slice %411 {offsets = [1, 0], sizes = [16, 286], strides = [1, 1]} : vector<18x286xf32> to vector<16x286xf32>
    %c58 = arith.constant 58 : index
    %418 = memref.load %arg6[%c58] : memref<108xf32, #tpu.memory_space<smem>>
    %419 = vector.broadcast %418 : f32 to vector<16x286xf32>
    %420 = arith.mulf %417, %419 : vector<16x286xf32>
    %421 = arith.addf %416, %420 : vector<16x286xf32>
    %422 = vector.extract_strided_slice %411 {offsets = [2, 0], sizes = [16, 286], strides = [1, 1]} : vector<18x286xf32> to vector<16x286xf32>
    %c94 = arith.constant 94 : index
    %423 = memref.load %arg6[%c94] : memref<108xf32, #tpu.memory_space<smem>>
    %424 = vector.broadcast %423 : f32 to vector<16x286xf32>
    %425 = arith.mulf %422, %424 : vector<16x286xf32>
    %426 = arith.addf %421, %425 : vector<16x286xf32>
    %427 = vector.extract_strided_slice %331 {offsets = [0, 36], sizes = [18, 286], strides = [1, 1]} : vector<18x324xf32> to vector<18x286xf32>
    %428 = vector.extract_strided_slice %427 {offsets = [0, 0], sizes = [16, 286], strides = [1, 1]} : vector<18x286xf32> to vector<16x286xf32>
    %c26 = arith.constant 26 : index
    %429 = memref.load %arg6[%c26] : memref<108xf32, #tpu.memory_space<smem>>
    %430 = vector.broadcast %429 : f32 to vector<16x286xf32>
    %431 = arith.mulf %428, %430 : vector<16x286xf32>
    %432 = arith.addf %426, %431 : vector<16x286xf32>
    %433 = vector.extract_strided_slice %427 {offsets = [1, 0], sizes = [16, 286], strides = [1, 1]} : vector<18x286xf32> to vector<16x286xf32>
    %c62 = arith.constant 62 : index
    %434 = memref.load %arg6[%c62] : memref<108xf32, #tpu.memory_space<smem>>
    %435 = vector.broadcast %434 : f32 to vector<16x286xf32>
    %436 = arith.mulf %433, %435 : vector<16x286xf32>
    %437 = arith.addf %432, %436 : vector<16x286xf32>
    %438 = vector.extract_strided_slice %427 {offsets = [2, 0], sizes = [16, 286], strides = [1, 1]} : vector<18x286xf32> to vector<16x286xf32>
    %c98 = arith.constant 98 : index
    %439 = memref.load %arg6[%c98] : memref<108xf32, #tpu.memory_space<smem>>
    %440 = vector.broadcast %439 : f32 to vector<16x286xf32>
    %441 = arith.mulf %438, %440 : vector<16x286xf32>
    %442 = arith.addf %437, %441 : vector<16x286xf32>
    %443 = vector.extract_strided_slice %331 {offsets = [0, 37], sizes = [18, 286], strides = [1, 1]} : vector<18x324xf32> to vector<18x286xf32>
    %444 = vector.extract_strided_slice %443 {offsets = [0, 0], sizes = [16, 286], strides = [1, 1]} : vector<18x286xf32> to vector<16x286xf32>
    %c30 = arith.constant 30 : index
    %445 = memref.load %arg6[%c30] : memref<108xf32, #tpu.memory_space<smem>>
    %446 = vector.broadcast %445 : f32 to vector<16x286xf32>
    %447 = arith.mulf %444, %446 : vector<16x286xf32>
    %448 = arith.addf %442, %447 : vector<16x286xf32>
    %449 = vector.extract_strided_slice %443 {offsets = [1, 0], sizes = [16, 286], strides = [1, 1]} : vector<18x286xf32> to vector<16x286xf32>
    %c66 = arith.constant 66 : index
    %450 = memref.load %arg6[%c66] : memref<108xf32, #tpu.memory_space<smem>>
    %451 = vector.broadcast %450 : f32 to vector<16x286xf32>
    %452 = arith.mulf %449, %451 : vector<16x286xf32>
    %453 = arith.addf %448, %452 : vector<16x286xf32>
    %454 = vector.extract_strided_slice %443 {offsets = [2, 0], sizes = [16, 286], strides = [1, 1]} : vector<18x286xf32> to vector<16x286xf32>
    %c102 = arith.constant 102 : index
    %455 = memref.load %arg6[%c102] : memref<108xf32, #tpu.memory_space<smem>>
    %456 = vector.broadcast %455 : f32 to vector<16x286xf32>
    %457 = arith.mulf %454, %456 : vector<16x286xf32>
    %458 = arith.addf %453, %457 : vector<16x286xf32>
    %459 = vector.extract_strided_slice %331 {offsets = [0, 38], sizes = [18, 286], strides = [1, 1]} : vector<18x324xf32> to vector<18x286xf32>
    %460 = vector.extract_strided_slice %459 {offsets = [0, 0], sizes = [16, 286], strides = [1, 1]} : vector<18x286xf32> to vector<16x286xf32>
    %c34 = arith.constant 34 : index
    %461 = memref.load %arg6[%c34] : memref<108xf32, #tpu.memory_space<smem>>
    %462 = vector.broadcast %461 : f32 to vector<16x286xf32>
    %463 = arith.mulf %460, %462 : vector<16x286xf32>
    %464 = arith.addf %458, %463 : vector<16x286xf32>
    %465 = vector.extract_strided_slice %459 {offsets = [1, 0], sizes = [16, 286], strides = [1, 1]} : vector<18x286xf32> to vector<16x286xf32>
    %c70 = arith.constant 70 : index
    %466 = memref.load %arg6[%c70] : memref<108xf32, #tpu.memory_space<smem>>
    %467 = vector.broadcast %466 : f32 to vector<16x286xf32>
    %468 = arith.mulf %465, %467 : vector<16x286xf32>
    %469 = arith.addf %464, %468 : vector<16x286xf32>
    %470 = vector.extract_strided_slice %459 {offsets = [2, 0], sizes = [16, 286], strides = [1, 1]} : vector<18x286xf32> to vector<16x286xf32>
    %c106 = arith.constant 106 : index
    %471 = memref.load %arg6[%c106] : memref<108xf32, #tpu.memory_space<smem>>
    %472 = vector.broadcast %471 : f32 to vector<16x286xf32>
    %473 = arith.mulf %470, %472 : vector<16x286xf32>
    %474 = arith.addf %469, %473 : vector<16x286xf32>
    %c2_14 = arith.constant 2 : index
    %475 = memref.load %arg7[%c2_14] : memref<4xf32, #tpu.memory_space<smem>>
    %476 = vector.broadcast %475 : f32 to vector<16x286xf32>
    %477 = arith.addf %474, %476 : vector<16x286xf32>
    %478 = vector.extract_strided_slice %477 {offsets = [0, 0], sizes = [16, 16], strides = [1, 1]} : vector<16x286xf32> to vector<16x16xf32>
    %479 = vector.extract_strided_slice %477 {offsets = [0, 18], sizes = [16, 16], strides = [1, 1]} : vector<16x286xf32> to vector<16x16xf32>
    %480 = vector.extract_strided_slice %477 {offsets = [0, 36], sizes = [16, 16], strides = [1, 1]} : vector<16x286xf32> to vector<16x16xf32>
    %481 = vector.extract_strided_slice %477 {offsets = [0, 54], sizes = [16, 16], strides = [1, 1]} : vector<16x286xf32> to vector<16x16xf32>
    %482 = vector.extract_strided_slice %477 {offsets = [0, 72], sizes = [16, 16], strides = [1, 1]} : vector<16x286xf32> to vector<16x16xf32>
    %483 = vector.extract_strided_slice %477 {offsets = [0, 90], sizes = [16, 16], strides = [1, 1]} : vector<16x286xf32> to vector<16x16xf32>
    %484 = vector.extract_strided_slice %477 {offsets = [0, 108], sizes = [16, 16], strides = [1, 1]} : vector<16x286xf32> to vector<16x16xf32>
    %485 = vector.extract_strided_slice %477 {offsets = [0, 126], sizes = [16, 16], strides = [1, 1]} : vector<16x286xf32> to vector<16x16xf32>
    %486 = vector.extract_strided_slice %477 {offsets = [0, 144], sizes = [16, 16], strides = [1, 1]} : vector<16x286xf32> to vector<16x16xf32>
    %487 = vector.extract_strided_slice %477 {offsets = [0, 162], sizes = [16, 16], strides = [1, 1]} : vector<16x286xf32> to vector<16x16xf32>
    %488 = vector.extract_strided_slice %477 {offsets = [0, 180], sizes = [16, 16], strides = [1, 1]} : vector<16x286xf32> to vector<16x16xf32>
    %489 = vector.extract_strided_slice %477 {offsets = [0, 198], sizes = [16, 16], strides = [1, 1]} : vector<16x286xf32> to vector<16x16xf32>
    %490 = vector.extract_strided_slice %477 {offsets = [0, 216], sizes = [16, 16], strides = [1, 1]} : vector<16x286xf32> to vector<16x16xf32>
    %491 = vector.extract_strided_slice %477 {offsets = [0, 234], sizes = [16, 16], strides = [1, 1]} : vector<16x286xf32> to vector<16x16xf32>
    %492 = vector.extract_strided_slice %477 {offsets = [0, 252], sizes = [16, 16], strides = [1, 1]} : vector<16x286xf32> to vector<16x16xf32>
    %493 = vector.extract_strided_slice %477 {offsets = [0, 270], sizes = [16, 16], strides = [1, 1]} : vector<16x286xf32> to vector<16x16xf32>
    %494 = tpu.concatenate %478, %479, %480, %481, %482, %483, %484, %485, %486, %487, %488, %489, %490, %491, %492, %493 in 1 : vector<16x16xf32>, vector<16x16xf32>, vector<16x16xf32>, vector<16x16xf32>, vector<16x16xf32>, vector<16x16xf32>, vector<16x16xf32>, vector<16x16xf32>, vector<16x16xf32>, vector<16x16xf32>, vector<16x16xf32>, vector<16x16xf32>, vector<16x16xf32>, vector<16x16xf32>, vector<16x16xf32>, vector<16x16xf32> -> vector<16x256xf32>
    %c0_15 = arith.constant 0 : index
    %c3 = arith.constant 3 : index
    %c0_16 = arith.constant 0 : index
    %c0_17 = arith.constant 0 : index
    %495 = vector.load %arg1[%c0_15, %c3, %c0_16, %c0_17] : memref<1x4x18x324xf32, #tpu.memory_space<vmem>>, vector<1x1x18x324xf32>
    %496 = vector.shape_cast %495 : vector<1x1x18x324xf32> to vector<18x324xf32>
    %497 = vector.extract_strided_slice %496 {offsets = [0, 0], sizes = [18, 286], strides = [1, 1]} : vector<18x324xf32> to vector<18x286xf32>
    %498 = vector.extract_strided_slice %497 {offsets = [0, 0], sizes = [16, 286], strides = [1, 1]} : vector<18x286xf32> to vector<16x286xf32>
    %c3_18 = arith.constant 3 : index
    %499 = memref.load %arg6[%c3_18] : memref<108xf32, #tpu.memory_space<smem>>
    %500 = vector.broadcast %499 : f32 to vector<16x286xf32>
    %501 = arith.mulf %498, %500 : vector<16x286xf32>
    %502 = vector.extract_strided_slice %497 {offsets = [1, 0], sizes = [16, 286], strides = [1, 1]} : vector<18x286xf32> to vector<16x286xf32>
    %c39 = arith.constant 39 : index
    %503 = memref.load %arg6[%c39] : memref<108xf32, #tpu.memory_space<smem>>
    %504 = vector.broadcast %503 : f32 to vector<16x286xf32>
    %505 = arith.mulf %502, %504 : vector<16x286xf32>
    %506 = arith.addf %501, %505 : vector<16x286xf32>
    %507 = vector.extract_strided_slice %497 {offsets = [2, 0], sizes = [16, 286], strides = [1, 1]} : vector<18x286xf32> to vector<16x286xf32>
    %c75 = arith.constant 75 : index
    %508 = memref.load %arg6[%c75] : memref<108xf32, #tpu.memory_space<smem>>
    %509 = vector.broadcast %508 : f32 to vector<16x286xf32>
    %510 = arith.mulf %507, %509 : vector<16x286xf32>
    %511 = arith.addf %506, %510 : vector<16x286xf32>
    %512 = vector.extract_strided_slice %496 {offsets = [0, 1], sizes = [18, 286], strides = [1, 1]} : vector<18x324xf32> to vector<18x286xf32>
    %513 = vector.extract_strided_slice %512 {offsets = [0, 0], sizes = [16, 286], strides = [1, 1]} : vector<18x286xf32> to vector<16x286xf32>
    %c7 = arith.constant 7 : index
    %514 = memref.load %arg6[%c7] : memref<108xf32, #tpu.memory_space<smem>>
    %515 = vector.broadcast %514 : f32 to vector<16x286xf32>
    %516 = arith.mulf %513, %515 : vector<16x286xf32>
    %517 = arith.addf %511, %516 : vector<16x286xf32>
    %518 = vector.extract_strided_slice %512 {offsets = [1, 0], sizes = [16, 286], strides = [1, 1]} : vector<18x286xf32> to vector<16x286xf32>
    %c43 = arith.constant 43 : index
    %519 = memref.load %arg6[%c43] : memref<108xf32, #tpu.memory_space<smem>>
    %520 = vector.broadcast %519 : f32 to vector<16x286xf32>
    %521 = arith.mulf %518, %520 : vector<16x286xf32>
    %522 = arith.addf %517, %521 : vector<16x286xf32>
    %523 = vector.extract_strided_slice %512 {offsets = [2, 0], sizes = [16, 286], strides = [1, 1]} : vector<18x286xf32> to vector<16x286xf32>
    %c79 = arith.constant 79 : index
    %524 = memref.load %arg6[%c79] : memref<108xf32, #tpu.memory_space<smem>>
    %525 = vector.broadcast %524 : f32 to vector<16x286xf32>
    %526 = arith.mulf %523, %525 : vector<16x286xf32>
    %527 = arith.addf %522, %526 : vector<16x286xf32>
    %528 = vector.extract_strided_slice %496 {offsets = [0, 2], sizes = [18, 286], strides = [1, 1]} : vector<18x324xf32> to vector<18x286xf32>
    %529 = vector.extract_strided_slice %528 {offsets = [0, 0], sizes = [16, 286], strides = [1, 1]} : vector<18x286xf32> to vector<16x286xf32>
    %c11 = arith.constant 11 : index
    %530 = memref.load %arg6[%c11] : memref<108xf32, #tpu.memory_space<smem>>
    %531 = vector.broadcast %530 : f32 to vector<16x286xf32>
    %532 = arith.mulf %529, %531 : vector<16x286xf32>
    %533 = arith.addf %527, %532 : vector<16x286xf32>
    %534 = vector.extract_strided_slice %528 {offsets = [1, 0], sizes = [16, 286], strides = [1, 1]} : vector<18x286xf32> to vector<16x286xf32>
    %c47 = arith.constant 47 : index
    %535 = memref.load %arg6[%c47] : memref<108xf32, #tpu.memory_space<smem>>
    %536 = vector.broadcast %535 : f32 to vector<16x286xf32>
    %537 = arith.mulf %534, %536 : vector<16x286xf32>
    %538 = arith.addf %533, %537 : vector<16x286xf32>
    %539 = vector.extract_strided_slice %528 {offsets = [2, 0], sizes = [16, 286], strides = [1, 1]} : vector<18x286xf32> to vector<16x286xf32>
    %c83 = arith.constant 83 : index
    %540 = memref.load %arg6[%c83] : memref<108xf32, #tpu.memory_space<smem>>
    %541 = vector.broadcast %540 : f32 to vector<16x286xf32>
    %542 = arith.mulf %539, %541 : vector<16x286xf32>
    %543 = arith.addf %538, %542 : vector<16x286xf32>
    %544 = vector.extract_strided_slice %496 {offsets = [0, 18], sizes = [18, 286], strides = [1, 1]} : vector<18x324xf32> to vector<18x286xf32>
    %545 = vector.extract_strided_slice %544 {offsets = [0, 0], sizes = [16, 286], strides = [1, 1]} : vector<18x286xf32> to vector<16x286xf32>
    %c15 = arith.constant 15 : index
    %546 = memref.load %arg6[%c15] : memref<108xf32, #tpu.memory_space<smem>>
    %547 = vector.broadcast %546 : f32 to vector<16x286xf32>
    %548 = arith.mulf %545, %547 : vector<16x286xf32>
    %549 = arith.addf %543, %548 : vector<16x286xf32>
    %550 = vector.extract_strided_slice %544 {offsets = [1, 0], sizes = [16, 286], strides = [1, 1]} : vector<18x286xf32> to vector<16x286xf32>
    %c51 = arith.constant 51 : index
    %551 = memref.load %arg6[%c51] : memref<108xf32, #tpu.memory_space<smem>>
    %552 = vector.broadcast %551 : f32 to vector<16x286xf32>
    %553 = arith.mulf %550, %552 : vector<16x286xf32>
    %554 = arith.addf %549, %553 : vector<16x286xf32>
    %555 = vector.extract_strided_slice %544 {offsets = [2, 0], sizes = [16, 286], strides = [1, 1]} : vector<18x286xf32> to vector<16x286xf32>
    %c87 = arith.constant 87 : index
    %556 = memref.load %arg6[%c87] : memref<108xf32, #tpu.memory_space<smem>>
    %557 = vector.broadcast %556 : f32 to vector<16x286xf32>
    %558 = arith.mulf %555, %557 : vector<16x286xf32>
    %559 = arith.addf %554, %558 : vector<16x286xf32>
    %560 = vector.extract_strided_slice %496 {offsets = [0, 19], sizes = [18, 286], strides = [1, 1]} : vector<18x324xf32> to vector<18x286xf32>
    %561 = vector.extract_strided_slice %560 {offsets = [0, 0], sizes = [16, 286], strides = [1, 1]} : vector<18x286xf32> to vector<16x286xf32>
    %c19 = arith.constant 19 : index
    %562 = memref.load %arg6[%c19] : memref<108xf32, #tpu.memory_space<smem>>
    %563 = vector.broadcast %562 : f32 to vector<16x286xf32>
    %564 = arith.mulf %561, %563 : vector<16x286xf32>
    %565 = arith.addf %559, %564 : vector<16x286xf32>
    %566 = vector.extract_strided_slice %560 {offsets = [1, 0], sizes = [16, 286], strides = [1, 1]} : vector<18x286xf32> to vector<16x286xf32>
    %c55 = arith.constant 55 : index
    %567 = memref.load %arg6[%c55] : memref<108xf32, #tpu.memory_space<smem>>
    %568 = vector.broadcast %567 : f32 to vector<16x286xf32>
    %569 = arith.mulf %566, %568 : vector<16x286xf32>
    %570 = arith.addf %565, %569 : vector<16x286xf32>
    %571 = vector.extract_strided_slice %560 {offsets = [2, 0], sizes = [16, 286], strides = [1, 1]} : vector<18x286xf32> to vector<16x286xf32>
    %c91 = arith.constant 91 : index
    %572 = memref.load %arg6[%c91] : memref<108xf32, #tpu.memory_space<smem>>
    %573 = vector.broadcast %572 : f32 to vector<16x286xf32>
    %574 = arith.mulf %571, %573 : vector<16x286xf32>
    %575 = arith.addf %570, %574 : vector<16x286xf32>
    %576 = vector.extract_strided_slice %496 {offsets = [0, 20], sizes = [18, 286], strides = [1, 1]} : vector<18x324xf32> to vector<18x286xf32>
    %577 = vector.extract_strided_slice %576 {offsets = [0, 0], sizes = [16, 286], strides = [1, 1]} : vector<18x286xf32> to vector<16x286xf32>
    %c23 = arith.constant 23 : index
    %578 = memref.load %arg6[%c23] : memref<108xf32, #tpu.memory_space<smem>>
    %579 = vector.broadcast %578 : f32 to vector<16x286xf32>
    %580 = arith.mulf %577, %579 : vector<16x286xf32>
    %581 = arith.addf %575, %580 : vector<16x286xf32>
    %582 = vector.extract_strided_slice %576 {offsets = [1, 0], sizes = [16, 286], strides = [1, 1]} : vector<18x286xf32> to vector<16x286xf32>
    %c59 = arith.constant 59 : index
    %583 = memref.load %arg6[%c59] : memref<108xf32, #tpu.memory_space<smem>>
    %584 = vector.broadcast %583 : f32 to vector<16x286xf32>
    %585 = arith.mulf %582, %584 : vector<16x286xf32>
    %586 = arith.addf %581, %585 : vector<16x286xf32>
    %587 = vector.extract_strided_slice %576 {offsets = [2, 0], sizes = [16, 286], strides = [1, 1]} : vector<18x286xf32> to vector<16x286xf32>
    %c95 = arith.constant 95 : index
    %588 = memref.load %arg6[%c95] : memref<108xf32, #tpu.memory_space<smem>>
    %589 = vector.broadcast %588 : f32 to vector<16x286xf32>
    %590 = arith.mulf %587, %589 : vector<16x286xf32>
    %591 = arith.addf %586, %590 : vector<16x286xf32>
    %592 = vector.extract_strided_slice %496 {offsets = [0, 36], sizes = [18, 286], strides = [1, 1]} : vector<18x324xf32> to vector<18x286xf32>
    %593 = vector.extract_strided_slice %592 {offsets = [0, 0], sizes = [16, 286], strides = [1, 1]} : vector<18x286xf32> to vector<16x286xf32>
    %c27 = arith.constant 27 : index
    %594 = memref.load %arg6[%c27] : memref<108xf32, #tpu.memory_space<smem>>
    %595 = vector.broadcast %594 : f32 to vector<16x286xf32>
    %596 = arith.mulf %593, %595 : vector<16x286xf32>
    %597 = arith.addf %591, %596 : vector<16x286xf32>
    %598 = vector.extract_strided_slice %592 {offsets = [1, 0], sizes = [16, 286], strides = [1, 1]} : vector<18x286xf32> to vector<16x286xf32>
    %c63 = arith.constant 63 : index
    %599 = memref.load %arg6[%c63] : memref<108xf32, #tpu.memory_space<smem>>
    %600 = vector.broadcast %599 : f32 to vector<16x286xf32>
    %601 = arith.mulf %598, %600 : vector<16x286xf32>
    %602 = arith.addf %597, %601 : vector<16x286xf32>
    %603 = vector.extract_strided_slice %592 {offsets = [2, 0], sizes = [16, 286], strides = [1, 1]} : vector<18x286xf32> to vector<16x286xf32>
    %c99 = arith.constant 99 : index
    %604 = memref.load %arg6[%c99] : memref<108xf32, #tpu.memory_space<smem>>
    %605 = vector.broadcast %604 : f32 to vector<16x286xf32>
    %606 = arith.mulf %603, %605 : vector<16x286xf32>
    %607 = arith.addf %602, %606 : vector<16x286xf32>
    %608 = vector.extract_strided_slice %496 {offsets = [0, 37], sizes = [18, 286], strides = [1, 1]} : vector<18x324xf32> to vector<18x286xf32>
    %609 = vector.extract_strided_slice %608 {offsets = [0, 0], sizes = [16, 286], strides = [1, 1]} : vector<18x286xf32> to vector<16x286xf32>
    %c31 = arith.constant 31 : index
    %610 = memref.load %arg6[%c31] : memref<108xf32, #tpu.memory_space<smem>>
    %611 = vector.broadcast %610 : f32 to vector<16x286xf32>
    %612 = arith.mulf %609, %611 : vector<16x286xf32>
    %613 = arith.addf %607, %612 : vector<16x286xf32>
    %614 = vector.extract_strided_slice %608 {offsets = [1, 0], sizes = [16, 286], strides = [1, 1]} : vector<18x286xf32> to vector<16x286xf32>
    %c67 = arith.constant 67 : index
    %615 = memref.load %arg6[%c67] : memref<108xf32, #tpu.memory_space<smem>>
    %616 = vector.broadcast %615 : f32 to vector<16x286xf32>
    %617 = arith.mulf %614, %616 : vector<16x286xf32>
    %618 = arith.addf %613, %617 : vector<16x286xf32>
    %619 = vector.extract_strided_slice %608 {offsets = [2, 0], sizes = [16, 286], strides = [1, 1]} : vector<18x286xf32> to vector<16x286xf32>
    %c103 = arith.constant 103 : index
    %620 = memref.load %arg6[%c103] : memref<108xf32, #tpu.memory_space<smem>>
    %621 = vector.broadcast %620 : f32 to vector<16x286xf32>
    %622 = arith.mulf %619, %621 : vector<16x286xf32>
    %623 = arith.addf %618, %622 : vector<16x286xf32>
    %624 = vector.extract_strided_slice %496 {offsets = [0, 38], sizes = [18, 286], strides = [1, 1]} : vector<18x324xf32> to vector<18x286xf32>
    %625 = vector.extract_strided_slice %624 {offsets = [0, 0], sizes = [16, 286], strides = [1, 1]} : vector<18x286xf32> to vector<16x286xf32>
    %c35 = arith.constant 35 : index
    %626 = memref.load %arg6[%c35] : memref<108xf32, #tpu.memory_space<smem>>
    %627 = vector.broadcast %626 : f32 to vector<16x286xf32>
    %628 = arith.mulf %625, %627 : vector<16x286xf32>
    %629 = arith.addf %623, %628 : vector<16x286xf32>
    %630 = vector.extract_strided_slice %624 {offsets = [1, 0], sizes = [16, 286], strides = [1, 1]} : vector<18x286xf32> to vector<16x286xf32>
    %c71 = arith.constant 71 : index
    %631 = memref.load %arg6[%c71] : memref<108xf32, #tpu.memory_space<smem>>
    %632 = vector.broadcast %631 : f32 to vector<16x286xf32>
    %633 = arith.mulf %630, %632 : vector<16x286xf32>
    %634 = arith.addf %629, %633 : vector<16x286xf32>
    %635 = vector.extract_strided_slice %624 {offsets = [2, 0], sizes = [16, 286], strides = [1, 1]} : vector<18x286xf32> to vector<16x286xf32>
    %c107 = arith.constant 107 : index
    %636 = memref.load %arg6[%c107] : memref<108xf32, #tpu.memory_space<smem>>
    %637 = vector.broadcast %636 : f32 to vector<16x286xf32>
    %638 = arith.mulf %635, %637 : vector<16x286xf32>
    %639 = arith.addf %634, %638 : vector<16x286xf32>
    %c3_19 = arith.constant 3 : index
    %640 = memref.load %arg7[%c3_19] : memref<4xf32, #tpu.memory_space<smem>>
    %641 = vector.broadcast %640 : f32 to vector<16x286xf32>
    %642 = arith.addf %639, %641 : vector<16x286xf32>
    %643 = vector.extract_strided_slice %642 {offsets = [0, 0], sizes = [16, 16], strides = [1, 1]} : vector<16x286xf32> to vector<16x16xf32>
    %644 = vector.extract_strided_slice %642 {offsets = [0, 18], sizes = [16, 16], strides = [1, 1]} : vector<16x286xf32> to vector<16x16xf32>
    %645 = vector.extract_strided_slice %642 {offsets = [0, 36], sizes = [16, 16], strides = [1, 1]} : vector<16x286xf32> to vector<16x16xf32>
    %646 = vector.extract_strided_slice %642 {offsets = [0, 54], sizes = [16, 16], strides = [1, 1]} : vector<16x286xf32> to vector<16x16xf32>
    %647 = vector.extract_strided_slice %642 {offsets = [0, 72], sizes = [16, 16], strides = [1, 1]} : vector<16x286xf32> to vector<16x16xf32>
    %648 = vector.extract_strided_slice %642 {offsets = [0, 90], sizes = [16, 16], strides = [1, 1]} : vector<16x286xf32> to vector<16x16xf32>
    %649 = vector.extract_strided_slice %642 {offsets = [0, 108], sizes = [16, 16], strides = [1, 1]} : vector<16x286xf32> to vector<16x16xf32>
    %650 = vector.extract_strided_slice %642 {offsets = [0, 126], sizes = [16, 16], strides = [1, 1]} : vector<16x286xf32> to vector<16x16xf32>
    %651 = vector.extract_strided_slice %642 {offsets = [0, 144], sizes = [16, 16], strides = [1, 1]} : vector<16x286xf32> to vector<16x16xf32>
    %652 = vector.extract_strided_slice %642 {offsets = [0, 162], sizes = [16, 16], strides = [1, 1]} : vector<16x286xf32> to vector<16x16xf32>
    %653 = vector.extract_strided_slice %642 {offsets = [0, 180], sizes = [16, 16], strides = [1, 1]} : vector<16x286xf32> to vector<16x16xf32>
    %654 = vector.extract_strided_slice %642 {offsets = [0, 198], sizes = [16, 16], strides = [1, 1]} : vector<16x286xf32> to vector<16x16xf32>
    %655 = vector.extract_strided_slice %642 {offsets = [0, 216], sizes = [16, 16], strides = [1, 1]} : vector<16x286xf32> to vector<16x16xf32>
    %656 = vector.extract_strided_slice %642 {offsets = [0, 234], sizes = [16, 16], strides = [1, 1]} : vector<16x286xf32> to vector<16x16xf32>
    %657 = vector.extract_strided_slice %642 {offsets = [0, 252], sizes = [16, 16], strides = [1, 1]} : vector<16x286xf32> to vector<16x16xf32>
    %658 = vector.extract_strided_slice %642 {offsets = [0, 270], sizes = [16, 16], strides = [1, 1]} : vector<16x286xf32> to vector<16x16xf32>
    %659 = tpu.concatenate %643, %644, %645, %646, %647, %648, %649, %650, %651, %652, %653, %654, %655, %656, %657, %658 in 1 : vector<16x16xf32>, vector<16x16xf32>, vector<16x16xf32>, vector<16x16xf32>, vector<16x16xf32>, vector<16x16xf32>, vector<16x16xf32>, vector<16x16xf32>, vector<16x16xf32>, vector<16x16xf32>, vector<16x16xf32>, vector<16x16xf32>, vector<16x16xf32>, vector<16x16xf32>, vector<16x16xf32>, vector<16x16xf32> -> vector<16x256xf32>
    %660 = vector.shape_cast %164 : vector<16x256xf32> to vector<1x16x256xf32>
    %661 = vector.shape_cast %329 : vector<16x256xf32> to vector<1x16x256xf32>
    %662 = vector.shape_cast %494 : vector<16x256xf32> to vector<1x16x256xf32>
    %663 = vector.shape_cast %659 : vector<16x256xf32> to vector<1x16x256xf32>
    %664 = tpu.concatenate %660, %661, %662, %663 in 0 : vector<1x16x256xf32>, vector<1x16x256xf32>, vector<1x16x256xf32>, vector<1x16x256xf32> -> vector<4x16x256xf32>
    %665 = vector.shape_cast %664 : vector<4x16x256xf32> to vector<1x4x16x256xf32>
    %cst = arith.constant dense<0.000000e+00> : vector<1xf32>
    %666 = vector.multi_reduction <add>, %665, %cst [1, 2, 3] : vector<1x4x16x256xf32> to vector<1xf32>
    %667 = vector.shape_cast %666 : vector<1xf32> to vector<1x1x1x1xf32>
    %668 = vector.extract %667[0, 0, 0, 0] : f32 from vector<1x1x1x1xf32>
    %cst_20 = arith.constant 6.10351563E-5 : f32
    %669 = arith.mulf %668, %cst_20 : f32
    %670 = arith.mulf %664, %664 : vector<4x16x256xf32>
    %671 = vector.shape_cast %670 : vector<4x16x256xf32> to vector<1x4x16x256xf32>
    %cst_21 = arith.constant dense<0.000000e+00> : vector<1xf32>
    %672 = vector.multi_reduction <add>, %671, %cst_21 [1, 2, 3] : vector<1x4x16x256xf32> to vector<1xf32>
    %673 = vector.shape_cast %672 : vector<1xf32> to vector<1x1x1x1xf32>
    %674 = vector.extract %673[0, 0, 0, 0] : f32 from vector<1x1x1x1xf32>
    %cst_22 = arith.constant 6.10351563E-5 : f32
    %675 = arith.mulf %674, %cst_22 : f32
    %676 = arith.mulf %669, %669 : f32
    %677 = arith.subf %675, %676 : f32
    %678 = vector.broadcast %669 : f32 to vector<4x16x256xf32>
    %679 = arith.subf %664, %678 : vector<4x16x256xf32>
    %cst_23 = arith.constant 9.99999974E-6 : f32
    %680 = arith.addf %677, %cst_23 : f32
    %681 = math.rsqrt %680 : f32
    %682 = vector.broadcast %681 : f32 to vector<4x16x256xf32>
    %683 = arith.mulf %679, %682 : vector<4x16x256xf32>
    %c0_24 = arith.constant 0 : index
    %c0_25 = arith.constant 0 : index
    %c0_26 = arith.constant 0 : index
    %684 = vector.load %arg2[%c0_24, %c0_25, %c0_26] : memref<4x16x256xf32, #tpu.memory_space<vmem>>, vector<4x16x256xf32>
    %685 = arith.mulf %683, %684 : vector<4x16x256xf32>
    %c0_27 = arith.constant 0 : index
    %c0_28 = arith.constant 0 : index
    %c0_29 = arith.constant 0 : index
    %686 = vector.load %arg3[%c0_27, %c0_28, %c0_29] : memref<4x16x256xf32, #tpu.memory_space<vmem>>, vector<4x16x256xf32>
    %687 = arith.addf %685, %686 : vector<4x16x256xf32>
    %cst_30 = arith.constant 5.000000e-01 : f32
    %688 = vector.broadcast %cst_30 : f32 to vector<4x16x256xf32>
    %689 = arith.mulf %688, %687 : vector<4x16x256xf32>
    %cst_31 = arith.constant 0.707106769 : f32
    %690 = vector.broadcast %cst_31 : f32 to vector<4x16x256xf32>
    %691 = arith.mulf %687, %690 : vector<4x16x256xf32>
    %692 = math.absf %691 : vector<4x16x256xf32>
    %cst_32 = arith.constant 0.327591091 : f32
    %693 = vector.broadcast %cst_32 : f32 to vector<4x16x256xf32>
    %694 = arith.mulf %693, %692 : vector<4x16x256xf32>
    %cst_33 = arith.constant 1.000000e+00 : f32
    %695 = vector.broadcast %cst_33 : f32 to vector<4x16x256xf32>
    %696 = arith.addf %695, %694 : vector<4x16x256xf32>
    %cst_34 = arith.constant 1.000000e+00 : f32
    %697 = vector.broadcast %cst_34 : f32 to vector<4x16x256xf32>
    %698 = arith.divf %697, %696 : vector<4x16x256xf32>
    %cst_35 = arith.constant 1.06140542 : f32
    %699 = vector.broadcast %cst_35 : f32 to vector<4x16x256xf32>
    %700 = arith.mulf %699, %698 : vector<4x16x256xf32>
    %cst_36 = arith.constant -1.45315206 : f32
    %701 = vector.broadcast %cst_36 : f32 to vector<4x16x256xf32>
    %702 = arith.addf %700, %701 : vector<4x16x256xf32>
    %703 = arith.mulf %702, %698 : vector<4x16x256xf32>
    %cst_37 = arith.constant 1.42141378 : f32
    %704 = vector.broadcast %cst_37 : f32 to vector<4x16x256xf32>
    %705 = arith.addf %703, %704 : vector<4x16x256xf32>
    %706 = arith.mulf %705, %698 : vector<4x16x256xf32>
    %cst_38 = arith.constant -0.284496725 : f32
    %707 = vector.broadcast %cst_38 : f32 to vector<4x16x256xf32>
    %708 = arith.addf %706, %707 : vector<4x16x256xf32>
    %709 = arith.mulf %708, %698 : vector<4x16x256xf32>
    %cst_39 = arith.constant 0.254829586 : f32
    %710 = vector.broadcast %cst_39 : f32 to vector<4x16x256xf32>
    %711 = arith.addf %709, %710 : vector<4x16x256xf32>
    %712 = arith.mulf %711, %698 : vector<4x16x256xf32>
    %713 = arith.mulf %692, %692 : vector<4x16x256xf32>
    %cst_40 = arith.constant 0.000000e+00 : f32
    %714 = vector.broadcast %cst_40 : f32 to vector<4x16x256xf32>
    %715 = arith.subf %714, %713 : vector<4x16x256xf32>
    %716 = math.exp %715 : vector<4x16x256xf32>
    %717 = arith.mulf %712, %716 : vector<4x16x256xf32>
    %cst_41 = arith.constant 1.000000e+00 : f32
    %718 = vector.broadcast %cst_41 : f32 to vector<4x16x256xf32>
    %719 = arith.subf %718, %717 : vector<4x16x256xf32>
    %cst_42 = arith.constant 0.000000e+00 : f32
    %720 = vector.broadcast %cst_42 : f32 to vector<4x16x256xf32>
    %721 = arith.cmpf oge, %691, %720 : vector<4x16x256xf32>
    %cst_43 = arith.constant 0.000000e+00 : f32
    %722 = vector.broadcast %cst_43 : f32 to vector<4x16x256xf32>
    %723 = arith.subf %722, %719 : vector<4x16x256xf32>
    %724 = arith.select %721, %719, %723 : vector<4x16x256xi1>, vector<4x16x256xf32>
    %cst_44 = arith.constant 1.000000e+00 : f32
    %725 = vector.broadcast %cst_44 : f32 to vector<4x16x256xf32>
    %726 = arith.addf %725, %724 : vector<4x16x256xf32>
    %727 = arith.mulf %689, %726 : vector<4x16x256xf32>
    %728 = vector.extract_strided_slice %727 {offsets = [0, 0, 0], sizes = [1, 16, 256], strides = [1, 1, 1]} : vector<4x16x256xf32> to vector<1x16x256xf32>
    %729 = vector.shape_cast %728 : vector<1x16x256xf32> to vector<16x256xf32>
    %c0_45 = arith.constant 0 : index
    %730 = memref.load %arg8[%c0_45] : memref<32xf32, #tpu.memory_space<smem>>
    %731 = vector.broadcast %730 : f32 to vector<16x256xf32>
    %732 = arith.mulf %729, %731 : vector<16x256xf32>
    %733 = vector.extract_strided_slice %727 {offsets = [1, 0, 0], sizes = [1, 16, 256], strides = [1, 1, 1]} : vector<4x16x256xf32> to vector<1x16x256xf32>
    %734 = vector.shape_cast %733 : vector<1x16x256xf32> to vector<16x256xf32>
    %c1_46 = arith.constant 1 : index
    %735 = memref.load %arg8[%c1_46] : memref<32xf32, #tpu.memory_space<smem>>
    %736 = vector.broadcast %735 : f32 to vector<16x256xf32>
    %737 = arith.mulf %734, %736 : vector<16x256xf32>
    %738 = arith.addf %732, %737 : vector<16x256xf32>
    %739 = vector.extract_strided_slice %727 {offsets = [2, 0, 0], sizes = [1, 16, 256], strides = [1, 1, 1]} : vector<4x16x256xf32> to vector<1x16x256xf32>
    %740 = vector.shape_cast %739 : vector<1x16x256xf32> to vector<16x256xf32>
    %c2_47 = arith.constant 2 : index
    %741 = memref.load %arg8[%c2_47] : memref<32xf32, #tpu.memory_space<smem>>
    %742 = vector.broadcast %741 : f32 to vector<16x256xf32>
    %743 = arith.mulf %740, %742 : vector<16x256xf32>
    %744 = arith.addf %738, %743 : vector<16x256xf32>
    %745 = vector.extract_strided_slice %727 {offsets = [3, 0, 0], sizes = [1, 16, 256], strides = [1, 1, 1]} : vector<4x16x256xf32> to vector<1x16x256xf32>
    %746 = vector.shape_cast %745 : vector<1x16x256xf32> to vector<16x256xf32>
    %c3_48 = arith.constant 3 : index
    %747 = memref.load %arg8[%c3_48] : memref<32xf32, #tpu.memory_space<smem>>
    %748 = vector.broadcast %747 : f32 to vector<16x256xf32>
    %749 = arith.mulf %746, %748 : vector<16x256xf32>
    %750 = arith.addf %744, %749 : vector<16x256xf32>
    %c0_49 = arith.constant 0 : index
    %751 = memref.load %arg9[%c0_49] : memref<8xf32, #tpu.memory_space<smem>>
    %752 = vector.broadcast %751 : f32 to vector<16x256xf32>
    %753 = arith.addf %750, %752 : vector<16x256xf32>
    %754 = vector.extract_strided_slice %727 {offsets = [0, 0, 0], sizes = [1, 16, 256], strides = [1, 1, 1]} : vector<4x16x256xf32> to vector<1x16x256xf32>
    %755 = vector.shape_cast %754 : vector<1x16x256xf32> to vector<16x256xf32>
    %c4_50 = arith.constant 4 : index
    %756 = memref.load %arg8[%c4_50] : memref<32xf32, #tpu.memory_space<smem>>
    %757 = vector.broadcast %756 : f32 to vector<16x256xf32>
    %758 = arith.mulf %755, %757 : vector<16x256xf32>
    %759 = vector.extract_strided_slice %727 {offsets = [1, 0, 0], sizes = [1, 16, 256], strides = [1, 1, 1]} : vector<4x16x256xf32> to vector<1x16x256xf32>
    %760 = vector.shape_cast %759 : vector<1x16x256xf32> to vector<16x256xf32>
    %c5_51 = arith.constant 5 : index
    %761 = memref.load %arg8[%c5_51] : memref<32xf32, #tpu.memory_space<smem>>
    %762 = vector.broadcast %761 : f32 to vector<16x256xf32>
    %763 = arith.mulf %760, %762 : vector<16x256xf32>
    %764 = arith.addf %758, %763 : vector<16x256xf32>
    %765 = vector.extract_strided_slice %727 {offsets = [2, 0, 0], sizes = [1, 16, 256], strides = [1, 1, 1]} : vector<4x16x256xf32> to vector<1x16x256xf32>
    %766 = vector.shape_cast %765 : vector<1x16x256xf32> to vector<16x256xf32>
    %c6_52 = arith.constant 6 : index
    %767 = memref.load %arg8[%c6_52] : memref<32xf32, #tpu.memory_space<smem>>
    %768 = vector.broadcast %767 : f32 to vector<16x256xf32>
    %769 = arith.mulf %766, %768 : vector<16x256xf32>
    %770 = arith.addf %764, %769 : vector<16x256xf32>
    %771 = vector.extract_strided_slice %727 {offsets = [3, 0, 0], sizes = [1, 16, 256], strides = [1, 1, 1]} : vector<4x16x256xf32> to vector<1x16x256xf32>
    %772 = vector.shape_cast %771 : vector<1x16x256xf32> to vector<16x256xf32>
    %c7_53 = arith.constant 7 : index
    %773 = memref.load %arg8[%c7_53] : memref<32xf32, #tpu.memory_space<smem>>
    %774 = vector.broadcast %773 : f32 to vector<16x256xf32>
    %775 = arith.mulf %772, %774 : vector<16x256xf32>
    %776 = arith.addf %770, %775 : vector<16x256xf32>
    %c1_54 = arith.constant 1 : index
    %777 = memref.load %arg9[%c1_54] : memref<8xf32, #tpu.memory_space<smem>>
    %778 = vector.broadcast %777 : f32 to vector<16x256xf32>
    %779 = arith.addf %776, %778 : vector<16x256xf32>
    %780 = vector.extract_strided_slice %727 {offsets = [0, 0, 0], sizes = [1, 16, 256], strides = [1, 1, 1]} : vector<4x16x256xf32> to vector<1x16x256xf32>
    %781 = vector.shape_cast %780 : vector<1x16x256xf32> to vector<16x256xf32>
    %c8_55 = arith.constant 8 : index
    %782 = memref.load %arg8[%c8_55] : memref<32xf32, #tpu.memory_space<smem>>
    %783 = vector.broadcast %782 : f32 to vector<16x256xf32>
    %784 = arith.mulf %781, %783 : vector<16x256xf32>
    %785 = vector.extract_strided_slice %727 {offsets = [1, 0, 0], sizes = [1, 16, 256], strides = [1, 1, 1]} : vector<4x16x256xf32> to vector<1x16x256xf32>
    %786 = vector.shape_cast %785 : vector<1x16x256xf32> to vector<16x256xf32>
    %c9_56 = arith.constant 9 : index
    %787 = memref.load %arg8[%c9_56] : memref<32xf32, #tpu.memory_space<smem>>
    %788 = vector.broadcast %787 : f32 to vector<16x256xf32>
    %789 = arith.mulf %786, %788 : vector<16x256xf32>
    %790 = arith.addf %784, %789 : vector<16x256xf32>
    %791 = vector.extract_strided_slice %727 {offsets = [2, 0, 0], sizes = [1, 16, 256], strides = [1, 1, 1]} : vector<4x16x256xf32> to vector<1x16x256xf32>
    %792 = vector.shape_cast %791 : vector<1x16x256xf32> to vector<16x256xf32>
    %c10_57 = arith.constant 10 : index
    %793 = memref.load %arg8[%c10_57] : memref<32xf32, #tpu.memory_space<smem>>
    %794 = vector.broadcast %793 : f32 to vector<16x256xf32>
    %795 = arith.mulf %792, %794 : vector<16x256xf32>
    %796 = arith.addf %790, %795 : vector<16x256xf32>
    %797 = vector.extract_strided_slice %727 {offsets = [3, 0, 0], sizes = [1, 16, 256], strides = [1, 1, 1]} : vector<4x16x256xf32> to vector<1x16x256xf32>
    %798 = vector.shape_cast %797 : vector<1x16x256xf32> to vector<16x256xf32>
    %c11_58 = arith.constant 11 : index
    %799 = memref.load %arg8[%c11_58] : memref<32xf32, #tpu.memory_space<smem>>
    %800 = vector.broadcast %799 : f32 to vector<16x256xf32>
    %801 = arith.mulf %798, %800 : vector<16x256xf32>
    %802 = arith.addf %796, %801 : vector<16x256xf32>
    %c2_59 = arith.constant 2 : index
    %803 = memref.load %arg9[%c2_59] : memref<8xf32, #tpu.memory_space<smem>>
    %804 = vector.broadcast %803 : f32 to vector<16x256xf32>
    %805 = arith.addf %802, %804 : vector<16x256xf32>
    %806 = vector.extract_strided_slice %727 {offsets = [0, 0, 0], sizes = [1, 16, 256], strides = [1, 1, 1]} : vector<4x16x256xf32> to vector<1x16x256xf32>
    %807 = vector.shape_cast %806 : vector<1x16x256xf32> to vector<16x256xf32>
    %c12_60 = arith.constant 12 : index
    %808 = memref.load %arg8[%c12_60] : memref<32xf32, #tpu.memory_space<smem>>
    %809 = vector.broadcast %808 : f32 to vector<16x256xf32>
    %810 = arith.mulf %807, %809 : vector<16x256xf32>
    %811 = vector.extract_strided_slice %727 {offsets = [1, 0, 0], sizes = [1, 16, 256], strides = [1, 1, 1]} : vector<4x16x256xf32> to vector<1x16x256xf32>
    %812 = vector.shape_cast %811 : vector<1x16x256xf32> to vector<16x256xf32>
    %c13_61 = arith.constant 13 : index
    %813 = memref.load %arg8[%c13_61] : memref<32xf32, #tpu.memory_space<smem>>
    %814 = vector.broadcast %813 : f32 to vector<16x256xf32>
    %815 = arith.mulf %812, %814 : vector<16x256xf32>
    %816 = arith.addf %810, %815 : vector<16x256xf32>
    %817 = vector.extract_strided_slice %727 {offsets = [2, 0, 0], sizes = [1, 16, 256], strides = [1, 1, 1]} : vector<4x16x256xf32> to vector<1x16x256xf32>
    %818 = vector.shape_cast %817 : vector<1x16x256xf32> to vector<16x256xf32>
    %c14_62 = arith.constant 14 : index
    %819 = memref.load %arg8[%c14_62] : memref<32xf32, #tpu.memory_space<smem>>
    %820 = vector.broadcast %819 : f32 to vector<16x256xf32>
    %821 = arith.mulf %818, %820 : vector<16x256xf32>
    %822 = arith.addf %816, %821 : vector<16x256xf32>
    %823 = vector.extract_strided_slice %727 {offsets = [3, 0, 0], sizes = [1, 16, 256], strides = [1, 1, 1]} : vector<4x16x256xf32> to vector<1x16x256xf32>
    %824 = vector.shape_cast %823 : vector<1x16x256xf32> to vector<16x256xf32>
    %c15_63 = arith.constant 15 : index
    %825 = memref.load %arg8[%c15_63] : memref<32xf32, #tpu.memory_space<smem>>
    %826 = vector.broadcast %825 : f32 to vector<16x256xf32>
    %827 = arith.mulf %824, %826 : vector<16x256xf32>
    %828 = arith.addf %822, %827 : vector<16x256xf32>
    %c3_64 = arith.constant 3 : index
    %829 = memref.load %arg9[%c3_64] : memref<8xf32, #tpu.memory_space<smem>>
    %830 = vector.broadcast %829 : f32 to vector<16x256xf32>
    %831 = arith.addf %828, %830 : vector<16x256xf32>
    %832 = vector.extract_strided_slice %727 {offsets = [0, 0, 0], sizes = [1, 16, 256], strides = [1, 1, 1]} : vector<4x16x256xf32> to vector<1x16x256xf32>
    %833 = vector.shape_cast %832 : vector<1x16x256xf32> to vector<16x256xf32>
    %c16_65 = arith.constant 16 : index
    %834 = memref.load %arg8[%c16_65] : memref<32xf32, #tpu.memory_space<smem>>
    %835 = vector.broadcast %834 : f32 to vector<16x256xf32>
    %836 = arith.mulf %833, %835 : vector<16x256xf32>
    %837 = vector.extract_strided_slice %727 {offsets = [1, 0, 0], sizes = [1, 16, 256], strides = [1, 1, 1]} : vector<4x16x256xf32> to vector<1x16x256xf32>
    %838 = vector.shape_cast %837 : vector<1x16x256xf32> to vector<16x256xf32>
    %c17_66 = arith.constant 17 : index
    %839 = memref.load %arg8[%c17_66] : memref<32xf32, #tpu.memory_space<smem>>
    %840 = vector.broadcast %839 : f32 to vector<16x256xf32>
    %841 = arith.mulf %838, %840 : vector<16x256xf32>
    %842 = arith.addf %836, %841 : vector<16x256xf32>
    %843 = vector.extract_strided_slice %727 {offsets = [2, 0, 0], sizes = [1, 16, 256], strides = [1, 1, 1]} : vector<4x16x256xf32> to vector<1x16x256xf32>
    %844 = vector.shape_cast %843 : vector<1x16x256xf32> to vector<16x256xf32>
    %c18_67 = arith.constant 18 : index
    %845 = memref.load %arg8[%c18_67] : memref<32xf32, #tpu.memory_space<smem>>
    %846 = vector.broadcast %845 : f32 to vector<16x256xf32>
    %847 = arith.mulf %844, %846 : vector<16x256xf32>
    %848 = arith.addf %842, %847 : vector<16x256xf32>
    %849 = vector.extract_strided_slice %727 {offsets = [3, 0, 0], sizes = [1, 16, 256], strides = [1, 1, 1]} : vector<4x16x256xf32> to vector<1x16x256xf32>
    %850 = vector.shape_cast %849 : vector<1x16x256xf32> to vector<16x256xf32>
    %c19_68 = arith.constant 19 : index
    %851 = memref.load %arg8[%c19_68] : memref<32xf32, #tpu.memory_space<smem>>
    %852 = vector.broadcast %851 : f32 to vector<16x256xf32>
    %853 = arith.mulf %850, %852 : vector<16x256xf32>
    %854 = arith.addf %848, %853 : vector<16x256xf32>
    %c4_69 = arith.constant 4 : index
    %855 = memref.load %arg9[%c4_69] : memref<8xf32, #tpu.memory_space<smem>>
    %856 = vector.broadcast %855 : f32 to vector<16x256xf32>
    %857 = arith.addf %854, %856 : vector<16x256xf32>
    %858 = vector.extract_strided_slice %727 {offsets = [0, 0, 0], sizes = [1, 16, 256], strides = [1, 1, 1]} : vector<4x16x256xf32> to vector<1x16x256xf32>
    %859 = vector.shape_cast %858 : vector<1x16x256xf32> to vector<16x256xf32>
    %c20_70 = arith.constant 20 : index
    %860 = memref.load %arg8[%c20_70] : memref<32xf32, #tpu.memory_space<smem>>
    %861 = vector.broadcast %860 : f32 to vector<16x256xf32>
    %862 = arith.mulf %859, %861 : vector<16x256xf32>
    %863 = vector.extract_strided_slice %727 {offsets = [1, 0, 0], sizes = [1, 16, 256], strides = [1, 1, 1]} : vector<4x16x256xf32> to vector<1x16x256xf32>
    %864 = vector.shape_cast %863 : vector<1x16x256xf32> to vector<16x256xf32>
    %c21_71 = arith.constant 21 : index
    %865 = memref.load %arg8[%c21_71] : memref<32xf32, #tpu.memory_space<smem>>
    %866 = vector.broadcast %865 : f32 to vector<16x256xf32>
    %867 = arith.mulf %864, %866 : vector<16x256xf32>
    %868 = arith.addf %862, %867 : vector<16x256xf32>
    %869 = vector.extract_strided_slice %727 {offsets = [2, 0, 0], sizes = [1, 16, 256], strides = [1, 1, 1]} : vector<4x16x256xf32> to vector<1x16x256xf32>
    %870 = vector.shape_cast %869 : vector<1x16x256xf32> to vector<16x256xf32>
    %c22_72 = arith.constant 22 : index
    %871 = memref.load %arg8[%c22_72] : memref<32xf32, #tpu.memory_space<smem>>
    %872 = vector.broadcast %871 : f32 to vector<16x256xf32>
    %873 = arith.mulf %870, %872 : vector<16x256xf32>
    %874 = arith.addf %868, %873 : vector<16x256xf32>
    %875 = vector.extract_strided_slice %727 {offsets = [3, 0, 0], sizes = [1, 16, 256], strides = [1, 1, 1]} : vector<4x16x256xf32> to vector<1x16x256xf32>
    %876 = vector.shape_cast %875 : vector<1x16x256xf32> to vector<16x256xf32>
    %c23_73 = arith.constant 23 : index
    %877 = memref.load %arg8[%c23_73] : memref<32xf32, #tpu.memory_space<smem>>
    %878 = vector.broadcast %877 : f32 to vector<16x256xf32>
    %879 = arith.mulf %876, %878 : vector<16x256xf32>
    %880 = arith.addf %874, %879 : vector<16x256xf32>
    %c5_74 = arith.constant 5 : index
    %881 = memref.load %arg9[%c5_74] : memref<8xf32, #tpu.memory_space<smem>>
    %882 = vector.broadcast %881 : f32 to vector<16x256xf32>
    %883 = arith.addf %880, %882 : vector<16x256xf32>
    %884 = vector.extract_strided_slice %727 {offsets = [0, 0, 0], sizes = [1, 16, 256], strides = [1, 1, 1]} : vector<4x16x256xf32> to vector<1x16x256xf32>
    %885 = vector.shape_cast %884 : vector<1x16x256xf32> to vector<16x256xf32>
    %c24_75 = arith.constant 24 : index
    %886 = memref.load %arg8[%c24_75] : memref<32xf32, #tpu.memory_space<smem>>
    %887 = vector.broadcast %886 : f32 to vector<16x256xf32>
    %888 = arith.mulf %885, %887 : vector<16x256xf32>
    %889 = vector.extract_strided_slice %727 {offsets = [1, 0, 0], sizes = [1, 16, 256], strides = [1, 1, 1]} : vector<4x16x256xf32> to vector<1x16x256xf32>
    %890 = vector.shape_cast %889 : vector<1x16x256xf32> to vector<16x256xf32>
    %c25_76 = arith.constant 25 : index
    %891 = memref.load %arg8[%c25_76] : memref<32xf32, #tpu.memory_space<smem>>
    %892 = vector.broadcast %891 : f32 to vector<16x256xf32>
    %893 = arith.mulf %890, %892 : vector<16x256xf32>
    %894 = arith.addf %888, %893 : vector<16x256xf32>
    %895 = vector.extract_strided_slice %727 {offsets = [2, 0, 0], sizes = [1, 16, 256], strides = [1, 1, 1]} : vector<4x16x256xf32> to vector<1x16x256xf32>
    %896 = vector.shape_cast %895 : vector<1x16x256xf32> to vector<16x256xf32>
    %c26_77 = arith.constant 26 : index
    %897 = memref.load %arg8[%c26_77] : memref<32xf32, #tpu.memory_space<smem>>
    %898 = vector.broadcast %897 : f32 to vector<16x256xf32>
    %899 = arith.mulf %896, %898 : vector<16x256xf32>
    %900 = arith.addf %894, %899 : vector<16x256xf32>
    %901 = vector.extract_strided_slice %727 {offsets = [3, 0, 0], sizes = [1, 16, 256], strides = [1, 1, 1]} : vector<4x16x256xf32> to vector<1x16x256xf32>
    %902 = vector.shape_cast %901 : vector<1x16x256xf32> to vector<16x256xf32>
    %c27_78 = arith.constant 27 : index
    %903 = memref.load %arg8[%c27_78] : memref<32xf32, #tpu.memory_space<smem>>
    %904 = vector.broadcast %903 : f32 to vector<16x256xf32>
    %905 = arith.mulf %902, %904 : vector<16x256xf32>
    %906 = arith.addf %900, %905 : vector<16x256xf32>
    %c6_79 = arith.constant 6 : index
    %907 = memref.load %arg9[%c6_79] : memref<8xf32, #tpu.memory_space<smem>>
    %908 = vector.broadcast %907 : f32 to vector<16x256xf32>
    %909 = arith.addf %906, %908 : vector<16x256xf32>
    %910 = vector.extract_strided_slice %727 {offsets = [0, 0, 0], sizes = [1, 16, 256], strides = [1, 1, 1]} : vector<4x16x256xf32> to vector<1x16x256xf32>
    %911 = vector.shape_cast %910 : vector<1x16x256xf32> to vector<16x256xf32>
    %c28_80 = arith.constant 28 : index
    %912 = memref.load %arg8[%c28_80] : memref<32xf32, #tpu.memory_space<smem>>
    %913 = vector.broadcast %912 : f32 to vector<16x256xf32>
    %914 = arith.mulf %911, %913 : vector<16x256xf32>
    %915 = vector.extract_strided_slice %727 {offsets = [1, 0, 0], sizes = [1, 16, 256], strides = [1, 1, 1]} : vector<4x16x256xf32> to vector<1x16x256xf32>
    %916 = vector.shape_cast %915 : vector<1x16x256xf32> to vector<16x256xf32>
    %c29_81 = arith.constant 29 : index
    %917 = memref.load %arg8[%c29_81] : memref<32xf32, #tpu.memory_space<smem>>
    %918 = vector.broadcast %917 : f32 to vector<16x256xf32>
    %919 = arith.mulf %916, %918 : vector<16x256xf32>
    %920 = arith.addf %914, %919 : vector<16x256xf32>
    %921 = vector.extract_strided_slice %727 {offsets = [2, 0, 0], sizes = [1, 16, 256], strides = [1, 1, 1]} : vector<4x16x256xf32> to vector<1x16x256xf32>
    %922 = vector.shape_cast %921 : vector<1x16x256xf32> to vector<16x256xf32>
    %c30_82 = arith.constant 30 : index
    %923 = memref.load %arg8[%c30_82] : memref<32xf32, #tpu.memory_space<smem>>
    %924 = vector.broadcast %923 : f32 to vector<16x256xf32>
    %925 = arith.mulf %922, %924 : vector<16x256xf32>
    %926 = arith.addf %920, %925 : vector<16x256xf32>
    %927 = vector.extract_strided_slice %727 {offsets = [3, 0, 0], sizes = [1, 16, 256], strides = [1, 1, 1]} : vector<4x16x256xf32> to vector<1x16x256xf32>
    %928 = vector.shape_cast %927 : vector<1x16x256xf32> to vector<16x256xf32>
    %c31_83 = arith.constant 31 : index
    %929 = memref.load %arg8[%c31_83] : memref<32xf32, #tpu.memory_space<smem>>
    %930 = vector.broadcast %929 : f32 to vector<16x256xf32>
    %931 = arith.mulf %928, %930 : vector<16x256xf32>
    %932 = arith.addf %926, %931 : vector<16x256xf32>
    %c7_84 = arith.constant 7 : index
    %933 = memref.load %arg9[%c7_84] : memref<8xf32, #tpu.memory_space<smem>>
    %934 = vector.broadcast %933 : f32 to vector<16x256xf32>
    %935 = arith.addf %932, %934 : vector<16x256xf32>
    %936 = vector.shape_cast %753 : vector<16x256xf32> to vector<1x16x256xf32>
    %937 = vector.shape_cast %779 : vector<16x256xf32> to vector<1x16x256xf32>
    %938 = vector.shape_cast %805 : vector<16x256xf32> to vector<1x16x256xf32>
    %939 = vector.shape_cast %831 : vector<16x256xf32> to vector<1x16x256xf32>
    %940 = vector.shape_cast %857 : vector<16x256xf32> to vector<1x16x256xf32>
    %941 = vector.shape_cast %883 : vector<16x256xf32> to vector<1x16x256xf32>
    %942 = vector.shape_cast %909 : vector<16x256xf32> to vector<1x16x256xf32>
    %943 = vector.shape_cast %935 : vector<16x256xf32> to vector<1x16x256xf32>
    %944 = tpu.concatenate %936, %937, %938, %939, %940, %941, %942, %943 in 0 : vector<1x16x256xf32>, vector<1x16x256xf32>, vector<1x16x256xf32>, vector<1x16x256xf32>, vector<1x16x256xf32>, vector<1x16x256xf32>, vector<1x16x256xf32>, vector<1x16x256xf32> -> vector<8x16x256xf32>
    %945 = vector.shape_cast %944 : vector<8x16x256xf32> to vector<1x8x16x256xf32>
    %cst_85 = arith.constant dense<0.000000e+00> : vector<1xf32>
    %946 = vector.multi_reduction <add>, %945, %cst_85 [1, 2, 3] : vector<1x8x16x256xf32> to vector<1xf32>
    %947 = vector.shape_cast %946 : vector<1xf32> to vector<1x1x1x1xf32>
    %948 = vector.extract %947[0, 0, 0, 0] : f32 from vector<1x1x1x1xf32>
    %cst_86 = arith.constant 3.05175781E-5 : f32
    %949 = arith.mulf %948, %cst_86 : f32
    %950 = arith.mulf %944, %944 : vector<8x16x256xf32>
    %951 = vector.shape_cast %950 : vector<8x16x256xf32> to vector<1x8x16x256xf32>
    %cst_87 = arith.constant dense<0.000000e+00> : vector<1xf32>
    %952 = vector.multi_reduction <add>, %951, %cst_87 [1, 2, 3] : vector<1x8x16x256xf32> to vector<1xf32>
    %953 = vector.shape_cast %952 : vector<1xf32> to vector<1x1x1x1xf32>
    %954 = vector.extract %953[0, 0, 0, 0] : f32 from vector<1x1x1x1xf32>
    %cst_88 = arith.constant 3.05175781E-5 : f32
    %955 = arith.mulf %954, %cst_88 : f32
    %956 = arith.mulf %949, %949 : f32
    %957 = arith.subf %955, %956 : f32
    %958 = vector.broadcast %949 : f32 to vector<8x16x256xf32>
    %959 = arith.subf %944, %958 : vector<8x16x256xf32>
    %cst_89 = arith.constant 9.99999974E-6 : f32
    %960 = arith.addf %957, %cst_89 : f32
    %961 = math.rsqrt %960 : f32
    %962 = vector.broadcast %961 : f32 to vector<8x16x256xf32>
    %963 = arith.mulf %959, %962 : vector<8x16x256xf32>
    %c0_90 = arith.constant 0 : index
    %c0_91 = arith.constant 0 : index
    %c0_92 = arith.constant 0 : index
    %964 = vector.load %arg4[%c0_90, %c0_91, %c0_92] : memref<8x16x256xf32, #tpu.memory_space<vmem>>, vector<8x16x256xf32>
    %965 = arith.mulf %963, %964 : vector<8x16x256xf32>
    %c0_93 = arith.constant 0 : index
    %c0_94 = arith.constant 0 : index
    %c0_95 = arith.constant 0 : index
    %966 = vector.load %arg5[%c0_93, %c0_94, %c0_95] : memref<8x16x256xf32, #tpu.memory_space<vmem>>, vector<8x16x256xf32>
    %967 = arith.addf %965, %966 : vector<8x16x256xf32>
    %cst_96 = arith.constant 5.000000e-01 : f32
    %968 = vector.broadcast %cst_96 : f32 to vector<8x16x256xf32>
    %969 = arith.mulf %968, %967 : vector<8x16x256xf32>
    %cst_97 = arith.constant 0.707106769 : f32
    %970 = vector.broadcast %cst_97 : f32 to vector<8x16x256xf32>
    %971 = arith.mulf %967, %970 : vector<8x16x256xf32>
    %972 = math.absf %971 : vector<8x16x256xf32>
    %cst_98 = arith.constant 0.327591091 : f32
    %973 = vector.broadcast %cst_98 : f32 to vector<8x16x256xf32>
    %974 = arith.mulf %973, %972 : vector<8x16x256xf32>
    %cst_99 = arith.constant 1.000000e+00 : f32
    %975 = vector.broadcast %cst_99 : f32 to vector<8x16x256xf32>
    %976 = arith.addf %975, %974 : vector<8x16x256xf32>
    %cst_100 = arith.constant 1.000000e+00 : f32
    %977 = vector.broadcast %cst_100 : f32 to vector<8x16x256xf32>
    %978 = arith.divf %977, %976 : vector<8x16x256xf32>
    %cst_101 = arith.constant 1.06140542 : f32
    %979 = vector.broadcast %cst_101 : f32 to vector<8x16x256xf32>
    %980 = arith.mulf %979, %978 : vector<8x16x256xf32>
    %cst_102 = arith.constant -1.45315206 : f32
    %981 = vector.broadcast %cst_102 : f32 to vector<8x16x256xf32>
    %982 = arith.addf %980, %981 : vector<8x16x256xf32>
    %983 = arith.mulf %982, %978 : vector<8x16x256xf32>
    %cst_103 = arith.constant 1.42141378 : f32
    %984 = vector.broadcast %cst_103 : f32 to vector<8x16x256xf32>
    %985 = arith.addf %983, %984 : vector<8x16x256xf32>
    %986 = arith.mulf %985, %978 : vector<8x16x256xf32>
    %cst_104 = arith.constant -0.284496725 : f32
    %987 = vector.broadcast %cst_104 : f32 to vector<8x16x256xf32>
    %988 = arith.addf %986, %987 : vector<8x16x256xf32>
    %989 = arith.mulf %988, %978 : vector<8x16x256xf32>
    %cst_105 = arith.constant 0.254829586 : f32
    %990 = vector.broadcast %cst_105 : f32 to vector<8x16x256xf32>
    %991 = arith.addf %989, %990 : vector<8x16x256xf32>
    %992 = arith.mulf %991, %978 : vector<8x16x256xf32>
    %993 = arith.mulf %972, %972 : vector<8x16x256xf32>
    %cst_106 = arith.constant 0.000000e+00 : f32
    %994 = vector.broadcast %cst_106 : f32 to vector<8x16x256xf32>
    %995 = arith.subf %994, %993 : vector<8x16x256xf32>
    %996 = math.exp %995 : vector<8x16x256xf32>
    %997 = arith.mulf %992, %996 : vector<8x16x256xf32>
    %cst_107 = arith.constant 1.000000e+00 : f32
    %998 = vector.broadcast %cst_107 : f32 to vector<8x16x256xf32>
    %999 = arith.subf %998, %997 : vector<8x16x256xf32>
    %cst_108 = arith.constant 0.000000e+00 : f32
    %1000 = vector.broadcast %cst_108 : f32 to vector<8x16x256xf32>
    %1001 = arith.cmpf oge, %971, %1000 : vector<8x16x256xf32>
    %cst_109 = arith.constant 0.000000e+00 : f32
    %1002 = vector.broadcast %cst_109 : f32 to vector<8x16x256xf32>
    %1003 = arith.subf %1002, %999 : vector<8x16x256xf32>
    %1004 = arith.select %1001, %999, %1003 : vector<8x16x256xi1>, vector<8x16x256xf32>
    %cst_110 = arith.constant 1.000000e+00 : f32
    %1005 = vector.broadcast %cst_110 : f32 to vector<8x16x256xf32>
    %1006 = arith.addf %1005, %1004 : vector<8x16x256xf32>
    %1007 = arith.mulf %969, %1006 : vector<8x16x256xf32>
    %c0_111 = arith.constant 0 : index
    %c0_112 = arith.constant 0 : index
    %c0_113 = arith.constant 0 : index
    %c0_114 = arith.constant 0 : index
    %1008 = vector.load %arg10[%c0_111, %c0_112, %c0_113, %c0_114] : memref<1x8x16x256xf32, #tpu.memory_space<vmem>>, vector<1x8x16x256xf32>
    %1009 = vector.shape_cast %1008 : vector<1x8x16x256xf32> to vector<8x16x256xf32>
    %1010 = vector.shape_cast %1007 : vector<8x16x256xf32> to vector<1x8x16x256xf32>
    tpu.vector_store %arg10[%c0_111, %c0_112, %c0_113, %c0_114], %1010 {strides = array<i32>} : memref<1x8x16x256xf32, #tpu.memory_space<vmem>>, vector<1x8x16x256xf32>,
    return
  }
  func.func @transform_0(%arg0: i32) -> (i32, i32, i32, i32) {
    %c0_i32 = arith.constant 0 : i32
    %c0_i32_0 = arith.constant 0 : i32
    %c0_i32_1 = arith.constant 0 : i32
    %c0_i32_2 = arith.constant 0 : i32
    return %arg0, %c0_i32, %c0_i32_0, %c0_i32_1 : i32, i32, i32, i32
  }
  func.func @transform_1(%arg0: i32) -> (i32, i32, i32) {
    %c0_i32 = arith.constant 0 : i32
    %c0_i32_0 = arith.constant 0 : i32
    %c0_i32_1 = arith.constant 0 : i32
    %c0_i32_2 = arith.constant 0 : i32
    return %c0_i32, %c0_i32_0, %c0_i32_1 : i32, i32, i32
  }
  func.func @transform_2(%arg0: i32) -> (i32, i32, i32) {
    %c0_i32 = arith.constant 0 : i32
    %c0_i32_0 = arith.constant 0 : i32
    %c0_i32_1 = arith.constant 0 : i32
    %c0_i32_2 = arith.constant 0 : i32
    return %c0_i32, %c0_i32_0, %c0_i32_1 : i32, i32, i32
  }
  func.func @transform_3(%arg0: i32) -> (i32, i32, i32) {
    %c0_i32 = arith.constant 0 : i32
    %c0_i32_0 = arith.constant 0 : i32
    %c0_i32_1 = arith.constant 0 : i32
    %c0_i32_2 = arith.constant 0 : i32
    return %c0_i32, %c0_i32_0, %c0_i32_1 : i32, i32, i32
  }
  func.func @transform_4(%arg0: i32) -> (i32, i32, i32) {
    %c0_i32 = arith.constant 0 : i32
    %c0_i32_0 = arith.constant 0 : i32
    %c0_i32_1 = arith.constant 0 : i32
    %c0_i32_2 = arith.constant 0 : i32
    return %c0_i32, %c0_i32_0, %c0_i32_1 : i32, i32, i32
  }
  func.func @transform_5(%arg0: i32) -> i32 {
    %c0_i32 = arith.constant 0 : i32
    %c0_i32_0 = arith.constant 0 : i32
    return %c0_i32 : i32
  }
  func.func @transform_6(%arg0: i32) -> i32 {
    %c0_i32 = arith.constant 0 : i32
    %c0_i32_0 = arith.constant 0 : i32
    return %c0_i32 : i32
  }
  func.func @transform_7(%arg0: i32) -> i32 {
    %c0_i32 = arith.constant 0 : i32
    %c0_i32_0 = arith.constant 0 : i32
    return %c0_i32 : i32
  }
  func.func @transform_8(%arg0: i32) -> i32 {
    %c0_i32 = arith.constant 0 : i32
    %c0_i32_0 = arith.constant 0 : i32
    return %c0_i32 : i32
  }
  func.func @transform_9(%arg0: i32) -> (i32, i32, i32, i32) {
    %c0_i32 = arith.constant 0 : i32
    %c0_i32_0 = arith.constant 0 : i32
    %c0_i32_1 = arith.constant 0 : i32
    %c0_i32_2 = arith.constant 0 : i32
    return %arg0, %c0_i32, %c0_i32_0, %c0_i32_1 : i32, i32, i32, i32
  }
}

</mosaic_0001>

<llo_original>
// kernel: tpu_custom_call.1
$region0: #{tpu_custom_call.1}
  #allocation0 [shape = 'u32[]', space=smem, size = 0x4, offset = 0x4, fixed_abs, tag = 'smem constant byte address 0x4 - core index']
  #allocation1 [shape = 'u32[144,128]{1,0:T(1,128)}', space=vmem, size = 0x12000, scoped, tag = 'internal scratch']
  %s0 = inlined_call_operand.vmem [shape: f32[2,4,18,324], index: 0, kind: input, shape index: {}]
  %s1 = inlined_call_operand.vmem [shape: f32[4,16,256], index: 1, kind: input, shape index: {}]
  %s2 = inlined_call_operand.vmem [shape: f32[4,16,256], index: 2, kind: input, shape index: {}]
  %s3 = inlined_call_operand.vmem [shape: f32[8,16,256], index: 3, kind: input, shape index: {}]
  %s4 = inlined_call_operand.vmem [shape: f32[8,16,256], index: 4, kind: input, shape index: {}]
  %s5 = inlined_call_operand.vmem [shape: f32[108], index: 5, kind: input, shape index: {}]
  %s6 = inlined_call_operand.vmem [shape: f32[4], index: 6, kind: input, shape index: {}]
  %s7 = inlined_call_operand.vmem [shape: f32[32], index: 7, kind: input, shape index: {}]
  %s8 = inlined_call_operand.vmem [shape: f32[8], index: 8, kind: input, shape index: {}]
  %s9 = inlined_call_operand.hbm [shape: f32[2,8,16,256], index: 9, kind: output, shape index: {}]
  %s10 = sld [smem:[#allocation0]]
  $region85: #{tpu_custom_call.1} parent=0
    _
  %s12 = ssub.s32 1, %s10
  %s13 = scalar_select 0, %s12, %s10
  $region1: #{tpu_custom_call.1} parent=0
    #allocation2 [shape = 'u8[512]{0}', space=smem, size = 0x200, scoped, tag = 'input window, operand 5, single buffered']
    #allocation3 [shape = 's32[2]{0}', space=sflag, size = 0x8, scoped, tag = 'scoped memory for tpu_custom_call.1']
    #allocation4 [shape = 's32[2]{0}', space=sflag, size = 0x8, scoped, tag = 'scoped memory for tpu_custom_call.1']
    #allocation5 [shape = 'u8[512]{0}', space=smem, size = 0x200, scoped, tag = 'input window, operand 6, single buffered']
    #allocation6 [shape = 's32[1]{0}', space=sflag, size = 0x4, scoped, tag = 'scoped memory for tpu_custom_call.1']
    #allocation7 [shape = 'u8[512]{0}', space=smem, size = 0x200, scoped, tag = 'input window, operand 7, single buffered']
    #allocation8 [shape = 'u8[512]{0}', space=smem, size = 0x200, scoped, tag = 'input window, operand 8, single buffered']
    #allocation9 [shape = 's32[1]{0}', space=sflag, size = 0x4, scoped, tag = 'scoped memory for tpu_custom_call.1']
    #allocation10 [shape = 'u8[262144]{0}', space=vmem, size = 0x40000, scoped, tag = 'output window, operand 0']
    %14 = vsyncpa [#allocation4], 0
    %15 = vsyncpa [#allocation6], 0
    %16 = vsyncpa [#allocation9], 0
    %17 = vsyncpa [#allocation3], 0
    %s18 = scalar_lea.sflag [#allocation3], 1
    %19 = vsyncpa %s18, 0
    loop: start=0, step=1, limit=4
    $region2: #{tpu_custom_call.1} parent=1 // loop_pre_header
      _
    $region3: #{tpu_custom_call.1} parent=1 // loop_header
      %s21 = sphi 0, %s25
      %p22 = scmp.ge.s32.totalorder %s21, 4
      %s31 = sphi 0, %s33
      %s34 = sphi 0, %s31
      %s35 = sphi 0, %s34
      %s51 = sphi 0, %s35
      %s55 = sphi 0, %s55
      %s57 = sphi 0, %s55
      %s58 = sphi 0, %s57
      %s72 = sphi 0, %s58
      %s76 = sphi 0, %s76
      %s78 = sphi 0, %s76
      %s79 = sphi 0, %s78
      %s93 = sphi 0, %s79
      %s97 = sphi 0, %s97
      %s99 = sphi 0, %s97
      %s100 = sphi 0, %s99
      %s114 = sphi 0, %s100
      %s118 = sphi 0, %s118
      %s120 = sphi 0, %s118
      %s121 = sphi 0, %s120
      %s135 = sphi 0, %s121
      %s139 = sphi 0, %s139
      %s141 = sphi 0, %s139
      %s142 = sphi 0, %s141
      %s156 = sphi 0, %s142
      %s160 = sphi 0, %s160
      %s162 = sphi 0, %s160
      %s163 = sphi 0, %s162
      %s177 = sphi 0, %s163
      %s181 = sphi 0, %s181
      %s183 = sphi 0, %s181
      %s184 = sphi 0, %s183
      %s198 = sphi 0, %s184
      %s202 = sphi 0, %s202
      %s204 = sphi 0, %s202
      %s205 = sphi 0, %s204
      %s219 = sphi 0, %s205
      %s225 = sphi 0, %s227
      %s228 = sphi 0, %s225
      %s229 = sphi 0, %s228
      %s245 = sphi 0, %s229
    $region4: #{tpu_custom_call.1} parent=1 // loop_header_branch
      %24 = sbr.rel (%p22) target = $region8
    $region5: #{tpu_custom_call.1} parent=1 // loop_body
      %s26 = ssub.s32 %s21, 1
      %s27 = ssub.s32 %s21, 2
      %s28 = sadd.s32 %s21, 1
      %s29 = ssub.s32 %s21, %s28
      %p30 = scmp.eq.s32.totalorder %s29, 0
      %s32 = sadd.s32 %s31, 1
      %s33 = scalar_select %p30, %s31, %s32
      %p36 = pneg %p30
      %p37 = scmp.eq.s32.totalorder %s21, 1
      %p38 = por %p36, %p37
      %p39 = scmp.ne.s32.totalorder %s31, %s34
      %p40 = scmp.eq.s32.totalorder %s21, 0
      %p41 = por %p39, %p40
      %p42 = scmp.ne.s32.totalorder %s31, %s34
      %p43 = scmp.eq.s32.totalorder %s26, 1
      %p44 = por %p42, %p43
      %p45 = scmp.ne.s32.totalorder %s34, %s35
      %p46 = scmp.eq.s32.totalorder %s26, 0
      %p47 = por %p45, %p46
      %p48 = scmp.ne.s32.totalorder %s34, %s35
      %p49 = scmp.eq.s32.totalorder %s27, 1
      %p50 = por %p48, %p49
      %p52 = scmp.ne.s32.totalorder %s35, %s51
      %p53 = scmp.eq.s32.totalorder %s27, 0
      %p54 = por %p52, %p53
      %s56 = sadd.s32 %s55, 1
      %p59 = scmp.eq.s32.totalorder %s21, 1
      %p60 = scmp.ne.s32.totalorder %s55, %s57
      %p61 = scmp.eq.s32.totalorder %s21, 0
      %p62 = por %p60, %p61
      %p63 = scmp.ne.s32.totalorder %s55, %s57
      %p64 = scmp.eq.s32.totalorder %s26, 1
      %p65 = por %p63, %p64
      %p66 = scmp.ne.s32.totalorder %s57, %s58
      %p67 = scmp.eq.s32.totalorder %s26, 0
      %p68 = por %p66, %p67
      %p69 = scmp.ne.s32.totalorder %s57, %s58
      %p70 = scmp.eq.s32.totalorder %s27, 1
      %p71 = por %p69, %p70
      %p73 = scmp.ne.s32.totalorder %s58, %s72
      %p74 = scmp.eq.s32.totalorder %s27, 0
      %p75 = por %p73, %p74
      %s77 = sadd.s32 %s76, 1
      %p80 = scmp.eq.s32.totalorder %s21, 1
      %p81 = scmp.ne.s32.totalorder %s76, %s78
      %p82 = scmp.eq.s32.totalorder %s21, 0
      %p83 = por %p81, %p82
      %p84 = scmp.ne.s32.totalorder %s76, %s78
      %p85 = scmp.eq.s32.totalorder %s26, 1
      %p86 = por %p84, %p85
      %p87 = scmp.ne.s32.totalorder %s78, %s79
      %p88 = scmp.eq.s32.totalorder %s26, 0
      %p89 = por %p87, %p88
      %p90 = scmp.ne.s32.totalorder %s78, %s79
      %p91 = scmp.eq.s32.totalorder %s27, 1
      %p92 = por %p90, %p91
      %p94 = scmp.ne.s32.totalorder %s79, %s93
      %p95 = scmp.eq.s32.totalorder %s27, 0
      %p96 = por %p94, %p95
      %s98 = sadd.s32 %s97, 1
      %p101 = scmp.eq.s32.totalorder %s21, 1
      %p102 = scmp.ne.s32.totalorder %s97, %s99
      %p103 = scmp.eq.s32.totalorder %s21, 0
      %p104 = por %p102, %p103
      %p105 = scmp.ne.s32.totalorder %s97, %s99
      %p106 = scmp.eq.s32.totalorder %s26, 1
      %p107 = por %p105, %p106
      %p108 = scmp.ne.s32.totalorder %s99, %s100
      %p109 = scmp.eq.s32.totalorder %s26, 0
      %p110 = por %p108, %p109
      %p111 = scmp.ne.s32.totalorder %s99, %s100
      %p112 = scmp.eq.s32.totalorder %s27, 1
      %p113 = por %p111, %p112
      %p115 = scmp.ne.s32.totalorder %s100, %s114
      %p116 = scmp.eq.s32.totalorder %s27, 0
      %p117 = por %p115, %p116
      %s119 = sadd.s32 %s118, 1
      %p122 = scmp.eq.s32.totalorder %s21, 1
      %p123 = scmp.ne.s32.totalorder %s118, %s120
      %p124 = scmp.eq.s32.totalorder %s21, 0
      %p125 = por %p123, %p124
      %p126 = scmp.ne.s32.totalorder %s118, %s120
      %p127 = scmp.eq.s32.totalorder %s26, 1
      %p128 = por %p126, %p127
      %p129 = scmp.ne.s32.totalorder %s120, %s121
      %p130 = scmp.eq.s32.totalorder %s26, 0
      %p131 = por %p129, %p130
      %p132 = scmp.ne.s32.totalorder %s120, %s121
      %p133 = scmp.eq.s32.totalorder %s27, 1
      %p134 = por %p132, %p133
      %p136 = scmp.ne.s32.totalorder %s121, %s135
      %p137 = scmp.eq.s32.totalorder %s27, 0
      %p138 = por %p136, %p137
      %s140 = sadd.s32 %s139, 1
      %p143 = scmp.eq.s32.totalorder %s21, 1
      %p144 = scmp.ne.s32.totalorder %s139, %s141
      %p145 = scmp.eq.s32.totalorder %s21, 0
      %p146 = por %p144, %p145
      %p147 = scmp.ne.s32.totalorder %s139, %s141
      %p148 = scmp.eq.s32.totalorder %s26, 1
      %p149 = por %p147, %p148
      %p150 = scmp.ne.s32.totalorder %s141, %s142
      %p151 = scmp.eq.s32.totalorder %s26, 0
      %p152 = por %p150, %p151
      %p153 = scmp.ne.s32.totalorder %s141, %s142
      %p154 = scmp.eq.s32.totalorder %s27, 1
      %p155 = por %p153, %p154
      %p157 = scmp.ne.s32.totalorder %s142, %s156
      %p158 = scmp.eq.s32.totalorder %s27, 0
      %p159 = por %p157, %p158
      %s161 = sadd.s32 %s160, 1
      %p164 = scmp.eq.s32.totalorder %s21, 1
      %p165 = scmp.ne.s32.totalorder %s160, %s162
      %p166 = scmp.eq.s32.totalorder %s21, 0
      %p167 = por %p165, %p166
      %p168 = scmp.ne.s32.totalorder %s160, %s162
      %p169 = scmp.eq.s32.totalorder %s26, 1
      %p170 = por %p168, %p169
      %p171 = scmp.ne.s32.totalorder %s162, %s163
      %p172 = scmp.eq.s32.totalorder %s26, 0
      %p173 = por %p171, %p172
      %p174 = scmp.ne.s32.totalorder %s162, %s163
      %p175 = scmp.eq.s32.totalorder %s27, 1
      %p176 = por %p174, %p175
      %p178 = scmp.ne.s32.totalorder %s163, %s177
      %p179 = scmp.eq.s32.totalorder %s27, 0
      %p180 = por %p178, %p179
      %s182 = sadd.s32 %s181, 1
      %p185 = scmp.eq.s32.totalorder %s21, 1
      %p186 = scmp.ne.s32.totalorder %s181, %s183
      %p187 = scmp.eq.s32.totalorder %s21, 0
      %p188 = por %p186, %p187
      %p189 = scmp.ne.s32.totalorder %s181, %s183
      %p190 = scmp.eq.s32.totalorder %s26, 1
      %p191 = por %p189, %p190
      %p192 = scmp.ne.s32.totalorder %s183, %s184
      %p193 = scmp.eq.s32.totalorder %s26, 0
      %p194 = por %p192, %p193
      %p195 = scmp.ne.s32.totalorder %s183, %s184
      %p196 = scmp.eq.s32.totalorder %s27, 1
      %p197 = por %p195, %p196
      %p199 = scmp.ne.s32.totalorder %s184, %s198
      %p200 = scmp.eq.s32.totalorder %s27, 0
      %p201 = por %p199, %p200
      %s203 = sadd.s32 %s202, 1
      %p206 = scmp.eq.s32.totalorder %s21, 1
      %p207 = scmp.ne.s32.totalorder %s202, %s204
      %p208 = scmp.eq.s32.totalorder %s21, 0
      %p209 = por %p207, %p208
      %p210 = scmp.ne.s32.totalorder %s202, %s204
      %p211 = scmp.eq.s32.totalorder %s26, 1
      %p212 = por %p210, %p211
      %p213 = scmp.ne.s32.totalorder %s204, %s205
      %p214 = scmp.eq.s32.totalorder %s26, 0
      %p215 = por %p213, %p214
      %p216 = scmp.ne.s32.totalorder %s204, %s205
      %p217 = scmp.eq.s32.totalorder %s27, 1
      %p218 = por %p216, %p217
      %p220 = scmp.ne.s32.totalorder %s205, %s219
      %p221 = scmp.eq.s32.totalorder %s27, 0
      %p222 = por %p220, %p221
      %s223 = ssub.s32 %s21, %s28
      %p224 = scmp.eq.s32.totalorder %s223, 0
      %s226 = sadd.s32 %s225, 1
      %s227 = scalar_select %p224, %s225, %s226
      %p230 = pneg %p224
      %p231 = scmp.eq.s32.totalorder %s21, 1
      %p232 = por %p230, %p231
      %p233 = scmp.ne.s32.totalorder %s225, %s228
      %p234 = scmp.eq.s32.totalorder %s21, 0
      %p235 = por %p233, %p234
      %p236 = scmp.ne.s32.totalorder %s225, %s228
      %p237 = scmp.eq.s32.totalorder %s26, 1
      %p238 = por %p236, %p237
      %p239 = scmp.ne.s32.totalorder %s228, %s229
      %p240 = scmp.eq.s32.totalorder %s26, 0
      %p241 = por %p239, %p240
      %p242 = scmp.ne.s32.totalorder %s228, %s229
      %p243 = scmp.eq.s32.totalorder %s27, 1
      %p244 = por %p242, %p243
      %p246 = scmp.ne.s32.totalorder %s229, %s245
      %p247 = scmp.eq.s32.totalorder %s27, 0
      %p248 = por %p246, %p247
      %p249 = scmp.le.s32.totalorder 1, %s21
      %p250 = scmp.lt.s32.totalorder %s21, 3
      %p251 = pnand %p249, %p250
      %p252 = pneg %p251
      // Predicated region
      $region9: #{tpu_custom_call.1} parent=5 // pred_check
        _
      $region10: #{tpu_custom_call.1} parent=5 // pred_check_branch
        %254 = sbr.rel (%p251) target = $region12
      $region11: #{tpu_custom_call.1} parent=5 // pred_region
        %s255 = ssub.s32 %s21, 1
        // Predicated region
        $region13: #{tpu_custom_call.1} parent=11 // pred_check
          %p256 = pneg %p68
        $region14: #{tpu_custom_call.1} parent=11 // pred_check_branch
          %258 = sbr.rel (%p256) target = $region16
        $region15: #{tpu_custom_call.1} parent=11 // pred_region
          _
        $region16: #{tpu_custom_call.1} parent=11 // pred_fallthru
          _
        // Predicated region
        $region17: #{tpu_custom_call.1} parent=11 // pred_check
          %p259 = pneg %p89
        $region18: #{tpu_custom_call.1} parent=11 // pred_check_branch
          %261 = sbr.rel (%p259) target = $region20
        $region19: #{tpu_custom_call.1} parent=11 // pred_region
          _
        $region20: #{tpu_custom_call.1} parent=11 // pred_fallthru
          _
        // Predicated region
        $region21: #{tpu_custom_call.1} parent=11 // pred_check
          %p262 = pneg %p110
        $region22: #{tpu_custom_call.1} parent=11 // pred_check_branch
          %264 = sbr.rel (%p262) target = $region24
        $region23: #{tpu_custom_call.1} parent=11 // pred_region
          _
        $region24: #{tpu_custom_call.1} parent=11 // pred_fallthru
          _
        // Predicated region
        $region25: #{tpu_custom_call.1} parent=11 // pred_check
          %p265 = pneg %p131
        $region26: #{tpu_custom_call.1} parent=11 // pred_check_branch
          %267 = sbr.rel (%p265) target = $region28
        $region27: #{tpu_custom_call.1} parent=11 // pred_region
          _
        $region28: #{tpu_custom_call.1} parent=11 // pred_fallthru
          _
        // Predicated region
        $region29: #{tpu_custom_call.1} parent=11 // pred_check
          %p268 = pneg %p152
        $region30: #{tpu_custom_call.1} parent=11 // pred_check_branch
          %270 = sbr.rel (%p268) target = $region32
        $region31: #{tpu_custom_call.1} parent=11 // pred_region
          %s272 = ssub.s32 16, 16
          %273 = vsyncadd [#allocation4], %s272
          %s275 = sshll.u32 %s5, 4
          %s276 = int_to_ptr.vmem [resolvable:$true] %s275
          %278 = dma.vmem_to_smem %s276, 16, [#allocation2], [#allocation4]
        $region32: #{tpu_custom_call.1} parent=11 // pred_fallthru
          _
        // Predicated region
        $region33: #{tpu_custom_call.1} parent=11 // pred_check
          %p279 = pneg %p173
        $region34: #{tpu_custom_call.1} parent=11 // pred_check_branch
          %281 = sbr.rel (%p279) target = $region36
        $region35: #{tpu_custom_call.1} parent=11 // pred_region
          %s283 = ssub.s32 16, 16
          %284 = vsyncadd [#allocation6], %s283
          %s286 = sshll.u32 %s6, 4
          %s287 = int_to_ptr.vmem [resolvable:$true] %s286
          %289 = dma.vmem_to_smem %s287, 16, [#allocation5], [#allocation6]
        $region36: #{tpu_custom_call.1} parent=11 // pred_fallthru
          _
        // Predicated region
        $region37: #{tpu_custom_call.1} parent=11 // pred_check
          %p290 = pneg %p194
        $region38: #{tpu_custom_call.1} parent=11 // pred_check_branch
          %292 = sbr.rel (%p290) target = $region40
        $region39: #{tpu_custom_call.1} parent=11 // pred_region
          %s294 = ssub.s32 16, 16
          %295 = vsyncadd [#allocation6], %s294
          %s297 = sshll.u32 %s7, 4
          %s298 = int_to_ptr.vmem [resolvable:$true] %s297
          %300 = dma.vmem_to_smem %s298, 16, [#allocation7], [#allocation6]
        $region40: #{tpu_custom_call.1} parent=11 // pred_fallthru
          _
        // Predicated region
        $region41: #{tpu_custom_call.1} parent=11 // pred_check
          %p301 = pneg %p215
        $region42: #{tpu_custom_call.1} parent=11 // pred_check_branch
          %303 = sbr.rel (%p301) target = $region44
        $region43: #{tpu_custom_call.1} parent=11 // pred_region
          %s305 = ssub.s32 16, 16
          %306 = vsyncadd [#allocation9], %s305
          %s308 = sshll.u32 %s8, 4
          %s309 = int_to_ptr.vmem [resolvable:$true] %s308
          %311 = dma.vmem_to_smem %s309, 16, [#allocation8], [#allocation9]
        $region44: #{tpu_custom_call.1} parent=11 // pred_fallthru
          _
      $region12: #{tpu_custom_call.1} parent=5 // pred_fallthru
        _
      %p312 = scmp.lt.s32.totalorder %s21, 2
      // Predicated region
      $region45: #{tpu_custom_call.1} parent=5 // pred_check
        %p313 = pneg %p312
      $region46: #{tpu_custom_call.1} parent=5 // pred_check_branch
        %315 = sbr.rel (%p313) target = $region48
      $region47: #{tpu_custom_call.1} parent=5 // pred_region
        // Predicated region
        $region49: #{tpu_custom_call.1} parent=47 // pred_check
          %p316 = pneg %p41
        $region50: #{tpu_custom_call.1} parent=47 // pred_check_branch
          %318 = sbr.rel (%p316) target = $region52
        $region51: #{tpu_custom_call.1} parent=47 // pred_region
          %p319 = scmp.lt.s32.totalorder %s21, 1
          %s320 = scalar_select %p319, %s21, 1
          %s321 = smul.addr %s320, 36
          %s322 = smul.addr %s321, 8
          %s323 = scalar_lea.vmem %s0, %s322
        $region52: #{tpu_custom_call.1} parent=47 // pred_fallthru
          _
      $region48: #{tpu_custom_call.1} parent=5 // pred_fallthru
        _
      %p324 = scmp.le.s32.totalorder 1, %s21
      %p325 = scmp.lt.s32.totalorder %s21, 3
      %p326 = pnand %p324, %p325
      %p327 = pneg %p326
      // Predicated region
      $region53: #{tpu_custom_call.1} parent=5 // pred_check
        _
      $region54: #{tpu_custom_call.1} parent=5 // pred_check_branch
        %329 = sbr.rel (%p326) target = $region56
      $region55: #{tpu_custom_call.1} parent=5 // pred_region
        %s330 = ssub.s32 %s21, 1
        // Predicated region
        $region57: #{tpu_custom_call.1} parent=55 // pred_check
          %p331 = pneg %p152
        $region58: #{tpu_custom_call.1} parent=55 // pred_check_branch
          %333 = sbr.rel (%p331) target = $region60
        $region59: #{tpu_custom_call.1} parent=55 // pred_region
          %334 = dma.done [#allocation4], 16
        $region60: #{tpu_custom_call.1} parent=55 // pred_fallthru
          _
        // Predicated region
        $region61: #{tpu_custom_call.1} parent=55 // pred_check
          %p335 = pneg %p173
        $region62: #{tpu_custom_call.1} parent=55 // pred_check_branch
          %337 = sbr.rel (%p335) target = $region64
        $region63: #{tpu_custom_call.1} parent=55 // pred_region
          %338 = dma.done [#allocation6], 16
        $region64: #{tpu_custom_call.1} parent=55 // pred_fallthru
          _
        // Predicated region
        $region65: #{tpu_custom_call.1} parent=55 // pred_check
          %p339 = pneg %p194
        $region66: #{tpu_custom_call.1} parent=55 // pred_check_branch
          %341 = sbr.rel (%p339) target = $region68
        $region67: #{tpu_custom_call.1} parent=55 // pred_region
          %342 = dma.done [#allocation6], 16
        $region68: #{tpu_custom_call.1} parent=55 // pred_fallthru
          _
        // Predicated region
        $region69: #{tpu_custom_call.1} parent=55 // pred_check
          %p343 = pneg %p215
        $region70: #{tpu_custom_call.1} parent=55 // pred_check_branch
          %345 = sbr.rel (%p343) target = $region72
        $region71: #{tpu_custom_call.1} parent=55 // pred_region
          %346 = dma.done [#allocation9], 16
        $region72: #{tpu_custom_call.1} parent=55 // pred_fallthru
          _
        %347 = sfence
        %p348 = scmp.lt.s32.totalorder %s26, 1
        %s349 = scalar_select %p348, %s26, 1
        %s350 = smul.addr %s349, 36
        %s351 = smul.addr %s350, 8
        %s352 = scalar_lea.vmem %s0, %s351
        %p353 = pneg %p47
        %p354 = pneg %p44
        %p355 = pneg %p68
        %p356 = pneg %p65
        %p357 = pneg %p89
        %p358 = pneg %p86
        %p359 = pneg %p110
        %p360 = pneg %p107
        %p361 = pneg %p131
        %p362 = pneg %p128
        %p363 = pneg %p152
        %p364 = pneg %p149
        %p365 = pneg %p173
        %p366 = pneg %p170
        %p367 = pneg %p194
        %p368 = pneg %p191
        %p369 = pneg %p215
        %p370 = pneg %p212
        %p371 = pneg %p241
        %p372 = pneg %p238
        %s373 = sand.u32 %s228, 1
        %s374 = scalar_lea.sflag [#allocation3], %s373
        %s375 = sand.u32 %s228, 1
        %s376 = smul.addr %s375, 256
        %s377 = scalar_lea.vmem [#allocation10], %s376
        %p378 = scmp.lt.s32.totalorder %s26, 1
        %s379 = scalar_select %p378, %s26, 1
        %s380 = smul.addr %s379, 36
        %s381 = smul.addr %s380, 8
        %s382 = scalar_lea.vmem %s0, %s381
        %v383 = vld [vmem:[%s382] sm:$0xff]
        %v384 = vld [vmem:[%s382 + $0x8] sm:$0xff]
        %v385 = vld [vmem:[%s382 + $0x10] sm:$0xff]
        %v386 = vld [vmem:[%s382 + $0x18] sm:$0xff]
        %v387 = vld [vmem:[%s382 + $0x20] sm:$0xff]
        %v388 = vld [vmem:[%s382 + $0x28] sm:$0xff]
        %v389 = vld [vmem:[%s382 + $0x30] sm:$0x3]
        %v390 = vld [vmem:[%s382 + $0x38] sm:$0x3]
        %v391 = vld [vmem:[%s382 + $0x40] sm:$0x3]
        %s392 = sld [smem:[#allocation2]]
        %v393 = vstv %s392
        %v394 = vmul.f32 %v383, %v393
        %v395 = vmul.f32 %v384, %v393
        %v396 = vmul.f32 %v385, %v393
        %v397 = vmul.f32 %v386, %v393
        %v398 = vmul.f32 %v387, %v393
        %v399 = vmul.f32 %v388, %v393
        %s400 = sld [smem:[#allocation2 + $0x24]]
        %v401 = vstv %s400
        %v402 = vmul.f32 %v383, %v401
        %v403 = vmul.f32 %v384, %v401
        %v404 = vmul.f32 %v385, %v401
        %v405 = vmul.f32 %v386, %v401
        %v406 = vmul.f32 %v387, %v401
        %v407 = vmul.f32 %v388, %v401
        %v408 = vmul.f32 %v389, %v401
        %v409 = vmul.f32 %v390, %v401
        %v410 = vmul.f32 %v391, %v401
        %vm420 = vcmask 1046528
        %v421 = vrot.slane %v402, 1
        %v422 = vrot.slane %v405, 1
        %v423 = vsel %vm420, %v421, %v422
        %v424 = vrot.slane %v403, 1
        %v425 = vrot.slane %v406, 1
        %v426 = vsel %vm420, %v424, %v425
        %v427 = vrot.slane %v404, 1
        %v428 = vrot.slane %v407, 1
        %v429 = vsel %vm420, %v427, %v428
        %v430 = vrot.slane %v408, 1
        %v431 = vsel %vm420, %v422, %v430
        %v432 = vrot.slane %v409, 1
        %v433 = vsel %vm420, %v425, %v432
        %v434 = vrot.slane %v410, 1
        %v435 = vsel %vm420, %v428, %v434
        %v442 = vadd.f32 %v394, %v423
        %v443 = vadd.f32 %v395, %v426
        %v444 = vadd.f32 %v396, %v429
        %v445 = vadd.f32 %v397, %v431
        %v446 = vadd.f32 %v398, %v433
        %v447 = vadd.f32 %v399, %v435
        %s448 = sld [smem:[#allocation2 + $0x48]]
        %v449 = vstv %s448
        %v450 = vmul.f32 %v383, %v449
        %v451 = vmul.f32 %v384, %v449
        %v452 = vmul.f32 %v385, %v449
        %v453 = vmul.f32 %v386, %v449
        %v454 = vmul.f32 %v387, %v449
        %v455 = vmul.f32 %v388, %v449
        %v456 = vmul.f32 %v389, %v449
        %v457 = vmul.f32 %v390, %v449
        %v458 = vmul.f32 %v391, %v449
        %vm468 = vcmask 1045504
        %v469 = vrot.slane %v450, 2
        %v470 = vrot.slane %v453, 2
        %v471 = vsel %vm468, %v469, %v470
        %v472 = vrot.slane %v451, 2
        %v473 = vrot.slane %v454, 2
        %v474 = vsel %vm468, %v472, %v473
        %v475 = vrot.slane %v452, 2
        %v476 = vrot.slane %v455, 2
        %v477 = vsel %vm468, %v475, %v476
        %v478 = vrot.slane %v456, 2
        %v479 = vsel %vm468, %v470, %v478
        %v480 = vrot.slane %v457, 2
        %v481 = vsel %vm468, %v473, %v480
        %v482 = vrot.slane %v458, 2
        %v483 = vsel %vm468, %v476, %v482
        %v490 = vadd.f32 %v442, %v471
        %v491 = vadd.f32 %v443, %v474
        %v492 = vadd.f32 %v444, %v477
        %v493 = vadd.f32 %v445, %v479
        %v494 = vadd.f32 %v446, %v481
        %v495 = vadd.f32 %v447, %v483
        %s496 = sld [smem:[#allocation2 + $0x4]]
        %v497 = vstv %s496
        %v498 = vmul.f32 %v383, %v497
        %v499 = vmul.f32 %v384, %v497
        %v500 = vmul.f32 %v385, %v497
        %v501 = vmul.f32 %v386, %v497
        %v502 = vmul.f32 %v387, %v497
        %v503 = vmul.f32 %v388, %v497
        %510 = vrot.lane.b32.xlu0 %v498, 127
        %v511 = vpop.permute.xlu0 %510
        %512 = vrot.lane.b32.xlu0 %v499, 127
        %v513 = vpop.permute.xlu0 %512
        %514 = vrot.lane.b32.xlu0 %v500, 127
        %v515 = vpop.permute.xlu0 %514
        %516 = vrot.lane.b32.xlu0 %v501, 127
        %v517 = vpop.permute.xlu0 %516
        %518 = vrot.lane.b32.xlu0 %v502, 127
        %v519 = vpop.permute.xlu0 %518
        %520 = vrot.lane.b32.xlu0 %v503, 127
        %v521 = vpop.permute.xlu0 %520
        %vm522 = vcmask 1039360
        %v523 = vsel %vm522, %v511, %v513
        %v524 = vsel %vm522, %v513, %v515
        %v525 = vsel %vm522, %v517, %v519
        %v526 = vsel %vm522, %v519, %v521
        %v533 = vadd.f32 %v490, %v523
        %v534 = vadd.f32 %v491, %v524
        %v535 = vadd.f32 %v492, %v515
        %v536 = vadd.f32 %v493, %v525
        %v537 = vadd.f32 %v494, %v526
        %v538 = vadd.f32 %v495, %v521
        %s539 = sld [smem:[#allocation2 + $0x28]]
        %v540 = vstv %s539
        %v541 = vmul.f32 %v383, %v540
        %v542 = vmul.f32 %v384, %v540
        %v543 = vmul.f32 %v385, %v540
        %v544 = vmul.f32 %v386, %v540
        %v545 = vmul.f32 %v387, %v540
        %v546 = vmul.f32 %v388, %v540
        %v547 = vmul.f32 %v389, %v540
        %v548 = vmul.f32 %v390, %v540
        %v549 = vmul.f32 %v391, %v540
        %v559 = vrot.slane %v541, 1
        %v560 = vrot.slane %v544, 1
        %v561 = vsel %vm420, %v559, %v560
        %v562 = vrot.slane %v542, 1
        %v563 = vrot.slane %v545, 1
        %v564 = vsel %vm420, %v562, %v563
        %v565 = vrot.slane %v543, 1
        %v566 = vrot.slane %v546, 1
        %v567 = vsel %vm420, %v565, %v566
        %v568 = vrot.slane %v547, 1
        %v569 = vsel %vm420, %v560, %v568
        %v570 = vrot.slane %v548, 1
        %v571 = vsel %vm420, %v563, %v570
        %v572 = vrot.slane %v549, 1
        %v573 = vsel %vm420, %v566, %v572
        %574 = vrot.lane.b32.xlu0 %v561, 127
        %v575 = vpop.permute.xlu0 %574
        %576 = vrot.lane.b32.xlu0 %v564, 127
        %v577 = vpop.permute.xlu0 %576
        %578 = vrot.lane.b32.xlu0 %v567, 127
        %v579 = vpop.permute.xlu0 %578
        %580 = vrot.lane.b32.xlu0 %v569, 127
        %v581 = vpop.permute.xlu0 %580
        %582 = vrot.lane.b32.xlu0 %v571, 127
        %v583 = vpop.permute.xlu0 %582
        %584 = vrot.lane.b32.xlu0 %v573, 127
        %v585 = vpop.permute.xlu0 %584
        %v586 = vsel %vm522, %v575, %v577
        %v587 = vsel %vm522, %v577, %v579
        %v588 = vsel %vm522, %v581, %v583
        %v589 = vsel %vm522, %v583, %v585
        %v596 = vadd.f32 %v533, %v586
        %v597 = vadd.f32 %v534, %v587
        %v598 = vadd.f32 %v535, %v579
        %v599 = vadd.f32 %v536, %v588
        %v600 = vadd.f32 %v537, %v589
        %v601 = vadd.f32 %v538, %v585
        %s602 = sld [smem:[#allocation2 + $0x4c]]
        %v603 = vstv %s602
        %v604 = vmul.f32 %v383, %v603
        %v605 = vmul.f32 %v384, %v603
        %v606 = vmul.f32 %v385, %v603
        %v607 = vmul.f32 %v386, %v603
        %v608 = vmul.f32 %v387, %v603
        %v609 = vmul.f32 %v388, %v603
        %v610 = vmul.f32 %v389, %v603
        %v611 = vmul.f32 %v390, %v603
        %v612 = vmul.f32 %v391, %v603
        %v622 = vrot.slane %v604, 2
        %v623 = vrot.slane %v607, 2
        %v624 = vsel %vm468, %v622, %v623
        %v625 = vrot.slane %v605, 2
        %v626 = vrot.slane %v608, 2
        %v627 = vsel %vm468, %v625, %v626
        %v628 = vrot.slane %v606, 2
        %v629 = vrot.slane %v609, 2
        %v630 = vsel %vm468, %v628, %v629
        %v631 = vrot.slane %v610, 2
        %v632 = vsel %vm468, %v623, %v631
        %v633 = vrot.slane %v611, 2
        %v634 = vsel %vm468, %v626, %v633
        %v635 = vrot.slane %v612, 2
        %v636 = vsel %vm468, %v629, %v635
        %637 = vrot.lane.b32.xlu0 %v624, 127
        %v638 = vpop.permute.xlu0 %637
        %639 = vrot.lane.b32.xlu0 %v627, 127
        %v640 = vpop.permute.xlu0 %639
        %641 = vrot.lane.b32.xlu0 %v630, 127
        %v642 = vpop.permute.xlu0 %641
        %643 = vrot.lane.b32.xlu0 %v632, 127
        %v644 = vpop.permute.xlu0 %643
        %645 = vrot.lane.b32.xlu0 %v634, 127
        %v646 = vpop.permute.xlu0 %645
        %647 = vrot.lane.b32.xlu0 %v636, 127
        %v648 = vpop.permute.xlu0 %647
        %v649 = vsel %vm522, %v638, %v640
        %v650 = vsel %vm522, %v640, %v642
        %v651 = vsel %vm522, %v644, %v646
        %v652 = vsel %vm522, %v646, %v648
        %v659 = vadd.f32 %v596, %v649
        %v660 = vadd.f32 %v597, %v650
        %v661 = vadd.f32 %v598, %v642
        %v662 = vadd.f32 %v599, %v651
        %v663 = vadd.f32 %v600, %v652
        %v664 = vadd.f32 %v601, %v648
        %s665 = sld [smem:[#allocation2 + $0x8]]
        %v666 = vstv %s665
        %v667 = vmul.f32 %v383, %v666
        %v668 = vmul.f32 %v384, %v666
        %v669 = vmul.f32 %v385, %v666
        %v670 = vmul.f32 %v386, %v666
        %v671 = vmul.f32 %v387, %v666
        %v672 = vmul.f32 %v388, %v666
        %679 = vrot.lane.b32.xlu0 %v667, 126
        %v680 = vpop.permute.xlu0 %679
        %681 = vrot.lane.b32.xlu0 %v668, 126
        %v682 = vpop.permute.xlu0 %681
        %683 = vrot.lane.b32.xlu0 %v669, 126
        %v684 = vpop.permute.xlu0 %683
        %685 = vrot.lane.b32.xlu0 %v670, 126
        %v686 = vpop.permute.xlu0 %685
        %687 = vrot.lane.b32.xlu0 %v671, 126
        %v688 = vpop.permute.xlu0 %687
        %689 = vrot.lane.b32.xlu0 %v672, 126
        %v690 = vpop.permute.xlu0 %689
        %vm691 = vcmask 1031168
        %v692 = vsel %vm691, %v680, %v682
        %v693 = vsel %vm691, %v682, %v684
        %v694 = vsel %vm691, %v686, %v688
        %v695 = vsel %vm691, %v688, %v690
        %v702 = vadd.f32 %v659, %v692
        %v703 = vadd.f32 %v660, %v693
        %v704 = vadd.f32 %v661, %v684
        %v705 = vadd.f32 %v662, %v694
        %v706 = vadd.f32 %v663, %v695
        %v707 = vadd.f32 %v664, %v690
        %s708 = sld [smem:[#allocation2 + $0x2c]]
        %v709 = vstv %s708
        %v710 = vmul.f32 %v383, %v709
        %v711 = vmul.f32 %v384, %v709
        %v712 = vmul.f32 %v385, %v709
        %v713 = vmul.f32 %v386, %v709
        %v714 = vmul.f32 %v387, %v709
        %v715 = vmul.f32 %v388, %v709
        %v716 = vmul.f32 %v389, %v709
        %v717 = vmul.f32 %v390, %v709
        %v718 = vmul.f32 %v391, %v709
        %v728 = vrot.slane %v710, 1
        %v729 = vrot.slane %v713, 1
        %v730 = vsel %vm420, %v728, %v729
        %v731 = vrot.slane %v711, 1
        %v732 = vrot.slane %v714, 1
        %v733 = vsel %vm420, %v731, %v732
        %v734 = vrot.slane %v712, 1
        %v735 = vrot.slane %v715, 1
        %v736 = vsel %vm420, %v734, %v735
        %v737 = vrot.slane %v716, 1
        %v738 = vsel %vm420, %v729, %v737
        %v739 = vrot.slane %v717, 1
        %v740 = vsel %vm420, %v732, %v739
        %v741 = vrot.slane %v718, 1
        %v742 = vsel %vm420, %v735, %v741
        %743 = vrot.lane.b32.xlu0 %v730, 126
        %v744 = vpop.permute.xlu0 %743
        %745 = vrot.lane.b32.xlu0 %v733, 126
        %v746 = vpop.permute.xlu0 %745
        %747 = vrot.lane.b32.xlu0 %v736, 126
        %v748 = vpop.permute.xlu0 %747
        %749 = vrot.lane.b32.xlu0 %v738, 126
        %v750 = vpop.permute.xlu0 %749
        %751 = vrot.lane.b32.xlu0 %v740, 126
        %v752 = vpop.permute.xlu0 %751
        %753 = vrot.lane.b32.xlu0 %v742, 126
        %v754 = vpop.permute.xlu0 %753
        %v755 = vsel %vm691, %v744, %v746
        %v756 = vsel %vm691, %v746, %v748
        %v757 = vsel %vm691, %v750, %v752
        %v758 = vsel %vm691, %v752, %v754
        %v765 = vadd.f32 %v702, %v755
        %v766 = vadd.f32 %v703, %v756
        %v767 = vadd.f32 %v704, %v748
        %v768 = vadd.f32 %v705, %v757
        %v769 = vadd.f32 %v706, %v758
        %v770 = vadd.f32 %v707, %v754
        %s771 = sld [smem:[#allocation2 + $0x50]]
        %v772 = vstv %s771
        %v773 = vmul.f32 %v383, %v772
        %v774 = vmul.f32 %v384, %v772
        %v775 = vmul.f32 %v385, %v772
        %v776 = vmul.f32 %v386, %v772
        %v777 = vmul.f32 %v387, %v772
        %v778 = vmul.f32 %v388, %v772
        %v779 = vmul.f32 %v389, %v772
        %v780 = vmul.f32 %v390, %v772
        %v781 = vmul.f32 %v391, %v772
        %v791 = vrot.slane %v773, 2
        %v792 = vrot.slane %v776, 2
        %v793 = vsel %vm468, %v791, %v792
        %v794 = vrot.slane %v774, 2
        %v795 = vrot.slane %v777, 2
        %v796 = vsel %vm468, %v794, %v795
        %v797 = vrot.slane %v775, 2
        %v798 = vrot.slane %v778, 2
        %v799 = vsel %vm468, %v797, %v798
        %v800 = vrot.slane %v779, 2
        %v801 = vsel %vm468, %v792, %v800
        %v802 = vrot.slane %v780, 2
        %v803 = vsel %vm468, %v795, %v802
        %v804 = vrot.slane %v781, 2
        %v805 = vsel %vm468, %v798, %v804
        %806 = vrot.lane.b32.xlu0 %v793, 126
        %v807 = vpop.permute.xlu0 %806
        %808 = vrot.lane.b32.xlu0 %v796, 126
        %v809 = vpop.permute.xlu0 %808
        %810 = vrot.lane.b32.xlu0 %v799, 126
        %v811 = vpop.permute.xlu0 %810
        %812 = vrot.lane.b32.xlu0 %v801, 126
        %v813 = vpop.permute.xlu0 %812
        %814 = vrot.lane.b32.xlu0 %v803, 126
        %v815 = vpop.permute.xlu0 %814
        %816 = vrot.lane.b32.xlu0 %v805, 126
        %v817 = vpop.permute.xlu0 %816
        %v818 = vsel %vm691, %v807, %v809
        %v819 = vsel %vm691, %v809, %v811
        %v820 = vsel %vm691, %v813, %v815
        %v821 = vsel %vm691, %v815, %v817
        %v828 = vadd.f32 %v765, %v818
        %v829 = vadd.f32 %v766, %v819
        %v830 = vadd.f32 %v767, %v811
        %v831 = vadd.f32 %v768, %v820
        %v832 = vadd.f32 %v769, %v821
        %v833 = vadd.f32 %v770, %v817
        %s834 = sld [smem:[#allocation2 + $0xc]]
        %v835 = vstv %s834
        %v836 = vmul.f32 %v383, %v835
        %v837 = vmul.f32 %v384, %v835
        %v838 = vmul.f32 %v385, %v835
        %v839 = vmul.f32 %v386, %v835
        %v840 = vmul.f32 %v387, %v835
        %v841 = vmul.f32 %v388, %v835
        %848 = vrot.lane.b32.xlu0 %v836, 110
        %v849 = vpop.permute.xlu0 %848
        %850 = vrot.lane.b32.xlu0 %v837, 110
        %v851 = vpop.permute.xlu0 %850
        %852 = vrot.lane.b32.xlu0 %v838, 110
        %v853 = vpop.permute.xlu0 %852
        %854 = vrot.lane.b32.xlu0 %v839, 110
        %v855 = vpop.permute.xlu0 %854
        %856 = vrot.lane.b32.xlu0 %v840, 110
        %v857 = vpop.permute.xlu0 %856
        %858 = vrot.lane.b32.xlu0 %v841, 110
        %v859 = vpop.permute.xlu0 %858
        %vm860 = vcmask 900096
        %v861 = vsel %vm860, %v849, %v851
        %v862 = vsel %vm860, %v851, %v853
        %v863 = vsel %vm860, %v855, %v857
        %v864 = vsel %vm860, %v857, %v859
        %v871 = vadd.f32 %v828, %v861
        %v872 = vadd.f32 %v829, %v862
        %v873 = vadd.f32 %v830, %v853
        %v874 = vadd.f32 %v831, %v863
        %v875 = vadd.f32 %v832, %v864
        %v876 = vadd.f32 %v833, %v859
        %s877 = sld [smem:[#allocation2 + $0x30]]
        %v878 = vstv %s877
        %v879 = vmul.f32 %v383, %v878
        %v880 = vmul.f32 %v384, %v878
        %v881 = vmul.f32 %v385, %v878
        %v882 = vmul.f32 %v386, %v878
        %v883 = vmul.f32 %v387, %v878
        %v884 = vmul.f32 %v388, %v878
        %v885 = vmul.f32 %v389, %v878
        %v886 = vmul.f32 %v390, %v878
        %v887 = vmul.f32 %v391, %v878
        %v897 = vrot.slane %v879, 1
        %v898 = vrot.slane %v882, 1
        %v899 = vsel %vm420, %v897, %v898
        %v900 = vrot.slane %v880, 1
        %v901 = vrot.slane %v883, 1
        %v902 = vsel %vm420, %v900, %v901
        %v903 = vrot.slane %v881, 1
        %v904 = vrot.slane %v884, 1
        %v905 = vsel %vm420, %v903, %v904
        %v906 = vrot.slane %v885, 1
        %v907 = vsel %vm420, %v898, %v906
        %v908 = vrot.slane %v886, 1
        %v909 = vsel %vm420, %v901, %v908
        %v910 = vrot.slane %v887, 1
        %v911 = vsel %vm420, %v904, %v910
        %912 = vrot.lane.b32.xlu0 %v899, 110
        %v913 = vpop.permute.xlu0 %912
        %914 = vrot.lane.b32.xlu0 %v902, 110
        %v915 = vpop.permute.xlu0 %914
        %916 = vrot.lane.b32.xlu0 %v905, 110
        %v917 = vpop.permute.xlu0 %916
        %918 = vrot.lane.b32.xlu0 %v907, 110
        %v919 = vpop.permute.xlu0 %918
        %920 = vrot.lane.b32.xlu0 %v909, 110
        %v921 = vpop.permute.xlu0 %920
        %922 = vrot.lane.b32.xlu0 %v911, 110
        %v923 = vpop.permute.xlu0 %922
        %v924 = vsel %vm860, %v913, %v915
        %v925 = vsel %vm860, %v915, %v917
        %v926 = vsel %vm860, %v919, %v921
        %v927 = vsel %vm860, %v921, %v923
        %v934 = vadd.f32 %v871, %v924
        %v935 = vadd.f32 %v872, %v925
        %v936 = vadd.f32 %v873, %v917
        %v937 = vadd.f32 %v874, %v926
        %v938 = vadd.f32 %v875, %v927
        %v939 = vadd.f32 %v876, %v923
        %s940 = sld [smem:[#allocation2 + $0x54]]
        %v941 = vstv %s940
        %v942 = vmul.f32 %v383, %v941
        %v943 = vmul.f32 %v384, %v941
        %v944 = vmul.f32 %v385, %v941
        %v945 = vmul.f32 %v386, %v941
        %v946 = vmul.f32 %v387, %v941
        %v947 = vmul.f32 %v388, %v941
        %v948 = vmul.f32 %v389, %v941
        %v949 = vmul.f32 %v390, %v941
        %v950 = vmul.f32 %v391, %v941
        %v960 = vrot.slane %v942, 2
        %v961 = vrot.slane %v945, 2
        %v962 = vsel %vm468, %v960, %v961
        %v963 = vrot.slane %v943, 2
        %v964 = vrot.slane %v946, 2
        %v965 = vsel %vm468, %v963, %v964
        %v966 = vrot.slane %v944, 2
        %v967 = vrot.slane %v947, 2
        %v968 = vsel %vm468, %v966, %v967
        %v969 = vrot.slane %v948, 2
        %v970 = vsel %vm468, %v961, %v969
        %v971 = vrot.slane %v949, 2
        %v972 = vsel %vm468, %v964, %v971
        %v973 = vrot.slane %v950, 2
        %v974 = vsel %vm468, %v967, %v973
        %975 = vrot.lane.b32.xlu0 %v962, 110
        %v976 = vpop.permute.xlu0 %975
        %977 = vrot.lane.b32.xlu0 %v965, 110
        %v978 = vpop.permute.xlu0 %977
        %979 = vrot.lane.b32.xlu0 %v968, 110
        %v980 = vpop.permute.xlu0 %979
        %981 = vrot.lane.b32.xlu0 %v970, 110
        %v982 = vpop.permute.xlu0 %981
        %983 = vrot.lane.b32.xlu0 %v972, 110
        %v984 = vpop.permute.xlu0 %983
        %985 = vrot.lane.b32.xlu0 %v974, 110
        %v986 = vpop.permute.xlu0 %985
        %v987 = vsel %vm860, %v976, %v978
        %v988 = vsel %vm860, %v978, %v980
        %v989 = vsel %vm860, %v982, %v984
        %v990 = vsel %vm860, %v984, %v986
        %v997 = vadd.f32 %v934, %v987
        %v998 = vadd.f32 %v935, %v988
        %v999 = vadd.f32 %v936, %v980
        %v1000 = vadd.f32 %v937, %v989
        %v1001 = vadd.f32 %v938, %v990
        %v1002 = vadd.f32 %v939, %v986
        %s1003 = sld [smem:[#allocation2 + $0x10]]
        %v1004 = vstv %s1003
        %v1005 = vmul.f32 %v383, %v1004
        %v1006 = vmul.f32 %v384, %v1004
        %v1007 = vmul.f32 %v385, %v1004
        %v1008 = vmul.f32 %v386, %v1004
        %v1009 = vmul.f32 %v387, %v1004
        %v1010 = vmul.f32 %v388, %v1004
        %1017 = vrot.lane.b32.xlu0 %v1005, 109
        %v1018 = vpop.permute.xlu0 %1017
        %1019 = vrot.lane.b32.xlu0 %v1006, 109
        %v1020 = vpop.permute.xlu0 %1019
        %1021 = vrot.lane.b32.xlu0 %v1007, 109
        %v1022 = vpop.permute.xlu0 %1021
        %1023 = vrot.lane.b32.xlu0 %v1008, 109
        %v1024 = vpop.permute.xlu0 %1023
        %1025 = vrot.lane.b32.xlu0 %v1009, 109
        %v1026 = vpop.permute.xlu0 %1025
        %1027 = vrot.lane.b32.xlu0 %v1010, 109
        %v1028 = vpop.permute.xlu0 %1027
        %vm1029 = vcmask 891904
        %v1030 = vsel %vm1029, %v1018, %v1020
        %v1031 = vsel %vm1029, %v1020, %v1022
        %v1032 = vsel %vm1029, %v1024, %v1026
        %v1033 = vsel %vm1029, %v1026, %v1028
        %v1040 = vadd.f32 %v997, %v1030
        %v1041 = vadd.f32 %v998, %v1031
        %v1042 = vadd.f32 %v999, %v1022
        %v1043 = vadd.f32 %v1000, %v1032
        %v1044 = vadd.f32 %v1001, %v1033
        %v1045 = vadd.f32 %v1002, %v1028
        %s1046 = sld [smem:[#allocation2 + $0x34]]
        %v1047 = vstv %s1046
        %v1048 = vmul.f32 %v383, %v1047
        %v1049 = vmul.f32 %v384, %v1047
        %v1050 = vmul.f32 %v385, %v1047
        %v1051 = vmul.f32 %v386, %v1047
        %v1052 = vmul.f32 %v387, %v1047
        %v1053 = vmul.f32 %v388, %v1047
        %v1054 = vmul.f32 %v389, %v1047
        %v1055 = vmul.f32 %v390, %v1047
        %v1056 = vmul.f32 %v391, %v1047
        %v1066 = vrot.slane %v1048, 1
        %v1067 = vrot.slane %v1051, 1
        %v1068 = vsel %vm420, %v1066, %v1067
        %v1069 = vrot.slane %v1049, 1
        %v1070 = vrot.slane %v1052, 1
        %v1071 = vsel %vm420, %v1069, %v1070
        %v1072 = vrot.slane %v1050, 1
        %v1073 = vrot.slane %v1053, 1
        %v1074 = vsel %vm420, %v1072, %v1073
        %v1075 = vrot.slane %v1054, 1
        %v1076 = vsel %vm420, %v1067, %v1075
        %v1077 = vrot.slane %v1055, 1
        %v1078 = vsel %vm420, %v1070, %v1077
        %v1079 = vrot.slane %v1056, 1
        %v1080 = vsel %vm420, %v1073, %v1079
        %1081 = vrot.lane.b32.xlu0 %v1068, 109
        %v1082 = vpop.permute.xlu0 %1081
        %1083 = vrot.lane.b32.xlu0 %v1071, 109
        %v1084 = vpop.permute.xlu0 %1083
        %1085 = vrot.lane.b32.xlu0 %v1074, 109
        %v1086 = vpop.permute.xlu0 %1085
        %1087 = vrot.lane.b32.xlu0 %v1076, 109
        %v1088 = vpop.permute.xlu0 %1087
        %1089 = vrot.lane.b32.xlu0 %v1078, 109
        %v1090 = vpop.permute.xlu0 %1089
        %1091 = vrot.lane.b32.xlu0 %v1080, 109
        %v1092 = vpop.permute.xlu0 %1091
        %v1093 = vsel %vm1029, %v1082, %v1084
        %v1094 = vsel %vm1029, %v1084, %v1086
        %v1095 = vsel %vm1029, %v1088, %v1090
        %v1096 = vsel %vm1029, %v1090, %v1092
        %v1103 = vadd.f32 %v1040, %v1093
        %v1104 = vadd.f32 %v1041, %v1094
        %v1105 = vadd.f32 %v1042, %v1086
        %v1106 = vadd.f32 %v1043, %v1095
        %v1107 = vadd.f32 %v1044, %v1096
        %v1108 = vadd.f32 %v1045, %v1092
        %s1109 = sld [smem:[#allocation2 + $0x58]]
        %v1110 = vstv %s1109
        %v1111 = vmul.f32 %v383, %v1110
        %v1112 = vmul.f32 %v384, %v1110
        %v1113 = vmul.f32 %v385, %v1110
        %v1114 = vmul.f32 %v386, %v1110
        %v1115 = vmul.f32 %v387, %v1110
        %v1116 = vmul.f32 %v388, %v1110
        %v1117 = vmul.f32 %v389, %v1110
        %v1118 = vmul.f32 %v390, %v1110
        %v1119 = vmul.f32 %v391, %v1110
        %v1129 = vrot.slane %v1111, 2
        %v1130 = vrot.slane %v1114, 2
        %v1131 = vsel %vm468, %v1129, %v1130
        %v1132 = vrot.slane %v1112, 2
        %v1133 = vrot.slane %v1115, 2
        %v1134 = vsel %vm468, %v1132, %v1133
        %v1135 = vrot.slane %v1113, 2
        %v1136 = vrot.slane %v1116, 2
        %v1137 = vsel %vm468, %v1135, %v1136
        %v1138 = vrot.slane %v1117, 2
        %v1139 = vsel %vm468, %v1130, %v1138
        %v1140 = vrot.slane %v1118, 2
        %v1141 = vsel %vm468, %v1133, %v1140
        %v1142 = vrot.slane %v1119, 2
        %v1143 = vsel %vm468, %v1136, %v1142
        %1144 = vrot.lane.b32.xlu0 %v1131, 109
        %v1145 = vpop.permute.xlu0 %1144
        %1146 = vrot.lane.b32.xlu0 %v1134, 109
        %v1147 = vpop.permute.xlu0 %1146
        %1148 = vrot.lane.b32.xlu0 %v1137, 109
        %v1149 = vpop.permute.xlu0 %1148
        %1150 = vrot.lane.b32.xlu0 %v1139, 109
        %v1151 = vpop.permute.xlu0 %1150
        %1152 = vrot.lane.b32.xlu0 %v1141, 109
        %v1153 = vpop.permute.xlu0 %1152
        %1154 = vrot.lane.b32.xlu0 %v1143, 109
        %v1155 = vpop.permute.xlu0 %1154
        %v1156 = vsel %vm1029, %v1145, %v1147
        %v1157 = vsel %vm1029, %v1147, %v1149
        %v1158 = vsel %vm1029, %v1151, %v1153
        %v1159 = vsel %vm1029, %v1153, %v1155
        %v1166 = vadd.f32 %v1103, %v1156
        %v1167 = vadd.f32 %v1104, %v1157
        %v1168 = vadd.f32 %v1105, %v1149
        %v1169 = vadd.f32 %v1106, %v1158
        %v1170 = vadd.f32 %v1107, %v1159
        %v1171 = vadd.f32 %v1108, %v1155
        %s1172 = sld [smem:[#allocation2 + $0x14]]
        %v1173 = vstv %s1172
        %v1174 = vmul.f32 %v383, %v1173
        %v1175 = vmul.f32 %v384, %v1173
        %v1176 = vmul.f32 %v385, %v1173
        %v1177 = vmul.f32 %v386, %v1173
        %v1178 = vmul.f32 %v387, %v1173
        %v1179 = vmul.f32 %v388, %v1173
        %1186 = vrot.lane.b32.xlu0 %v1174, 108
        %v1187 = vpop.permute.xlu0 %1186
        %1188 = vrot.lane.b32.xlu0 %v1175, 108
        %v1189 = vpop.permute.xlu0 %1188
        %1190 = vrot.lane.b32.xlu0 %v1176, 108
        %v1191 = vpop.permute.xlu0 %1190
        %1192 = vrot.lane.b32.xlu0 %v1177, 108
        %v1193 = vpop.permute.xlu0 %1192
        %1194 = vrot.lane.b32.xlu0 %v1178, 108
        %v1195 = vpop.permute.xlu0 %1194
        %1196 = vrot.lane.b32.xlu0 %v1179, 108
        %v1197 = vpop.permute.xlu0 %1196
        %vm1198 = vcmask 883712
        %v1199 = vsel %vm1198, %v1187, %v1189
        %v1200 = vsel %vm1198, %v1189, %v1191
        %v1201 = vsel %vm1198, %v1193, %v1195
        %v1202 = vsel %vm1198, %v1195, %v1197
        %v1209 = vadd.f32 %v1166, %v1199
        %v1210 = vadd.f32 %v1167, %v1200
        %v1211 = vadd.f32 %v1168, %v1191
        %v1212 = vadd.f32 %v1169, %v1201
        %v1213 = vadd.f32 %v1170, %v1202
        %v1214 = vadd.f32 %v1171, %v1197
        %s1215 = sld [smem:[#allocation2 + $0x38]]
        %v1216 = vstv %s1215
        %v1217 = vmul.f32 %v383, %v1216
        %v1218 = vmul.f32 %v384, %v1216
        %v1219 = vmul.f32 %v385, %v1216
        %v1220 = vmul.f32 %v386, %v1216
        %v1221 = vmul.f32 %v387, %v1216
        %v1222 = vmul.f32 %v388, %v1216
        %v1223 = vmul.f32 %v389, %v1216
        %v1224 = vmul.f32 %v390, %v1216
        %v1225 = vmul.f32 %v391, %v1216
        %v1235 = vrot.slane %v1217, 1
        %v1236 = vrot.slane %v1220, 1
        %v1237 = vsel %vm420, %v1235, %v1236
        %v1238 = vrot.slane %v1218, 1
        %v1239 = vrot.slane %v1221, 1
        %v1240 = vsel %vm420, %v1238, %v1239
        %v1241 = vrot.slane %v1219, 1
        %v1242 = vrot.slane %v1222, 1
        %v1243 = vsel %vm420, %v1241, %v1242
        %v1244 = vrot.slane %v1223, 1
        %v1245 = vsel %vm420, %v1236, %v1244
        %v1246 = vrot.slane %v1224, 1
        %v1247 = vsel %vm420, %v1239, %v1246
        %v1248 = vrot.slane %v1225, 1
        %v1249 = vsel %vm420, %v1242, %v1248
        %1250 = vrot.lane.b32.xlu0 %v1237, 108
        %v1251 = vpop.permute.xlu0 %1250
        %1252 = vrot.lane.b32.xlu0 %v1240, 108
        %v1253 = vpop.permute.xlu0 %1252
        %1254 = vrot.lane.b32.xlu0 %v1243, 108
        %v1255 = vpop.permute.xlu0 %1254
        %1256 = vrot.lane.b32.xlu0 %v1245, 108
        %v1257 = vpop.permute.xlu0 %1256
        %1258 = vrot.lane.b32.xlu0 %v1247, 108
        %v1259 = vpop.permute.xlu0 %1258
        %1260 = vrot.lane.b32.xlu0 %v1249, 108
        %v1261 = vpop.permute.xlu0 %1260
        %v1262 = vsel %vm1198, %v1251, %v1253
        %v1263 = vsel %vm1198, %v1253, %v1255
        %v1264 = vsel %vm1198, %v1257, %v1259
        %v1265 = vsel %vm1198, %v1259, %v1261
        %v1272 = vadd.f32 %v1209, %v1262
        %v1273 = vadd.f32 %v1210, %v1263
        %v1274 = vadd.f32 %v1211, %v1255
        %v1275 = vadd.f32 %v1212, %v1264
        %v1276 = vadd.f32 %v1213, %v1265
        %v1277 = vadd.f32 %v1214, %v1261
        %s1278 = sld [smem:[#allocation2 + $0x5c]]
        %v1279 = vstv %s1278
        %v1280 = vmul.f32 %v383, %v1279
        %v1281 = vmul.f32 %v384, %v1279
        %v1282 = vmul.f32 %v385, %v1279
        %v1283 = vmul.f32 %v386, %v1279
        %v1284 = vmul.f32 %v387, %v1279
        %v1285 = vmul.f32 %v388, %v1279
        %v1286 = vmul.f32 %v389, %v1279
        %v1287 = vmul.f32 %v390, %v1279
        %v1288 = vmul.f32 %v391, %v1279
        %v1298 = vrot.slane %v1280, 2
        %v1299 = vrot.slane %v1283, 2
        %v1300 = vsel %vm468, %v1298, %v1299
        %v1301 = vrot.slane %v1281, 2
        %v1302 = vrot.slane %v1284, 2
        %v1303 = vsel %vm468, %v1301, %v1302
        %v1304 = vrot.slane %v1282, 2
        %v1305 = vrot.slane %v1285, 2
        %v1306 = vsel %vm468, %v1304, %v1305
        %v1307 = vrot.slane %v1286, 2
        %v1308 = vsel %vm468, %v1299, %v1307
        %v1309 = vrot.slane %v1287, 2
        %v1310 = vsel %vm468, %v1302, %v1309
        %v1311 = vrot.slane %v1288, 2
        %v1312 = vsel %vm468, %v1305, %v1311
        %1313 = vrot.lane.b32.xlu0 %v1300, 108
        %v1314 = vpop.permute.xlu0 %1313
        %1315 = vrot.lane.b32.xlu0 %v1303, 108
        %v1316 = vpop.permute.xlu0 %1315
        %1317 = vrot.lane.b32.xlu0 %v1306, 108
        %v1318 = vpop.permute.xlu0 %1317
        %1319 = vrot.lane.b32.xlu0 %v1308, 108
        %v1320 = vpop.permute.xlu0 %1319
        %1321 = vrot.lane.b32.xlu0 %v1310, 108
        %v1322 = vpop.permute.xlu0 %1321
        %1323 = vrot.lane.b32.xlu0 %v1312, 108
        %v1324 = vpop.permute.xlu0 %1323
        %v1325 = vsel %vm1198, %v1314, %v1316
        %v1326 = vsel %vm1198, %v1316, %v1318
        %v1327 = vsel %vm1198, %v1320, %v1322
        %v1328 = vsel %vm1198, %v1322, %v1324
        %v1335 = vadd.f32 %v1272, %v1325
        %v1336 = vadd.f32 %v1273, %v1326
        %v1337 = vadd.f32 %v1274, %v1318
        %v1338 = vadd.f32 %v1275, %v1327
        %v1339 = vadd.f32 %v1276, %v1328
        %v1340 = vadd.f32 %v1277, %v1324
        %s1341 = sld [smem:[#allocation2 + $0x18]]
        %v1342 = vstv %s1341
        %v1343 = vmul.f32 %v383, %v1342
        %v1344 = vmul.f32 %v384, %v1342
        %v1345 = vmul.f32 %v385, %v1342
        %v1346 = vmul.f32 %v386, %v1342
        %v1347 = vmul.f32 %v387, %v1342
        %v1348 = vmul.f32 %v388, %v1342
        %1355 = vrot.lane.b32.xlu0 %v1343, 92
        %v1356 = vpop.permute.xlu0 %1355
        %1357 = vrot.lane.b32.xlu0 %v1344, 92
        %v1358 = vpop.permute.xlu0 %1357
        %1359 = vrot.lane.b32.xlu0 %v1345, 92
        %v1360 = vpop.permute.xlu0 %1359
        %1361 = vrot.lane.b32.xlu0 %v1346, 92
        %v1362 = vpop.permute.xlu0 %1361
        %1363 = vrot.lane.b32.xlu0 %v1347, 92
        %v1364 = vpop.permute.xlu0 %1363
        %1365 = vrot.lane.b32.xlu0 %v1348, 92
        %v1366 = vpop.permute.xlu0 %1365
        %vm1367 = vcmask 752640
        %v1368 = vsel %vm1367, %v1356, %v1358
        %v1369 = vsel %vm1367, %v1358, %v1360
        %v1370 = vsel %vm1367, %v1362, %v1364
        %v1371 = vsel %vm1367, %v1364, %v1366
        %v1378 = vadd.f32 %v1335, %v1368
        %v1379 = vadd.f32 %v1336, %v1369
        %v1380 = vadd.f32 %v1337, %v1360
        %v1381 = vadd.f32 %v1338, %v1370
        %v1382 = vadd.f32 %v1339, %v1371
        %v1383 = vadd.f32 %v1340, %v1366
        %s1384 = sld [smem:[#allocation2 + $0x3c]]
        %v1385 = vstv %s1384
        %v1386 = vmul.f32 %v383, %v1385
        %v1387 = vmul.f32 %v384, %v1385
        %v1388 = vmul.f32 %v385, %v1385
        %v1389 = vmul.f32 %v386, %v1385
        %v1390 = vmul.f32 %v387, %v1385
        %v1391 = vmul.f32 %v388, %v1385
        %v1392 = vmul.f32 %v389, %v1385
        %v1393 = vmul.f32 %v390, %v1385
        %v1394 = vmul.f32 %v391, %v1385
        %v1404 = vrot.slane %v1386, 1
        %v1405 = vrot.slane %v1389, 1
        %v1406 = vsel %vm420, %v1404, %v1405
        %v1407 = vrot.slane %v1387, 1
        %v1408 = vrot.slane %v1390, 1
        %v1409 = vsel %vm420, %v1407, %v1408
        %v1410 = vrot.slane %v1388, 1
        %v1411 = vrot.slane %v1391, 1
        %v1412 = vsel %vm420, %v1410, %v1411
        %v1413 = vrot.slane %v1392, 1
        %v1414 = vsel %vm420, %v1405, %v1413
        %v1415 = vrot.slane %v1393, 1
        %v1416 = vsel %vm420, %v1408, %v1415
        %v1417 = vrot.slane %v1394, 1
        %v1418 = vsel %vm420, %v1411, %v1417
        %1419 = vrot.lane.b32.xlu0 %v1406, 92
        %v1420 = vpop.permute.xlu0 %1419
        %1421 = vrot.lane.b32.xlu0 %v1409, 92
        %v1422 = vpop.permute.xlu0 %1421
        %1423 = vrot.lane.b32.xlu0 %v1412, 92
        %v1424 = vpop.permute.xlu0 %1423
        %1425 = vrot.lane.b32.xlu0 %v1414, 92
        %v1426 = vpop.permute.xlu0 %1425
        %1427 = vrot.lane.b32.xlu0 %v1416, 92
        %v1428 = vpop.permute.xlu0 %1427
        %1429 = vrot.lane.b32.xlu0 %v1418, 92
        %v1430 = vpop.permute.xlu0 %1429
        %v1431 = vsel %vm1367, %v1420, %v1422
        %v1432 = vsel %vm1367, %v1422, %v1424
        %v1433 = vsel %vm1367, %v1426, %v1428
        %v1434 = vsel %vm1367, %v1428, %v1430
        %v1441 = vadd.f32 %v1378, %v1431
        %v1442 = vadd.f32 %v1379, %v1432
        %v1443 = vadd.f32 %v1380, %v1424
        %v1444 = vadd.f32 %v1381, %v1433
        %v1445 = vadd.f32 %v1382, %v1434
        %v1446 = vadd.f32 %v1383, %v1430
        %s1447 = sld [smem:[#allocation2 + $0x60]]
        %v1448 = vstv %s1447
        %v1449 = vmul.f32 %v383, %v1448
        %v1450 = vmul.f32 %v384, %v1448
        %v1451 = vmul.f32 %v385, %v1448
        %v1452 = vmul.f32 %v386, %v1448
        %v1453 = vmul.f32 %v387, %v1448
        %v1454 = vmul.f32 %v388, %v1448
        %v1455 = vmul.f32 %v389, %v1448
        %v1456 = vmul.f32 %v390, %v1448
        %v1457 = vmul.f32 %v391, %v1448
        %v1467 = vrot.slane %v1449, 2
        %v1468 = vrot.slane %v1452, 2
        %v1469 = vsel %vm468, %v1467, %v1468
        %v1470 = vrot.slane %v1450, 2
        %v1471 = vrot.slane %v1453, 2
        %v1472 = vsel %vm468, %v1470, %v1471
        %v1473 = vrot.slane %v1451, 2
        %v1474 = vrot.slane %v1454, 2
        %v1475 = vsel %vm468, %v1473, %v1474
        %v1476 = vrot.slane %v1455, 2
        %v1477 = vsel %vm468, %v1468, %v1476
        %v1478 = vrot.slane %v1456, 2
        %v1479 = vsel %vm468, %v1471, %v1478
        %v1480 = vrot.slane %v1457, 2
        %v1481 = vsel %vm468, %v1474, %v1480
        %1482 = vrot.lane.b32.xlu0 %v1469, 92
        %v1483 = vpop.permute.xlu0 %1482
        %1484 = vrot.lane.b32.xlu0 %v1472, 92
        %v1485 = vpop.permute.xlu0 %1484
        %1486 = vrot.lane.b32.xlu0 %v1475, 92
        %v1487 = vpop.permute.xlu0 %1486
        %1488 = vrot.lane.b32.xlu0 %v1477, 92
        %v1489 = vpop.permute.xlu0 %1488
        %1490 = vrot.lane.b32.xlu0 %v1479, 92
        %v1491 = vpop.permute.xlu0 %1490
        %1492 = vrot.lane.b32.xlu0 %v1481, 92
        %v1493 = vpop.permute.xlu0 %1492
        %v1494 = vsel %vm1367, %v1483, %v1485
        %v1495 = vsel %vm1367, %v1485, %v1487
        %v1496 = vsel %vm1367, %v1489, %v1491
        %v1497 = vsel %vm1367, %v1491, %v1493
        %v1504 = vadd.f32 %v1441, %v1494
        %v1505 = vadd.f32 %v1442, %v1495
        %v1506 = vadd.f32 %v1443, %v1487
        %v1507 = vadd.f32 %v1444, %v1496
        %v1508 = vadd.f32 %v1445, %v1497
        %v1509 = vadd.f32 %v1446, %v1493
        %s1510 = sld [smem:[#allocation2 + $0x1c]]
        %v1511 = vstv %s1510
        %v1512 = vmul.f32 %v383, %v1511
        %v1513 = vmul.f32 %v384, %v1511
        %v1514 = vmul.f32 %v385, %v1511
        %v1515 = vmul.f32 %v386, %v1511
        %v1516 = vmul.f32 %v387, %v1511
        %v1517 = vmul.f32 %v388, %v1511
        %1524 = vrot.lane.b32.xlu0 %v1512, 91
        %v1525 = vpop.permute.xlu0 %1524
        %1526 = vrot.lane.b32.xlu0 %v1513, 91
        %v1527 = vpop.permute.xlu0 %1526
        %1528 = vrot.lane.b32.xlu0 %v1514, 91
        %v1529 = vpop.permute.xlu0 %1528
        %1530 = vrot.lane.b32.xlu0 %v1515, 91
        %v1531 = vpop.permute.xlu0 %1530
        %1532 = vrot.lane.b32.xlu0 %v1516, 91
        %v1533 = vpop.permute.xlu0 %1532
        %1534 = vrot.lane.b32.xlu0 %v1517, 91
        %v1535 = vpop.permute.xlu0 %1534
        %vm1536 = vcmask 744448
        %v1537 = vsel %vm1536, %v1525, %v1527
        %v1538 = vsel %vm1536, %v1527, %v1529
        %v1539 = vsel %vm1536, %v1531, %v1533
        %v1540 = vsel %vm1536, %v1533, %v1535
        %v1547 = vadd.f32 %v1504, %v1537
        %v1548 = vadd.f32 %v1505, %v1538
        %v1549 = vadd.f32 %v1506, %v1529
        %v1550 = vadd.f32 %v1507, %v1539
        %v1551 = vadd.f32 %v1508, %v1540
        %v1552 = vadd.f32 %v1509, %v1535
        %s1553 = sld [smem:[#allocation2 + $0x40]]
        %v1554 = vstv %s1553
        %v1555 = vmul.f32 %v383, %v1554
        %v1556 = vmul.f32 %v384, %v1554
        %v1557 = vmul.f32 %v385, %v1554
        %v1558 = vmul.f32 %v386, %v1554
        %v1559 = vmul.f32 %v387, %v1554
        %v1560 = vmul.f32 %v388, %v1554
        %v1561 = vmul.f32 %v389, %v1554
        %v1562 = vmul.f32 %v390, %v1554
        %v1563 = vmul.f32 %v391, %v1554
        %v1573 = vrot.slane %v1555, 1
        %v1574 = vrot.slane %v1558, 1
        %v1575 = vsel %vm420, %v1573, %v1574
        %v1576 = vrot.slane %v1556, 1
        %v1577 = vrot.slane %v1559, 1
        %v1578 = vsel %vm420, %v1576, %v1577
        %v1579 = vrot.slane %v1557, 1
        %v1580 = vrot.slane %v1560, 1
        %v1581 = vsel %vm420, %v1579, %v1580
        %v1582 = vrot.slane %v1561, 1
        %v1583 = vsel %vm420, %v1574, %v1582
        %v1584 = vrot.slane %v1562, 1
        %v1585 = vsel %vm420, %v1577, %v1584
        %v1586 = vrot.slane %v1563, 1
        %v1587 = vsel %vm420, %v1580, %v1586
        %1588 = vrot.lane.b32.xlu0 %v1575, 91
        %v1589 = vpop.permute.xlu0 %1588
        %1590 = vrot.lane.b32.xlu0 %v1578, 91
        %v1591 = vpop.permute.xlu0 %1590
        %1592 = vrot.lane.b32.xlu0 %v1581, 91
        %v1593 = vpop.permute.xlu0 %1592
        %1594 = vrot.lane.b32.xlu0 %v1583, 91
        %v1595 = vpop.permute.xlu0 %1594
        %1596 = vrot.lane.b32.xlu0 %v1585, 91
        %v1597 = vpop.permute.xlu0 %1596
        %1598 = vrot.lane.b32.xlu0 %v1587, 91
        %v1599 = vpop.permute.xlu0 %1598
        %v1600 = vsel %vm1536, %v1589, %v1591
        %v1601 = vsel %vm1536, %v1591, %v1593
        %v1602 = vsel %vm1536, %v1595, %v1597
        %v1603 = vsel %vm1536, %v1597, %v1599
        %v1610 = vadd.f32 %v1547, %v1600
        %v1611 = vadd.f32 %v1548, %v1601
        %v1612 = vadd.f32 %v1549, %v1593
        %v1613 = vadd.f32 %v1550, %v1602
        %v1614 = vadd.f32 %v1551, %v1603
        %v1615 = vadd.f32 %v1552, %v1599
        %s1616 = sld [smem:[#allocation2 + $0x64]]
        %v1617 = vstv %s1616
        %v1618 = vmul.f32 %v383, %v1617
        %v1619 = vmul.f32 %v384, %v1617
        %v1620 = vmul.f32 %v385, %v1617
        %v1621 = vmul.f32 %v386, %v1617
        %v1622 = vmul.f32 %v387, %v1617
        %v1623 = vmul.f32 %v388, %v1617
        %v1624 = vmul.f32 %v389, %v1617
        %v1625 = vmul.f32 %v390, %v1617
        %v1626 = vmul.f32 %v391, %v1617
        %v1636 = vrot.slane %v1618, 2
        %v1637 = vrot.slane %v1621, 2
        %v1638 = vsel %vm468, %v1636, %v1637
        %v1639 = vrot.slane %v1619, 2
        %v1640 = vrot.slane %v1622, 2
        %v1641 = vsel %vm468, %v1639, %v1640
        %v1642 = vrot.slane %v1620, 2
        %v1643 = vrot.slane %v1623, 2
        %v1644 = vsel %vm468, %v1642, %v1643
        %v1645 = vrot.slane %v1624, 2
        %v1646 = vsel %vm468, %v1637, %v1645
        %v1647 = vrot.slane %v1625, 2
        %v1648 = vsel %vm468, %v1640, %v1647
        %v1649 = vrot.slane %v1626, 2
        %v1650 = vsel %vm468, %v1643, %v1649
        %1651 = vrot.lane.b32.xlu0 %v1638, 91
        %v1652 = vpop.permute.xlu0 %1651
        %1653 = vrot.lane.b32.xlu0 %v1641, 91
        %v1654 = vpop.permute.xlu0 %1653
        %1655 = vrot.lane.b32.xlu0 %v1644, 91
        %v1656 = vpop.permute.xlu0 %1655
        %1657 = vrot.lane.b32.xlu0 %v1646, 91
        %v1658 = vpop.permute.xlu0 %1657
        %1659 = vrot.lane.b32.xlu0 %v1648, 91
        %v1660 = vpop.permute.xlu0 %1659
        %1661 = vrot.lane.b32.xlu0 %v1650, 91
        %v1662 = vpop.permute.xlu0 %1661
        %v1663 = vsel %vm1536, %v1652, %v1654
        %v1664 = vsel %vm1536, %v1654, %v1656
        %v1665 = vsel %vm1536, %v1658, %v1660
        %v1666 = vsel %vm1536, %v1660, %v1662
        %v1673 = vadd.f32 %v1610, %v1663
        %v1674 = vadd.f32 %v1611, %v1664
        %v1675 = vadd.f32 %v1612, %v1656
        %v1676 = vadd.f32 %v1613, %v1665
        %v1677 = vadd.f32 %v1614, %v1666
        %v1678 = vadd.f32 %v1615, %v1662
        %s1679 = sld [smem:[#allocation2 + $0x20]]
        %v1680 = vstv %s1679
        %v1681 = vmul.f32 %v383, %v1680
        %v1682 = vmul.f32 %v384, %v1680
        %v1683 = vmul.f32 %v385, %v1680
        %v1684 = vmul.f32 %v386, %v1680
        %v1685 = vmul.f32 %v387, %v1680
        %v1686 = vmul.f32 %v388, %v1680
        %1693 = vrot.lane.b32.xlu0 %v1681, 90
        %v1694 = vpop.permute.xlu0 %1693
        %1695 = vrot.lane.b32.xlu0 %v1682, 90
        %v1696 = vpop.permute.xlu0 %1695
        %1697 = vrot.lane.b32.xlu0 %v1683, 90
        %v1698 = vpop.permute.xlu0 %1697
        %1699 = vrot.lane.b32.xlu0 %v1684, 90
        %v1700 = vpop.permute.xlu0 %1699
        %1701 = vrot.lane.b32.xlu0 %v1685, 90
        %v1702 = vpop.permute.xlu0 %1701
        %1703 = vrot.lane.b32.xlu0 %v1686, 90
        %v1704 = vpop.permute.xlu0 %1703
        %vm1705 = vcmask 736256
        %v1706 = vsel %vm1705, %v1694, %v1696
        %v1707 = vsel %vm1705, %v1696, %v1698
        %v1708 = vsel %vm1705, %v1700, %v1702
        %v1709 = vsel %vm1705, %v1702, %v1704
        %v1716 = vadd.f32 %v1673, %v1706
        %v1717 = vadd.f32 %v1674, %v1707
        %v1718 = vadd.f32 %v1675, %v1698
        %v1719 = vadd.f32 %v1676, %v1708
        %v1720 = vadd.f32 %v1677, %v1709
        %v1721 = vadd.f32 %v1678, %v1704
        %s1722 = sld [smem:[#allocation2 + $0x44]]
        %v1723 = vstv %s1722
        %v1724 = vmul.f32 %v383, %v1723
        %v1725 = vmul.f32 %v384, %v1723
        %v1726 = vmul.f32 %v385, %v1723
        %v1727 = vmul.f32 %v386, %v1723
        %v1728 = vmul.f32 %v387, %v1723
        %v1729 = vmul.f32 %v388, %v1723
        %v1730 = vmul.f32 %v389, %v1723
        %v1731 = vmul.f32 %v390, %v1723
        %v1732 = vmul.f32 %v391, %v1723
        %v1742 = vrot.slane %v1724, 1
        %v1743 = vrot.slane %v1727, 1
        %v1744 = vsel %vm420, %v1742, %v1743
        %v1745 = vrot.slane %v1725, 1
        %v1746 = vrot.slane %v1728, 1
        %v1747 = vsel %vm420, %v1745, %v1746
        %v1748 = vrot.slane %v1726, 1
        %v1749 = vrot.slane %v1729, 1
        %v1750 = vsel %vm420, %v1748, %v1749
        %v1751 = vrot.slane %v1730, 1
        %v1752 = vsel %vm420, %v1743, %v1751
        %v1753 = vrot.slane %v1731, 1
        %v1754 = vsel %vm420, %v1746, %v1753
        %v1755 = vrot.slane %v1732, 1
        %v1756 = vsel %vm420, %v1749, %v1755
        %1757 = vrot.lane.b32.xlu0 %v1744, 90
        %v1758 = vpop.permute.xlu0 %1757
        %1759 = vrot.lane.b32.xlu0 %v1747, 90
        %v1760 = vpop.permute.xlu0 %1759
        %1761 = vrot.lane.b32.xlu0 %v1750, 90
        %v1762 = vpop.permute.xlu0 %1761
        %1763 = vrot.lane.b32.xlu0 %v1752, 90
        %v1764 = vpop.permute.xlu0 %1763
        %1765 = vrot.lane.b32.xlu0 %v1754, 90
        %v1766 = vpop.permute.xlu0 %1765
        %1767 = vrot.lane.b32.xlu0 %v1756, 90
        %v1768 = vpop.permute.xlu0 %1767
        %v1769 = vsel %vm1705, %v1758, %v1760
        %v1770 = vsel %vm1705, %v1760, %v1762
        %v1771 = vsel %vm1705, %v1764, %v1766
        %v1772 = vsel %vm1705, %v1766, %v1768
        %v1779 = vadd.f32 %v1716, %v1769
        %v1780 = vadd.f32 %v1717, %v1770
        %v1781 = vadd.f32 %v1718, %v1762
        %v1782 = vadd.f32 %v1719, %v1771
        %v1783 = vadd.f32 %v1720, %v1772
        %v1784 = vadd.f32 %v1721, %v1768
        %s1785 = sld [smem:[#allocation2 + $0x68]]
        %v1786 = vstv %s1785
        %v1787 = vmul.f32 %v383, %v1786
        %v1788 = vmul.f32 %v384, %v1786
        %v1789 = vmul.f32 %v385, %v1786
        %v1790 = vmul.f32 %v386, %v1786
        %v1791 = vmul.f32 %v387, %v1786
        %v1792 = vmul.f32 %v388, %v1786
        %v1793 = vmul.f32 %v389, %v1786
        %v1794 = vmul.f32 %v390, %v1786
        %v1795 = vmul.f32 %v391, %v1786
        %v1805 = vrot.slane %v1787, 2
        %v1806 = vrot.slane %v1790, 2
        %v1807 = vsel %vm468, %v1805, %v1806
        %v1808 = vrot.slane %v1788, 2
        %v1809 = vrot.slane %v1791, 2
        %v1810 = vsel %vm468, %v1808, %v1809
        %v1811 = vrot.slane %v1789, 2
        %v1812 = vrot.slane %v1792, 2
        %v1813 = vsel %vm468, %v1811, %v1812
        %v1814 = vrot.slane %v1793, 2
        %v1815 = vsel %vm468, %v1806, %v1814
        %v1816 = vrot.slane %v1794, 2
        %v1817 = vsel %vm468, %v1809, %v1816
        %v1818 = vrot.slane %v1795, 2
        %v1819 = vsel %vm468, %v1812, %v1818
        %1820 = vrot.lane.b32.xlu0 %v1807, 90
        %v1821 = vpop.permute.xlu0 %1820
        %1822 = vrot.lane.b32.xlu0 %v1810, 90
        %v1823 = vpop.permute.xlu0 %1822
        %1824 = vrot.lane.b32.xlu0 %v1813, 90
        %v1825 = vpop.permute.xlu0 %1824
        %1826 = vrot.lane.b32.xlu0 %v1815, 90
        %v1827 = vpop.permute.xlu0 %1826
        %1828 = vrot.lane.b32.xlu0 %v1817, 90
        %v1829 = vpop.permute.xlu0 %1828
        %1830 = vrot.lane.b32.xlu0 %v1819, 90
        %v1831 = vpop.permute.xlu0 %1830
        %v1832 = vsel %vm1705, %v1821, %v1823
        %v1833 = vsel %vm1705, %v1823, %v1825
        %v1834 = vsel %vm1705, %v1827, %v1829
        %v1835 = vsel %vm1705, %v1829, %v1831
        %v1842 = vadd.f32 %v1779, %v1832
        %v1843 = vadd.f32 %v1780, %v1833
        %v1844 = vadd.f32 %v1781, %v1825
        %v1845 = vadd.f32 %v1782, %v1834
        %v1846 = vadd.f32 %v1783, %v1835
        %v1847 = vadd.f32 %v1784, %v1831
        %s1848 = sld [smem:[#allocation5]]
        %v1849 = vstv %s1848
        %v1850 = vadd.f32 %v1842, %v1849
        %v1851 = vadd.f32 %v1843, %v1849
        %v1852 = vadd.f32 %v1844, %v1849
        %v1853 = vadd.f32 %v1845, %v1849
        %v1854 = vadd.f32 %v1846, %v1849
        %v1855 = vadd.f32 %v1847, %v1849
        %1858 = vrot.lane.b32.xlu0 %v1850, 126
        %v1859 = vpop.permute.xlu0 %1858
        %1860 = vrot.lane.b32.xlu0 %v1853, 126
        %v1861 = vpop.permute.xlu0 %1860
        %1864 = vrot.lane.b32.xlu0 %v1850, 124
        %v1865 = vpop.permute.xlu0 %1864
        %1866 = vrot.lane.b32.xlu0 %v1853, 124
        %v1867 = vpop.permute.xlu0 %1866
        %1870 = vrot.lane.b32.xlu0 %v1850, 122
        %v1871 = vpop.permute.xlu0 %1870
        %1872 = vrot.lane.b32.xlu0 %v1853, 122
        %v1873 = vpop.permute.xlu0 %1872
        %1876 = vrot.lane.b32.xlu0 %v1850, 120
        %v1877 = vpop.permute.xlu0 %1876
        %1878 = vrot.lane.b32.xlu0 %v1853, 120
        %v1879 = vpop.permute.xlu0 %1878
        %1882 = vrot.lane.b32.xlu0 %v1850, 118
        %v1883 = vpop.permute.xlu0 %1882
        %1884 = vrot.lane.b32.xlu0 %v1853, 118
        %v1885 = vpop.permute.xlu0 %1884
        %1888 = vrot.lane.b32.xlu0 %v1850, 116
        %v1889 = vpop.permute.xlu0 %1888
        %1890 = vrot.lane.b32.xlu0 %v1853, 116
        %v1891 = vpop.permute.xlu0 %1890
        %1896 = vrot.lane.b32.xlu0 %v1850, 114
        %v1897 = vpop.permute.xlu0 %1896
        %1898 = vrot.lane.b32.xlu0 %v1851, 114
        %v1899 = vpop.permute.xlu0 %1898
        %1900 = vrot.lane.b32.xlu0 %v1853, 114
        %v1901 = vpop.permute.xlu0 %1900
        %1902 = vrot.lane.b32.xlu0 %v1854, 114
        %v1903 = vpop.permute.xlu0 %1902
        %vm1904 = vcmask 932864
        %v1905 = vsel %vm1904, %v1897, %v1899
        %v1906 = vsel %vm1904, %v1901, %v1903
        %1909 = vrot.lane.b32.xlu0 %v1851, 112
        %v1910 = vpop.permute.xlu0 %1909
        %1911 = vrot.lane.b32.xlu0 %v1854, 112
        %v1912 = vpop.permute.xlu0 %1911
        %1915 = vrot.lane.b32.xlu0 %v1851, 110
        %v1916 = vpop.permute.xlu0 %1915
        %1917 = vrot.lane.b32.xlu0 %v1854, 110
        %v1918 = vpop.permute.xlu0 %1917
        %1921 = vrot.lane.b32.xlu0 %v1851, 108
        %v1922 = vpop.permute.xlu0 %1921
        %1923 = vrot.lane.b32.xlu0 %v1854, 108
        %v1924 = vpop.permute.xlu0 %1923
        %1927 = vrot.lane.b32.xlu0 %v1851, 106
        %v1928 = vpop.permute.xlu0 %1927
        %1929 = vrot.lane.b32.xlu0 %v1854, 106
        %v1930 = vpop.permute.xlu0 %1929
        %1933 = vrot.lane.b32.xlu0 %v1851, 104
        %v1934 = vpop.permute.xlu0 %1933
        %1935 = vrot.lane.b32.xlu0 %v1854, 104
        %v1936 = vpop.permute.xlu0 %1935
        %1939 = vrot.lane.b32.xlu0 %v1851, 102
        %v1940 = vpop.permute.xlu0 %1939
        %1941 = vrot.lane.b32.xlu0 %v1854, 102
        %v1942 = vpop.permute.xlu0 %1941
        %1947 = vrot.lane.b32.xlu0 %v1851, 100
        %v1948 = vpop.permute.xlu0 %1947
        %1949 = vrot.lane.b32.xlu0 %v1852, 100
        %v1950 = vpop.permute.xlu0 %1949
        %1951 = vrot.lane.b32.xlu0 %v1854, 100
        %v1952 = vpop.permute.xlu0 %1951
        %1953 = vrot.lane.b32.xlu0 %v1855, 100
        %v1954 = vpop.permute.xlu0 %1953
        %vm1955 = vcmask 818176
        %v1956 = vsel %vm1955, %v1948, %v1950
        %v1957 = vsel %vm1955, %v1952, %v1954
        %1960 = vrot.lane.b32.xlu0 %v1852, 98
        %v1961 = vpop.permute.xlu0 %1960
        %1962 = vrot.lane.b32.xlu0 %v1855, 98
        %v1963 = vpop.permute.xlu0 %1962
        %vm1966 = vcmask 130048
        %v1967 = vsel %vm1966, %v1850, %v1859
        %v1968 = vsel %vm1966, %v1853, %v1861
        %vm1969 = vcmask 261120
        %v1970 = vsel %vm1969, %v1967, %v1865
        %v1971 = vsel %vm1969, %v1968, %v1867
        %vm1972 = vcmask 392192
        %v1973 = vsel %vm1972, %v1970, %v1871
        %v1974 = vsel %vm1972, %v1971, %v1873
        %vm1975 = vcmask 523264
        %v1976 = vsel %vm1975, %v1973, %v1877
        %v1977 = vsel %vm1975, %v1974, %v1879
        %vm1978 = vcmask 654336
        %v1979 = vsel %vm1978, %v1976, %v1883
        %v1980 = vsel %vm1978, %v1977, %v1885
        %vm1981 = vcmask 785408
        %v1982 = vsel %vm1981, %v1979, %v1889
        %v1983 = vsel %vm1981, %v1980, %v1891
        %vm1984 = vcmask 916480
        %v1985 = vsel %vm1984, %v1982, %v1905
        %v1986 = vsel %vm1984, %v1983, %v1906
        %v1987 = vsel %vm1966, %v1910, %v1916
        %v1988 = vsel %vm1966, %v1912, %v1918
        %v1989 = vsel %vm1969, %v1987, %v1922
        %v1990 = vsel %vm1969, %v1988, %v1924
        %v1991 = vsel %vm1972, %v1989, %v1928
        %v1992 = vsel %vm1972, %v1990, %v1930
        %v1993 = vsel %vm1975, %v1991, %v1934
        %v1994 = vsel %vm1975, %v1992, %v1936
        %v1995 = vsel %vm1978, %v1993, %v1940
        %v1996 = vsel %vm1978, %v1994, %v1942
        %v1997 = vsel %vm1981, %v1995, %v1956
        %v1998 = vsel %vm1981, %v1996, %v1957
        %v1999 = vsel %vm1984, %v1997, %v1961
        %v2000 = vsel %vm1984, %v1998, %v1963
        %s2001 = scalar_lea.vmem %s382, 72
        %v2002 = vld [vmem:[%s2001] sm:$0xff]
        %v2003 = vld [vmem:[%s2001 + $0x8] sm:$0xff]
        %v2004 = vld [vmem:[%s2001 + $0x10] sm:$0xff]
        %v2005 = vld [vmem:[%s2001 + $0x18] sm:$0xff]
        %v2006 = vld [vmem:[%s2001 + $0x20] sm:$0xff]
        %v2007 = vld [vmem:[%s2001 + $0x28] sm:$0xff]
        %v2008 = vld [vmem:[%s2001 + $0x30] sm:$0x3]
        %v2009 = vld [vmem:[%s2001 + $0x38] sm:$0x3]
        %v2010 = vld [vmem:[%s2001 + $0x40] sm:$0x3]
        %s2011 = sld [smem:[#allocation2 + $0x1]]
        %v2012 = vstv %s2011
        %v2013 = vmul.f32 %v2002, %v2012
        %v2014 = vmul.f32 %v2003, %v2012
        %v2015 = vmul.f32 %v2004, %v2012
        %v2016 = vmul.f32 %v2005, %v2012
        %v2017 = vmul.f32 %v2006, %v2012
        %v2018 = vmul.f32 %v2007, %v2012
        %s2019 = sld [smem:[#allocation2 + $0x25]]
        %v2020 = vstv %s2019
        %v2021 = vmul.f32 %v2002, %v2020
        %v2022 = vmul.f32 %v2003, %v2020
        %v2023 = vmul.f32 %v2004, %v2020
        %v2024 = vmul.f32 %v2005, %v2020
        %v2025 = vmul.f32 %v2006, %v2020
        %v2026 = vmul.f32 %v2007, %v2020
        %v2027 = vmul.f32 %v2008, %v2020
        %v2028 = vmul.f32 %v2009, %v2020
        %v2029 = vmul.f32 %v2010, %v2020
        %v2039 = vrot.slane %v2021, 1
        %v2040 = vrot.slane %v2024, 1
        %v2041 = vsel %vm420, %v2039, %v2040
        %v2042 = vrot.slane %v2022, 1
        %v2043 = vrot.slane %v2025, 1
        %v2044 = vsel %vm420, %v2042, %v2043
        %v2045 = vrot.slane %v2023, 1
        %v2046 = vrot.slane %v2026, 1
        %v2047 = vsel %vm420, %v2045, %v2046
        %v2048 = vrot.slane %v2027, 1
        %v2049 = vsel %vm420, %v2040, %v2048
        %v2050 = vrot.slane %v2028, 1
        %v2051 = vsel %vm420, %v2043, %v2050
        %v2052 = vrot.slane %v2029, 1
        %v2053 = vsel %vm420, %v2046, %v2052
        %v2060 = vadd.f32 %v2013, %v2041
        %v2061 = vadd.f32 %v2014, %v2044
        %v2062 = vadd.f32 %v2015, %v2047
        %v2063 = vadd.f32 %v2016, %v2049
        %v2064 = vadd.f32 %v2017, %v2051
        %v2065 = vadd.f32 %v2018, %v2053
        %s2066 = sld [smem:[#allocation2 + $0x49]]
        %v2067 = vstv %s2066
        %v2068 = vmul.f32 %v2002, %v2067
        %v2069 = vmul.f32 %v2003, %v2067
        %v2070 = vmul.f32 %v2004, %v2067
        %v2071 = vmul.f32 %v2005, %v2067
        %v2072 = vmul.f32 %v2006, %v2067
        %v2073 = vmul.f32 %v2007, %v2067
        %v2074 = vmul.f32 %v2008, %v2067
        %v2075 = vmul.f32 %v2009, %v2067
        %v2076 = vmul.f32 %v2010, %v2067
        %v2086 = vrot.slane %v2068, 2
        %v2087 = vrot.slane %v2071, 2
        %v2088 = vsel %vm468, %v2086, %v2087
        %v2089 = vrot.slane %v2069, 2
        %v2090 = vrot.slane %v2072, 2
        %v2091 = vsel %vm468, %v2089, %v2090
        %v2092 = vrot.slane %v2070, 2
        %v2093 = vrot.slane %v2073, 2
        %v2094 = vsel %vm468, %v2092, %v2093
        %v2095 = vrot.slane %v2074, 2
        %v2096 = vsel %vm468, %v2087, %v2095
        %v2097 = vrot.slane %v2075, 2
        %v2098 = vsel %vm468, %v2090, %v2097
        %v2099 = vrot.slane %v2076, 2
        %v2100 = vsel %vm468, %v2093, %v2099
        %v2107 = vadd.f32 %v2060, %v2088
        %v2108 = vadd.f32 %v2061, %v2091
        %v2109 = vadd.f32 %v2062, %v2094
        %v2110 = vadd.f32 %v2063, %v2096
        %v2111 = vadd.f32 %v2064, %v2098
        %v2112 = vadd.f32 %v2065, %v2100
        %s2113 = sld [smem:[#allocation2 + $0x5]]
        %v2114 = vstv %s2113
        %v2115 = vmul.f32 %v2002, %v2114
        %v2116 = vmul.f32 %v2003, %v2114
        %v2117 = vmul.f32 %v2004, %v2114
        %v2118 = vmul.f32 %v2005, %v2114
        %v2119 = vmul.f32 %v2006, %v2114
        %v2120 = vmul.f32 %v2007, %v2114
        %2127 = vrot.lane.b32.xlu0 %v2115, 127
        %v2128 = vpop.permute.xlu0 %2127
        %2129 = vrot.lane.b32.xlu0 %v2116, 127
        %v2130 = vpop.permute.xlu0 %2129
        %2131 = vrot.lane.b32.xlu0 %v2117, 127
        %v2132 = vpop.permute.xlu0 %2131
        %2133 = vrot.lane.b32.xlu0 %v2118, 127
        %v2134 = vpop.permute.xlu0 %2133
        %2135 = vrot.lane.b32.xlu0 %v2119, 127
        %v2136 = vpop.permute.xlu0 %2135
        %2137 = vrot.lane.b32.xlu0 %v2120, 127
        %v2138 = vpop.permute.xlu0 %2137
        %v2139 = vsel %vm522, %v2128, %v2130
        %v2140 = vsel %vm522, %v2130, %v2132
        %v2141 = vsel %vm522, %v2134, %v2136
        %v2142 = vsel %vm522, %v2136, %v2138
        %v2149 = vadd.f32 %v2107, %v2139
        %v2150 = vadd.f32 %v2108, %v2140
        %v2151 = vadd.f32 %v2109, %v2132
        %v2152 = vadd.f32 %v2110, %v2141
        %v2153 = vadd.f32 %v2111, %v2142
        %v2154 = vadd.f32 %v2112, %v2138
        %s2155 = sld [smem:[#allocation2 + $0x29]]
        %v2156 = vstv %s2155
        %v2157 = vmul.f32 %v2002, %v2156
        %v2158 = vmul.f32 %v2003, %v2156
        %v2159 = vmul.f32 %v2004, %v2156
        %v2160 = vmul.f32 %v2005, %v2156
        %v2161 = vmul.f32 %v2006, %v2156
        %v2162 = vmul.f32 %v2007, %v2156
        %v2163 = vmul.f32 %v2008, %v2156
        %v2164 = vmul.f32 %v2009, %v2156
        %v2165 = vmul.f32 %v2010, %v2156
        %v2175 = vrot.slane %v2157, 1
        %v2176 = vrot.slane %v2160, 1
        %v2177 = vsel %vm420, %v2175, %v2176
        %v2178 = vrot.slane %v2158, 1
        %v2179 = vrot.slane %v2161, 1
        %v2180 = vsel %vm420, %v2178, %v2179
        %v2181 = vrot.slane %v2159, 1
        %v2182 = vrot.slane %v2162, 1
        %v2183 = vsel %vm420, %v2181, %v2182
        %v2184 = vrot.slane %v2163, 1
        %v2185 = vsel %vm420, %v2176, %v2184
        %v2186 = vrot.slane %v2164, 1
        %v2187 = vsel %vm420, %v2179, %v2186
        %v2188 = vrot.slane %v2165, 1
        %v2189 = vsel %vm420, %v2182, %v2188
        %2190 = vrot.lane.b32.xlu0 %v2177, 127
        %v2191 = vpop.permute.xlu0 %2190
        %2192 = vrot.lane.b32.xlu0 %v2180, 127
        %v2193 = vpop.permute.xlu0 %2192
        %2194 = vrot.lane.b32.xlu0 %v2183, 127
        %v2195 = vpop.permute.xlu0 %2194
        %2196 = vrot.lane.b32.xlu0 %v2185, 127
        %v2197 = vpop.permute.xlu0 %2196
        %2198 = vrot.lane.b32.xlu0 %v2187, 127
        %v2199 = vpop.permute.xlu0 %2198
        %2200 = vrot.lane.b32.xlu0 %v2189, 127
        %v2201 = vpop.permute.xlu0 %2200
        %v2202 = vsel %vm522, %v2191, %v2193
        %v2203 = vsel %vm522, %v2193, %v2195
        %v2204 = vsel %vm522, %v2197, %v2199
        %v2205 = vsel %vm522, %v2199, %v2201
        %v2212 = vadd.f32 %v2149, %v2202
        %v2213 = vadd.f32 %v2150, %v2203
        %v2214 = vadd.f32 %v2151, %v2195
        %v2215 = vadd.f32 %v2152, %v2204
        %v2216 = vadd.f32 %v2153, %v2205
        %v2217 = vadd.f32 %v2154, %v2201
        %s2218 = sld [smem:[#allocation2 + $0x4d]]
        %v2219 = vstv %s2218
        %v2220 = vmul.f32 %v2002, %v2219
        %v2221 = vmul.f32 %v2003, %v2219
        %v2222 = vmul.f32 %v2004, %v2219
        %v2223 = vmul.f32 %v2005, %v2219
        %v2224 = vmul.f32 %v2006, %v2219
        %v2225 = vmul.f32 %v2007, %v2219
        %v2226 = vmul.f32 %v2008, %v2219
        %v2227 = vmul.f32 %v2009, %v2219
        %v2228 = vmul.f32 %v2010, %v2219
        %v2238 = vrot.slane %v2220, 2
        %v2239 = vrot.slane %v2223, 2
        %v2240 = vsel %vm468, %v2238, %v2239
        %v2241 = vrot.slane %v2221, 2
        %v2242 = vrot.slane %v2224, 2
        %v2243 = vsel %vm468, %v2241, %v2242
        %v2244 = vrot.slane %v2222, 2
        %v2245 = vrot.slane %v2225, 2
        %v2246 = vsel %vm468, %v2244, %v2245
        %v2247 = vrot.slane %v2226, 2
        %v2248 = vsel %vm468, %v2239, %v2247
        %v2249 = vrot.slane %v2227, 2
        %v2250 = vsel %vm468, %v2242, %v2249
        %v2251 = vrot.slane %v2228, 2
        %v2252 = vsel %vm468, %v2245, %v2251
        %2253 = vrot.lane.b32.xlu0 %v2240, 127
        %v2254 = vpop.permute.xlu0 %2253
        %2255 = vrot.lane.b32.xlu0 %v2243, 127
        %v2256 = vpop.permute.xlu0 %2255
        %2257 = vrot.lane.b32.xlu0 %v2246, 127
        %v2258 = vpop.permute.xlu0 %2257
        %2259 = vrot.lane.b32.xlu0 %v2248, 127
        %v2260 = vpop.permute.xlu0 %2259
        %2261 = vrot.lane.b32.xlu0 %v2250, 127
        %v2262 = vpop.permute.xlu0 %2261
        %2263 = vrot.lane.b32.xlu0 %v2252, 127
        %v2264 = vpop.permute.xlu0 %2263
        %v2265 = vsel %vm522, %v2254, %v2256
        %v2266 = vsel %vm522, %v2256, %v2258
        %v2267 = vsel %vm522, %v2260, %v2262
        %v2268 = vsel %vm522, %v2262, %v2264
        %v2275 = vadd.f32 %v2212, %v2265
        %v2276 = vadd.f32 %v2213, %v2266
        %v2277 = vadd.f32 %v2214, %v2258
        %v2278 = vadd.f32 %v2215, %v2267
        %v2279 = vadd.f32 %v2216, %v2268
        %v2280 = vadd.f32 %v2217, %v2264
        %s2281 = sld [smem:[#allocation2 + $0x9]]
        %v2282 = vstv %s2281
        %v2283 = vmul.f32 %v2002, %v2282
        %v2284 = vmul.f32 %v2003, %v2282
        %v2285 = vmul.f32 %v2004, %v2282
        %v2286 = vmul.f32 %v2005, %v2282
        %v2287 = vmul.f32 %v2006, %v2282
        %v2288 = vmul.f32 %v2007, %v2282
        %2295 = vrot.lane.b32.xlu0 %v2283, 126
        %v2296 = vpop.permute.xlu0 %2295
        %2297 = vrot.lane.b32.xlu0 %v2284, 126
        %v2298 = vpop.permute.xlu0 %2297
        %2299 = vrot.lane.b32.xlu0 %v2285, 126
        %v2300 = vpop.permute.xlu0 %2299
        %2301 = vrot.lane.b32.xlu0 %v2286, 126
        %v2302 = vpop.permute.xlu0 %2301
        %2303 = vrot.lane.b32.xlu0 %v2287, 126
        %v2304 = vpop.permute.xlu0 %2303
        %2305 = vrot.lane.b32.xlu0 %v2288, 126
        %v2306 = vpop.permute.xlu0 %2305
        %v2307 = vsel %vm691, %v2296, %v2298
        %v2308 = vsel %vm691, %v2298, %v2300
        %v2309 = vsel %vm691, %v2302, %v2304
        %v2310 = vsel %vm691, %v2304, %v2306
        %v2317 = vadd.f32 %v2275, %v2307
        %v2318 = vadd.f32 %v2276, %v2308
        %v2319 = vadd.f32 %v2277, %v2300
        %v2320 = vadd.f32 %v2278, %v2309
        %v2321 = vadd.f32 %v2279, %v2310
        %v2322 = vadd.f32 %v2280, %v2306
        %s2323 = sld [smem:[#allocation2 + $0x2d]]
        %v2324 = vstv %s2323
        %v2325 = vmul.f32 %v2002, %v2324
        %v2326 = vmul.f32 %v2003, %v2324
        %v2327 = vmul.f32 %v2004, %v2324
        %v2328 = vmul.f32 %v2005, %v2324
        %v2329 = vmul.f32 %v2006, %v2324
        %v2330 = vmul.f32 %v2007, %v2324
        %v2331 = vmul.f32 %v2008, %v2324
        %v2332 = vmul.f32 %v2009, %v2324
        %v2333 = vmul.f32 %v2010, %v2324
        %v2343 = vrot.slane %v2325, 1
        %v2344 = vrot.slane %v2328, 1
        %v2345 = vsel %vm420, %v2343, %v2344
        %v2346 = vrot.slane %v2326, 1
        %v2347 = vrot.slane %v2329, 1
        %v2348 = vsel %vm420, %v2346, %v2347
        %v2349 = vrot.slane %v2327, 1
        %v2350 = vrot.slane %v2330, 1
        %v2351 = vsel %vm420, %v2349, %v2350
        %v2352 = vrot.slane %v2331, 1
        %v2353 = vsel %vm420, %v2344, %v2352
        %v2354 = vrot.slane %v2332, 1
        %v2355 = vsel %vm420, %v2347, %v2354
        %v2356 = vrot.slane %v2333, 1
        %v2357 = vsel %vm420, %v2350, %v2356
        %2358 = vrot.lane.b32.xlu0 %v2345, 126
        %v2359 = vpop.permute.xlu0 %2358
        %2360 = vrot.lane.b32.xlu0 %v2348, 126
        %v2361 = vpop.permute.xlu0 %2360
        %2362 = vrot.lane.b32.xlu0 %v2351, 126
        %v2363 = vpop.permute.xlu0 %2362
        %2364 = vrot.lane.b32.xlu0 %v2353, 126
        %v2365 = vpop.permute.xlu0 %2364
        %2366 = vrot.lane.b32.xlu0 %v2355, 126
        %v2367 = vpop.permute.xlu0 %2366
        %2368 = vrot.lane.b32.xlu0 %v2357, 126
        %v2369 = vpop.permute.xlu0 %2368
        %v2370 = vsel %vm691, %v2359, %v2361
        %v2371 = vsel %vm691, %v2361, %v2363
        %v2372 = vsel %vm691, %v2365, %v2367
        %v2373 = vsel %vm691, %v2367, %v2369
        %v2380 = vadd.f32 %v2317, %v2370
        %v2381 = vadd.f32 %v2318, %v2371
        %v2382 = vadd.f32 %v2319, %v2363
        %v2383 = vadd.f32 %v2320, %v2372
        %v2384 = vadd.f32 %v2321, %v2373
        %v2385 = vadd.f32 %v2322, %v2369
        %s2386 = sld [smem:[#allocation2 + $0x51]]
        %v2387 = vstv %s2386
        %v2388 = vmul.f32 %v2002, %v2387
        %v2389 = vmul.f32 %v2003, %v2387
        %v2390 = vmul.f32 %v2004, %v2387
        %v2391 = vmul.f32 %v2005, %v2387
        %v2392 = vmul.f32 %v2006, %v2387
        %v2393 = vmul.f32 %v2007, %v2387
        %v2394 = vmul.f32 %v2008, %v2387
        %v2395 = vmul.f32 %v2009, %v2387
        %v2396 = vmul.f32 %v2010, %v2387
        %v2406 = vrot.slane %v2388, 2
        %v2407 = vrot.slane %v2391, 2
        %v2408 = vsel %vm468, %v2406, %v2407
        %v2409 = vrot.slane %v2389, 2
        %v2410 = vrot.slane %v2392, 2
        %v2411 = vsel %vm468, %v2409, %v2410
        %v2412 = vrot.slane %v2390, 2
        %v2413 = vrot.slane %v2393, 2
        %v2414 = vsel %vm468, %v2412, %v2413
        %v2415 = vrot.slane %v2394, 2
        %v2416 = vsel %vm468, %v2407, %v2415
        %v2417 = vrot.slane %v2395, 2
        %v2418 = vsel %vm468, %v2410, %v2417
        %v2419 = vrot.slane %v2396, 2
        %v2420 = vsel %vm468, %v2413, %v2419
        %2421 = vrot.lane.b32.xlu0 %v2408, 126
        %v2422 = vpop.permute.xlu0 %2421
        %2423 = vrot.lane.b32.xlu0 %v2411, 126
        %v2424 = vpop.permute.xlu0 %2423
        %2425 = vrot.lane.b32.xlu0 %v2414, 126
        %v2426 = vpop.permute.xlu0 %2425
        %2427 = vrot.lane.b32.xlu0 %v2416, 126
        %v2428 = vpop.permute.xlu0 %2427
        %2429 = vrot.lane.b32.xlu0 %v2418, 126
        %v2430 = vpop.permute.xlu0 %2429
        %2431 = vrot.lane.b32.xlu0 %v2420, 126
        %v2432 = vpop.permute.xlu0 %2431
        %v2433 = vsel %vm691, %v2422, %v2424
        %v2434 = vsel %vm691, %v2424, %v2426
        %v2435 = vsel %vm691, %v2428, %v2430
        %v2436 = vsel %vm691, %v2430, %v2432
        %v2443 = vadd.f32 %v2380, %v2433
        %v2444 = vadd.f32 %v2381, %v2434
        %v2445 = vadd.f32 %v2382, %v2426
        %v2446 = vadd.f32 %v2383, %v2435
        %v2447 = vadd.f32 %v2384, %v2436
        %v2448 = vadd.f32 %v2385, %v2432
        %s2449 = sld [smem:[#allocation2 + $0xd]]
        %v2450 = vstv %s2449
        %v2451 = vmul.f32 %v2002, %v2450
        %v2452 = vmul.f32 %v2003, %v2450
        %v2453 = vmul.f32 %v2004, %v2450
        %v2454 = vmul.f32 %v2005, %v2450
        %v2455 = vmul.f32 %v2006, %v2450
        %v2456 = vmul.f32 %v2007, %v2450
        %2463 = vrot.lane.b32.xlu0 %v2451, 110
        %v2464 = vpop.permute.xlu0 %2463
        %2465 = vrot.lane.b32.xlu0 %v2452, 110
        %v2466 = vpop.permute.xlu0 %2465
        %2467 = vrot.lane.b32.xlu0 %v2453, 110
        %v2468 = vpop.permute.xlu0 %2467
        %2469 = vrot.lane.b32.xlu0 %v2454, 110
        %v2470 = vpop.permute.xlu0 %2469
        %2471 = vrot.lane.b32.xlu0 %v2455, 110
        %v2472 = vpop.permute.xlu0 %2471
        %2473 = vrot.lane.b32.xlu0 %v2456, 110
        %v2474 = vpop.permute.xlu0 %2473
        %v2475 = vsel %vm860, %v2464, %v2466
        %v2476 = vsel %vm860, %v2466, %v2468
        %v2477 = vsel %vm860, %v2470, %v2472
        %v2478 = vsel %vm860, %v2472, %v2474
        %v2485 = vadd.f32 %v2443, %v2475
        %v2486 = vadd.f32 %v2444, %v2476
        %v2487 = vadd.f32 %v2445, %v2468
        %v2488 = vadd.f32 %v2446, %v2477
        %v2489 = vadd.f32 %v2447, %v2478
        %v2490 = vadd.f32 %v2448, %v2474
        %s2491 = sld [smem:[#allocation2 + $0x31]]
        %v2492 = vstv %s2491
        %v2493 = vmul.f32 %v2002, %v2492
        %v2494 = vmul.f32 %v2003, %v2492
        %v2495 = vmul.f32 %v2004, %v2492
        %v2496 = vmul.f32 %v2005, %v2492
        %v2497 = vmul.f32 %v2006, %v2492
        %v2498 = vmul.f32 %v2007, %v2492
        %v2499 = vmul.f32 %v2008, %v2492
        %v2500 = vmul.f32 %v2009, %v2492
        %v2501 = vmul.f32 %v2010, %v2492
        %v2511 = vrot.slane %v2493, 1
        %v2512 = vrot.slane %v2496, 1
        %v2513 = vsel %vm420, %v2511, %v2512
        %v2514 = vrot.slane %v2494, 1
        %v2515 = vrot.slane %v2497, 1
        %v2516 = vsel %vm420, %v2514, %v2515
        %v2517 = vrot.slane %v2495, 1
        %v2518 = vrot.slane %v2498, 1
        %v2519 = vsel %vm420, %v2517, %v2518
        %v2520 = vrot.slane %v2499, 1
        %v2521 = vsel %vm420, %v2512, %v2520
        %v2522 = vrot.slane %v2500, 1
        %v2523 = vsel %vm420, %v2515, %v2522
        %v2524 = vrot.slane %v2501, 1
        %v2525 = vsel %vm420, %v2518, %v2524
        %2526 = vrot.lane.b32.xlu0 %v2513, 110
        %v2527 = vpop.permute.xlu0 %2526
        %2528 = vrot.lane.b32.xlu0 %v2516, 110
        %v2529 = vpop.permute.xlu0 %2528
        %2530 = vrot.lane.b32.xlu0 %v2519, 110
        %v2531 = vpop.permute.xlu0 %2530
        %2532 = vrot.lane.b32.xlu0 %v2521, 110
        %v2533 = vpop.permute.xlu0 %2532
        %2534 = vrot.lane.b32.xlu0 %v2523, 110
        %v2535 = vpop.permute.xlu0 %2534
        %2536 = vrot.lane.b32.xlu0 %v2525, 110
        %v2537 = vpop.permute.xlu0 %2536
        %v2538 = vsel %vm860, %v2527, %v2529
        %v2539 = vsel %vm860, %v2529, %v2531
        %v2540 = vsel %vm860, %v2533, %v2535
        %v2541 = vsel %vm860, %v2535, %v2537
        %v2548 = vadd.f32 %v2485, %v2538
        %v2549 = vadd.f32 %v2486, %v2539
        %v2550 = vadd.f32 %v2487, %v2531
        %v2551 = vadd.f32 %v2488, %v2540
        %v2552 = vadd.f32 %v2489, %v2541
        %v2553 = vadd.f32 %v2490, %v2537
        %s2554 = sld [smem:[#allocation2 + $0x55]]
        %v2555 = vstv %s2554
        %v2556 = vmul.f32 %v2002, %v2555
        %v2557 = vmul.f32 %v2003, %v2555
        %v2558 = vmul.f32 %v2004, %v2555
        %v2559 = vmul.f32 %v2005, %v2555
        %v2560 = vmul.f32 %v2006, %v2555
        %v2561 = vmul.f32 %v2007, %v2555
        %v2562 = vmul.f32 %v2008, %v2555
        %v2563 = vmul.f32 %v2009, %v2555
        %v2564 = vmul.f32 %v2010, %v2555
        %v2574 = vrot.slane %v2556, 2
        %v2575 = vrot.slane %v2559, 2
        %v2576 = vsel %vm468, %v2574, %v2575
        %v2577 = vrot.slane %v2557, 2
        %v2578 = vrot.slane %v2560, 2
        %v2579 = vsel %vm468, %v2577, %v2578
        %v2580 = vrot.slane %v2558, 2
        %v2581 = vrot.slane %v2561, 2
        %v2582 = vsel %vm468, %v2580, %v2581
        %v2583 = vrot.slane %v2562, 2
        %v2584 = vsel %vm468, %v2575, %v2583
        %v2585 = vrot.slane %v2563, 2
        %v2586 = vsel %vm468, %v2578, %v2585
        %v2587 = vrot.slane %v2564, 2
        %v2588 = vsel %vm468, %v2581, %v2587
        %2589 = vrot.lane.b32.xlu0 %v2576, 110
        %v2590 = vpop.permute.xlu0 %2589
        %2591 = vrot.lane.b32.xlu0 %v2579, 110
        %v2592 = vpop.permute.xlu0 %2591
        %2593 = vrot.lane.b32.xlu0 %v2582, 110
        %v2594 = vpop.permute.xlu0 %2593
        %2595 = vrot.lane.b32.xlu0 %v2584, 110
        %v2596 = vpop.permute.xlu0 %2595
        %2597 = vrot.lane.b32.xlu0 %v2586, 110
        %v2598 = vpop.permute.xlu0 %2597
        %2599 = vrot.lane.b32.xlu0 %v2588, 110
        %v2600 = vpop.permute.xlu0 %2599
        %v2601 = vsel %vm860, %v2590, %v2592
        %v2602 = vsel %vm860, %v2592, %v2594
        %v2603 = vsel %vm860, %v2596, %v2598
        %v2604 = vsel %vm860, %v2598, %v2600
        %v2611 = vadd.f32 %v2548, %v2601
        %v2612 = vadd.f32 %v2549, %v2602
        %v2613 = vadd.f32 %v2550, %v2594
        %v2614 = vadd.f32 %v2551, %v2603
        %v2615 = vadd.f32 %v2552, %v2604
        %v2616 = vadd.f32 %v2553, %v2600
        %s2617 = sld [smem:[#allocation2 + $0x11]]
        %v2618 = vstv %s2617
        %v2619 = vmul.f32 %v2002, %v2618
        %v2620 = vmul.f32 %v2003, %v2618
        %v2621 = vmul.f32 %v2004, %v2618
        %v2622 = vmul.f32 %v2005, %v2618
        %v2623 = vmul.f32 %v2006, %v2618
        %v2624 = vmul.f32 %v2007, %v2618
        %2631 = vrot.lane.b32.xlu0 %v2619, 109
        %v2632 = vpop.permute.xlu0 %2631
        %2633 = vrot.lane.b32.xlu0 %v2620, 109
        %v2634 = vpop.permute.xlu0 %2633
        %2635 = vrot.lane.b32.xlu0 %v2621, 109
        %v2636 = vpop.permute.xlu0 %2635
        %2637 = vrot.lane.b32.xlu0 %v2622, 109
        %v2638 = vpop.permute.xlu0 %2637
        %2639 = vrot.lane.b32.xlu0 %v2623, 109
        %v2640 = vpop.permute.xlu0 %2639
        %2641 = vrot.lane.b32.xlu0 %v2624, 109
        %v2642 = vpop.permute.xlu0 %2641
        %v2643 = vsel %vm1029, %v2632, %v2634
        %v2644 = vsel %vm1029, %v2634, %v2636
        %v2645 = vsel %vm1029, %v2638, %v2640
        %v2646 = vsel %vm1029, %v2640, %v2642
        %v2653 = vadd.f32 %v2611, %v2643
        %v2654 = vadd.f32 %v2612, %v2644
        %v2655 = vadd.f32 %v2613, %v2636
        %v2656 = vadd.f32 %v2614, %v2645
        %v2657 = vadd.f32 %v2615, %v2646
        %v2658 = vadd.f32 %v2616, %v2642
        %s2659 = sld [smem:[#allocation2 + $0x35]]
        %v2660 = vstv %s2659
        %v2661 = vmul.f32 %v2002, %v2660
        %v2662 = vmul.f32 %v2003, %v2660
        %v2663 = vmul.f32 %v2004, %v2660
        %v2664 = vmul.f32 %v2005, %v2660
        %v2665 = vmul.f32 %v2006, %v2660
        %v2666 = vmul.f32 %v2007, %v2660
        %v2667 = vmul.f32 %v2008, %v2660
        %v2668 = vmul.f32 %v2009, %v2660
        %v2669 = vmul.f32 %v2010, %v2660
        %v2679 = vrot.slane %v2661, 1
        %v2680 = vrot.slane %v2664, 1
        %v2681 = vsel %vm420, %v2679, %v2680
        %v2682 = vrot.slane %v2662, 1
        %v2683 = vrot.slane %v2665, 1
        %v2684 = vsel %vm420, %v2682, %v2683
        %v2685 = vrot.slane %v2663, 1
        %v2686 = vrot.slane %v2666, 1
        %v2687 = vsel %vm420, %v2685, %v2686
        %v2688 = vrot.slane %v2667, 1
        %v2689 = vsel %vm420, %v2680, %v2688
        %v2690 = vrot.slane %v2668, 1
        %v2691 = vsel %vm420, %v2683, %v2690
        %v2692 = vrot.slane %v2669, 1
        %v2693 = vsel %vm420, %v2686, %v2692
        %2694 = vrot.lane.b32.xlu0 %v2681, 109
        %v2695 = vpop.permute.xlu0 %2694
        %2696 = vrot.lane.b32.xlu0 %v2684, 109
        %v2697 = vpop.permute.xlu0 %2696
        %2698 = vrot.lane.b32.xlu0 %v2687, 109
        %v2699 = vpop.permute.xlu0 %2698
        %2700 = vrot.lane.b32.xlu0 %v2689, 109
        %v2701 = vpop.permute.xlu0 %2700
        %2702 = vrot.lane.b32.xlu0 %v2691, 109
        %v2703 = vpop.permute.xlu0 %2702
        %2704 = vrot.lane.b32.xlu0 %v2693, 109
        %v2705 = vpop.permute.xlu0 %2704
        %v2706 = vsel %vm1029, %v2695, %v2697
        %v2707 = vsel %vm1029, %v2697, %v2699
        %v2708 = vsel %vm1029, %v2701, %v2703
        %v2709 = vsel %vm1029, %v2703, %v2705
        %v2716 = vadd.f32 %v2653, %v2706
        %v2717 = vadd.f32 %v2654, %v2707
        %v2718 = vadd.f32 %v2655, %v2699
        %v2719 = vadd.f32 %v2656, %v2708
        %v2720 = vadd.f32 %v2657, %v2709
        %v2721 = vadd.f32 %v2658, %v2705
        %s2722 = sld [smem:[#allocation2 + $0x59]]
        %v2723 = vstv %s2722
        %v2724 = vmul.f32 %v2002, %v2723
        %v2725 = vmul.f32 %v2003, %v2723
        %v2726 = vmul.f32 %v2004, %v2723
        %v2727 = vmul.f32 %v2005, %v2723
        %v2728 = vmul.f32 %v2006, %v2723
        %v2729 = vmul.f32 %v2007, %v2723
        %v2730 = vmul.f32 %v2008, %v2723
        %v2731 = vmul.f32 %v2009, %v2723
        %v2732 = vmul.f32 %v2010, %v2723
        %v2742 = vrot.slane %v2724, 2
        %v2743 = vrot.slane %v2727, 2
        %v2744 = vsel %vm468, %v2742, %v2743
        %v2745 = vrot.slane %v2725, 2
        %v2746 = vrot.slane %v2728, 2
        %v2747 = vsel %vm468, %v2745, %v2746
        %v2748 = vrot.slane %v2726, 2
        %v2749 = vrot.slane %v2729, 2
        %v2750 = vsel %vm468, %v2748, %v2749
        %v2751 = vrot.slane %v2730, 2
        %v2752 = vsel %vm468, %v2743, %v2751
        %v2753 = vrot.slane %v2731, 2
        %v2754 = vsel %vm468, %v2746, %v2753
        %v2755 = vrot.slane %v2732, 2
        %v2756 = vsel %vm468, %v2749, %v2755
        %2757 = vrot.lane.b32.xlu0 %v2744, 109
        %v2758 = vpop.permute.xlu0 %2757
        %2759 = vrot.lane.b32.xlu0 %v2747, 109
        %v2760 = vpop.permute.xlu0 %2759
        %2761 = vrot.lane.b32.xlu0 %v2750, 109
        %v2762 = vpop.permute.xlu0 %2761
        %2763 = vrot.lane.b32.xlu0 %v2752, 109
        %v2764 = vpop.permute.xlu0 %2763
        %2765 = vrot.lane.b32.xlu0 %v2754, 109
        %v2766 = vpop.permute.xlu0 %2765
        %2767 = vrot.lane.b32.xlu0 %v2756, 109
        %v2768 = vpop.permute.xlu0 %2767
        %v2769 = vsel %vm1029, %v2758, %v2760
        %v2770 = vsel %vm1029, %v2760, %v2762
        %v2771 = vsel %vm1029, %v2764, %v2766
        %v2772 = vsel %vm1029, %v2766, %v2768
        %v2779 = vadd.f32 %v2716, %v2769
        %v2780 = vadd.f32 %v2717, %v2770
        %v2781 = vadd.f32 %v2718, %v2762
        %v2782 = vadd.f32 %v2719, %v2771
        %v2783 = vadd.f32 %v2720, %v2772
        %v2784 = vadd.f32 %v2721, %v2768
        %s2785 = sld [smem:[#allocation2 + $0x15]]
        %v2786 = vstv %s2785
        %v2787 = vmul.f32 %v2002, %v2786
        %v2788 = vmul.f32 %v2003, %v2786
        %v2789 = vmul.f32 %v2004, %v2786
        %v2790 = vmul.f32 %v2005, %v2786
        %v2791 = vmul.f32 %v2006, %v2786
        %v2792 = vmul.f32 %v2007, %v2786
        %2799 = vrot.lane.b32.xlu0 %v2787, 108
        %v2800 = vpop.permute.xlu0 %2799
        %2801 = vrot.lane.b32.xlu0 %v2788, 108
        %v2802 = vpop.permute.xlu0 %2801
        %2803 = vrot.lane.b32.xlu0 %v2789, 108
        %v2804 = vpop.permute.xlu0 %2803
        %2805 = vrot.lane.b32.xlu0 %v2790, 108
        %v2806 = vpop.permute.xlu0 %2805
        %2807 = vrot.lane.b32.xlu0 %v2791, 108
        %v2808 = vpop.permute.xlu0 %2807
        %2809 = vrot.lane.b32.xlu0 %v2792, 108
        %v2810 = vpop.permute.xlu0 %2809
        %v2811 = vsel %vm1198, %v2800, %v2802
        %v2812 = vsel %vm1198, %v2802, %v2804
        %v2813 = vsel %vm1198, %v2806, %v2808
        %v2814 = vsel %vm1198, %v2808, %v2810
        %v2821 = vadd.f32 %v2779, %v2811
        %v2822 = vadd.f32 %v2780, %v2812
        %v2823 = vadd.f32 %v2781, %v2804
        %v2824 = vadd.f32 %v2782, %v2813
        %v2825 = vadd.f32 %v2783, %v2814
        %v2826 = vadd.f32 %v2784, %v2810
        %s2827 = sld [smem:[#allocation2 + $0x39]]
        %v2828 = vstv %s2827
        %v2829 = vmul.f32 %v2002, %v2828
        %v2830 = vmul.f32 %v2003, %v2828
        %v2831 = vmul.f32 %v2004, %v2828
        %v2832 = vmul.f32 %v2005, %v2828
        %v2833 = vmul.f32 %v2006, %v2828
        %v2834 = vmul.f32 %v2007, %v2828
        %v2835 = vmul.f32 %v2008, %v2828
        %v2836 = vmul.f32 %v2009, %v2828
        %v2837 = vmul.f32 %v2010, %v2828
        %v2847 = vrot.slane %v2829, 1
        %v2848 = vrot.slane %v2832, 1
        %v2849 = vsel %vm420, %v2847, %v2848
        %v2850 = vrot.slane %v2830, 1
        %v2851 = vrot.slane %v2833, 1
        %v2852 = vsel %vm420, %v2850, %v2851
        %v2853 = vrot.slane %v2831, 1
        %v2854 = vrot.slane %v2834, 1
        %v2855 = vsel %vm420, %v2853, %v2854
        %v2856 = vrot.slane %v2835, 1
        %v2857 = vsel %vm420, %v2848, %v2856
        %v2858 = vrot.slane %v2836, 1
        %v2859 = vsel %vm420, %v2851, %v2858
        %v2860 = vrot.slane %v2837, 1
        %v2861 = vsel %vm420, %v2854, %v2860
        %2862 = vrot.lane.b32.xlu0 %v2849, 108
        %v2863 = vpop.permute.xlu0 %2862
        %2864 = vrot.lane.b32.xlu0 %v2852, 108
        %v2865 = vpop.permute.xlu0 %2864
        %2866 = vrot.lane.b32.xlu0 %v2855, 108
        %v2867 = vpop.permute.xlu0 %2866
        %2868 = vrot.lane.b32.xlu0 %v2857, 108
        %v2869 = vpop.permute.xlu0 %2868
        %2870 = vrot.lane.b32.xlu0 %v2859, 108
        %v2871 = vpop.permute.xlu0 %2870
        %2872 = vrot.lane.b32.xlu0 %v2861, 108
        %v2873 = vpop.permute.xlu0 %2872
        %v2874 = vsel %vm1198, %v2863, %v2865
        %v2875 = vsel %vm1198, %v2865, %v2867
        %v2876 = vsel %vm1198, %v2869, %v2871
        %v2877 = vsel %vm1198, %v2871, %v2873
        %v2884 = vadd.f32 %v2821, %v2874
        %v2885 = vadd.f32 %v2822, %v2875
        %v2886 = vadd.f32 %v2823, %v2867
        %v2887 = vadd.f32 %v2824, %v2876
        %v2888 = vadd.f32 %v2825, %v2877
        %v2889 = vadd.f32 %v2826, %v2873
        %s2890 = sld [smem:[#allocation2 + $0x5d]]
        %v2891 = vstv %s2890
        %v2892 = vmul.f32 %v2002, %v2891
        %v2893 = vmul.f32 %v2003, %v2891
        %v2894 = vmul.f32 %v2004, %v2891
        %v2895 = vmul.f32 %v2005, %v2891
        %v2896 = vmul.f32 %v2006, %v2891
        %v2897 = vmul.f32 %v2007, %v2891
        %v2898 = vmul.f32 %v2008, %v2891
        %v2899 = vmul.f32 %v2009, %v2891
        %v2900 = vmul.f32 %v2010, %v2891
        %v2910 = vrot.slane %v2892, 2
        %v2911 = vrot.slane %v2895, 2
        %v2912 = vsel %vm468, %v2910, %v2911
        %v2913 = vrot.slane %v2893, 2
        %v2914 = vrot.slane %v2896, 2
        %v2915 = vsel %vm468, %v2913, %v2914
        %v2916 = vrot.slane %v2894, 2
        %v2917 = vrot.slane %v2897, 2
        %v2918 = vsel %vm468, %v2916, %v2917
        %v2919 = vrot.slane %v2898, 2
        %v2920 = vsel %vm468, %v2911, %v2919
        %v2921 = vrot.slane %v2899, 2
        %v2922 = vsel %vm468, %v2914, %v2921
        %v2923 = vrot.slane %v2900, 2
        %v2924 = vsel %vm468, %v2917, %v2923
        %2925 = vrot.lane.b32.xlu0 %v2912, 108
        %v2926 = vpop.permute.xlu0 %2925
        %2927 = vrot.lane.b32.xlu0 %v2915, 108
        %v2928 = vpop.permute.xlu0 %2927
        %2929 = vrot.lane.b32.xlu0 %v2918, 108
        %v2930 = vpop.permute.xlu0 %2929
        %2931 = vrot.lane.b32.xlu0 %v2920, 108
        %v2932 = vpop.permute.xlu0 %2931
        %2933 = vrot.lane.b32.xlu0 %v2922, 108
        %v2934 = vpop.permute.xlu0 %2933
        %2935 = vrot.lane.b32.xlu0 %v2924, 108
        %v2936 = vpop.permute.xlu0 %2935
        %v2937 = vsel %vm1198, %v2926, %v2928
        %v2938 = vsel %vm1198, %v2928, %v2930
        %v2939 = vsel %vm1198, %v2932, %v2934
        %v2940 = vsel %vm1198, %v2934, %v2936
        %v2947 = vadd.f32 %v2884, %v2937
        %v2948 = vadd.f32 %v2885, %v2938
        %v2949 = vadd.f32 %v2886, %v2930
        %v2950 = vadd.f32 %v2887, %v2939
        %v2951 = vadd.f32 %v2888, %v2940
        %v2952 = vadd.f32 %v2889, %v2936
        %s2953 = sld [smem:[#allocation2 + $0x19]]
        %v2954 = vstv %s2953
        %v2955 = vmul.f32 %v2002, %v2954
        %v2956 = vmul.f32 %v2003, %v2954
        %v2957 = vmul.f32 %v2004, %v2954
        %v2958 = vmul.f32 %v2005, %v2954
        %v2959 = vmul.f32 %v2006, %v2954
        %v2960 = vmul.f32 %v2007, %v2954
        %2967 = vrot.lane.b32.xlu0 %v2955, 92
        %v2968 = vpop.permute.xlu0 %2967
        %2969 = vrot.lane.b32.xlu0 %v2956, 92
        %v2970 = vpop.permute.xlu0 %2969
        %2971 = vrot.lane.b32.xlu0 %v2957, 92
        %v2972 = vpop.permute.xlu0 %2971
        %2973 = vrot.lane.b32.xlu0 %v2958, 92
        %v2974 = vpop.permute.xlu0 %2973
        %2975 = vrot.lane.b32.xlu0 %v2959, 92
        %v2976 = vpop.permute.xlu0 %2975
        %2977 = vrot.lane.b32.xlu0 %v2960, 92
        %v2978 = vpop.permute.xlu0 %2977
        %v2979 = vsel %vm1367, %v2968, %v2970
        %v2980 = vsel %vm1367, %v2970, %v2972
        %v2981 = vsel %vm1367, %v2974, %v2976
        %v2982 = vsel %vm1367, %v2976, %v2978
        %v2989 = vadd.f32 %v2947, %v2979
        %v2990 = vadd.f32 %v2948, %v2980
        %v2991 = vadd.f32 %v2949, %v2972
        %v2992 = vadd.f32 %v2950, %v2981
        %v2993 = vadd.f32 %v2951, %v2982
        %v2994 = vadd.f32 %v2952, %v2978
        %s2995 = sld [smem:[#allocation2 + $0x3d]]
        %v2996 = vstv %s2995
        %v2997 = vmul.f32 %v2002, %v2996
        %v2998 = vmul.f32 %v2003, %v2996
        %v2999 = vmul.f32 %v2004, %v2996
        %v3000 = vmul.f32 %v2005, %v2996
        %v3001 = vmul.f32 %v2006, %v2996
        %v3002 = vmul.f32 %v2007, %v2996
        %v3003 = vmul.f32 %v2008, %v2996
        %v3004 = vmul.f32 %v2009, %v2996
        %v3005 = vmul.f32 %v2010, %v2996
        %v3015 = vrot.slane %v2997, 1
        %v3016 = vrot.slane %v3000, 1
        %v3017 = vsel %vm420, %v3015, %v3016
        %v3018 = vrot.slane %v2998, 1
        %v3019 = vrot.slane %v3001, 1
        %v3020 = vsel %vm420, %v3018, %v3019
        %v3021 = vrot.slane %v2999, 1
        %v3022 = vrot.slane %v3002, 1
        %v3023 = vsel %vm420, %v3021, %v3022
        %v3024 = vrot.slane %v3003, 1
        %v3025 = vsel %vm420, %v3016, %v3024
        %v3026 = vrot.slane %v3004, 1
        %v3027 = vsel %vm420, %v3019, %v3026
        %v3028 = vrot.slane %v3005, 1
        %v3029 = vsel %vm420, %v3022, %v3028
        %3030 = vrot.lane.b32.xlu0 %v3017, 92
        %v3031 = vpop.permute.xlu0 %3030
        %3032 = vrot.lane.b32.xlu0 %v3020, 92
        %v3033 = vpop.permute.xlu0 %3032
        %3034 = vrot.lane.b32.xlu0 %v3023, 92
        %v3035 = vpop.permute.xlu0 %3034
        %3036 = vrot.lane.b32.xlu0 %v3025, 92
        %v3037 = vpop.permute.xlu0 %3036
        %3038 = vrot.lane.b32.xlu0 %v3027, 92
        %v3039 = vpop.permute.xlu0 %3038
        %3040 = vrot.lane.b32.xlu0 %v3029, 92
        %v3041 = vpop.permute.xlu0 %3040
        %v3042 = vsel %vm1367, %v3031, %v3033
        %v3043 = vsel %vm1367, %v3033, %v3035
        %v3044 = vsel %vm1367, %v3037, %v3039
        %v3045 = vsel %vm1367, %v3039, %v3041
        %v3052 = vadd.f32 %v2989, %v3042
        %v3053 = vadd.f32 %v2990, %v3043
        %v3054 = vadd.f32 %v2991, %v3035
        %v3055 = vadd.f32 %v2992, %v3044
        %v3056 = vadd.f32 %v2993, %v3045
        %v3057 = vadd.f32 %v2994, %v3041
        %s3058 = sld [smem:[#allocation2 + $0x61]]
        %v3059 = vstv %s3058
        %v3060 = vmul.f32 %v2002, %v3059
        %v3061 = vmul.f32 %v2003, %v3059
        %v3062 = vmul.f32 %v2004, %v3059
        %v3063 = vmul.f32 %v2005, %v3059
        %v3064 = vmul.f32 %v2006, %v3059
        %v3065 = vmul.f32 %v2007, %v3059
        %v3066 = vmul.f32 %v2008, %v3059
        %v3067 = vmul.f32 %v2009, %v3059
        %v3068 = vmul.f32 %v2010, %v3059
        %v3078 = vrot.slane %v3060, 2
        %v3079 = vrot.slane %v3063, 2
        %v3080 = vsel %vm468, %v3078, %v3079
        %v3081 = vrot.slane %v3061, 2
        %v3082 = vrot.slane %v3064, 2
        %v3083 = vsel %vm468, %v3081, %v3082
        %v3084 = vrot.slane %v3062, 2
        %v3085 = vrot.slane %v3065, 2
        %v3086 = vsel %vm468, %v3084, %v3085
        %v3087 = vrot.slane %v3066, 2
        %v3088 = vsel %vm468, %v3079, %v3087
        %v3089 = vrot.slane %v3067, 2
        %v3090 = vsel %vm468, %v3082, %v3089
        %v3091 = vrot.slane %v3068, 2
        %v3092 = vsel %vm468, %v3085, %v3091
        %3093 = vrot.lane.b32.xlu0 %v3080, 92
        %v3094 = vpop.permute.xlu0 %3093
        %3095 = vrot.lane.b32.xlu0 %v3083, 92
        %v3096 = vpop.permute.xlu0 %3095
        %3097 = vrot.lane.b32.xlu0 %v3086, 92
        %v3098 = vpop.permute.xlu0 %3097
        %3099 = vrot.lane.b32.xlu0 %v3088, 92
        %v3100 = vpop.permute.xlu0 %3099
        %3101 = vrot.lane.b32.xlu0 %v3090, 92
        %v3102 = vpop.permute.xlu0 %3101
        %3103 = vrot.lane.b32.xlu0 %v3092, 92
        %v3104 = vpop.permute.xlu0 %3103
        %v3105 = vsel %vm1367, %v3094, %v3096
        %v3106 = vsel %vm1367, %v3096, %v3098
        %v3107 = vsel %vm1367, %v3100, %v3102
        %v3108 = vsel %vm1367, %v3102, %v3104
        %v3115 = vadd.f32 %v3052, %v3105
        %v3116 = vadd.f32 %v3053, %v3106
        %v3117 = vadd.f32 %v3054, %v3098
        %v3118 = vadd.f32 %v3055, %v3107
        %v3119 = vadd.f32 %v3056, %v3108
        %v3120 = vadd.f32 %v3057, %v3104
        %s3121 = sld [smem:[#allocation2 + $0x1d]]
        %v3122 = vstv %s3121
        %v3123 = vmul.f32 %v2002, %v3122
        %v3124 = vmul.f32 %v2003, %v3122
        %v3125 = vmul.f32 %v2004, %v3122
        %v3126 = vmul.f32 %v2005, %v3122
        %v3127 = vmul.f32 %v2006, %v3122
        %v3128 = vmul.f32 %v2007, %v3122
        %3135 = vrot.lane.b32.xlu0 %v3123, 91
        %v3136 = vpop.permute.xlu0 %3135
        %3137 = vrot.lane.b32.xlu0 %v3124, 91
        %v3138 = vpop.permute.xlu0 %3137
        %3139 = vrot.lane.b32.xlu0 %v3125, 91
        %v3140 = vpop.permute.xlu0 %3139
        %3141 = vrot.lane.b32.xlu0 %v3126, 91
        %v3142 = vpop.permute.xlu0 %3141
        %3143 = vrot.lane.b32.xlu0 %v3127, 91
        %v3144 = vpop.permute.xlu0 %3143
        %3145 = vrot.lane.b32.xlu0 %v3128, 91
        %v3146 = vpop.permute.xlu0 %3145
        %v3147 = vsel %vm1536, %v3136, %v3138
        %v3148 = vsel %vm1536, %v3138, %v3140
        %v3149 = vsel %vm1536, %v3142, %v3144
        %v3150 = vsel %vm1536, %v3144, %v3146
        %v3157 = vadd.f32 %v3115, %v3147
        %v3158 = vadd.f32 %v3116, %v3148
        %v3159 = vadd.f32 %v3117, %v3140
        %v3160 = vadd.f32 %v3118, %v3149
        %v3161 = vadd.f32 %v3119, %v3150
        %v3162 = vadd.f32 %v3120, %v3146
        %s3163 = sld [smem:[#allocation2 + $0x41]]
        %v3164 = vstv %s3163
        %v3165 = vmul.f32 %v2002, %v3164
        %v3166 = vmul.f32 %v2003, %v3164
        %v3167 = vmul.f32 %v2004, %v3164
        %v3168 = vmul.f32 %v2005, %v3164
        %v3169 = vmul.f32 %v2006, %v3164
        %v3170 = vmul.f32 %v2007, %v3164
        %v3171 = vmul.f32 %v2008, %v3164
        %v3172 = vmul.f32 %v2009, %v3164
        %v3173 = vmul.f32 %v2010, %v3164
        %v3183 = vrot.slane %v3165, 1
        %v3184 = vrot.slane %v3168, 1
        %v3185 = vsel %vm420, %v3183, %v3184
        %v3186 = vrot.slane %v3166, 1
        %v3187 = vrot.slane %v3169, 1
        %v3188 = vsel %vm420, %v3186, %v3187
        %v3189 = vrot.slane %v3167, 1
        %v3190 = vrot.slane %v3170, 1
        %v3191 = vsel %vm420, %v3189, %v3190
        %v3192 = vrot.slane %v3171, 1
        %v3193 = vsel %vm420, %v3184, %v3192
        %v3194 = vrot.slane %v3172, 1
        %v3195 = vsel %vm420, %v3187, %v3194
        %v3196 = vrot.slane %v3173, 1
        %v3197 = vsel %vm420, %v3190, %v3196
        %3198 = vrot.lane.b32.xlu0 %v3185, 91
        %v3199 = vpop.permute.xlu0 %3198
        %3200 = vrot.lane.b32.xlu0 %v3188, 91
        %v3201 = vpop.permute.xlu0 %3200
        %3202 = vrot.lane.b32.xlu0 %v3191, 91
        %v3203 = vpop.permute.xlu0 %3202
        %3204 = vrot.lane.b32.xlu0 %v3193, 91
        %v3205 = vpop.permute.xlu0 %3204
        %3206 = vrot.lane.b32.xlu0 %v3195, 91
        %v3207 = vpop.permute.xlu0 %3206
        %3208 = vrot.lane.b32.xlu0 %v3197, 91
        %v3209 = vpop.permute.xlu0 %3208
        %v3210 = vsel %vm1536, %v3199, %v3201
        %v3211 = vsel %vm1536, %v3201, %v3203
        %v3212 = vsel %vm1536, %v3205, %v3207
        %v3213 = vsel %vm1536, %v3207, %v3209
        %v3220 = vadd.f32 %v3157, %v3210
        %v3221 = vadd.f32 %v3158, %v3211
        %v3222 = vadd.f32 %v3159, %v3203
        %v3223 = vadd.f32 %v3160, %v3212
        %v3224 = vadd.f32 %v3161, %v3213
        %v3225 = vadd.f32 %v3162, %v3209
        %s3226 = sld [smem:[#allocation2 + $0x65]]
        %v3227 = vstv %s3226
        %v3228 = vmul.f32 %v2002, %v3227
        %v3229 = vmul.f32 %v2003, %v3227
        %v3230 = vmul.f32 %v2004, %v3227
        %v3231 = vmul.f32 %v2005, %v3227
        %v3232 = vmul.f32 %v2006, %v3227
        %v3233 = vmul.f32 %v2007, %v3227
        %v3234 = vmul.f32 %v2008, %v3227
        %v3235 = vmul.f32 %v2009, %v3227
        %v3236 = vmul.f32 %v2010, %v3227
        %v3246 = vrot.slane %v3228, 2
        %v3247 = vrot.slane %v3231, 2
        %v3248 = vsel %vm468, %v3246, %v3247
        %v3249 = vrot.slane %v3229, 2
        %v3250 = vrot.slane %v3232, 2
        %v3251 = vsel %vm468, %v3249, %v3250
        %v3252 = vrot.slane %v3230, 2
        %v3253 = vrot.slane %v3233, 2
        %v3254 = vsel %vm468, %v3252, %v3253
        %v3255 = vrot.slane %v3234, 2
        %v3256 = vsel %vm468, %v3247, %v3255
        %v3257 = vrot.slane %v3235, 2
        %v3258 = vsel %vm468, %v3250, %v3257
        %v3259 = vrot.slane %v3236, 2
        %v3260 = vsel %vm468, %v3253, %v3259
        %3261 = vrot.lane.b32.xlu0 %v3248, 91
        %v3262 = vpop.permute.xlu0 %3261
        %3263 = vrot.lane.b32.xlu0 %v3251, 91
        %v3264 = vpop.permute.xlu0 %3263
        %3265 = vrot.lane.b32.xlu0 %v3254, 91
        %v3266 = vpop.permute.xlu0 %3265
        %3267 = vrot.lane.b32.xlu0 %v3256, 91
        %v3268 = vpop.permute.xlu0 %3267
        %3269 = vrot.lane.b32.xlu0 %v3258, 91
        %v3270 = vpop.permute.xlu0 %3269
        %3271 = vrot.lane.b32.xlu0 %v3260, 91
        %v3272 = vpop.permute.xlu0 %3271
        %v3273 = vsel %vm1536, %v3262, %v3264
        %v3274 = vsel %vm1536, %v3264, %v3266
        %v3275 = vsel %vm1536, %v3268, %v3270
        %v3276 = vsel %vm1536, %v3270, %v3272
        %v3283 = vadd.f32 %v3220, %v3273
        %v3284 = vadd.f32 %v3221, %v3274
        %v3285 = vadd.f32 %v3222, %v3266
        %v3286 = vadd.f32 %v3223, %v3275
        %v3287 = vadd.f32 %v3224, %v3276
        %v3288 = vadd.f32 %v3225, %v3272
        %s3289 = sld [smem:[#allocation2 + $0x21]]
        %v3290 = vstv %s3289
        %v3291 = vmul.f32 %v2002, %v3290
        %v3292 = vmul.f32 %v2003, %v3290
        %v3293 = vmul.f32 %v2004, %v3290
        %v3294 = vmul.f32 %v2005, %v3290
        %v3295 = vmul.f32 %v2006, %v3290
        %v3296 = vmul.f32 %v2007, %v3290
        %3303 = vrot.lane.b32.xlu0 %v3291, 90
        %v3304 = vpop.permute.xlu0 %3303
        %3305 = vrot.lane.b32.xlu0 %v3292, 90
        %v3306 = vpop.permute.xlu0 %3305
        %3307 = vrot.lane.b32.xlu0 %v3293, 90
        %v3308 = vpop.permute.xlu0 %3307
        %3309 = vrot.lane.b32.xlu0 %v3294, 90
        %v3310 = vpop.permute.xlu0 %3309
        %3311 = vrot.lane.b32.xlu0 %v3295, 90
        %v3312 = vpop.permute.xlu0 %3311
        %3313 = vrot.lane.b32.xlu0 %v3296, 90
        %v3314 = vpop.permute.xlu0 %3313
        %v3315 = vsel %vm1705, %v3304, %v3306
        %v3316 = vsel %vm1705, %v3306, %v3308
        %v3317 = vsel %vm1705, %v3310, %v3312
        %v3318 = vsel %vm1705, %v3312, %v3314
        %v3325 = vadd.f32 %v3283, %v3315
        %v3326 = vadd.f32 %v3284, %v3316
        %v3327 = vadd.f32 %v3285, %v3308
        %v3328 = vadd.f32 %v3286, %v3317
        %v3329 = vadd.f32 %v3287, %v3318
        %v3330 = vadd.f32 %v3288, %v3314
        %s3331 = sld [smem:[#allocation2 + $0x45]]
        %v3332 = vstv %s3331
        %v3333 = vmul.f32 %v2002, %v3332
        %v3334 = vmul.f32 %v2003, %v3332
        %v3335 = vmul.f32 %v2004, %v3332
        %v3336 = vmul.f32 %v2005, %v3332
        %v3337 = vmul.f32 %v2006, %v3332
        %v3338 = vmul.f32 %v2007, %v3332
        %v3339 = vmul.f32 %v2008, %v3332
        %v3340 = vmul.f32 %v2009, %v3332
        %v3341 = vmul.f32 %v2010, %v3332
        %v3351 = vrot.slane %v3333, 1
        %v3352 = vrot.slane %v3336, 1
        %v3353 = vsel %vm420, %v3351, %v3352
        %v3354 = vrot.slane %v3334, 1
        %v3355 = vrot.slane %v3337, 1
        %v3356 = vsel %vm420, %v3354, %v3355
        %v3357 = vrot.slane %v3335, 1
        %v3358 = vrot.slane %v3338, 1
        %v3359 = vsel %vm420, %v3357, %v3358
        %v3360 = vrot.slane %v3339, 1
        %v3361 = vsel %vm420, %v3352, %v3360
        %v3362 = vrot.slane %v3340, 1
        %v3363 = vsel %vm420, %v3355, %v3362
        %v3364 = vrot.slane %v3341, 1
        %v3365 = vsel %vm420, %v3358, %v3364
        %3366 = vrot.lane.b32.xlu0 %v3353, 90
        %v3367 = vpop.permute.xlu0 %3366
        %3368 = vrot.lane.b32.xlu0 %v3356, 90
        %v3369 = vpop.permute.xlu0 %3368
        %3370 = vrot.lane.b32.xlu0 %v3359, 90
        %v3371 = vpop.permute.xlu0 %3370
        %3372 = vrot.lane.b32.xlu0 %v3361, 90
        %v3373 = vpop.permute.xlu0 %3372
        %3374 = vrot.lane.b32.xlu0 %v3363, 90
        %v3375 = vpop.permute.xlu0 %3374
        %3376 = vrot.lane.b32.xlu0 %v3365, 90
        %v3377 = vpop.permute.xlu0 %3376
        %v3378 = vsel %vm1705, %v3367, %v3369
        %v3379 = vsel %vm1705, %v3369, %v3371
        %v3380 = vsel %vm1705, %v3373, %v3375
        %v3381 = vsel %vm1705, %v3375, %v3377
        %v3388 = vadd.f32 %v3325, %v3378
        %v3389 = vadd.f32 %v3326, %v3379
        %v3390 = vadd.f32 %v3327, %v3371
        %v3391 = vadd.f32 %v3328, %v3380
        %v3392 = vadd.f32 %v3329, %v3381
        %v3393 = vadd.f32 %v3330, %v3377
        %s3394 = sld [smem:[#allocation2 + $0x69]]
        %v3395 = vstv %s3394
        %v3396 = vmul.f32 %v2002, %v3395
        %v3397 = vmul.f32 %v2003, %v3395
        %v3398 = vmul.f32 %v2004, %v3395
        %v3399 = vmul.f32 %v2005, %v3395
        %v3400 = vmul.f32 %v2006, %v3395
        %v3401 = vmul.f32 %v2007, %v3395
        %v3402 = vmul.f32 %v2008, %v3395
        %v3403 = vmul.f32 %v2009, %v3395
        %v3404 = vmul.f32 %v2010, %v3395
        %v3414 = vrot.slane %v3396, 2
        %v3415 = vrot.slane %v3399, 2
        %v3416 = vsel %vm468, %v3414, %v3415
        %v3417 = vrot.slane %v3397, 2
        %v3418 = vrot.slane %v3400, 2
        %v3419 = vsel %vm468, %v3417, %v3418
        %v3420 = vrot.slane %v3398, 2
        %v3421 = vrot.slane %v3401, 2
        %v3422 = vsel %vm468, %v3420, %v3421
        %v3423 = vrot.slane %v3402, 2
        %v3424 = vsel %vm468, %v3415, %v3423
        %v3425 = vrot.slane %v3403, 2
        %v3426 = vsel %vm468, %v3418, %v3425
        %v3427 = vrot.slane %v3404, 2
        %v3428 = vsel %vm468, %v3421, %v3427
        %3429 = vrot.lane.b32.xlu0 %v3416, 90
        %v3430 = vpop.permute.xlu0 %3429
        %3431 = vrot.lane.b32.xlu0 %v3419, 90
        %v3432 = vpop.permute.xlu0 %3431
        %3433 = vrot.lane.b32.xlu0 %v3422, 90
        %v3434 = vpop.permute.xlu0 %3433
        %3435 = vrot.lane.b32.xlu0 %v3424, 90
        %v3436 = vpop.permute.xlu0 %3435
        %3437 = vrot.lane.b32.xlu0 %v3426, 90
        %v3438 = vpop.permute.xlu0 %3437
        %3439 = vrot.lane.b32.xlu0 %v3428, 90
        %v3440 = vpop.permute.xlu0 %3439
        %v3441 = vsel %vm1705, %v3430, %v3432
        %v3442 = vsel %vm1705, %v3432, %v3434
        %v3443 = vsel %vm1705, %v3436, %v3438
        %v3444 = vsel %vm1705, %v3438, %v3440
        %v3451 = vadd.f32 %v3388, %v3441
        %v3452 = vadd.f32 %v3389, %v3442
        %v3453 = vadd.f32 %v3390, %v3434
        %v3454 = vadd.f32 %v3391, %v3443
        %v3455 = vadd.f32 %v3392, %v3444
        %v3456 = vadd.f32 %v3393, %v3440
        %s3457 = sld [smem:[#allocation5 + $0x1]]
        %v3458 = vstv %s3457
        %v3459 = vadd.f32 %v3451, %v3458
        %v3460 = vadd.f32 %v3452, %v3458
        %v3461 = vadd.f32 %v3453, %v3458
        %v3462 = vadd.f32 %v3454, %v3458
        %v3463 = vadd.f32 %v3455, %v3458
        %v3464 = vadd.f32 %v3456, %v3458
        %3467 = vrot.lane.b32.xlu0 %v3459, 126
        %v3468 = vpop.permute.xlu0 %3467
        %3469 = vrot.lane.b32.xlu0 %v3462, 126
        %v3470 = vpop.permute.xlu0 %3469
        %3473 = vrot.lane.b32.xlu0 %v3459, 124
        %v3474 = vpop.permute.xlu0 %3473
        %3475 = vrot.lane.b32.xlu0 %v3462, 124
        %v3476 = vpop.permute.xlu0 %3475
        %3479 = vrot.lane.b32.xlu0 %v3459, 122
        %v3480 = vpop.permute.xlu0 %3479
        %3481 = vrot.lane.b32.xlu0 %v3462, 122
        %v3482 = vpop.permute.xlu0 %3481
        %3485 = vrot.lane.b32.xlu0 %v3459, 120
        %v3486 = vpop.permute.xlu0 %3485
        %3487 = vrot.lane.b32.xlu0 %v3462, 120
        %v3488 = vpop.permute.xlu0 %3487
        %3491 = vrot.lane.b32.xlu0 %v3459, 118
        %v3492 = vpop.permute.xlu0 %3491
        %3493 = vrot.lane.b32.xlu0 %v3462, 118
        %v3494 = vpop.permute.xlu0 %3493
        %3497 = vrot.lane.b32.xlu0 %v3459, 116
        %v3498 = vpop.permute.xlu0 %3497
        %3499 = vrot.lane.b32.xlu0 %v3462, 116
        %v3500 = vpop.permute.xlu0 %3499
        %3505 = vrot.lane.b32.xlu0 %v3459, 114
        %v3506 = vpop.permute.xlu0 %3505
        %3507 = vrot.lane.b32.xlu0 %v3460, 114
        %v3508 = vpop.permute.xlu0 %3507
        %3509 = vrot.lane.b32.xlu0 %v3462, 114
        %v3510 = vpop.permute.xlu0 %3509
        %3511 = vrot.lane.b32.xlu0 %v3463, 114
        %v3512 = vpop.permute.xlu0 %3511
        %v3513 = vsel %vm1904, %v3506, %v3508
        %v3514 = vsel %vm1904, %v3510, %v3512
        %3517 = vrot.lane.b32.xlu0 %v3460, 112
        %v3518 = vpop.permute.xlu0 %3517
        %3519 = vrot.lane.b32.xlu0 %v3463, 112
        %v3520 = vpop.permute.xlu0 %3519
        %3523 = vrot.lane.b32.xlu0 %v3460, 110
        %v3524 = vpop.permute.xlu0 %3523
        %3525 = vrot.lane.b32.xlu0 %v3463, 110
        %v3526 = vpop.permute.xlu0 %3525
        %3529 = vrot.lane.b32.xlu0 %v3460, 108
        %v3530 = vpop.permute.xlu0 %3529
        %3531 = vrot.lane.b32.xlu0 %v3463, 108
        %v3532 = vpop.permute.xlu0 %3531
        %3535 = vrot.lane.b32.xlu0 %v3460, 106
        %v3536 = vpop.permute.xlu0 %3535
        %3537 = vrot.lane.b32.xlu0 %v3463, 106
        %v3538 = vpop.permute.xlu0 %3537
        %3541 = vrot.lane.b32.xlu0 %v3460, 104
        %v3542 = vpop.permute.xlu0 %3541
        %3543 = vrot.lane.b32.xlu0 %v3463, 104
        %v3544 = vpop.permute.xlu0 %3543
        %3547 = vrot.lane.b32.xlu0 %v3460, 102
        %v3548 = vpop.permute.xlu0 %3547
        %3549 = vrot.lane.b32.xlu0 %v3463, 102
        %v3550 = vpop.permute.xlu0 %3549
        %3555 = vrot.lane.b32.xlu0 %v3460, 100
        %v3556 = vpop.permute.xlu0 %3555
        %3557 = vrot.lane.b32.xlu0 %v3461, 100
        %v3558 = vpop.permute.xlu0 %3557
        %3559 = vrot.lane.b32.xlu0 %v3463, 100
        %v3560 = vpop.permute.xlu0 %3559
        %3561 = vrot.lane.b32.xlu0 %v3464, 100
        %v3562 = vpop.permute.xlu0 %3561
        %v3563 = vsel %vm1955, %v3556, %v3558
        %v3564 = vsel %vm1955, %v3560, %v3562
        %3567 = vrot.lane.b32.xlu0 %v3461, 98
        %v3568 = vpop.permute.xlu0 %3567
        %3569 = vrot.lane.b32.xlu0 %v3464, 98
        %v3570 = vpop.permute.xlu0 %3569
        %v3573 = vsel %vm1966, %v3459, %v3468
        %v3574 = vsel %vm1966, %v3462, %v3470
        %v3575 = vsel %vm1969, %v3573, %v3474
        %v3576 = vsel %vm1969, %v3574, %v3476
        %v3577 = vsel %vm1972, %v3575, %v3480
        %v3578 = vsel %vm1972, %v3576, %v3482
        %v3579 = vsel %vm1975, %v3577, %v3486
        %v3580 = vsel %vm1975, %v3578, %v3488
        %v3581 = vsel %vm1978, %v3579, %v3492
        %v3582 = vsel %vm1978, %v3580, %v3494
        %v3583 = vsel %vm1981, %v3581, %v3498
        %v3584 = vsel %vm1981, %v3582, %v3500
        %v3585 = vsel %vm1984, %v3583, %v3513
        %v3586 = vsel %vm1984, %v3584, %v3514
        %v3587 = vsel %vm1966, %v3518, %v3524
        %v3588 = vsel %vm1966, %v3520, %v3526
        %v3589 = vsel %vm1969, %v3587, %v3530
        %v3590 = vsel %vm1969, %v3588, %v3532
        %v3591 = vsel %vm1972, %v3589, %v3536
        %v3592 = vsel %vm1972, %v3590, %v3538
        %v3593 = vsel %vm1975, %v3591, %v3542
        %v3594 = vsel %vm1975, %v3592, %v3544
        %v3595 = vsel %vm1978, %v3593, %v3548
        %v3596 = vsel %vm1978, %v3594, %v3550
        %v3597 = vsel %vm1981, %v3595, %v3563
        %v3598 = vsel %vm1981, %v3596, %v3564
        %v3599 = vsel %vm1984, %v3597, %v3568
        %v3600 = vsel %vm1984, %v3598, %v3570
        %s3601 = scalar_lea.vmem %s382, 144
        %v3602 = vld [vmem:[%s3601] sm:$0xff]
        %v3603 = vld [vmem:[%s3601 + $0x8] sm:$0xff]
        %v3604 = vld [vmem:[%s3601 + $0x10] sm:$0xff]
        %v3605 = vld [vmem:[%s3601 + $0x18] sm:$0xff]
        %v3606 = vld [vmem:[%s3601 + $0x20] sm:$0xff]
        %v3607 = vld [vmem:[%s3601 + $0x28] sm:$0xff]
        %v3608 = vld [vmem:[%s3601 + $0x30] sm:$0x3]
        %v3609 = vld [vmem:[%s3601 + $0x38] sm:$0x3]
        %v3610 = vld [vmem:[%s3601 + $0x40] sm:$0x3]
        %s3611 = sld [smem:[#allocation2 + $0x2]]
        %v3612 = vstv %s3611
        %v3613 = vmul.f32 %v3602, %v3612
        %v3614 = vmul.f32 %v3603, %v3612
        %v3615 = vmul.f32 %v3604, %v3612
        %v3616 = vmul.f32 %v3605, %v3612
        %v3617 = vmul.f32 %v3606, %v3612
        %v3618 = vmul.f32 %v3607, %v3612
        %s3619 = sld [smem:[#allocation2 + $0x26]]
        %v3620 = vstv %s3619
        %v3621 = vmul.f32 %v3602, %v3620
        %v3622 = vmul.f32 %v3603, %v3620
        %v3623 = vmul.f32 %v3604, %v3620
        %v3624 = vmul.f32 %v3605, %v3620
        %v3625 = vmul.f32 %v3606, %v3620
        %v3626 = vmul.f32 %v3607, %v3620
        %v3627 = vmul.f32 %v3608, %v3620
        %v3628 = vmul.f32 %v3609, %v3620
        %v3629 = vmul.f32 %v3610, %v3620
        %v3639 = vrot.slane %v3621, 1
        %v3640 = vrot.slane %v3624, 1
        %v3641 = vsel %vm420, %v3639, %v3640
        %v3642 = vrot.slane %v3622, 1
        %v3643 = vrot.slane %v3625, 1
        %v3644 = vsel %vm420, %v3642, %v3643
        %v3645 = vrot.slane %v3623, 1
        %v3646 = vrot.slane %v3626, 1
        %v3647 = vsel %vm420, %v3645, %v3646
        %v3648 = vrot.slane %v3627, 1
        %v3649 = vsel %vm420, %v3640, %v3648
        %v3650 = vrot.slane %v3628, 1
        %v3651 = vsel %vm420, %v3643, %v3650
        %v3652 = vrot.slane %v3629, 1
        %v3653 = vsel %vm420, %v3646, %v3652
        %v3660 = vadd.f32 %v3613, %v3641
        %v3661 = vadd.f32 %v3614, %v3644
        %v3662 = vadd.f32 %v3615, %v3647
        %v3663 = vadd.f32 %v3616, %v3649
        %v3664 = vadd.f32 %v3617, %v3651
        %v3665 = vadd.f32 %v3618, %v3653
        %s3666 = sld [smem:[#allocation2 + $0x4a]]
        %v3667 = vstv %s3666
        %v3668 = vmul.f32 %v3602, %v3667
        %v3669 = vmul.f32 %v3603, %v3667
        %v3670 = vmul.f32 %v3604, %v3667
        %v3671 = vmul.f32 %v3605, %v3667
        %v3672 = vmul.f32 %v3606, %v3667
        %v3673 = vmul.f32 %v3607, %v3667
        %v3674 = vmul.f32 %v3608, %v3667
        %v3675 = vmul.f32 %v3609, %v3667
        %v3676 = vmul.f32 %v3610, %v3667
        %v3686 = vrot.slane %v3668, 2
        %v3687 = vrot.slane %v3671, 2
        %v3688 = vsel %vm468, %v3686, %v3687
        %v3689 = vrot.slane %v3669, 2
        %v3690 = vrot.slane %v3672, 2
        %v3691 = vsel %vm468, %v3689, %v3690
        %v3692 = vrot.slane %v3670, 2
        %v3693 = vrot.slane %v3673, 2
        %v3694 = vsel %vm468, %v3692, %v3693
        %v3695 = vrot.slane %v3674, 2
        %v3696 = vsel %vm468, %v3687, %v3695
        %v3697 = vrot.slane %v3675, 2
        %v3698 = vsel %vm468, %v3690, %v3697
        %v3699 = vrot.slane %v3676, 2
        %v3700 = vsel %vm468, %v3693, %v3699
        %v3707 = vadd.f32 %v3660, %v3688
        %v3708 = vadd.f32 %v3661, %v3691
        %v3709 = vadd.f32 %v3662, %v3694
        %v3710 = vadd.f32 %v3663, %v3696
        %v3711 = vadd.f32 %v3664, %v3698
        %v3712 = vadd.f32 %v3665, %v3700
        %s3713 = sld [smem:[#allocation2 + $0x6]]
        %v3714 = vstv %s3713
        %v3715 = vmul.f32 %v3602, %v3714
        %v3716 = vmul.f32 %v3603, %v3714
        %v3717 = vmul.f32 %v3604, %v3714
        %v3718 = vmul.f32 %v3605, %v3714
        %v3719 = vmul.f32 %v3606, %v3714
        %v3720 = vmul.f32 %v3607, %v3714
        %3727 = vrot.lane.b32.xlu0 %v3715, 127
        %v3728 = vpop.permute.xlu0 %3727
        %3729 = vrot.lane.b32.xlu0 %v3716, 127
        %v3730 = vpop.permute.xlu0 %3729
        %3731 = vrot.lane.b32.xlu0 %v3717, 127
        %v3732 = vpop.permute.xlu0 %3731
        %3733 = vrot.lane.b32.xlu0 %v3718, 127
        %v3734 = vpop.permute.xlu0 %3733
        %3735 = vrot.lane.b32.xlu0 %v3719, 127
        %v3736 = vpop.permute.xlu0 %3735
        %3737 = vrot.lane.b32.xlu0 %v3720, 127
        %v3738 = vpop.permute.xlu0 %3737
        %v3739 = vsel %vm522, %v3728, %v3730
        %v3740 = vsel %vm522, %v3730, %v3732
        %v3741 = vsel %vm522, %v3734, %v3736
        %v3742 = vsel %vm522, %v3736, %v3738
        %v3749 = vadd.f32 %v3707, %v3739
        %v3750 = vadd.f32 %v3708, %v3740
        %v3751 = vadd.f32 %v3709, %v3732
        %v3752 = vadd.f32 %v3710, %v3741
        %v3753 = vadd.f32 %v3711, %v3742
        %v3754 = vadd.f32 %v3712, %v3738
        %s3755 = sld [smem:[#allocation2 + $0x2a]]
        %v3756 = vstv %s3755
        %v3757 = vmul.f32 %v3602, %v3756
        %v3758 = vmul.f32 %v3603, %v3756
        %v3759 = vmul.f32 %v3604, %v3756
        %v3760 = vmul.f32 %v3605, %v3756
        %v3761 = vmul.f32 %v3606, %v3756
        %v3762 = vmul.f32 %v3607, %v3756
        %v3763 = vmul.f32 %v3608, %v3756
        %v3764 = vmul.f32 %v3609, %v3756
        %v3765 = vmul.f32 %v3610, %v3756
        %v3775 = vrot.slane %v3757, 1
        %v3776 = vrot.slane %v3760, 1
        %v3777 = vsel %vm420, %v3775, %v3776
        %v3778 = vrot.slane %v3758, 1
        %v3779 = vrot.slane %v3761, 1
        %v3780 = vsel %vm420, %v3778, %v3779
        %v3781 = vrot.slane %v3759, 1
        %v3782 = vrot.slane %v3762, 1
        %v3783 = vsel %vm420, %v3781, %v3782
        %v3784 = vrot.slane %v3763, 1
        %v3785 = vsel %vm420, %v3776, %v3784
        %v3786 = vrot.slane %v3764, 1
        %v3787 = vsel %vm420, %v3779, %v3786
        %v3788 = vrot.slane %v3765, 1
        %v3789 = vsel %vm420, %v3782, %v3788
        %3790 = vrot.lane.b32.xlu0 %v3777, 127
        %v3791 = vpop.permute.xlu0 %3790
        %3792 = vrot.lane.b32.xlu0 %v3780, 127
        %v3793 = vpop.permute.xlu0 %3792
        %3794 = vrot.lane.b32.xlu0 %v3783, 127
        %v3795 = vpop.permute.xlu0 %3794
        %3796 = vrot.lane.b32.xlu0 %v3785, 127
        %v3797 = vpop.permute.xlu0 %3796
        %3798 = vrot.lane.b32.xlu0 %v3787, 127
        %v3799 = vpop.permute.xlu0 %3798
        %3800 = vrot.lane.b32.xlu0 %v3789, 127
        %v3801 = vpop.permute.xlu0 %3800
        %v3802 = vsel %vm522, %v3791, %v3793
        %v3803 = vsel %vm522, %v3793, %v3795
        %v3804 = vsel %vm522, %v3797, %v3799
        %v3805 = vsel %vm522, %v3799, %v3801
        %v3812 = vadd.f32 %v3749, %v3802
        %v3813 = vadd.f32 %v3750, %v3803
        %v3814 = vadd.f32 %v3751, %v3795
        %v3815 = vadd.f32 %v3752, %v3804
        %v3816 = vadd.f32 %v3753, %v3805
        %v3817 = vadd.f32 %v3754, %v3801
        %s3818 = sld [smem:[#allocation2 + $0x4e]]
        %v3819 = vstv %s3818
        %v3820 = vmul.f32 %v3602, %v3819
        %v3821 = vmul.f32 %v3603, %v3819
        %v3822 = vmul.f32 %v3604, %v3819
        %v3823 = vmul.f32 %v3605, %v3819
        %v3824 = vmul.f32 %v3606, %v3819
        %v3825 = vmul.f32 %v3607, %v3819
        %v3826 = vmul.f32 %v3608, %v3819
        %v3827 = vmul.f32 %v3609, %v3819
        %v3828 = vmul.f32 %v3610, %v3819
        %v3838 = vrot.slane %v3820, 2
        %v3839 = vrot.slane %v3823, 2
        %v3840 = vsel %vm468, %v3838, %v3839
        %v3841 = vrot.slane %v3821, 2
        %v3842 = vrot.slane %v3824, 2
        %v3843 = vsel %vm468, %v3841, %v3842
        %v3844 = vrot.slane %v3822, 2
        %v3845 = vrot.slane %v3825, 2
        %v3846 = vsel %vm468, %v3844, %v3845
        %v3847 = vrot.slane %v3826, 2
        %v3848 = vsel %vm468, %v3839, %v3847
        %v3849 = vrot.slane %v3827, 2
        %v3850 = vsel %vm468, %v3842, %v3849
        %v3851 = vrot.slane %v3828, 2
        %v3852 = vsel %vm468, %v3845, %v3851
        %3853 = vrot.lane.b32.xlu0 %v3840, 127
        %v3854 = vpop.permute.xlu0 %3853
        %3855 = vrot.lane.b32.xlu0 %v3843, 127
        %v3856 = vpop.permute.xlu0 %3855
        %3857 = vrot.lane.b32.xlu0 %v3846, 127
        %v3858 = vpop.permute.xlu0 %3857
        %3859 = vrot.lane.b32.xlu0 %v3848, 127
        %v3860 = vpop.permute.xlu0 %3859
        %3861 = vrot.lane.b32.xlu0 %v3850, 127
        %v3862 = vpop.permute.xlu0 %3861
        %3863 = vrot.lane.b32.xlu0 %v3852, 127
        %v3864 = vpop.permute.xlu0 %3863
        %v3865 = vsel %vm522, %v3854, %v3856
        %v3866 = vsel %vm522, %v3856, %v3858
        %v3867 = vsel %vm522, %v3860, %v3862
        %v3868 = vsel %vm522, %v3862, %v3864
        %v3875 = vadd.f32 %v3812, %v3865
        %v3876 = vadd.f32 %v3813, %v3866
        %v3877 = vadd.f32 %v3814, %v3858
        %v3878 = vadd.f32 %v3815, %v3867
        %v3879 = vadd.f32 %v3816, %v3868
        %v3880 = vadd.f32 %v3817, %v3864
        %s3881 = sld [smem:[#allocation2 + $0xa]]
        %v3882 = vstv %s3881
        %v3883 = vmul.f32 %v3602, %v3882
        %v3884 = vmul.f32 %v3603, %v3882
        %v3885 = vmul.f32 %v3604, %v3882
        %v3886 = vmul.f32 %v3605, %v3882
        %v3887 = vmul.f32 %v3606, %v3882
        %v3888 = vmul.f32 %v3607, %v3882
        %3895 = vrot.lane.b32.xlu0 %v3883, 126
        %v3896 = vpop.permute.xlu0 %3895
        %3897 = vrot.lane.b32.xlu0 %v3884, 126
        %v3898 = vpop.permute.xlu0 %3897
        %3899 = vrot.lane.b32.xlu0 %v3885, 126
        %v3900 = vpop.permute.xlu0 %3899
        %3901 = vrot.lane.b32.xlu0 %v3886, 126
        %v3902 = vpop.permute.xlu0 %3901
        %3903 = vrot.lane.b32.xlu0 %v3887, 126
        %v3904 = vpop.permute.xlu0 %3903
        %3905 = vrot.lane.b32.xlu0 %v3888, 126
        %v3906 = vpop.permute.xlu0 %3905
        %v3907 = vsel %vm691, %v3896, %v3898
        %v3908 = vsel %vm691, %v3898, %v3900
        %v3909 = vsel %vm691, %v3902, %v3904
        %v3910 = vsel %vm691, %v3904, %v3906
        %v3917 = vadd.f32 %v3875, %v3907
        %v3918 = vadd.f32 %v3876, %v3908
        %v3919 = vadd.f32 %v3877, %v3900
        %v3920 = vadd.f32 %v3878, %v3909
        %v3921 = vadd.f32 %v3879, %v3910
        %v3922 = vadd.f32 %v3880, %v3906
        %s3923 = sld [smem:[#allocation2 + $0x2e]]
        %v3924 = vstv %s3923
        %v3925 = vmul.f32 %v3602, %v3924
        %v3926 = vmul.f32 %v3603, %v3924
        %v3927 = vmul.f32 %v3604, %v3924
        %v3928 = vmul.f32 %v3605, %v3924
        %v3929 = vmul.f32 %v3606, %v3924
        %v3930 = vmul.f32 %v3607, %v3924
        %v3931 = vmul.f32 %v3608, %v3924
        %v3932 = vmul.f32 %v3609, %v3924
        %v3933 = vmul.f32 %v3610, %v3924
        %v3943 = vrot.slane %v3925, 1
        %v3944 = vrot.slane %v3928, 1
        %v3945 = vsel %vm420, %v3943, %v3944
        %v3946 = vrot.slane %v3926, 1
        %v3947 = vrot.slane %v3929, 1
        %v3948 = vsel %vm420, %v3946, %v3947
        %v3949 = vrot.slane %v3927, 1
        %v3950 = vrot.slane %v3930, 1
        %v3951 = vsel %vm420, %v3949, %v3950
        %v3952 = vrot.slane %v3931, 1
        %v3953 = vsel %vm420, %v3944, %v3952
        %v3954 = vrot.slane %v3932, 1
        %v3955 = vsel %vm420, %v3947, %v3954
        %v3956 = vrot.slane %v3933, 1
        %v3957 = vsel %vm420, %v3950, %v3956
        %3958 = vrot.lane.b32.xlu0 %v3945, 126
        %v3959 = vpop.permute.xlu0 %3958
        %3960 = vrot.lane.b32.xlu0 %v3948, 126
        %v3961 = vpop.permute.xlu0 %3960
        %3962 = vrot.lane.b32.xlu0 %v3951, 126
        %v3963 = vpop.permute.xlu0 %3962
        %3964 = vrot.lane.b32.xlu0 %v3953, 126
        %v3965 = vpop.permute.xlu0 %3964
        %3966 = vrot.lane.b32.xlu0 %v3955, 126
        %v3967 = vpop.permute.xlu0 %3966
        %3968 = vrot.lane.b32.xlu0 %v3957, 126
        %v3969 = vpop.permute.xlu0 %3968
        %v3970 = vsel %vm691, %v3959, %v3961
        %v3971 = vsel %vm691, %v3961, %v3963
        %v3972 = vsel %vm691, %v3965, %v3967
        %v3973 = vsel %vm691, %v3967, %v3969
        %v3980 = vadd.f32 %v3917, %v3970
        %v3981 = vadd.f32 %v3918, %v3971
        %v3982 = vadd.f32 %v3919, %v3963
        %v3983 = vadd.f32 %v3920, %v3972
        %v3984 = vadd.f32 %v3921, %v3973
        %v3985 = vadd.f32 %v3922, %v3969
        %s3986 = sld [smem:[#allocation2 + $0x52]]
        %v3987 = vstv %s3986
        %v3988 = vmul.f32 %v3602, %v3987
        %v3989 = vmul.f32 %v3603, %v3987
        %v3990 = vmul.f32 %v3604, %v3987
        %v3991 = vmul.f32 %v3605, %v3987
        %v3992 = vmul.f32 %v3606, %v3987
        %v3993 = vmul.f32 %v3607, %v3987
        %v3994 = vmul.f32 %v3608, %v3987
        %v3995 = vmul.f32 %v3609, %v3987
        %v3996 = vmul.f32 %v3610, %v3987
        %v4006 = vrot.slane %v3988, 2
        %v4007 = vrot.slane %v3991, 2
        %v4008 = vsel %vm468, %v4006, %v4007
        %v4009 = vrot.slane %v3989, 2
        %v4010 = vrot.slane %v3992, 2
        %v4011 = vsel %vm468, %v4009, %v4010
        %v4012 = vrot.slane %v3990, 2
        %v4013 = vrot.slane %v3993, 2
        %v4014 = vsel %vm468, %v4012, %v4013
        %v4015 = vrot.slane %v3994, 2
        %v4016 = vsel %vm468, %v4007, %v4015
        %v4017 = vrot.slane %v3995, 2
        %v4018 = vsel %vm468, %v4010, %v4017
        %v4019 = vrot.slane %v3996, 2
        %v4020 = vsel %vm468, %v4013, %v4019
        %4021 = vrot.lane.b32.xlu0 %v4008, 126
        %v4022 = vpop.permute.xlu0 %4021
        %4023 = vrot.lane.b32.xlu0 %v4011, 126
        %v4024 = vpop.permute.xlu0 %4023
        %4025 = vrot.lane.b32.xlu0 %v4014, 126
        %v4026 = vpop.permute.xlu0 %4025
        %4027 = vrot.lane.b32.xlu0 %v4016, 126
        %v4028 = vpop.permute.xlu0 %4027
        %4029 = vrot.lane.b32.xlu0 %v4018, 126
        %v4030 = vpop.permute.xlu0 %4029
        %4031 = vrot.lane.b32.xlu0 %v4020, 126
        %v4032 = vpop.permute.xlu0 %4031
        %v4033 = vsel %vm691, %v4022, %v4024
        %v4034 = vsel %vm691, %v4024, %v4026
        %v4035 = vsel %vm691, %v4028, %v4030
        %v4036 = vsel %vm691, %v4030, %v4032
        %v4043 = vadd.f32 %v3980, %v4033
        %v4044 = vadd.f32 %v3981, %v4034
        %v4045 = vadd.f32 %v3982, %v4026
        %v4046 = vadd.f32 %v3983, %v4035
        %v4047 = vadd.f32 %v3984, %v4036
        %v4048 = vadd.f32 %v3985, %v4032
        %s4049 = sld [smem:[#allocation2 + $0xe]]
        %v4050 = vstv %s4049
        %v4051 = vmul.f32 %v3602, %v4050
        %v4052 = vmul.f32 %v3603, %v4050
        %v4053 = vmul.f32 %v3604, %v4050
        %v4054 = vmul.f32 %v3605, %v4050
        %v4055 = vmul.f32 %v3606, %v4050
        %v4056 = vmul.f32 %v3607, %v4050
        %4063 = vrot.lane.b32.xlu0 %v4051, 110
        %v4064 = vpop.permute.xlu0 %4063
        %4065 = vrot.lane.b32.xlu0 %v4052, 110
        %v4066 = vpop.permute.xlu0 %4065
        %4067 = vrot.lane.b32.xlu0 %v4053, 110
        %v4068 = vpop.permute.xlu0 %4067
        %4069 = vrot.lane.b32.xlu0 %v4054, 110
        %v4070 = vpop.permute.xlu0 %4069
        %4071 = vrot.lane.b32.xlu0 %v4055, 110
        %v4072 = vpop.permute.xlu0 %4071
        %4073 = vrot.lane.b32.xlu0 %v4056, 110
        %v4074 = vpop.permute.xlu0 %4073
        %v4075 = vsel %vm860, %v4064, %v4066
        %v4076 = vsel %vm860, %v4066, %v4068
        %v4077 = vsel %vm860, %v4070, %v4072
        %v4078 = vsel %vm860, %v4072, %v4074
        %v4085 = vadd.f32 %v4043, %v4075
        %v4086 = vadd.f32 %v4044, %v4076
        %v4087 = vadd.f32 %v4045, %v4068
        %v4088 = vadd.f32 %v4046, %v4077
        %v4089 = vadd.f32 %v4047, %v4078
        %v4090 = vadd.f32 %v4048, %v4074
        %s4091 = sld [smem:[#allocation2 + $0x32]]
        %v4092 = vstv %s4091
        %v4093 = vmul.f32 %v3602, %v4092
        %v4094 = vmul.f32 %v3603, %v4092
        %v4095 = vmul.f32 %v3604, %v4092
        %v4096 = vmul.f32 %v3605, %v4092
        %v4097 = vmul.f32 %v3606, %v4092
        %v4098 = vmul.f32 %v3607, %v4092
        %v4099 = vmul.f32 %v3608, %v4092
        %v4100 = vmul.f32 %v3609, %v4092
        %v4101 = vmul.f32 %v3610, %v4092
        %v4111 = vrot.slane %v4093, 1
        %v4112 = vrot.slane %v4096, 1
        %v4113 = vsel %vm420, %v4111, %v4112
        %v4114 = vrot.slane %v4094, 1
        %v4115 = vrot.slane %v4097, 1
        %v4116 = vsel %vm420, %v4114, %v4115
        %v4117 = vrot.slane %v4095, 1
        %v4118 = vrot.slane %v4098, 1
        %v4119 = vsel %vm420, %v4117, %v4118
        %v4120 = vrot.slane %v4099, 1
        %v4121 = vsel %vm420, %v4112, %v4120
        %v4122 = vrot.slane %v4100, 1
        %v4123 = vsel %vm420, %v4115, %v4122
        %v4124 = vrot.slane %v4101, 1
        %v4125 = vsel %vm420, %v4118, %v4124
        %4126 = vrot.lane.b32.xlu0 %v4113, 110
        %v4127 = vpop.permute.xlu0 %4126
        %4128 = vrot.lane.b32.xlu0 %v4116, 110
        %v4129 = vpop.permute.xlu0 %4128
        %4130 = vrot.lane.b32.xlu0 %v4119, 110
        %v4131 = vpop.permute.xlu0 %4130
        %4132 = vrot.lane.b32.xlu0 %v4121, 110
        %v4133 = vpop.permute.xlu0 %4132
        %4134 = vrot.lane.b32.xlu0 %v4123, 110
        %v4135 = vpop.permute.xlu0 %4134
        %4136 = vrot.lane.b32.xlu0 %v4125, 110
        %v4137 = vpop.permute.xlu0 %4136
        %v4138 = vsel %vm860, %v4127, %v4129
        %v4139 = vsel %vm860, %v4129, %v4131
        %v4140 = vsel %vm860, %v4133, %v4135
        %v4141 = vsel %vm860, %v4135, %v4137
        %v4148 = vadd.f32 %v4085, %v4138
        %v4149 = vadd.f32 %v4086, %v4139
        %v4150 = vadd.f32 %v4087, %v4131
        %v4151 = vadd.f32 %v4088, %v4140
        %v4152 = vadd.f32 %v4089, %v4141
        %v4153 = vadd.f32 %v4090, %v4137
        %s4154 = sld [smem:[#allocation2 + $0x56]]
        %v4155 = vstv %s4154
        %v4156 = vmul.f32 %v3602, %v4155
        %v4157 = vmul.f32 %v3603, %v4155
        %v4158 = vmul.f32 %v3604, %v4155
        %v4159 = vmul.f32 %v3605, %v4155
        %v4160 = vmul.f32 %v3606, %v4155
        %v4161 = vmul.f32 %v3607, %v4155
        %v4162 = vmul.f32 %v3608, %v4155
        %v4163 = vmul.f32 %v3609, %v4155
        %v4164 = vmul.f32 %v3610, %v4155
        %v4174 = vrot.slane %v4156, 2
        %v4175 = vrot.slane %v4159, 2
        %v4176 = vsel %vm468, %v4174, %v4175
        %v4177 = vrot.slane %v4157, 2
        %v4178 = vrot.slane %v4160, 2
        %v4179 = vsel %vm468, %v4177, %v4178
        %v4180 = vrot.slane %v4158, 2
        %v4181 = vrot.slane %v4161, 2
        %v4182 = vsel %vm468, %v4180, %v4181
        %v4183 = vrot.slane %v4162, 2
        %v4184 = vsel %vm468, %v4175, %v4183
        %v4185 = vrot.slane %v4163, 2
        %v4186 = vsel %vm468, %v4178, %v4185
        %v4187 = vrot.slane %v4164, 2
        %v4188 = vsel %vm468, %v4181, %v4187
        %4189 = vrot.lane.b32.xlu0 %v4176, 110
        %v4190 = vpop.permute.xlu0 %4189
        %4191 = vrot.lane.b32.xlu0 %v4179, 110
        %v4192 = vpop.permute.xlu0 %4191
        %4193 = vrot.lane.b32.xlu0 %v4182, 110
        %v4194 = vpop.permute.xlu0 %4193
        %4195 = vrot.lane.b32.xlu0 %v4184, 110
        %v4196 = vpop.permute.xlu0 %4195
        %4197 = vrot.lane.b32.xlu0 %v4186, 110
        %v4198 = vpop.permute.xlu0 %4197
        %4199 = vrot.lane.b32.xlu0 %v4188, 110
        %v4200 = vpop.permute.xlu0 %4199
        %v4201 = vsel %vm860, %v4190, %v4192
        %v4202 = vsel %vm860, %v4192, %v4194
        %v4203 = vsel %vm860, %v4196, %v4198
        %v4204 = vsel %vm860, %v4198, %v4200
        %v4211 = vadd.f32 %v4148, %v4201
        %v4212 = vadd.f32 %v4149, %v4202
        %v4213 = vadd.f32 %v4150, %v4194
        %v4214 = vadd.f32 %v4151, %v4203
        %v4215 = vadd.f32 %v4152, %v4204
        %v4216 = vadd.f32 %v4153, %v4200
        %s4217 = sld [smem:[#allocation2 + $0x12]]
        %v4218 = vstv %s4217
        %v4219 = vmul.f32 %v3602, %v4218
        %v4220 = vmul.f32 %v3603, %v4218
        %v4221 = vmul.f32 %v3604, %v4218
        %v4222 = vmul.f32 %v3605, %v4218
        %v4223 = vmul.f32 %v3606, %v4218
        %v4224 = vmul.f32 %v3607, %v4218
        %4231 = vrot.lane.b32.xlu0 %v4219, 109
        %v4232 = vpop.permute.xlu0 %4231
        %4233 = vrot.lane.b32.xlu0 %v4220, 109
        %v4234 = vpop.permute.xlu0 %4233
        %4235 = vrot.lane.b32.xlu0 %v4221, 109
        %v4236 = vpop.permute.xlu0 %4235
        %4237 = vrot.lane.b32.xlu0 %v4222, 109
        %v4238 = vpop.permute.xlu0 %4237
        %4239 = vrot.lane.b32.xlu0 %v4223, 109
        %v4240 = vpop.permute.xlu0 %4239
        %4241 = vrot.lane.b32.xlu0 %v4224, 109
        %v4242 = vpop.permute.xlu0 %4241
        %v4243 = vsel %vm1029, %v4232, %v4234
        %v4244 = vsel %vm1029, %v4234, %v4236
        %v4245 = vsel %vm1029, %v4238, %v4240
        %v4246 = vsel %vm1029, %v4240, %v4242
        %v4253 = vadd.f32 %v4211, %v4243
        %v4254 = vadd.f32 %v4212, %v4244
        %v4255 = vadd.f32 %v4213, %v4236
        %v4256 = vadd.f32 %v4214, %v4245
        %v4257 = vadd.f32 %v4215, %v4246
        %v4258 = vadd.f32 %v4216, %v4242
        %s4259 = sld [smem:[#allocation2 + $0x36]]
        %v4260 = vstv %s4259
        %v4261 = vmul.f32 %v3602, %v4260
        %v4262 = vmul.f32 %v3603, %v4260
        %v4263 = vmul.f32 %v3604, %v4260
        %v4264 = vmul.f32 %v3605, %v4260
        %v4265 = vmul.f32 %v3606, %v4260
        %v4266 = vmul.f32 %v3607, %v4260
        %v4267 = vmul.f32 %v3608, %v4260
        %v4268 = vmul.f32 %v3609, %v4260
        %v4269 = vmul.f32 %v3610, %v4260
        %v4279 = vrot.slane %v4261, 1
        %v4280 = vrot.slane %v4264, 1
        %v4281 = vsel %vm420, %v4279, %v4280
        %v4282 = vrot.slane %v4262, 1
        %v4283 = vrot.slane %v4265, 1
        %v4284 = vsel %vm420, %v4282, %v4283
        %v4285 = vrot.slane %v4263, 1
        %v4286 = vrot.slane %v4266, 1
        %v4287 = vsel %vm420, %v4285, %v4286
        %v4288 = vrot.slane %v4267, 1
        %v4289 = vsel %vm420, %v4280, %v4288
        %v4290 = vrot.slane %v4268, 1
        %v4291 = vsel %vm420, %v4283, %v4290
        %v4292 = vrot.slane %v4269, 1
        %v4293 = vsel %vm420, %v4286, %v4292
        %4294 = vrot.lane.b32.xlu0 %v4281, 109
        %v4295 = vpop.permute.xlu0 %4294
        %4296 = vrot.lane.b32.xlu0 %v4284, 109
        %v4297 = vpop.permute.xlu0 %4296
        %4298 = vrot.lane.b32.xlu0 %v4287, 109
        %v4299 = vpop.permute.xlu0 %4298
        %4300 = vrot.lane.b32.xlu0 %v4289, 109
        %v4301 = vpop.permute.xlu0 %4300
        %4302 = vrot.lane.b32.xlu0 %v4291, 109
        %v4303 = vpop.permute.xlu0 %4302
        %4304 = vrot.lane.b32.xlu0 %v4293, 109
        %v4305 = vpop.permute.xlu0 %4304
        %v4306 = vsel %vm1029, %v4295, %v4297
        %v4307 = vsel %vm1029, %v4297, %v4299
        %v4308 = vsel %vm1029, %v4301, %v4303
        %v4309 = vsel %vm1029, %v4303, %v4305
        %v4316 = vadd.f32 %v4253, %v4306
        %v4317 = vadd.f32 %v4254, %v4307
        %v4318 = vadd.f32 %v4255, %v4299
        %v4319 = vadd.f32 %v4256, %v4308
        %v4320 = vadd.f32 %v4257, %v4309
        %v4321 = vadd.f32 %v4258, %v4305
        %s4322 = sld [smem:[#allocation2 + $0x5a]]
        %v4323 = vstv %s4322
        %v4324 = vmul.f32 %v3602, %v4323
        %v4325 = vmul.f32 %v3603, %v4323
        %v4326 = vmul.f32 %v3604, %v4323
        %v4327 = vmul.f32 %v3605, %v4323
        %v4328 = vmul.f32 %v3606, %v4323
        %v4329 = vmul.f32 %v3607, %v4323
        %v4330 = vmul.f32 %v3608, %v4323
        %v4331 = vmul.f32 %v3609, %v4323
        %v4332 = vmul.f32 %v3610, %v4323
        %v4342 = vrot.slane %v4324, 2
        %v4343 = vrot.slane %v4327, 2
        %v4344 = vsel %vm468, %v4342, %v4343
        %v4345 = vrot.slane %v4325, 2
        %v4346 = vrot.slane %v4328, 2
        %v4347 = vsel %vm468, %v4345, %v4346
        %v4348 = vrot.slane %v4326, 2
        %v4349 = vrot.slane %v4329, 2
        %v4350 = vsel %vm468, %v4348, %v4349
        %v4351 = vrot.slane %v4330, 2
        %v4352 = vsel %vm468, %v4343, %v4351
        %v4353 = vrot.slane %v4331, 2
        %v4354 = vsel %vm468, %v4346, %v4353
        %v4355 = vrot.slane %v4332, 2
        %v4356 = vsel %vm468, %v4349, %v4355
        %4357 = vrot.lane.b32.xlu0 %v4344, 109
        %v4358 = vpop.permute.xlu0 %4357
        %4359 = vrot.lane.b32.xlu0 %v4347, 109
        %v4360 = vpop.permute.xlu0 %4359
        %4361 = vrot.lane.b32.xlu0 %v4350, 109
        %v4362 = vpop.permute.xlu0 %4361
        %4363 = vrot.lane.b32.xlu0 %v4352, 109
        %v4364 = vpop.permute.xlu0 %4363
        %4365 = vrot.lane.b32.xlu0 %v4354, 109
        %v4366 = vpop.permute.xlu0 %4365
        %4367 = vrot.lane.b32.xlu0 %v4356, 109
        %v4368 = vpop.permute.xlu0 %4367
        %v4369 = vsel %vm1029, %v4358, %v4360
        %v4370 = vsel %vm1029, %v4360, %v4362
        %v4371 = vsel %vm1029, %v4364, %v4366
        %v4372 = vsel %vm1029, %v4366, %v4368
        %v4379 = vadd.f32 %v4316, %v4369
        %v4380 = vadd.f32 %v4317, %v4370
        %v4381 = vadd.f32 %v4318, %v4362
        %v4382 = vadd.f32 %v4319, %v4371
        %v4383 = vadd.f32 %v4320, %v4372
        %v4384 = vadd.f32 %v4321, %v4368
        %s4385 = sld [smem:[#allocation2 + $0x16]]
        %v4386 = vstv %s4385
        %v4387 = vmul.f32 %v3602, %v4386
        %v4388 = vmul.f32 %v3603, %v4386
        %v4389 = vmul.f32 %v3604, %v4386
        %v4390 = vmul.f32 %v3605, %v4386
        %v4391 = vmul.f32 %v3606, %v4386
        %v4392 = vmul.f32 %v3607, %v4386
        %4399 = vrot.lane.b32.xlu0 %v4387, 108
        %v4400 = vpop.permute.xlu0 %4399
        %4401 = vrot.lane.b32.xlu0 %v4388, 108
        %v4402 = vpop.permute.xlu0 %4401
        %4403 = vrot.lane.b32.xlu0 %v4389, 108
        %v4404 = vpop.permute.xlu0 %4403
        %4405 = vrot.lane.b32.xlu0 %v4390, 108
        %v4406 = vpop.permute.xlu0 %4405
        %4407 = vrot.lane.b32.xlu0 %v4391, 108
        %v4408 = vpop.permute.xlu0 %4407
        %4409 = vrot.lane.b32.xlu0 %v4392, 108
        %v4410 = vpop.permute.xlu0 %4409
        %v4411 = vsel %vm1198, %v4400, %v4402
        %v4412 = vsel %vm1198, %v4402, %v4404
        %v4413 = vsel %vm1198, %v4406, %v4408
        %v4414 = vsel %vm1198, %v4408, %v4410
        %v4421 = vadd.f32 %v4379, %v4411
        %v4422 = vadd.f32 %v4380, %v4412
        %v4423 = vadd.f32 %v4381, %v4404
        %v4424 = vadd.f32 %v4382, %v4413
        %v4425 = vadd.f32 %v4383, %v4414
        %v4426 = vadd.f32 %v4384, %v4410
        %s4427 = sld [smem:[#allocation2 + $0x3a]]
        %v4428 = vstv %s4427
        %v4429 = vmul.f32 %v3602, %v4428
        %v4430 = vmul.f32 %v3603, %v4428
        %v4431 = vmul.f32 %v3604, %v4428
        %v4432 = vmul.f32 %v3605, %v4428
        %v4433 = vmul.f32 %v3606, %v4428
        %v4434 = vmul.f32 %v3607, %v4428
        %v4435 = vmul.f32 %v3608, %v4428
        %v4436 = vmul.f32 %v3609, %v4428
        %v4437 = vmul.f32 %v3610, %v4428
        %v4447 = vrot.slane %v4429, 1
        %v4448 = vrot.slane %v4432, 1
        %v4449 = vsel %vm420, %v4447, %v4448
        %v4450 = vrot.slane %v4430, 1
        %v4451 = vrot.slane %v4433, 1
        %v4452 = vsel %vm420, %v4450, %v4451
        %v4453 = vrot.slane %v4431, 1
        %v4454 = vrot.slane %v4434, 1
        %v4455 = vsel %vm420, %v4453, %v4454
        %v4456 = vrot.slane %v4435, 1
        %v4457 = vsel %vm420, %v4448, %v4456
        %v4458 = vrot.slane %v4436, 1
        %v4459 = vsel %vm420, %v4451, %v4458
        %v4460 = vrot.slane %v4437, 1
        %v4461 = vsel %vm420, %v4454, %v4460
        %4462 = vrot.lane.b32.xlu0 %v4449, 108
        %v4463 = vpop.permute.xlu0 %4462
        %4464 = vrot.lane.b32.xlu0 %v4452, 108
        %v4465 = vpop.permute.xlu0 %4464
        %4466 = vrot.lane.b32.xlu0 %v4455, 108
        %v4467 = vpop.permute.xlu0 %4466
        %4468 = vrot.lane.b32.xlu0 %v4457, 108
        %v4469 = vpop.permute.xlu0 %4468
        %4470 = vrot.lane.b32.xlu0 %v4459, 108
        %v4471 = vpop.permute.xlu0 %4470
        %4472 = vrot.lane.b32.xlu0 %v4461, 108
        %v4473 = vpop.permute.xlu0 %4472
        %v4474 = vsel %vm1198, %v4463, %v4465
        %v4475 = vsel %vm1198, %v4465, %v4467
        %v4476 = vsel %vm1198, %v4469, %v4471
        %v4477 = vsel %vm1198, %v4471, %v4473
        %v4484 = vadd.f32 %v4421, %v4474
        %v4485 = vadd.f32 %v4422, %v4475
        %v4486 = vadd.f32 %v4423, %v4467
        %v4487 = vadd.f32 %v4424, %v4476
        %v4488 = vadd.f32 %v4425, %v4477
        %v4489 = vadd.f32 %v4426, %v4473
        %s4490 = sld [smem:[#allocation2 + $0x5e]]
        %v4491 = vstv %s4490
        %v4492 = vmul.f32 %v3602, %v4491
        %v4493 = vmul.f32 %v3603, %v4491
        %v4494 = vmul.f32 %v3604, %v4491
        %v4495 = vmul.f32 %v3605, %v4491
        %v4496 = vmul.f32 %v3606, %v4491
        %v4497 = vmul.f32 %v3607, %v4491
        %v4498 = vmul.f32 %v3608, %v4491
        %v4499 = vmul.f32 %v3609, %v4491
        %v4500 = vmul.f32 %v3610, %v4491
        %v4510 = vrot.slane %v4492, 2
        %v4511 = vrot.slane %v4495, 2
        %v4512 = vsel %vm468, %v4510, %v4511
        %v4513 = vrot.slane %v4493, 2
        %v4514 = vrot.slane %v4496, 2
        %v4515 = vsel %vm468, %v4513, %v4514
        %v4516 = vrot.slane %v4494, 2
        %v4517 = vrot.slane %v4497, 2
        %v4518 = vsel %vm468, %v4516, %v4517
        %v4519 = vrot.slane %v4498, 2
        %v4520 = vsel %vm468, %v4511, %v4519
        %v4521 = vrot.slane %v4499, 2
        %v4522 = vsel %vm468, %v4514, %v4521
        %v4523 = vrot.slane %v4500, 2
        %v4524 = vsel %vm468, %v4517, %v4523
        %4525 = vrot.lane.b32.xlu0 %v4512, 108
        %v4526 = vpop.permute.xlu0 %4525
        %4527 = vrot.lane.b32.xlu0 %v4515, 108
        %v4528 = vpop.permute.xlu0 %4527
        %4529 = vrot.lane.b32.xlu0 %v4518, 108
        %v4530 = vpop.permute.xlu0 %4529
        %4531 = vrot.lane.b32.xlu0 %v4520, 108
        %v4532 = vpop.permute.xlu0 %4531
        %4533 = vrot.lane.b32.xlu0 %v4522, 108
        %v4534 = vpop.permute.xlu0 %4533
        %4535 = vrot.lane.b32.xlu0 %v4524, 108
        %v4536 = vpop.permute.xlu0 %4535
        %v4537 = vsel %vm1198, %v4526, %v4528
        %v4538 = vsel %vm1198, %v4528, %v4530
        %v4539 = vsel %vm1198, %v4532, %v4534
        %v4540 = vsel %vm1198, %v4534, %v4536
        %v4547 = vadd.f32 %v4484, %v4537
        %v4548 = vadd.f32 %v4485, %v4538
        %v4549 = vadd.f32 %v4486, %v4530
        %v4550 = vadd.f32 %v4487, %v4539
        %v4551 = vadd.f32 %v4488, %v4540
        %v4552 = vadd.f32 %v4489, %v4536
        %s4553 = sld [smem:[#allocation2 + $0x1a]]
        %v4554 = vstv %s4553
        %v4555 = vmul.f32 %v3602, %v4554
        %v4556 = vmul.f32 %v3603, %v4554
        %v4557 = vmul.f32 %v3604, %v4554
        %v4558 = vmul.f32 %v3605, %v4554
        %v4559 = vmul.f32 %v3606, %v4554
        %v4560 = vmul.f32 %v3607, %v4554
        %4567 = vrot.lane.b32.xlu0 %v4555, 92
        %v4568 = vpop.permute.xlu0 %4567
        %4569 = vrot.lane.b32.xlu0 %v4556, 92
        %v4570 = vpop.permute.xlu0 %4569
        %4571 = vrot.lane.b32.xlu0 %v4557, 92
        %v4572 = vpop.permute.xlu0 %4571
        %4573 = vrot.lane.b32.xlu0 %v4558, 92
        %v4574 = vpop.permute.xlu0 %4573
        %4575 = vrot.lane.b32.xlu0 %v4559, 92
        %v4576 = vpop.permute.xlu0 %4575
        %4577 = vrot.lane.b32.xlu0 %v4560, 92
        %v4578 = vpop.permute.xlu0 %4577
        %v4579 = vsel %vm1367, %v4568, %v4570
        %v4580 = vsel %vm1367, %v4570, %v4572
        %v4581 = vsel %vm1367, %v4574, %v4576
        %v4582 = vsel %vm1367, %v4576, %v4578
        %v4589 = vadd.f32 %v4547, %v4579
        %v4590 = vadd.f32 %v4548, %v4580
        %v4591 = vadd.f32 %v4549, %v4572
        %v4592 = vadd.f32 %v4550, %v4581
        %v4593 = vadd.f32 %v4551, %v4582
        %v4594 = vadd.f32 %v4552, %v4578
        %s4595 = sld [smem:[#allocation2 + $0x3e]]
        %v4596 = vstv %s4595
        %v4597 = vmul.f32 %v3602, %v4596
        %v4598 = vmul.f32 %v3603, %v4596
        %v4599 = vmul.f32 %v3604, %v4596
        %v4600 = vmul.f32 %v3605, %v4596
        %v4601 = vmul.f32 %v3606, %v4596
        %v4602 = vmul.f32 %v3607, %v4596
        %v4603 = vmul.f32 %v3608, %v4596
        %v4604 = vmul.f32 %v3609, %v4596
        %v4605 = vmul.f32 %v3610, %v4596
        %v4615 = vrot.slane %v4597, 1
        %v4616 = vrot.slane %v4600, 1
        %v4617 = vsel %vm420, %v4615, %v4616
        %v4618 = vrot.slane %v4598, 1
        %v4619 = vrot.slane %v4601, 1
        %v4620 = vsel %vm420, %v4618, %v4619
        %v4621 = vrot.slane %v4599, 1
        %v4622 = vrot.slane %v4602, 1
        %v4623 = vsel %vm420, %v4621, %v4622
        %v4624 = vrot.slane %v4603, 1
        %v4625 = vsel %vm420, %v4616, %v4624
        %v4626 = vrot.slane %v4604, 1
        %v4627 = vsel %vm420, %v4619, %v4626
        %v4628 = vrot.slane %v4605, 1
        %v4629 = vsel %vm420, %v4622, %v4628
        %4630 = vrot.lane.b32.xlu0 %v4617, 92
        %v4631 = vpop.permute.xlu0 %4630
        %4632 = vrot.lane.b32.xlu0 %v4620, 92
        %v4633 = vpop.permute.xlu0 %4632
        %4634 = vrot.lane.b32.xlu0 %v4623, 92
        %v4635 = vpop.permute.xlu0 %4634
        %4636 = vrot.lane.b32.xlu0 %v4625, 92
        %v4637 = vpop.permute.xlu0 %4636
        %4638 = vrot.lane.b32.xlu0 %v4627, 92
        %v4639 = vpop.permute.xlu0 %4638
        %4640 = vrot.lane.b32.xlu0 %v4629, 92
        %v4641 = vpop.permute.xlu0 %4640
        %v4642 = vsel %vm1367, %v4631, %v4633
        %v4643 = vsel %vm1367, %v4633, %v4635
        %v4644 = vsel %vm1367, %v4637, %v4639
        %v4645 = vsel %vm1367, %v4639, %v4641
        %v4652 = vadd.f32 %v4589, %v4642
        %v4653 = vadd.f32 %v4590, %v4643
        %v4654 = vadd.f32 %v4591, %v4635
        %v4655 = vadd.f32 %v4592, %v4644
        %v4656 = vadd.f32 %v4593, %v4645
        %v4657 = vadd.f32 %v4594, %v4641
        %s4658 = sld [smem:[#allocation2 + $0x62]]
        %v4659 = vstv %s4658
        %v4660 = vmul.f32 %v3602, %v4659
        %v4661 = vmul.f32 %v3603, %v4659
        %v4662 = vmul.f32 %v3604, %v4659
        %v4663 = vmul.f32 %v3605, %v4659
        %v4664 = vmul.f32 %v3606, %v4659
        %v4665 = vmul.f32 %v3607, %v4659
        %v4666 = vmul.f32 %v3608, %v4659
        %v4667 = vmul.f32 %v3609, %v4659
        %v4668 = vmul.f32 %v3610, %v4659
        %v4678 = vrot.slane %v4660, 2
        %v4679 = vrot.slane %v4663, 2
        %v4680 = vsel %vm468, %v4678, %v4679
        %v4681 = vrot.slane %v4661, 2
        %v4682 = vrot.slane %v4664, 2
        %v4683 = vsel %vm468, %v4681, %v4682
        %v4684 = vrot.slane %v4662, 2
        %v4685 = vrot.slane %v4665, 2
        %v4686 = vsel %vm468, %v4684, %v4685
        %v4687 = vrot.slane %v4666, 2
        %v4688 = vsel %vm468, %v4679, %v4687
        %v4689 = vrot.slane %v4667, 2
        %v4690 = vsel %vm468, %v4682, %v4689
        %v4691 = vrot.slane %v4668, 2
        %v4692 = vsel %vm468, %v4685, %v4691
        %4693 = vrot.lane.b32.xlu0 %v4680, 92
        %v4694 = vpop.permute.xlu0 %4693
        %4695 = vrot.lane.b32.xlu0 %v4683, 92
        %v4696 = vpop.permute.xlu0 %4695
        %4697 = vrot.lane.b32.xlu0 %v4686, 92
        %v4698 = vpop.permute.xlu0 %4697
        %4699 = vrot.lane.b32.xlu0 %v4688, 92
        %v4700 = vpop.permute.xlu0 %4699
        %4701 = vrot.lane.b32.xlu0 %v4690, 92
        %v4702 = vpop.permute.xlu0 %4701
        %4703 = vrot.lane.b32.xlu0 %v4692, 92
        %v4704 = vpop.permute.xlu0 %4703
        %v4705 = vsel %vm1367, %v4694, %v4696
        %v4706 = vsel %vm1367, %v4696, %v4698
        %v4707 = vsel %vm1367, %v4700, %v4702
        %v4708 = vsel %vm1367, %v4702, %v4704
        %v4715 = vadd.f32 %v4652, %v4705
        %v4716 = vadd.f32 %v4653, %v4706
        %v4717 = vadd.f32 %v4654, %v4698
        %v4718 = vadd.f32 %v4655, %v4707
        %v4719 = vadd.f32 %v4656, %v4708
        %v4720 = vadd.f32 %v4657, %v4704
        %s4721 = sld [smem:[#allocation2 + $0x1e]]
        %v4722 = vstv %s4721
        %v4723 = vmul.f32 %v3602, %v4722
        %v4724 = vmul.f32 %v3603, %v4722
        %v4725 = vmul.f32 %v3604, %v4722
        %v4726 = vmul.f32 %v3605, %v4722
        %v4727 = vmul.f32 %v3606, %v4722
        %v4728 = vmul.f32 %v3607, %v4722
        %4735 = vrot.lane.b32.xlu0 %v4723, 91
        %v4736 = vpop.permute.xlu0 %4735
        %4737 = vrot.lane.b32.xlu0 %v4724, 91
        %v4738 = vpop.permute.xlu0 %4737
        %4739 = vrot.lane.b32.xlu0 %v4725, 91
        %v4740 = vpop.permute.xlu0 %4739
        %4741 = vrot.lane.b32.xlu0 %v4726, 91
        %v4742 = vpop.permute.xlu0 %4741
        %4743 = vrot.lane.b32.xlu0 %v4727, 91
        %v4744 = vpop.permute.xlu0 %4743
        %4745 = vrot.lane.b32.xlu0 %v4728, 91
        %v4746 = vpop.permute.xlu0 %4745
        %v4747 = vsel %vm1536, %v4736, %v4738
        %v4748 = vsel %vm1536, %v4738, %v4740
        %v4749 = vsel %vm1536, %v4742, %v4744
        %v4750 = vsel %vm1536, %v4744, %v4746
        %v4757 = vadd.f32 %v4715, %v4747
        %v4758 = vadd.f32 %v4716, %v4748
        %v4759 = vadd.f32 %v4717, %v4740
        %v4760 = vadd.f32 %v4718, %v4749
        %v4761 = vadd.f32 %v4719, %v4750
        %v4762 = vadd.f32 %v4720, %v4746
        %s4763 = sld [smem:[#allocation2 + $0x42]]
        %v4764 = vstv %s4763
        %v4765 = vmul.f32 %v3602, %v4764
        %v4766 = vmul.f32 %v3603, %v4764
        %v4767 = vmul.f32 %v3604, %v4764
        %v4768 = vmul.f32 %v3605, %v4764
        %v4769 = vmul.f32 %v3606, %v4764
        %v4770 = vmul.f32 %v3607, %v4764
        %v4771 = vmul.f32 %v3608, %v4764
        %v4772 = vmul.f32 %v3609, %v4764
        %v4773 = vmul.f32 %v3610, %v4764
        %v4783 = vrot.slane %v4765, 1
        %v4784 = vrot.slane %v4768, 1
        %v4785 = vsel %vm420, %v4783, %v4784
        %v4786 = vrot.slane %v4766, 1
        %v4787 = vrot.slane %v4769, 1
        %v4788 = vsel %vm420, %v4786, %v4787
        %v4789 = vrot.slane %v4767, 1
        %v4790 = vrot.slane %v4770, 1
        %v4791 = vsel %vm420, %v4789, %v4790
        %v4792 = vrot.slane %v4771, 1
        %v4793 = vsel %vm420, %v4784, %v4792
        %v4794 = vrot.slane %v4772, 1
        %v4795 = vsel %vm420, %v4787, %v4794
        %v4796 = vrot.slane %v4773, 1
        %v4797 = vsel %vm420, %v4790, %v4796
        %4798 = vrot.lane.b32.xlu0 %v4785, 91
        %v4799 = vpop.permute.xlu0 %4798
        %4800 = vrot.lane.b32.xlu0 %v4788, 91
        %v4801 = vpop.permute.xlu0 %4800
        %4802 = vrot.lane.b32.xlu0 %v4791, 91
        %v4803 = vpop.permute.xlu0 %4802
        %4804 = vrot.lane.b32.xlu0 %v4793, 91
        %v4805 = vpop.permute.xlu0 %4804
        %4806 = vrot.lane.b32.xlu0 %v4795, 91
        %v4807 = vpop.permute.xlu0 %4806
        %4808 = vrot.lane.b32.xlu0 %v4797, 91
        %v4809 = vpop.permute.xlu0 %4808
        %v4810 = vsel %vm1536, %v4799, %v4801
        %v4811 = vsel %vm1536, %v4801, %v4803
        %v4812 = vsel %vm1536, %v4805, %v4807
        %v4813 = vsel %vm1536, %v4807, %v4809
        %v4820 = vadd.f32 %v4757, %v4810
        %v4821 = vadd.f32 %v4758, %v4811
        %v4822 = vadd.f32 %v4759, %v4803
        %v4823 = vadd.f32 %v4760, %v4812
        %v4824 = vadd.f32 %v4761, %v4813
        %v4825 = vadd.f32 %v4762, %v4809
        %s4826 = sld [smem:[#allocation2 + $0x66]]
        %v4827 = vstv %s4826
        %v4828 = vmul.f32 %v3602, %v4827
        %v4829 = vmul.f32 %v3603, %v4827
        %v4830 = vmul.f32 %v3604, %v4827
        %v4831 = vmul.f32 %v3605, %v4827
        %v4832 = vmul.f32 %v3606, %v4827
        %v4833 = vmul.f32 %v3607, %v4827
        %v4834 = vmul.f32 %v3608, %v4827
        %v4835 = vmul.f32 %v3609, %v4827
        %v4836 = vmul.f32 %v3610, %v4827
        %v4846 = vrot.slane %v4828, 2
        %v4847 = vrot.slane %v4831, 2
        %v4848 = vsel %vm468, %v4846, %v4847
        %v4849 = vrot.slane %v4829, 2
        %v4850 = vrot.slane %v4832, 2
        %v4851 = vsel %vm468, %v4849, %v4850
        %v4852 = vrot.slane %v4830, 2
        %v4853 = vrot.slane %v4833, 2
        %v4854 = vsel %vm468, %v4852, %v4853
        %v4855 = vrot.slane %v4834, 2
        %v4856 = vsel %vm468, %v4847, %v4855
        %v4857 = vrot.slane %v4835, 2
        %v4858 = vsel %vm468, %v4850, %v4857
        %v4859 = vrot.slane %v4836, 2
        %v4860 = vsel %vm468, %v4853, %v4859
        %4861 = vrot.lane.b32.xlu0 %v4848, 91
        %v4862 = vpop.permute.xlu0 %4861
        %4863 = vrot.lane.b32.xlu0 %v4851, 91
        %v4864 = vpop.permute.xlu0 %4863
        %4865 = vrot.lane.b32.xlu0 %v4854, 91
        %v4866 = vpop.permute.xlu0 %4865
        %4867 = vrot.lane.b32.xlu0 %v4856, 91
        %v4868 = vpop.permute.xlu0 %4867
        %4869 = vrot.lane.b32.xlu0 %v4858, 91
        %v4870 = vpop.permute.xlu0 %4869
        %4871 = vrot.lane.b32.xlu0 %v4860, 91
        %v4872 = vpop.permute.xlu0 %4871
        %v4873 = vsel %vm1536, %v4862, %v4864
        %v4874 = vsel %vm1536, %v4864, %v4866
        %v4875 = vsel %vm1536, %v4868, %v4870
        %v4876 = vsel %vm1536, %v4870, %v4872
        %v4883 = vadd.f32 %v4820, %v4873
        %v4884 = vadd.f32 %v4821, %v4874
        %v4885 = vadd.f32 %v4822, %v4866
        %v4886 = vadd.f32 %v4823, %v4875
        %v4887 = vadd.f32 %v4824, %v4876
        %v4888 = vadd.f32 %v4825, %v4872
        %s4889 = sld [smem:[#allocation2 + $0x22]]
        %v4890 = vstv %s4889
        %v4891 = vmul.f32 %v3602, %v4890
        %v4892 = vmul.f32 %v3603, %v4890
        %v4893 = vmul.f32 %v3604, %v4890
        %v4894 = vmul.f32 %v3605, %v4890
        %v4895 = vmul.f32 %v3606, %v4890
        %v4896 = vmul.f32 %v3607, %v4890
        %4903 = vrot.lane.b32.xlu0 %v4891, 90
        %v4904 = vpop.permute.xlu0 %4903
        %4905 = vrot.lane.b32.xlu0 %v4892, 90
        %v4906 = vpop.permute.xlu0 %4905
        %4907 = vrot.lane.b32.xlu0 %v4893, 90
        %v4908 = vpop.permute.xlu0 %4907
        %4909 = vrot.lane.b32.xlu0 %v4894, 90
        %v4910 = vpop.permute.xlu0 %4909
        %4911 = vrot.lane.b32.xlu0 %v4895, 90
        %v4912 = vpop.permute.xlu0 %4911
        %4913 = vrot.lane.b32.xlu0 %v4896, 90
        %v4914 = vpop.permute.xlu0 %4913
        %v4915 = vsel %vm1705, %v4904, %v4906
        %v4916 = vsel %vm1705, %v4906, %v4908
        %v4917 = vsel %vm1705, %v4910, %v4912
        %v4918 = vsel %vm1705, %v4912, %v4914
        %v4925 = vadd.f32 %v4883, %v4915
        %v4926 = vadd.f32 %v4884, %v4916
        %v4927 = vadd.f32 %v4885, %v4908
        %v4928 = vadd.f32 %v4886, %v4917
        %v4929 = vadd.f32 %v4887, %v4918
        %v4930 = vadd.f32 %v4888, %v4914
        %s4931 = sld [smem:[#allocation2 + $0x46]]
        %v4932 = vstv %s4931
        %v4933 = vmul.f32 %v3602, %v4932
        %v4934 = vmul.f32 %v3603, %v4932
        %v4935 = vmul.f32 %v3604, %v4932
        %v4936 = vmul.f32 %v3605, %v4932
        %v4937 = vmul.f32 %v3606, %v4932
        %v4938 = vmul.f32 %v3607, %v4932
        %v4939 = vmul.f32 %v3608, %v4932
        %v4940 = vmul.f32 %v3609, %v4932
        %v4941 = vmul.f32 %v3610, %v4932
        %v4951 = vrot.slane %v4933, 1
        %v4952 = vrot.slane %v4936, 1
        %v4953 = vsel %vm420, %v4951, %v4952
        %v4954 = vrot.slane %v4934, 1
        %v4955 = vrot.slane %v4937, 1
        %v4956 = vsel %vm420, %v4954, %v4955
        %v4957 = vrot.slane %v4935, 1
        %v4958 = vrot.slane %v4938, 1
        %v4959 = vsel %vm420, %v4957, %v4958
        %v4960 = vrot.slane %v4939, 1
        %v4961 = vsel %vm420, %v4952, %v4960
        %v4962 = vrot.slane %v4940, 1
        %v4963 = vsel %vm420, %v4955, %v4962
        %v4964 = vrot.slane %v4941, 1
        %v4965 = vsel %vm420, %v4958, %v4964
        %4966 = vrot.lane.b32.xlu0 %v4953, 90
        %v4967 = vpop.permute.xlu0 %4966
        %4968 = vrot.lane.b32.xlu0 %v4956, 90
        %v4969 = vpop.permute.xlu0 %4968
        %4970 = vrot.lane.b32.xlu0 %v4959, 90
        %v4971 = vpop.permute.xlu0 %4970
        %4972 = vrot.lane.b32.xlu0 %v4961, 90
        %v4973 = vpop.permute.xlu0 %4972
        %4974 = vrot.lane.b32.xlu0 %v4963, 90
        %v4975 = vpop.permute.xlu0 %4974
        %4976 = vrot.lane.b32.xlu0 %v4965, 90
        %v4977 = vpop.permute.xlu0 %4976
        %v4978 = vsel %vm1705, %v4967, %v4969
        %v4979 = vsel %vm1705, %v4969, %v4971
        %v4980 = vsel %vm1705, %v4973, %v4975
        %v4981 = vsel %vm1705, %v4975, %v4977
        %v4988 = vadd.f32 %v4925, %v4978
        %v4989 = vadd.f32 %v4926, %v4979
        %v4990 = vadd.f32 %v4927, %v4971
        %v4991 = vadd.f32 %v4928, %v4980
        %v4992 = vadd.f32 %v4929, %v4981
        %v4993 = vadd.f32 %v4930, %v4977
        %s4994 = sld [smem:[#allocation2 + $0x6a]]
        %v4995 = vstv %s4994
        %v4996 = vmul.f32 %v3602, %v4995
        %v4997 = vmul.f32 %v3603, %v4995
        %v4998 = vmul.f32 %v3604, %v4995
        %v4999 = vmul.f32 %v3605, %v4995
        %v5000 = vmul.f32 %v3606, %v4995
        %v5001 = vmul.f32 %v3607, %v4995
        %v5002 = vmul.f32 %v3608, %v4995
        %v5003 = vmul.f32 %v3609, %v4995
        %v5004 = vmul.f32 %v3610, %v4995
        %v5014 = vrot.slane %v4996, 2
        %v5015 = vrot.slane %v4999, 2
        %v5016 = vsel %vm468, %v5014, %v5015
        %v5017 = vrot.slane %v4997, 2
        %v5018 = vrot.slane %v5000, 2
        %v5019 = vsel %vm468, %v5017, %v5018
        %v5020 = vrot.slane %v4998, 2
        %v5021 = vrot.slane %v5001, 2
        %v5022 = vsel %vm468, %v5020, %v5021
        %v5023 = vrot.slane %v5002, 2
        %v5024 = vsel %vm468, %v5015, %v5023
        %v5025 = vrot.slane %v5003, 2
        %v5026 = vsel %vm468, %v5018, %v5025
        %v5027 = vrot.slane %v5004, 2
        %v5028 = vsel %vm468, %v5021, %v5027
        %5029 = vrot.lane.b32.xlu0 %v5016, 90
        %v5030 = vpop.permute.xlu0 %5029
        %5031 = vrot.lane.b32.xlu0 %v5019, 90
        %v5032 = vpop.permute.xlu0 %5031
        %5033 = vrot.lane.b32.xlu0 %v5022, 90
        %v5034 = vpop.permute.xlu0 %5033
        %5035 = vrot.lane.b32.xlu0 %v5024, 90
        %v5036 = vpop.permute.xlu0 %5035
        %5037 = vrot.lane.b32.xlu0 %v5026, 90
        %v5038 = vpop.permute.xlu0 %5037
        %5039 = vrot.lane.b32.xlu0 %v5028, 90
        %v5040 = vpop.permute.xlu0 %5039
        %v5041 = vsel %vm1705, %v5030, %v5032
        %v5042 = vsel %vm1705, %v5032, %v5034
        %v5043 = vsel %vm1705, %v5036, %v5038
        %v5044 = vsel %vm1705, %v5038, %v5040
        %v5051 = vadd.f32 %v4988, %v5041
        %v5052 = vadd.f32 %v4989, %v5042
        %v5053 = vadd.f32 %v4990, %v5034
        %v5054 = vadd.f32 %v4991, %v5043
        %v5055 = vadd.f32 %v4992, %v5044
        %v5056 = vadd.f32 %v4993, %v5040
        %s5057 = sld [smem:[#allocation5 + $0x2]]
        %v5058 = vstv %s5057
        %v5059 = vadd.f32 %v5051, %v5058
        %v5060 = vadd.f32 %v5052, %v5058
        %v5061 = vadd.f32 %v5053, %v5058
        %v5062 = vadd.f32 %v5054, %v5058
        %v5063 = vadd.f32 %v5055, %v5058
        %v5064 = vadd.f32 %v5056, %v5058
        %5067 = vrot.lane.b32.xlu0 %v5059, 126
        %v5068 = vpop.permute.xlu0 %5067
        %5069 = vrot.lane.b32.xlu0 %v5062, 126
        %v5070 = vpop.permute.xlu0 %5069
        %5073 = vrot.lane.b32.xlu0 %v5059, 124
        %v5074 = vpop.permute.xlu0 %5073
        %5075 = vrot.lane.b32.xlu0 %v5062, 124
        %v5076 = vpop.permute.xlu0 %5075
        %5079 = vrot.lane.b32.xlu0 %v5059, 122
        %v5080 = vpop.permute.xlu0 %5079
        %5081 = vrot.lane.b32.xlu0 %v5062, 122
        %v5082 = vpop.permute.xlu0 %5081
        %5085 = vrot.lane.b32.xlu0 %v5059, 120
        %v5086 = vpop.permute.xlu0 %5085
        %5087 = vrot.lane.b32.xlu0 %v5062, 120
        %v5088 = vpop.permute.xlu0 %5087
        %5091 = vrot.lane.b32.xlu0 %v5059, 118
        %v5092 = vpop.permute.xlu0 %5091
        %5093 = vrot.lane.b32.xlu0 %v5062, 118
        %v5094 = vpop.permute.xlu0 %5093
        %5097 = vrot.lane.b32.xlu0 %v5059, 116
        %v5098 = vpop.permute.xlu0 %5097
        %5099 = vrot.lane.b32.xlu0 %v5062, 116
        %v5100 = vpop.permute.xlu0 %5099
        %5105 = vrot.lane.b32.xlu0 %v5059, 114
        %v5106 = vpop.permute.xlu0 %5105
        %5107 = vrot.lane.b32.xlu0 %v5060, 114
        %v5108 = vpop.permute.xlu0 %5107
        %5109 = vrot.lane.b32.xlu0 %v5062, 114
        %v5110 = vpop.permute.xlu0 %5109
        %5111 = vrot.lane.b32.xlu0 %v5063, 114
        %v5112 = vpop.permute.xlu0 %5111
        %v5113 = vsel %vm1904, %v5106, %v5108
        %v5114 = vsel %vm1904, %v5110, %v5112
        %5117 = vrot.lane.b32.xlu0 %v5060, 112
        %v5118 = vpop.permute.xlu0 %5117
        %5119 = vrot.lane.b32.xlu0 %v5063, 112
        %v5120 = vpop.permute.xlu0 %5119
        %5123 = vrot.lane.b32.xlu0 %v5060, 110
        %v5124 = vpop.permute.xlu0 %5123
        %5125 = vrot.lane.b32.xlu0 %v5063, 110
        %v5126 = vpop.permute.xlu0 %5125
        %5129 = vrot.lane.b32.xlu0 %v5060, 108
        %v5130 = vpop.permute.xlu0 %5129
        %5131 = vrot.lane.b32.xlu0 %v5063, 108
        %v5132 = vpop.permute.xlu0 %5131
        %5135 = vrot.lane.b32.xlu0 %v5060, 106
        %v5136 = vpop.permute.xlu0 %5135
        %5137 = vrot.lane.b32.xlu0 %v5063, 106
        %v5138 = vpop.permute.xlu0 %5137
        %5141 = vrot.lane.b32.xlu0 %v5060, 104
        %v5142 = vpop.permute.xlu0 %5141
        %5143 = vrot.lane.b32.xlu0 %v5063, 104
        %v5144 = vpop.permute.xlu0 %5143
        %5147 = vrot.lane.b32.xlu0 %v5060, 102
        %v5148 = vpop.permute.xlu0 %5147
        %5149 = vrot.lane.b32.xlu0 %v5063, 102
        %v5150 = vpop.permute.xlu0 %5149
        %5155 = vrot.lane.b32.xlu0 %v5060, 100
        %v5156 = vpop.permute.xlu0 %5155
        %5157 = vrot.lane.b32.xlu0 %v5061, 100
        %v5158 = vpop.permute.xlu0 %5157
        %5159 = vrot.lane.b32.xlu0 %v5063, 100
        %v5160 = vpop.permute.xlu0 %5159
        %5161 = vrot.lane.b32.xlu0 %v5064, 100
        %v5162 = vpop.permute.xlu0 %5161
        %v5163 = vsel %vm1955, %v5156, %v5158
        %v5164 = vsel %vm1955, %v5160, %v5162
        %5167 = vrot.lane.b32.xlu0 %v5061, 98
        %v5168 = vpop.permute.xlu0 %5167
        %5169 = vrot.lane.b32.xlu0 %v5064, 98
        %v5170 = vpop.permute.xlu0 %5169
        %v5173 = vsel %vm1966, %v5059, %v5068
        %v5174 = vsel %vm1966, %v5062, %v5070
        %v5175 = vsel %vm1969, %v5173, %v5074
        %v5176 = vsel %vm1969, %v5174, %v5076
        %v5177 = vsel %vm1972, %v5175, %v5080
        %v5178 = vsel %vm1972, %v5176, %v5082
        %v5179 = vsel %vm1975, %v5177, %v5086
        %v5180 = vsel %vm1975, %v5178, %v5088
        %v5181 = vsel %vm1978, %v5179, %v5092
        %v5182 = vsel %vm1978, %v5180, %v5094
        %v5183 = vsel %vm1981, %v5181, %v5098
        %v5184 = vsel %vm1981, %v5182, %v5100
        %v5185 = vsel %vm1984, %v5183, %v5113
        %v5186 = vsel %vm1984, %v5184, %v5114
        %v5187 = vsel %vm1966, %v5118, %v5124
        %v5188 = vsel %vm1966, %v5120, %v5126
        %v5189 = vsel %vm1969, %v5187, %v5130
        %v5190 = vsel %vm1969, %v5188, %v5132
        %v5191 = vsel %vm1972, %v5189, %v5136
        %v5192 = vsel %vm1972, %v5190, %v5138
        %v5193 = vsel %vm1975, %v5191, %v5142
        %v5194 = vsel %vm1975, %v5192, %v5144
        %v5195 = vsel %vm1978, %v5193, %v5148
        %v5196 = vsel %vm1978, %v5194, %v5150
        %v5197 = vsel %vm1981, %v5195, %v5163
        %v5198 = vsel %vm1981, %v5196, %v5164
        %v5199 = vsel %vm1984, %v5197, %v5168
        %v5200 = vsel %vm1984, %v5198, %v5170
        %s5201 = scalar_lea.vmem %s382, 216
        %v5202 = vld [vmem:[%s5201] sm:$0xff]
        %v5203 = vld [vmem:[%s5201 + $0x8] sm:$0xff]
        %v5204 = vld [vmem:[%s5201 + $0x10] sm:$0xff]
        %v5205 = vld [vmem:[%s5201 + $0x18] sm:$0xff]
        %v5206 = vld [vmem:[%s5201 + $0x20] sm:$0xff]
        %v5207 = vld [vmem:[%s5201 + $0x28] sm:$0xff]
        %v5208 = vld [vmem:[%s5201 + $0x30] sm:$0x3]
        %v5209 = vld [vmem:[%s5201 + $0x38] sm:$0x3]
        %v5210 = vld [vmem:[%s5201 + $0x40] sm:$0x3]
        %s5211 = sld [smem:[#allocation2 + $0x3]]
        %v5212 = vstv %s5211
        %v5213 = vmul.f32 %v5202, %v5212
        %v5214 = vmul.f32 %v5203, %v5212
        %v5215 = vmul.f32 %v5204, %v5212
        %v5216 = vmul.f32 %v5205, %v5212
        %v5217 = vmul.f32 %v5206, %v5212
        %v5218 = vmul.f32 %v5207, %v5212
        %s5219 = sld [smem:[#allocation2 + $0x27]]
        %v5220 = vstv %s5219
        %v5221 = vmul.f32 %v5202, %v5220
        %v5222 = vmul.f32 %v5203, %v5220
        %v5223 = vmul.f32 %v5204, %v5220
        %v5224 = vmul.f32 %v5205, %v5220
        %v5225 = vmul.f32 %v5206, %v5220
        %v5226 = vmul.f32 %v5207, %v5220
        %v5227 = vmul.f32 %v5208, %v5220
        %v5228 = vmul.f32 %v5209, %v5220
        %v5229 = vmul.f32 %v5210, %v5220
        %v5239 = vrot.slane %v5221, 1
        %v5240 = vrot.slane %v5224, 1
        %v5241 = vsel %vm420, %v5239, %v5240
        %v5242 = vrot.slane %v5222, 1
        %v5243 = vrot.slane %v5225, 1
        %v5244 = vsel %vm420, %v5242, %v5243
        %v5245 = vrot.slane %v5223, 1
        %v5246 = vrot.slane %v5226, 1
        %v5247 = vsel %vm420, %v5245, %v5246
        %v5248 = vrot.slane %v5227, 1
        %v5249 = vsel %vm420, %v5240, %v5248
        %v5250 = vrot.slane %v5228, 1
        %v5251 = vsel %vm420, %v5243, %v5250
        %v5252 = vrot.slane %v5229, 1
        %v5253 = vsel %vm420, %v5246, %v5252
        %v5260 = vadd.f32 %v5213, %v5241
        %v5261 = vadd.f32 %v5214, %v5244
        %v5262 = vadd.f32 %v5215, %v5247
        %v5263 = vadd.f32 %v5216, %v5249
        %v5264 = vadd.f32 %v5217, %v5251
        %v5265 = vadd.f32 %v5218, %v5253
        %s5266 = sld [smem:[#allocation2 + $0x4b]]
        %v5267 = vstv %s5266
        %v5268 = vmul.f32 %v5202, %v5267
        %v5269 = vmul.f32 %v5203, %v5267
        %v5270 = vmul.f32 %v5204, %v5267
        %v5271 = vmul.f32 %v5205, %v5267
        %v5272 = vmul.f32 %v5206, %v5267
        %v5273 = vmul.f32 %v5207, %v5267
        %v5274 = vmul.f32 %v5208, %v5267
        %v5275 = vmul.f32 %v5209, %v5267
        %v5276 = vmul.f32 %v5210, %v5267
        %v5286 = vrot.slane %v5268, 2
        %v5287 = vrot.slane %v5271, 2
        %v5288 = vsel %vm468, %v5286, %v5287
        %v5289 = vrot.slane %v5269, 2
        %v5290 = vrot.slane %v5272, 2
        %v5291 = vsel %vm468, %v5289, %v5290
        %v5292 = vrot.slane %v5270, 2
        %v5293 = vrot.slane %v5273, 2
        %v5294 = vsel %vm468, %v5292, %v5293
        %v5295 = vrot.slane %v5274, 2
        %v5296 = vsel %vm468, %v5287, %v5295
        %v5297 = vrot.slane %v5275, 2
        %v5298 = vsel %vm468, %v5290, %v5297
        %v5299 = vrot.slane %v5276, 2
        %v5300 = vsel %vm468, %v5293, %v5299
        %v5307 = vadd.f32 %v5260, %v5288
        %v5308 = vadd.f32 %v5261, %v5291
        %v5309 = vadd.f32 %v5262, %v5294
        %v5310 = vadd.f32 %v5263, %v5296
        %v5311 = vadd.f32 %v5264, %v5298
        %v5312 = vadd.f32 %v5265, %v5300
        %s5313 = sld [smem:[#allocation2 + $0x7]]
        %v5314 = vstv %s5313
        %v5315 = vmul.f32 %v5202, %v5314
        %v5316 = vmul.f32 %v5203, %v5314
        %v5317 = vmul.f32 %v5204, %v5314
        %v5318 = vmul.f32 %v5205, %v5314
        %v5319 = vmul.f32 %v5206, %v5314
        %v5320 = vmul.f32 %v5207, %v5314
        %5327 = vrot.lane.b32.xlu0 %v5315, 127
        %v5328 = vpop.permute.xlu0 %5327
        %5329 = vrot.lane.b32.xlu0 %v5316, 127
        %v5330 = vpop.permute.xlu0 %5329
        %5331 = vrot.lane.b32.xlu0 %v5317, 127
        %v5332 = vpop.permute.xlu0 %5331
        %5333 = vrot.lane.b32.xlu0 %v5318, 127
        %v5334 = vpop.permute.xlu0 %5333
        %5335 = vrot.lane.b32.xlu0 %v5319, 127
        %v5336 = vpop.permute.xlu0 %5335
        %5337 = vrot.lane.b32.xlu0 %v5320, 127
        %v5338 = vpop.permute.xlu0 %5337
        %v5339 = vsel %vm522, %v5328, %v5330
        %v5340 = vsel %vm522, %v5330, %v5332
        %v5341 = vsel %vm522, %v5334, %v5336
        %v5342 = vsel %vm522, %v5336, %v5338
        %v5349 = vadd.f32 %v5307, %v5339
        %v5350 = vadd.f32 %v5308, %v5340
        %v5351 = vadd.f32 %v5309, %v5332
        %v5352 = vadd.f32 %v5310, %v5341
        %v5353 = vadd.f32 %v5311, %v5342
        %v5354 = vadd.f32 %v5312, %v5338
        %s5355 = sld [smem:[#allocation2 + $0x2b]]
        %v5356 = vstv %s5355
        %v5357 = vmul.f32 %v5202, %v5356
        %v5358 = vmul.f32 %v5203, %v5356
        %v5359 = vmul.f32 %v5204, %v5356
        %v5360 = vmul.f32 %v5205, %v5356
        %v5361 = vmul.f32 %v5206, %v5356
        %v5362 = vmul.f32 %v5207, %v5356
        %v5363 = vmul.f32 %v5208, %v5356
        %v5364 = vmul.f32 %v5209, %v5356
        %v5365 = vmul.f32 %v5210, %v5356
        %v5375 = vrot.slane %v5357, 1
        %v5376 = vrot.slane %v5360, 1
        %v5377 = vsel %vm420, %v5375, %v5376
        %v5378 = vrot.slane %v5358, 1
        %v5379 = vrot.slane %v5361, 1
        %v5380 = vsel %vm420, %v5378, %v5379
        %v5381 = vrot.slane %v5359, 1
        %v5382 = vrot.slane %v5362, 1
        %v5383 = vsel %vm420, %v5381, %v5382
        %v5384 = vrot.slane %v5363, 1
        %v5385 = vsel %vm420, %v5376, %v5384
        %v5386 = vrot.slane %v5364, 1
        %v5387 = vsel %vm420, %v5379, %v5386
        %v5388 = vrot.slane %v5365, 1
        %v5389 = vsel %vm420, %v5382, %v5388
        %5390 = vrot.lane.b32.xlu0 %v5377, 127
        %v5391 = vpop.permute.xlu0 %5390
        %5392 = vrot.lane.b32.xlu0 %v5380, 127
        %v5393 = vpop.permute.xlu0 %5392
        %5394 = vrot.lane.b32.xlu0 %v5383, 127
        %v5395 = vpop.permute.xlu0 %5394
        %5396 = vrot.lane.b32.xlu0 %v5385, 127
        %v5397 = vpop.permute.xlu0 %5396
        %5398 = vrot.lane.b32.xlu0 %v5387, 127
        %v5399 = vpop.permute.xlu0 %5398
        %5400 = vrot.lane.b32.xlu0 %v5389, 127
        %v5401 = vpop.permute.xlu0 %5400
        %v5402 = vsel %vm522, %v5391, %v5393
        %v5403 = vsel %vm522, %v5393, %v5395
        %v5404 = vsel %vm522, %v5397, %v5399
        %v5405 = vsel %vm522, %v5399, %v5401
        %v5412 = vadd.f32 %v5349, %v5402
        %v5413 = vadd.f32 %v5350, %v5403
        %v5414 = vadd.f32 %v5351, %v5395
        %v5415 = vadd.f32 %v5352, %v5404
        %v5416 = vadd.f32 %v5353, %v5405
        %v5417 = vadd.f32 %v5354, %v5401
        %s5418 = sld [smem:[#allocation2 + $0x4f]]
        %v5419 = vstv %s5418
        %v5420 = vmul.f32 %v5202, %v5419
        %v5421 = vmul.f32 %v5203, %v5419
        %v5422 = vmul.f32 %v5204, %v5419
        %v5423 = vmul.f32 %v5205, %v5419
        %v5424 = vmul.f32 %v5206, %v5419
        %v5425 = vmul.f32 %v5207, %v5419
        %v5426 = vmul.f32 %v5208, %v5419
        %v5427 = vmul.f32 %v5209, %v5419
        %v5428 = vmul.f32 %v5210, %v5419
        %v5438 = vrot.slane %v5420, 2
        %v5439 = vrot.slane %v5423, 2
        %v5440 = vsel %vm468, %v5438, %v5439
        %v5441 = vrot.slane %v5421, 2
        %v5442 = vrot.slane %v5424, 2
        %v5443 = vsel %vm468, %v5441, %v5442
        %v5444 = vrot.slane %v5422, 2
        %v5445 = vrot.slane %v5425, 2
        %v5446 = vsel %vm468, %v5444, %v5445
        %v5447 = vrot.slane %v5426, 2
        %v5448 = vsel %vm468, %v5439, %v5447
        %v5449 = vrot.slane %v5427, 2
        %v5450 = vsel %vm468, %v5442, %v5449
        %v5451 = vrot.slane %v5428, 2
        %v5452 = vsel %vm468, %v5445, %v5451
        %5453 = vrot.lane.b32.xlu0 %v5440, 127
        %v5454 = vpop.permute.xlu0 %5453
        %5455 = vrot.lane.b32.xlu0 %v5443, 127
        %v5456 = vpop.permute.xlu0 %5455
        %5457 = vrot.lane.b32.xlu0 %v5446, 127
        %v5458 = vpop.permute.xlu0 %5457
        %5459 = vrot.lane.b32.xlu0 %v5448, 127
        %v5460 = vpop.permute.xlu0 %5459
        %5461 = vrot.lane.b32.xlu0 %v5450, 127
        %v5462 = vpop.permute.xlu0 %5461
        %5463 = vrot.lane.b32.xlu0 %v5452, 127
        %v5464 = vpop.permute.xlu0 %5463
        %v5465 = vsel %vm522, %v5454, %v5456
        %v5466 = vsel %vm522, %v5456, %v5458
        %v5467 = vsel %vm522, %v5460, %v5462
        %v5468 = vsel %vm522, %v5462, %v5464
        %v5475 = vadd.f32 %v5412, %v5465
        %v5476 = vadd.f32 %v5413, %v5466
        %v5477 = vadd.f32 %v5414, %v5458
        %v5478 = vadd.f32 %v5415, %v5467
        %v5479 = vadd.f32 %v5416, %v5468
        %v5480 = vadd.f32 %v5417, %v5464
        %s5481 = sld [smem:[#allocation2 + $0xb]]
        %v5482 = vstv %s5481
        %v5483 = vmul.f32 %v5202, %v5482
        %v5484 = vmul.f32 %v5203, %v5482
        %v5485 = vmul.f32 %v5204, %v5482
        %v5486 = vmul.f32 %v5205, %v5482
        %v5487 = vmul.f32 %v5206, %v5482
        %v5488 = vmul.f32 %v5207, %v5482
        %5495 = vrot.lane.b32.xlu0 %v5483, 126
        %v5496 = vpop.permute.xlu0 %5495
        %5497 = vrot.lane.b32.xlu0 %v5484, 126
        %v5498 = vpop.permute.xlu0 %5497
        %5499 = vrot.lane.b32.xlu0 %v5485, 126
        %v5500 = vpop.permute.xlu0 %5499
        %5501 = vrot.lane.b32.xlu0 %v5486, 126
        %v5502 = vpop.permute.xlu0 %5501
        %5503 = vrot.lane.b32.xlu0 %v5487, 126
        %v5504 = vpop.permute.xlu0 %5503
        %5505 = vrot.lane.b32.xlu0 %v5488, 126
        %v5506 = vpop.permute.xlu0 %5505
        %v5507 = vsel %vm691, %v5496, %v5498
        %v5508 = vsel %vm691, %v5498, %v5500
        %v5509 = vsel %vm691, %v5502, %v5504
        %v5510 = vsel %vm691, %v5504, %v5506
        %v5517 = vadd.f32 %v5475, %v5507
        %v5518 = vadd.f32 %v5476, %v5508
        %v5519 = vadd.f32 %v5477, %v5500
        %v5520 = vadd.f32 %v5478, %v5509
        %v5521 = vadd.f32 %v5479, %v5510
        %v5522 = vadd.f32 %v5480, %v5506
        %s5523 = sld [smem:[#allocation2 + $0x2f]]
        %v5524 = vstv %s5523
        %v5525 = vmul.f32 %v5202, %v5524
        %v5526 = vmul.f32 %v5203, %v5524
        %v5527 = vmul.f32 %v5204, %v5524
        %v5528 = vmul.f32 %v5205, %v5524
        %v5529 = vmul.f32 %v5206, %v5524
        %v5530 = vmul.f32 %v5207, %v5524
        %v5531 = vmul.f32 %v5208, %v5524
        %v5532 = vmul.f32 %v5209, %v5524
        %v5533 = vmul.f32 %v5210, %v5524
        %v5543 = vrot.slane %v5525, 1
        %v5544 = vrot.slane %v5528, 1
        %v5545 = vsel %vm420, %v5543, %v5544
        %v5546 = vrot.slane %v5526, 1
        %v5547 = vrot.slane %v5529, 1
        %v5548 = vsel %vm420, %v5546, %v5547
        %v5549 = vrot.slane %v5527, 1
        %v5550 = vrot.slane %v5530, 1
        %v5551 = vsel %vm420, %v5549, %v5550
        %v5552 = vrot.slane %v5531, 1
        %v5553 = vsel %vm420, %v5544, %v5552
        %v5554 = vrot.slane %v5532, 1
        %v5555 = vsel %vm420, %v5547, %v5554
        %v5556 = vrot.slane %v5533, 1
        %v5557 = vsel %vm420, %v5550, %v5556
        %5558 = vrot.lane.b32.xlu0 %v5545, 126
        %v5559 = vpop.permute.xlu0 %5558
        %5560 = vrot.lane.b32.xlu0 %v5548, 126
        %v5561 = vpop.permute.xlu0 %5560
        %5562 = vrot.lane.b32.xlu0 %v5551, 126
        %v5563 = vpop.permute.xlu0 %5562
        %5564 = vrot.lane.b32.xlu0 %v5553, 126
        %v5565 = vpop.permute.xlu0 %5564
        %5566 = vrot.lane.b32.xlu0 %v5555, 126
        %v5567 = vpop.permute.xlu0 %5566
        %5568 = vrot.lane.b32.xlu0 %v5557, 126
        %v5569 = vpop.permute.xlu0 %5568
        %v5570 = vsel %vm691, %v5559, %v5561
        %v5571 = vsel %vm691, %v5561, %v5563
        %v5572 = vsel %vm691, %v5565, %v5567
        %v5573 = vsel %vm691, %v5567, %v5569
        %v5580 = vadd.f32 %v5517, %v5570
        %v5581 = vadd.f32 %v5518, %v5571
        %v5582 = vadd.f32 %v5519, %v5563
        %v5583 = vadd.f32 %v5520, %v5572
        %v5584 = vadd.f32 %v5521, %v5573
        %v5585 = vadd.f32 %v5522, %v5569
        %s5586 = sld [smem:[#allocation2 + $0x53]]
        %v5587 = vstv %s5586
        %v5588 = vmul.f32 %v5202, %v5587
        %v5589 = vmul.f32 %v5203, %v5587
        %v5590 = vmul.f32 %v5204, %v5587
        %v5591 = vmul.f32 %v5205, %v5587
        %v5592 = vmul.f32 %v5206, %v5587
        %v5593 = vmul.f32 %v5207, %v5587
        %v5594 = vmul.f32 %v5208, %v5587
        %v5595 = vmul.f32 %v5209, %v5587
        %v5596 = vmul.f32 %v5210, %v5587
        %v5606 = vrot.slane %v5588, 2
        %v5607 = vrot.slane %v5591, 2
        %v5608 = vsel %vm468, %v5606, %v5607
        %v5609 = vrot.slane %v5589, 2
        %v5610 = vrot.slane %v5592, 2
        %v5611 = vsel %vm468, %v5609, %v5610
        %v5612 = vrot.slane %v5590, 2
        %v5613 = vrot.slane %v5593, 2
        %v5614 = vsel %vm468, %v5612, %v5613
        %v5615 = vrot.slane %v5594, 2
        %v5616 = vsel %vm468, %v5607, %v5615
        %v5617 = vrot.slane %v5595, 2
        %v5618 = vsel %vm468, %v5610, %v5617
        %v5619 = vrot.slane %v5596, 2
        %v5620 = vsel %vm468, %v5613, %v5619
        %5621 = vrot.lane.b32.xlu0 %v5608, 126
        %v5622 = vpop.permute.xlu0 %5621
        %5623 = vrot.lane.b32.xlu0 %v5611, 126
        %v5624 = vpop.permute.xlu0 %5623
        %5625 = vrot.lane.b32.xlu0 %v5614, 126
        %v5626 = vpop.permute.xlu0 %5625
        %5627 = vrot.lane.b32.xlu0 %v5616, 126
        %v5628 = vpop.permute.xlu0 %5627
        %5629 = vrot.lane.b32.xlu0 %v5618, 126
        %v5630 = vpop.permute.xlu0 %5629
        %5631 = vrot.lane.b32.xlu0 %v5620, 126
        %v5632 = vpop.permute.xlu0 %5631
        %v5633 = vsel %vm691, %v5622, %v5624
        %v5634 = vsel %vm691, %v5624, %v5626
        %v5635 = vsel %vm691, %v5628, %v5630
        %v5636 = vsel %vm691, %v5630, %v5632
        %v5643 = vadd.f32 %v5580, %v5633
        %v5644 = vadd.f32 %v5581, %v5634
        %v5645 = vadd.f32 %v5582, %v5626
        %v5646 = vadd.f32 %v5583, %v5635
        %v5647 = vadd.f32 %v5584, %v5636
        %v5648 = vadd.f32 %v5585, %v5632
        %s5649 = sld [smem:[#allocation2 + $0xf]]
        %v5650 = vstv %s5649
        %v5651 = vmul.f32 %v5202, %v5650
        %v5652 = vmul.f32 %v5203, %v5650
        %v5653 = vmul.f32 %v5204, %v5650
        %v5654 = vmul.f32 %v5205, %v5650
        %v5655 = vmul.f32 %v5206, %v5650
        %v5656 = vmul.f32 %v5207, %v5650
        %5663 = vrot.lane.b32.xlu0 %v5651, 110
        %v5664 = vpop.permute.xlu0 %5663
        %5665 = vrot.lane.b32.xlu0 %v5652, 110
        %v5666 = vpop.permute.xlu0 %5665
        %5667 = vrot.lane.b32.xlu0 %v5653, 110
        %v5668 = vpop.permute.xlu0 %5667
        %5669 = vrot.lane.b32.xlu0 %v5654, 110
        %v5670 = vpop.permute.xlu0 %5669
        %5671 = vrot.lane.b32.xlu0 %v5655, 110
        %v5672 = vpop.permute.xlu0 %5671
        %5673 = vrot.lane.b32.xlu0 %v5656, 110
        %v5674 = vpop.permute.xlu0 %5673
        %v5675 = vsel %vm860, %v5664, %v5666
        %v5676 = vsel %vm860, %v5666, %v5668
        %v5677 = vsel %vm860, %v5670, %v5672
        %v5678 = vsel %vm860, %v5672, %v5674
        %v5685 = vadd.f32 %v5643, %v5675
        %v5686 = vadd.f32 %v5644, %v5676
        %v5687 = vadd.f32 %v5645, %v5668
        %v5688 = vadd.f32 %v5646, %v5677
        %v5689 = vadd.f32 %v5647, %v5678
        %v5690 = vadd.f32 %v5648, %v5674
        %s5691 = sld [smem:[#allocation2 + $0x33]]
        %v5692 = vstv %s5691
        %v5693 = vmul.f32 %v5202, %v5692
        %v5694 = vmul.f32 %v5203, %v5692
        %v5695 = vmul.f32 %v5204, %v5692
        %v5696 = vmul.f32 %v5205, %v5692
        %v5697 = vmul.f32 %v5206, %v5692
        %v5698 = vmul.f32 %v5207, %v5692
        %v5699 = vmul.f32 %v5208, %v5692
        %v5700 = vmul.f32 %v5209, %v5692
        %v5701 = vmul.f32 %v5210, %v5692
        %v5711 = vrot.slane %v5693, 1
        %v5712 = vrot.slane %v5696, 1
        %v5713 = vsel %vm420, %v5711, %v5712
        %v5714 = vrot.slane %v5694, 1
        %v5715 = vrot.slane %v5697, 1
        %v5716 = vsel %vm420, %v5714, %v5715
        %v5717 = vrot.slane %v5695, 1
        %v5718 = vrot.slane %v5698, 1
        %v5719 = vsel %vm420, %v5717, %v5718
        %v5720 = vrot.slane %v5699, 1
        %v5721 = vsel %vm420, %v5712, %v5720
        %v5722 = vrot.slane %v5700, 1
        %v5723 = vsel %vm420, %v5715, %v5722
        %v5724 = vrot.slane %v5701, 1
        %v5725 = vsel %vm420, %v5718, %v5724
        %5726 = vrot.lane.b32.xlu0 %v5713, 110
        %v5727 = vpop.permute.xlu0 %5726
        %5728 = vrot.lane.b32.xlu0 %v5716, 110
        %v5729 = vpop.permute.xlu0 %5728
        %5730 = vrot.lane.b32.xlu0 %v5719, 110
        %v5731 = vpop.permute.xlu0 %5730
        %5732 = vrot.lane.b32.xlu0 %v5721, 110
        %v5733 = vpop.permute.xlu0 %5732
        %5734 = vrot.lane.b32.xlu0 %v5723, 110
        %v5735 = vpop.permute.xlu0 %5734
        %5736 = vrot.lane.b32.xlu0 %v5725, 110
        %v5737 = vpop.permute.xlu0 %5736
        %v5738 = vsel %vm860, %v5727, %v5729
        %v5739 = vsel %vm860, %v5729, %v5731
        %v5740 = vsel %vm860, %v5733, %v5735
        %v5741 = vsel %vm860, %v5735, %v5737
        %v5748 = vadd.f32 %v5685, %v5738
        %v5749 = vadd.f32 %v5686, %v5739
        %v5750 = vadd.f32 %v5687, %v5731
        %v5751 = vadd.f32 %v5688, %v5740
        %v5752 = vadd.f32 %v5689, %v5741
        %v5753 = vadd.f32 %v5690, %v5737
        %s5754 = sld [smem:[#allocation2 + $0x57]]
        %v5755 = vstv %s5754
        %v5756 = vmul.f32 %v5202, %v5755
        %v5757 = vmul.f32 %v5203, %v5755
        %v5758 = vmul.f32 %v5204, %v5755
        %v5759 = vmul.f32 %v5205, %v5755
        %v5760 = vmul.f32 %v5206, %v5755
        %v5761 = vmul.f32 %v5207, %v5755
        %v5762 = vmul.f32 %v5208, %v5755
        %v5763 = vmul.f32 %v5209, %v5755
        %v5764 = vmul.f32 %v5210, %v5755
        %v5774 = vrot.slane %v5756, 2
        %v5775 = vrot.slane %v5759, 2
        %v5776 = vsel %vm468, %v5774, %v5775
        %v5777 = vrot.slane %v5757, 2
        %v5778 = vrot.slane %v5760, 2
        %v5779 = vsel %vm468, %v5777, %v5778
        %v5780 = vrot.slane %v5758, 2
        %v5781 = vrot.slane %v5761, 2
        %v5782 = vsel %vm468, %v5780, %v5781
        %v5783 = vrot.slane %v5762, 2
        %v5784 = vsel %vm468, %v5775, %v5783
        %v5785 = vrot.slane %v5763, 2
        %v5786 = vsel %vm468, %v5778, %v5785
        %v5787 = vrot.slane %v5764, 2
        %v5788 = vsel %vm468, %v5781, %v5787
        %5789 = vrot.lane.b32.xlu0 %v5776, 110
        %v5790 = vpop.permute.xlu0 %5789
        %5791 = vrot.lane.b32.xlu0 %v5779, 110
        %v5792 = vpop.permute.xlu0 %5791
        %5793 = vrot.lane.b32.xlu0 %v5782, 110
        %v5794 = vpop.permute.xlu0 %5793
        %5795 = vrot.lane.b32.xlu0 %v5784, 110
        %v5796 = vpop.permute.xlu0 %5795
        %5797 = vrot.lane.b32.xlu0 %v5786, 110
        %v5798 = vpop.permute.xlu0 %5797
        %5799 = vrot.lane.b32.xlu0 %v5788, 110
        %v5800 = vpop.permute.xlu0 %5799
        %v5801 = vsel %vm860, %v5790, %v5792
        %v5802 = vsel %vm860, %v5792, %v5794
        %v5803 = vsel %vm860, %v5796, %v5798
        %v5804 = vsel %vm860, %v5798, %v5800
        %v5811 = vadd.f32 %v5748, %v5801
        %v5812 = vadd.f32 %v5749, %v5802
        %v5813 = vadd.f32 %v5750, %v5794
        %v5814 = vadd.f32 %v5751, %v5803
        %v5815 = vadd.f32 %v5752, %v5804
        %v5816 = vadd.f32 %v5753, %v5800
        %s5817 = sld [smem:[#allocation2 + $0x13]]
        %v5818 = vstv %s5817
        %v5819 = vmul.f32 %v5202, %v5818
        %v5820 = vmul.f32 %v5203, %v5818
        %v5821 = vmul.f32 %v5204, %v5818
        %v5822 = vmul.f32 %v5205, %v5818
        %v5823 = vmul.f32 %v5206, %v5818
        %v5824 = vmul.f32 %v5207, %v5818
        %5831 = vrot.lane.b32.xlu0 %v5819, 109
        %v5832 = vpop.permute.xlu0 %5831
        %5833 = vrot.lane.b32.xlu0 %v5820, 109
        %v5834 = vpop.permute.xlu0 %5833
        %5835 = vrot.lane.b32.xlu0 %v5821, 109
        %v5836 = vpop.permute.xlu0 %5835
        %5837 = vrot.lane.b32.xlu0 %v5822, 109
        %v5838 = vpop.permute.xlu0 %5837
        %5839 = vrot.lane.b32.xlu0 %v5823, 109
        %v5840 = vpop.permute.xlu0 %5839
        %5841 = vrot.lane.b32.xlu0 %v5824, 109
        %v5842 = vpop.permute.xlu0 %5841
        %v5843 = vsel %vm1029, %v5832, %v5834
        %v5844 = vsel %vm1029, %v5834, %v5836
        %v5845 = vsel %vm1029, %v5838, %v5840
        %v5846 = vsel %vm1029, %v5840, %v5842
        %v5853 = vadd.f32 %v5811, %v5843
        %v5854 = vadd.f32 %v5812, %v5844
        %v5855 = vadd.f32 %v5813, %v5836
        %v5856 = vadd.f32 %v5814, %v5845
        %v5857 = vadd.f32 %v5815, %v5846
        %v5858 = vadd.f32 %v5816, %v5842
        %s5859 = sld [smem:[#allocation2 + $0x37]]
        %v5860 = vstv %s5859
        %v5861 = vmul.f32 %v5202, %v5860
        %v5862 = vmul.f32 %v5203, %v5860
        %v5863 = vmul.f32 %v5204, %v5860
        %v5864 = vmul.f32 %v5205, %v5860
        %v5865 = vmul.f32 %v5206, %v5860
        %v5866 = vmul.f32 %v5207, %v5860
        %v5867 = vmul.f32 %v5208, %v5860
        %v5868 = vmul.f32 %v5209, %v5860
        %v5869 = vmul.f32 %v5210, %v5860
        %v5879 = vrot.slane %v5861, 1
        %v5880 = vrot.slane %v5864, 1
        %v5881 = vsel %vm420, %v5879, %v5880
        %v5882 = vrot.slane %v5862, 1
        %v5883 = vrot.slane %v5865, 1
        %v5884 = vsel %vm420, %v5882, %v5883
        %v5885 = vrot.slane %v5863, 1
        %v5886 = vrot.slane %v5866, 1
        %v5887 = vsel %vm420, %v5885, %v5886
        %v5888 = vrot.slane %v5867, 1
        %v5889 = vsel %vm420, %v5880, %v5888
        %v5890 = vrot.slane %v5868, 1
        %v5891 = vsel %vm420, %v5883, %v5890
        %v5892 = vrot.slane %v5869, 1
        %v5893 = vsel %vm420, %v5886, %v5892
        %5894 = vrot.lane.b32.xlu0 %v5881, 109
        %v5895 = vpop.permute.xlu0 %5894
        %5896 = vrot.lane.b32.xlu0 %v5884, 109
        %v5897 = vpop.permute.xlu0 %5896
        %5898 = vrot.lane.b32.xlu0 %v5887, 109
        %v5899 = vpop.permute.xlu0 %5898
        %5900 = vrot.lane.b32.xlu0 %v5889, 109
        %v5901 = vpop.permute.xlu0 %5900
        %5902 = vrot.lane.b32.xlu0 %v5891, 109
        %v5903 = vpop.permute.xlu0 %5902
        %5904 = vrot.lane.b32.xlu0 %v5893, 109
        %v5905 = vpop.permute.xlu0 %5904
        %v5906 = vsel %vm1029, %v5895, %v5897
        %v5907 = vsel %vm1029, %v5897, %v5899
        %v5908 = vsel %vm1029, %v5901, %v5903
        %v5909 = vsel %vm1029, %v5903, %v5905
        %v5916 = vadd.f32 %v5853, %v5906
        %v5917 = vadd.f32 %v5854, %v5907
        %v5918 = vadd.f32 %v5855, %v5899
        %v5919 = vadd.f32 %v5856, %v5908
        %v5920 = vadd.f32 %v5857, %v5909
        %v5921 = vadd.f32 %v5858, %v5905
        %s5922 = sld [smem:[#allocation2 + $0x5b]]
        %v5923 = vstv %s5922
        %v5924 = vmul.f32 %v5202, %v5923
        %v5925 = vmul.f32 %v5203, %v5923
        %v5926 = vmul.f32 %v5204, %v5923
        %v5927 = vmul.f32 %v5205, %v5923
        %v5928 = vmul.f32 %v5206, %v5923
        %v5929 = vmul.f32 %v5207, %v5923
        %v5930 = vmul.f32 %v5208, %v5923
        %v5931 = vmul.f32 %v5209, %v5923
        %v5932 = vmul.f32 %v5210, %v5923
        %v5942 = vrot.slane %v5924, 2
        %v5943 = vrot.slane %v5927, 2
        %v5944 = vsel %vm468, %v5942, %v5943
        %v5945 = vrot.slane %v5925, 2
        %v5946 = vrot.slane %v5928, 2
        %v5947 = vsel %vm468, %v5945, %v5946
        %v5948 = vrot.slane %v5926, 2
        %v5949 = vrot.slane %v5929, 2
        %v5950 = vsel %vm468, %v5948, %v5949
        %v5951 = vrot.slane %v5930, 2
        %v5952 = vsel %vm468, %v5943, %v5951
        %v5953 = vrot.slane %v5931, 2
        %v5954 = vsel %vm468, %v5946, %v5953
        %v5955 = vrot.slane %v5932, 2
        %v5956 = vsel %vm468, %v5949, %v5955
        %5957 = vrot.lane.b32.xlu0 %v5944, 109
        %v5958 = vpop.permute.xlu0 %5957
        %5959 = vrot.lane.b32.xlu0 %v5947, 109
        %v5960 = vpop.permute.xlu0 %5959
        %5961 = vrot.lane.b32.xlu0 %v5950, 109
        %v5962 = vpop.permute.xlu0 %5961
        %5963 = vrot.lane.b32.xlu0 %v5952, 109
        %v5964 = vpop.permute.xlu0 %5963
        %5965 = vrot.lane.b32.xlu0 %v5954, 109
        %v5966 = vpop.permute.xlu0 %5965
        %5967 = vrot.lane.b32.xlu0 %v5956, 109
        %v5968 = vpop.permute.xlu0 %5967
        %v5969 = vsel %vm1029, %v5958, %v5960
        %v5970 = vsel %vm1029, %v5960, %v5962
        %v5971 = vsel %vm1029, %v5964, %v5966
        %v5972 = vsel %vm1029, %v5966, %v5968
        %v5979 = vadd.f32 %v5916, %v5969
        %v5980 = vadd.f32 %v5917, %v5970
        %v5981 = vadd.f32 %v5918, %v5962
        %v5982 = vadd.f32 %v5919, %v5971
        %v5983 = vadd.f32 %v5920, %v5972
        %v5984 = vadd.f32 %v5921, %v5968
        %s5985 = sld [smem:[#allocation2 + $0x17]]
        %v5986 = vstv %s5985
        %v5987 = vmul.f32 %v5202, %v5986
        %v5988 = vmul.f32 %v5203, %v5986
        %v5989 = vmul.f32 %v5204, %v5986
        %v5990 = vmul.f32 %v5205, %v5986
        %v5991 = vmul.f32 %v5206, %v5986
        %v5992 = vmul.f32 %v5207, %v5986
        %5999 = vrot.lane.b32.xlu0 %v5987, 108
        %v6000 = vpop.permute.xlu0 %5999
        %6001 = vrot.lane.b32.xlu0 %v5988, 108
        %v6002 = vpop.permute.xlu0 %6001
        %6003 = vrot.lane.b32.xlu0 %v5989, 108
        %v6004 = vpop.permute.xlu0 %6003
        %6005 = vrot.lane.b32.xlu0 %v5990, 108
        %v6006 = vpop.permute.xlu0 %6005
        %6007 = vrot.lane.b32.xlu0 %v5991, 108
        %v6008 = vpop.permute.xlu0 %6007
        %6009 = vrot.lane.b32.xlu0 %v5992, 108
        %v6010 = vpop.permute.xlu0 %6009
        %v6011 = vsel %vm1198, %v6000, %v6002
        %v6012 = vsel %vm1198, %v6002, %v6004
        %v6013 = vsel %vm1198, %v6006, %v6008
        %v6014 = vsel %vm1198, %v6008, %v6010
        %v6021 = vadd.f32 %v5979, %v6011
        %v6022 = vadd.f32 %v5980, %v6012
        %v6023 = vadd.f32 %v5981, %v6004
        %v6024 = vadd.f32 %v5982, %v6013
        %v6025 = vadd.f32 %v5983, %v6014
        %v6026 = vadd.f32 %v5984, %v6010
        %s6027 = sld [smem:[#allocation2 + $0x3b]]
        %v6028 = vstv %s6027
        %v6029 = vmul.f32 %v5202, %v6028
        %v6030 = vmul.f32 %v5203, %v6028
        %v6031 = vmul.f32 %v5204, %v6028
        %v6032 = vmul.f32 %v5205, %v6028
        %v6033 = vmul.f32 %v5206, %v6028
        %v6034 = vmul.f32 %v5207, %v6028
        %v6035 = vmul.f32 %v5208, %v6028
        %v6036 = vmul.f32 %v5209, %v6028
        %v6037 = vmul.f32 %v5210, %v6028
        %v6047 = vrot.slane %v6029, 1
        %v6048 = vrot.slane %v6032, 1
        %v6049 = vsel %vm420, %v6047, %v6048
        %v6050 = vrot.slane %v6030, 1
        %v6051 = vrot.slane %v6033, 1
        %v6052 = vsel %vm420, %v6050, %v6051
        %v6053 = vrot.slane %v6031, 1
        %v6054 = vrot.slane %v6034, 1
        %v6055 = vsel %vm420, %v6053, %v6054
        %v6056 = vrot.slane %v6035, 1
        %v6057 = vsel %vm420, %v6048, %v6056
        %v6058 = vrot.slane %v6036, 1
        %v6059 = vsel %vm420, %v6051, %v6058
        %v6060 = vrot.slane %v6037, 1
        %v6061 = vsel %vm420, %v6054, %v6060
        %6062 = vrot.lane.b32.xlu0 %v6049, 108
        %v6063 = vpop.permute.xlu0 %6062
        %6064 = vrot.lane.b32.xlu0 %v6052, 108
        %v6065 = vpop.permute.xlu0 %6064
        %6066 = vrot.lane.b32.xlu0 %v6055, 108
        %v6067 = vpop.permute.xlu0 %6066
        %6068 = vrot.lane.b32.xlu0 %v6057, 108
        %v6069 = vpop.permute.xlu0 %6068
        %6070 = vrot.lane.b32.xlu0 %v6059, 108
        %v6071 = vpop.permute.xlu0 %6070
        %6072 = vrot.lane.b32.xlu0 %v6061, 108
        %v6073 = vpop.permute.xlu0 %6072
        %v6074 = vsel %vm1198, %v6063, %v6065
        %v6075 = vsel %vm1198, %v6065, %v6067
        %v6076 = vsel %vm1198, %v6069, %v6071
        %v6077 = vsel %vm1198, %v6071, %v6073
        %v6084 = vadd.f32 %v6021, %v6074
        %v6085 = vadd.f32 %v6022, %v6075
        %v6086 = vadd.f32 %v6023, %v6067
        %v6087 = vadd.f32 %v6024, %v6076
        %v6088 = vadd.f32 %v6025, %v6077
        %v6089 = vadd.f32 %v6026, %v6073
        %s6090 = sld [smem:[#allocation2 + $0x5f]]
        %v6091 = vstv %s6090
        %v6092 = vmul.f32 %v5202, %v6091
        %v6093 = vmul.f32 %v5203, %v6091
        %v6094 = vmul.f32 %v5204, %v6091
        %v6095 = vmul.f32 %v5205, %v6091
        %v6096 = vmul.f32 %v5206, %v6091
        %v6097 = vmul.f32 %v5207, %v6091
        %v6098 = vmul.f32 %v5208, %v6091
        %v6099 = vmul.f32 %v5209, %v6091
        %v6100 = vmul.f32 %v5210, %v6091
        %v6110 = vrot.slane %v6092, 2
        %v6111 = vrot.slane %v6095, 2
        %v6112 = vsel %vm468, %v6110, %v6111
        %v6113 = vrot.slane %v6093, 2
        %v6114 = vrot.slane %v6096, 2
        %v6115 = vsel %vm468, %v6113, %v6114
        %v6116 = vrot.slane %v6094, 2
        %v6117 = vrot.slane %v6097, 2
        %v6118 = vsel %vm468, %v6116, %v6117
        %v6119 = vrot.slane %v6098, 2
        %v6120 = vsel %vm468, %v6111, %v6119
        %v6121 = vrot.slane %v6099, 2
        %v6122 = vsel %vm468, %v6114, %v6121
        %v6123 = vrot.slane %v6100, 2
        %v6124 = vsel %vm468, %v6117, %v6123
        %6125 = vrot.lane.b32.xlu0 %v6112, 108
        %v6126 = vpop.permute.xlu0 %6125
        %6127 = vrot.lane.b32.xlu0 %v6115, 108
        %v6128 = vpop.permute.xlu0 %6127
        %6129 = vrot.lane.b32.xlu0 %v6118, 108
        %v6130 = vpop.permute.xlu0 %6129
        %6131 = vrot.lane.b32.xlu0 %v6120, 108
        %v6132 = vpop.permute.xlu0 %6131
        %6133 = vrot.lane.b32.xlu0 %v6122, 108
        %v6134 = vpop.permute.xlu0 %6133
        %6135 = vrot.lane.b32.xlu0 %v6124, 108
        %v6136 = vpop.permute.xlu0 %6135
        %v6137 = vsel %vm1198, %v6126, %v6128
        %v6138 = vsel %vm1198, %v6128, %v6130
        %v6139 = vsel %vm1198, %v6132, %v6134
        %v6140 = vsel %vm1198, %v6134, %v6136
        %v6147 = vadd.f32 %v6084, %v6137
        %v6148 = vadd.f32 %v6085, %v6138
        %v6149 = vadd.f32 %v6086, %v6130
        %v6150 = vadd.f32 %v6087, %v6139
        %v6151 = vadd.f32 %v6088, %v6140
        %v6152 = vadd.f32 %v6089, %v6136
        %s6153 = sld [smem:[#allocation2 + $0x1b]]
        %v6154 = vstv %s6153
        %v6155 = vmul.f32 %v5202, %v6154
        %v6156 = vmul.f32 %v5203, %v6154
        %v6157 = vmul.f32 %v5204, %v6154
        %v6158 = vmul.f32 %v5205, %v6154
        %v6159 = vmul.f32 %v5206, %v6154
        %v6160 = vmul.f32 %v5207, %v6154
        %6167 = vrot.lane.b32.xlu0 %v6155, 92
        %v6168 = vpop.permute.xlu0 %6167
        %6169 = vrot.lane.b32.xlu0 %v6156, 92
        %v6170 = vpop.permute.xlu0 %6169
        %6171 = vrot.lane.b32.xlu0 %v6157, 92
        %v6172 = vpop.permute.xlu0 %6171
        %6173 = vrot.lane.b32.xlu0 %v6158, 92
        %v6174 = vpop.permute.xlu0 %6173
        %6175 = vrot.lane.b32.xlu0 %v6159, 92
        %v6176 = vpop.permute.xlu0 %6175
        %6177 = vrot.lane.b32.xlu0 %v6160, 92
        %v6178 = vpop.permute.xlu0 %6177
        %v6179 = vsel %vm1367, %v6168, %v6170
        %v6180 = vsel %vm1367, %v6170, %v6172
        %v6181 = vsel %vm1367, %v6174, %v6176
        %v6182 = vsel %vm1367, %v6176, %v6178
        %v6189 = vadd.f32 %v6147, %v6179
        %v6190 = vadd.f32 %v6148, %v6180
        %v6191 = vadd.f32 %v6149, %v6172
        %v6192 = vadd.f32 %v6150, %v6181
        %v6193 = vadd.f32 %v6151, %v6182
        %v6194 = vadd.f32 %v6152, %v6178
        %s6195 = sld [smem:[#allocation2 + $0x3f]]
        %v6196 = vstv %s6195
        %v6197 = vmul.f32 %v5202, %v6196
        %v6198 = vmul.f32 %v5203, %v6196
        %v6199 = vmul.f32 %v5204, %v6196
        %v6200 = vmul.f32 %v5205, %v6196
        %v6201 = vmul.f32 %v5206, %v6196
        %v6202 = vmul.f32 %v5207, %v6196
        %v6203 = vmul.f32 %v5208, %v6196
        %v6204 = vmul.f32 %v5209, %v6196
        %v6205 = vmul.f32 %v5210, %v6196
        %v6215 = vrot.slane %v6197, 1
        %v6216 = vrot.slane %v6200, 1
        %v6217 = vsel %vm420, %v6215, %v6216
        %v6218 = vrot.slane %v6198, 1
        %v6219 = vrot.slane %v6201, 1
        %v6220 = vsel %vm420, %v6218, %v6219
        %v6221 = vrot.slane %v6199, 1
        %v6222 = vrot.slane %v6202, 1
        %v6223 = vsel %vm420, %v6221, %v6222
        %v6224 = vrot.slane %v6203, 1
        %v6225 = vsel %vm420, %v6216, %v6224
        %v6226 = vrot.slane %v6204, 1
        %v6227 = vsel %vm420, %v6219, %v6226
        %v6228 = vrot.slane %v6205, 1
        %v6229 = vsel %vm420, %v6222, %v6228
        %6230 = vrot.lane.b32.xlu0 %v6217, 92
        %v6231 = vpop.permute.xlu0 %6230
        %6232 = vrot.lane.b32.xlu0 %v6220, 92
        %v6233 = vpop.permute.xlu0 %6232
        %6234 = vrot.lane.b32.xlu0 %v6223, 92
        %v6235 = vpop.permute.xlu0 %6234
        %6236 = vrot.lane.b32.xlu0 %v6225, 92
        %v6237 = vpop.permute.xlu0 %6236
        %6238 = vrot.lane.b32.xlu0 %v6227, 92
        %v6239 = vpop.permute.xlu0 %6238
        %6240 = vrot.lane.b32.xlu0 %v6229, 92
        %v6241 = vpop.permute.xlu0 %6240
        %v6242 = vsel %vm1367, %v6231, %v6233
        %v6243 = vsel %vm1367, %v6233, %v6235
        %v6244 = vsel %vm1367, %v6237, %v6239
        %v6245 = vsel %vm1367, %v6239, %v6241
        %v6252 = vadd.f32 %v6189, %v6242
        %v6253 = vadd.f32 %v6190, %v6243
        %v6254 = vadd.f32 %v6191, %v6235
        %v6255 = vadd.f32 %v6192, %v6244
        %v6256 = vadd.f32 %v6193, %v6245
        %v6257 = vadd.f32 %v6194, %v6241
        %s6258 = sld [smem:[#allocation2 + $0x63]]
        %v6259 = vstv %s6258
        %v6260 = vmul.f32 %v5202, %v6259
        %v6261 = vmul.f32 %v5203, %v6259
        %v6262 = vmul.f32 %v5204, %v6259
        %v6263 = vmul.f32 %v5205, %v6259
        %v6264 = vmul.f32 %v5206, %v6259
        %v6265 = vmul.f32 %v5207, %v6259
        %v6266 = vmul.f32 %v5208, %v6259
        %v6267 = vmul.f32 %v5209, %v6259
        %v6268 = vmul.f32 %v5210, %v6259
        %v6278 = vrot.slane %v6260, 2
        %v6279 = vrot.slane %v6263, 2
        %v6280 = vsel %vm468, %v6278, %v6279
        %v6281 = vrot.slane %v6261, 2
        %v6282 = vrot.slane %v6264, 2
        %v6283 = vsel %vm468, %v6281, %v6282
        %v6284 = vrot.slane %v6262, 2
        %v6285 = vrot.slane %v6265, 2
        %v6286 = vsel %vm468, %v6284, %v6285
        %v6287 = vrot.slane %v6266, 2
        %v6288 = vsel %vm468, %v6279, %v6287
        %v6289 = vrot.slane %v6267, 2
        %v6290 = vsel %vm468, %v6282, %v6289
        %v6291 = vrot.slane %v6268, 2
        %v6292 = vsel %vm468, %v6285, %v6291
        %6293 = vrot.lane.b32.xlu0 %v6280, 92
        %v6294 = vpop.permute.xlu0 %6293
        %6295 = vrot.lane.b32.xlu0 %v6283, 92
        %v6296 = vpop.permute.xlu0 %6295
        %6297 = vrot.lane.b32.xlu0 %v6286, 92
        %v6298 = vpop.permute.xlu0 %6297
        %6299 = vrot.lane.b32.xlu0 %v6288, 92
        %v6300 = vpop.permute.xlu0 %6299
        %6301 = vrot.lane.b32.xlu0 %v6290, 92
        %v6302 = vpop.permute.xlu0 %6301
        %6303 = vrot.lane.b32.xlu0 %v6292, 92
        %v6304 = vpop.permute.xlu0 %6303
        %v6305 = vsel %vm1367, %v6294, %v6296
        %v6306 = vsel %vm1367, %v6296, %v6298
        %v6307 = vsel %vm1367, %v6300, %v6302
        %v6308 = vsel %vm1367, %v6302, %v6304
        %v6315 = vadd.f32 %v6252, %v6305
        %v6316 = vadd.f32 %v6253, %v6306
        %v6317 = vadd.f32 %v6254, %v6298
        %v6318 = vadd.f32 %v6255, %v6307
        %v6319 = vadd.f32 %v6256, %v6308
        %v6320 = vadd.f32 %v6257, %v6304
        %s6321 = sld [smem:[#allocation2 + $0x1f]]
        %v6322 = vstv %s6321
        %v6323 = vmul.f32 %v5202, %v6322
        %v6324 = vmul.f32 %v5203, %v6322
        %v6325 = vmul.f32 %v5204, %v6322
        %v6326 = vmul.f32 %v5205, %v6322
        %v6327 = vmul.f32 %v5206, %v6322
        %v6328 = vmul.f32 %v5207, %v6322
        %6335 = vrot.lane.b32.xlu0 %v6323, 91
        %v6336 = vpop.permute.xlu0 %6335
        %6337 = vrot.lane.b32.xlu0 %v6324, 91
        %v6338 = vpop.permute.xlu0 %6337
        %6339 = vrot.lane.b32.xlu0 %v6325, 91
        %v6340 = vpop.permute.xlu0 %6339
        %6341 = vrot.lane.b32.xlu0 %v6326, 91
        %v6342 = vpop.permute.xlu0 %6341
        %6343 = vrot.lane.b32.xlu0 %v6327, 91
        %v6344 = vpop.permute.xlu0 %6343
        %6345 = vrot.lane.b32.xlu0 %v6328, 91
        %v6346 = vpop.permute.xlu0 %6345
        %v6347 = vsel %vm1536, %v6336, %v6338
        %v6348 = vsel %vm1536, %v6338, %v6340
        %v6349 = vsel %vm1536, %v6342, %v6344
        %v6350 = vsel %vm1536, %v6344, %v6346
        %v6357 = vadd.f32 %v6315, %v6347
        %v6358 = vadd.f32 %v6316, %v6348
        %v6359 = vadd.f32 %v6317, %v6340
        %v6360 = vadd.f32 %v6318, %v6349
        %v6361 = vadd.f32 %v6319, %v6350
        %v6362 = vadd.f32 %v6320, %v6346
        %s6363 = sld [smem:[#allocation2 + $0x43]]
        %v6364 = vstv %s6363
        %v6365 = vmul.f32 %v5202, %v6364
        %v6366 = vmul.f32 %v5203, %v6364
        %v6367 = vmul.f32 %v5204, %v6364
        %v6368 = vmul.f32 %v5205, %v6364
        %v6369 = vmul.f32 %v5206, %v6364
        %v6370 = vmul.f32 %v5207, %v6364
        %v6371 = vmul.f32 %v5208, %v6364
        %v6372 = vmul.f32 %v5209, %v6364
        %v6373 = vmul.f32 %v5210, %v6364
        %v6383 = vrot.slane %v6365, 1
        %v6384 = vrot.slane %v6368, 1
        %v6385 = vsel %vm420, %v6383, %v6384
        %v6386 = vrot.slane %v6366, 1
        %v6387 = vrot.slane %v6369, 1
        %v6388 = vsel %vm420, %v6386, %v6387
        %v6389 = vrot.slane %v6367, 1
        %v6390 = vrot.slane %v6370, 1
        %v6391 = vsel %vm420, %v6389, %v6390
        %v6392 = vrot.slane %v6371, 1
        %v6393 = vsel %vm420, %v6384, %v6392
        %v6394 = vrot.slane %v6372, 1
        %v6395 = vsel %vm420, %v6387, %v6394
        %v6396 = vrot.slane %v6373, 1
        %v6397 = vsel %vm420, %v6390, %v6396
        %6398 = vrot.lane.b32.xlu0 %v6385, 91
        %v6399 = vpop.permute.xlu0 %6398
        %6400 = vrot.lane.b32.xlu0 %v6388, 91
        %v6401 = vpop.permute.xlu0 %6400
        %6402 = vrot.lane.b32.xlu0 %v6391, 91
        %v6403 = vpop.permute.xlu0 %6402
        %6404 = vrot.lane.b32.xlu0 %v6393, 91
        %v6405 = vpop.permute.xlu0 %6404
        %6406 = vrot.lane.b32.xlu0 %v6395, 91
        %v6407 = vpop.permute.xlu0 %6406
        %6408 = vrot.lane.b32.xlu0 %v6397, 91
        %v6409 = vpop.permute.xlu0 %6408
        %v6410 = vsel %vm1536, %v6399, %v6401
        %v6411 = vsel %vm1536, %v6401, %v6403
        %v6412 = vsel %vm1536, %v6405, %v6407
        %v6413 = vsel %vm1536, %v6407, %v6409
        %v6420 = vadd.f32 %v6357, %v6410
        %v6421 = vadd.f32 %v6358, %v6411
        %v6422 = vadd.f32 %v6359, %v6403
        %v6423 = vadd.f32 %v6360, %v6412
        %v6424 = vadd.f32 %v6361, %v6413
        %v6425 = vadd.f32 %v6362, %v6409
        %s6426 = sld [smem:[#allocation2 + $0x67]]
        %v6427 = vstv %s6426
        %v6428 = vmul.f32 %v5202, %v6427
        %v6429 = vmul.f32 %v5203, %v6427
        %v6430 = vmul.f32 %v5204, %v6427
        %v6431 = vmul.f32 %v5205, %v6427
        %v6432 = vmul.f32 %v5206, %v6427
        %v6433 = vmul.f32 %v5207, %v6427
        %v6434 = vmul.f32 %v5208, %v6427
        %v6435 = vmul.f32 %v5209, %v6427
        %v6436 = vmul.f32 %v5210, %v6427
        %v6446 = vrot.slane %v6428, 2
        %v6447 = vrot.slane %v6431, 2
        %v6448 = vsel %vm468, %v6446, %v6447
        %v6449 = vrot.slane %v6429, 2
        %v6450 = vrot.slane %v6432, 2
        %v6451 = vsel %vm468, %v6449, %v6450
        %v6452 = vrot.slane %v6430, 2
        %v6453 = vrot.slane %v6433, 2
        %v6454 = vsel %vm468, %v6452, %v6453
        %v6455 = vrot.slane %v6434, 2
        %v6456 = vsel %vm468, %v6447, %v6455
        %v6457 = vrot.slane %v6435, 2
        %v6458 = vsel %vm468, %v6450, %v6457
        %v6459 = vrot.slane %v6436, 2
        %v6460 = vsel %vm468, %v6453, %v6459
        %6461 = vrot.lane.b32.xlu0 %v6448, 91
        %v6462 = vpop.permute.xlu0 %6461
        %6463 = vrot.lane.b32.xlu0 %v6451, 91
        %v6464 = vpop.permute.xlu0 %6463
        %6465 = vrot.lane.b32.xlu0 %v6454, 91
        %v6466 = vpop.permute.xlu0 %6465
        %6467 = vrot.lane.b32.xlu0 %v6456, 91
        %v6468 = vpop.permute.xlu0 %6467
        %6469 = vrot.lane.b32.xlu0 %v6458, 91
        %v6470 = vpop.permute.xlu0 %6469
        %6471 = vrot.lane.b32.xlu0 %v6460, 91
        %v6472 = vpop.permute.xlu0 %6471
        %v6473 = vsel %vm1536, %v6462, %v6464
        %v6474 = vsel %vm1536, %v6464, %v6466
        %v6475 = vsel %vm1536, %v6468, %v6470
        %v6476 = vsel %vm1536, %v6470, %v6472
        %v6483 = vadd.f32 %v6420, %v6473
        %v6484 = vadd.f32 %v6421, %v6474
        %v6485 = vadd.f32 %v6422, %v6466
        %v6486 = vadd.f32 %v6423, %v6475
        %v6487 = vadd.f32 %v6424, %v6476
        %v6488 = vadd.f32 %v6425, %v6472
        %s6489 = sld [smem:[#allocation2 + $0x23]]
        %v6490 = vstv %s6489
        %v6491 = vmul.f32 %v5202, %v6490
        %v6492 = vmul.f32 %v5203, %v6490
        %v6493 = vmul.f32 %v5204, %v6490
        %v6494 = vmul.f32 %v5205, %v6490
        %v6495 = vmul.f32 %v5206, %v6490
        %v6496 = vmul.f32 %v5207, %v6490
        %6503 = vrot.lane.b32.xlu0 %v6491, 90
        %v6504 = vpop.permute.xlu0 %6503
        %6505 = vrot.lane.b32.xlu0 %v6492, 90
        %v6506 = vpop.permute.xlu0 %6505
        %6507 = vrot.lane.b32.xlu0 %v6493, 90
        %v6508 = vpop.permute.xlu0 %6507
        %6509 = vrot.lane.b32.xlu0 %v6494, 90
        %v6510 = vpop.permute.xlu0 %6509
        %6511 = vrot.lane.b32.xlu0 %v6495, 90
        %v6512 = vpop.permute.xlu0 %6511
        %6513 = vrot.lane.b32.xlu0 %v6496, 90
        %v6514 = vpop.permute.xlu0 %6513
        %v6515 = vsel %vm1705, %v6504, %v6506
        %v6516 = vsel %vm1705, %v6506, %v6508
        %v6517 = vsel %vm1705, %v6510, %v6512
        %v6518 = vsel %vm1705, %v6512, %v6514
        %v6525 = vadd.f32 %v6483, %v6515
        %v6526 = vadd.f32 %v6484, %v6516
        %v6527 = vadd.f32 %v6485, %v6508
        %v6528 = vadd.f32 %v6486, %v6517
        %v6529 = vadd.f32 %v6487, %v6518
        %v6530 = vadd.f32 %v6488, %v6514
        %s6531 = sld [smem:[#allocation2 + $0x47]]
        %v6532 = vstv %s6531
        %v6533 = vmul.f32 %v5202, %v6532
        %v6534 = vmul.f32 %v5203, %v6532
        %v6535 = vmul.f32 %v5204, %v6532
        %v6536 = vmul.f32 %v5205, %v6532
        %v6537 = vmul.f32 %v5206, %v6532
        %v6538 = vmul.f32 %v5207, %v6532
        %v6539 = vmul.f32 %v5208, %v6532
        %v6540 = vmul.f32 %v5209, %v6532
        %v6541 = vmul.f32 %v5210, %v6532
        %v6551 = vrot.slane %v6533, 1
        %v6552 = vrot.slane %v6536, 1
        %v6553 = vsel %vm420, %v6551, %v6552
        %v6554 = vrot.slane %v6534, 1
        %v6555 = vrot.slane %v6537, 1
        %v6556 = vsel %vm420, %v6554, %v6555
        %v6557 = vrot.slane %v6535, 1
        %v6558 = vrot.slane %v6538, 1
        %v6559 = vsel %vm420, %v6557, %v6558
        %v6560 = vrot.slane %v6539, 1
        %v6561 = vsel %vm420, %v6552, %v6560
        %v6562 = vrot.slane %v6540, 1
        %v6563 = vsel %vm420, %v6555, %v6562
        %v6564 = vrot.slane %v6541, 1
        %v6565 = vsel %vm420, %v6558, %v6564
        %6566 = vrot.lane.b32.xlu0 %v6553, 90
        %v6567 = vpop.permute.xlu0 %6566
        %6568 = vrot.lane.b32.xlu0 %v6556, 90
        %v6569 = vpop.permute.xlu0 %6568
        %6570 = vrot.lane.b32.xlu0 %v6559, 90
        %v6571 = vpop.permute.xlu0 %6570
        %6572 = vrot.lane.b32.xlu0 %v6561, 90
        %v6573 = vpop.permute.xlu0 %6572
        %6574 = vrot.lane.b32.xlu0 %v6563, 90
        %v6575 = vpop.permute.xlu0 %6574
        %6576 = vrot.lane.b32.xlu0 %v6565, 90
        %v6577 = vpop.permute.xlu0 %6576
        %v6578 = vsel %vm1705, %v6567, %v6569
        %v6579 = vsel %vm1705, %v6569, %v6571
        %v6580 = vsel %vm1705, %v6573, %v6575
        %v6581 = vsel %vm1705, %v6575, %v6577
        %v6588 = vadd.f32 %v6525, %v6578
        %v6589 = vadd.f32 %v6526, %v6579
        %v6590 = vadd.f32 %v6527, %v6571
        %v6591 = vadd.f32 %v6528, %v6580
        %v6592 = vadd.f32 %v6529, %v6581
        %v6593 = vadd.f32 %v6530, %v6577
        %s6594 = sld [smem:[#allocation2 + $0x6b]]
        %v6595 = vstv %s6594
        %v6596 = vmul.f32 %v5202, %v6595
        %v6597 = vmul.f32 %v5203, %v6595
        %v6598 = vmul.f32 %v5204, %v6595
        %v6599 = vmul.f32 %v5205, %v6595
        %v6600 = vmul.f32 %v5206, %v6595
        %v6601 = vmul.f32 %v5207, %v6595
        %v6602 = vmul.f32 %v5208, %v6595
        %v6603 = vmul.f32 %v5209, %v6595
        %v6604 = vmul.f32 %v5210, %v6595
        %v6614 = vrot.slane %v6596, 2
        %v6615 = vrot.slane %v6599, 2
        %v6616 = vsel %vm468, %v6614, %v6615
        %v6617 = vrot.slane %v6597, 2
        %v6618 = vrot.slane %v6600, 2
        %v6619 = vsel %vm468, %v6617, %v6618
        %v6620 = vrot.slane %v6598, 2
        %v6621 = vrot.slane %v6601, 2
        %v6622 = vsel %vm468, %v6620, %v6621
        %v6623 = vrot.slane %v6602, 2
        %v6624 = vsel %vm468, %v6615, %v6623
        %v6625 = vrot.slane %v6603, 2
        %v6626 = vsel %vm468, %v6618, %v6625
        %v6627 = vrot.slane %v6604, 2
        %v6628 = vsel %vm468, %v6621, %v6627
        %6629 = vrot.lane.b32.xlu0 %v6616, 90
        %v6630 = vpop.permute.xlu0 %6629
        %6631 = vrot.lane.b32.xlu0 %v6619, 90
        %v6632 = vpop.permute.xlu0 %6631
        %6633 = vrot.lane.b32.xlu0 %v6622, 90
        %v6634 = vpop.permute.xlu0 %6633
        %6635 = vrot.lane.b32.xlu0 %v6624, 90
        %v6636 = vpop.permute.xlu0 %6635
        %6637 = vrot.lane.b32.xlu0 %v6626, 90
        %v6638 = vpop.permute.xlu0 %6637
        %6639 = vrot.lane.b32.xlu0 %v6628, 90
        %v6640 = vpop.permute.xlu0 %6639
        %v6641 = vsel %vm1705, %v6630, %v6632
        %v6642 = vsel %vm1705, %v6632, %v6634
        %v6643 = vsel %vm1705, %v6636, %v6638
        %v6644 = vsel %vm1705, %v6638, %v6640
        %v6651 = vadd.f32 %v6588, %v6641
        %v6652 = vadd.f32 %v6589, %v6642
        %v6653 = vadd.f32 %v6590, %v6634
        %v6654 = vadd.f32 %v6591, %v6643
        %v6655 = vadd.f32 %v6592, %v6644
        %v6656 = vadd.f32 %v6593, %v6640
        %s6657 = sld [smem:[#allocation5 + $0x3]]
        %v6658 = vstv %s6657
        %v6659 = vadd.f32 %v6651, %v6658
        %v6660 = vadd.f32 %v6652, %v6658
        %v6661 = vadd.f32 %v6653, %v6658
        %v6662 = vadd.f32 %v6654, %v6658
        %v6663 = vadd.f32 %v6655, %v6658
        %v6664 = vadd.f32 %v6656, %v6658
        %6667 = vrot.lane.b32.xlu0 %v6659, 126
        %v6668 = vpop.permute.xlu0 %6667
        %6669 = vrot.lane.b32.xlu0 %v6662, 126
        %v6670 = vpop.permute.xlu0 %6669
        %6673 = vrot.lane.b32.xlu0 %v6659, 124
        %v6674 = vpop.permute.xlu0 %6673
        %6675 = vrot.lane.b32.xlu0 %v6662, 124
        %v6676 = vpop.permute.xlu0 %6675
        %6679 = vrot.lane.b32.xlu0 %v6659, 122
        %v6680 = vpop.permute.xlu0 %6679
        %6681 = vrot.lane.b32.xlu0 %v6662, 122
        %v6682 = vpop.permute.xlu0 %6681
        %6685 = vrot.lane.b32.xlu0 %v6659, 120
        %v6686 = vpop.permute.xlu0 %6685
        %6687 = vrot.lane.b32.xlu0 %v6662, 120
        %v6688 = vpop.permute.xlu0 %6687
        %6691 = vrot.lane.b32.xlu0 %v6659, 118
        %v6692 = vpop.permute.xlu0 %6691
        %6693 = vrot.lane.b32.xlu0 %v6662, 118
        %v6694 = vpop.permute.xlu0 %6693
        %6697 = vrot.lane.b32.xlu0 %v6659, 116
        %v6698 = vpop.permute.xlu0 %6697
        %6699 = vrot.lane.b32.xlu0 %v6662, 116
        %v6700 = vpop.permute.xlu0 %6699
        %6705 = vrot.lane.b32.xlu0 %v6659, 114
        %v6706 = vpop.permute.xlu0 %6705
        %6707 = vrot.lane.b32.xlu0 %v6660, 114
        %v6708 = vpop.permute.xlu0 %6707
        %6709 = vrot.lane.b32.xlu0 %v6662, 114
        %v6710 = vpop.permute.xlu0 %6709
        %6711 = vrot.lane.b32.xlu0 %v6663, 114
        %v6712 = vpop.permute.xlu0 %6711
        %v6713 = vsel %vm1904, %v6706, %v6708
        %v6714 = vsel %vm1904, %v6710, %v6712
        %6717 = vrot.lane.b32.xlu0 %v6660, 112
        %v6718 = vpop.permute.xlu0 %6717
        %6719 = vrot.lane.b32.xlu0 %v6663, 112
        %v6720 = vpop.permute.xlu0 %6719
        %6723 = vrot.lane.b32.xlu0 %v6660, 110
        %v6724 = vpop.permute.xlu0 %6723
        %6725 = vrot.lane.b32.xlu0 %v6663, 110
        %v6726 = vpop.permute.xlu0 %6725
        %6729 = vrot.lane.b32.xlu0 %v6660, 108
        %v6730 = vpop.permute.xlu0 %6729
        %6731 = vrot.lane.b32.xlu0 %v6663, 108
        %v6732 = vpop.permute.xlu0 %6731
        %6735 = vrot.lane.b32.xlu0 %v6660, 106
        %v6736 = vpop.permute.xlu0 %6735
        %6737 = vrot.lane.b32.xlu0 %v6663, 106
        %v6738 = vpop.permute.xlu0 %6737
        %6741 = vrot.lane.b32.xlu0 %v6660, 104
        %v6742 = vpop.permute.xlu0 %6741
        %6743 = vrot.lane.b32.xlu0 %v6663, 104
        %v6744 = vpop.permute.xlu0 %6743
        %6747 = vrot.lane.b32.xlu0 %v6660, 102
        %v6748 = vpop.permute.xlu0 %6747
        %6749 = vrot.lane.b32.xlu0 %v6663, 102
        %v6750 = vpop.permute.xlu0 %6749
        %6755 = vrot.lane.b32.xlu0 %v6660, 100
        %v6756 = vpop.permute.xlu0 %6755
        %6757 = vrot.lane.b32.xlu0 %v6661, 100
        %v6758 = vpop.permute.xlu0 %6757
        %6759 = vrot.lane.b32.xlu0 %v6663, 100
        %v6760 = vpop.permute.xlu0 %6759
        %6761 = vrot.lane.b32.xlu0 %v6664, 100
        %v6762 = vpop.permute.xlu0 %6761
        %v6763 = vsel %vm1955, %v6756, %v6758
        %v6764 = vsel %vm1955, %v6760, %v6762
        %6767 = vrot.lane.b32.xlu0 %v6661, 98
        %v6768 = vpop.permute.xlu0 %6767
        %6769 = vrot.lane.b32.xlu0 %v6664, 98
        %v6770 = vpop.permute.xlu0 %6769
        %v6773 = vsel %vm1966, %v6659, %v6668
        %v6774 = vsel %vm1966, %v6662, %v6670
        %v6775 = vsel %vm1969, %v6773, %v6674
        %v6776 = vsel %vm1969, %v6774, %v6676
        %v6777 = vsel %vm1972, %v6775, %v6680
        %v6778 = vsel %vm1972, %v6776, %v6682
        %v6779 = vsel %vm1975, %v6777, %v6686
        %v6780 = vsel %vm1975, %v6778, %v6688
        %v6781 = vsel %vm1978, %v6779, %v6692
        %v6782 = vsel %vm1978, %v6780, %v6694
        %v6783 = vsel %vm1981, %v6781, %v6698
        %v6784 = vsel %vm1981, %v6782, %v6700
        %v6785 = vsel %vm1984, %v6783, %v6713
        %v6786 = vsel %vm1984, %v6784, %v6714
        %v6787 = vsel %vm1966, %v6718, %v6724
        %v6788 = vsel %vm1966, %v6720, %v6726
        %v6789 = vsel %vm1969, %v6787, %v6730
        %v6790 = vsel %vm1969, %v6788, %v6732
        %v6791 = vsel %vm1972, %v6789, %v6736
        %v6792 = vsel %vm1972, %v6790, %v6738
        %v6793 = vsel %vm1975, %v6791, %v6742
        %v6794 = vsel %vm1975, %v6792, %v6744
        %v6795 = vsel %vm1978, %v6793, %v6748
        %v6796 = vsel %vm1978, %v6794, %v6750
        %v6797 = vsel %vm1981, %v6795, %v6763
        %v6798 = vsel %vm1981, %v6796, %v6764
        %v6799 = vsel %vm1984, %v6797, %v6768
        %v6800 = vsel %vm1984, %v6798, %v6770
        %v6801 = vadd.f32 %v1985, %v1999
        %v6802 = vadd.f32 %v6801, %v1986
        %v6803 = vadd.f32 %v6802, %v2000
        %v6804 = vadd.f32 %v6803, %v3585
        %v6805 = vadd.f32 %v6804, %v3599
        %v6806 = vadd.f32 %v6805, %v3586
        %v6807 = vadd.f32 %v6806, %v3600
        %v6808 = vadd.f32 %v6807, %v5185
        %v6809 = vadd.f32 %v6808, %v5199
        %v6810 = vadd.f32 %v6809, %v5186
        %v6811 = vadd.f32 %v6810, %v5200
        %v6812 = vadd.f32 %v6811, %v6785
        %v6813 = vadd.f32 %v6812, %v6799
        %v6814 = vadd.f32 %v6813, %v6786
        %v6815 = vadd.f32 %v6814, %v6800
        %6816 = vadd.xlane.f32.xlu0 %v6815
        %v6817 = vpop.xlane.xlu0 %6816
        %v6818 = vrot.slane %v6817, 4
        %v6819 = vadd.f32 %v6817, %v6818
        %v6820 = vrot.slane %v6819, 2
        %v6821 = vadd.f32 %v6819, %v6820
        %v6822 = vrot.slane %v6821, 1
        %v6823 = vadd.f32 %v6821, %v6822
        %s6824 = vtos %v6823
        %s6825 = smul.f32 %s6824, 6.1035156e-05
        %v6826 = vmul.f32 %v1985, %v1985
        %v6827 = vmul.f32 %v1999, %v1999
        %v6828 = vmul.f32 %v1986, %v1986
        %v6829 = vmul.f32 %v2000, %v2000
        %v6830 = vmul.f32 %v3585, %v3585
        %v6831 = vmul.f32 %v3599, %v3599
        %v6832 = vmul.f32 %v3586, %v3586
        %v6833 = vmul.f32 %v3600, %v3600
        %v6834 = vmul.f32 %v5185, %v5185
        %v6835 = vmul.f32 %v5199, %v5199
        %v6836 = vmul.f32 %v5186, %v5186
        %v6837 = vmul.f32 %v5200, %v5200
        %v6838 = vmul.f32 %v6785, %v6785
        %v6839 = vmul.f32 %v6799, %v6799
        %v6840 = vmul.f32 %v6786, %v6786
        %v6841 = vmul.f32 %v6800, %v6800
        %v6842 = vadd.f32 %v6826, %v6827
        %v6843 = vadd.f32 %v6842, %v6828
        %v6844 = vadd.f32 %v6843, %v6829
        %v6845 = vadd.f32 %v6844, %v6830
        %v6846 = vadd.f32 %v6845, %v6831
        %v6847 = vadd.f32 %v6846, %v6832
        %v6848 = vadd.f32 %v6847, %v6833
        %v6849 = vadd.f32 %v6848, %v6834
        %v6850 = vadd.f32 %v6849, %v6835
        %v6851 = vadd.f32 %v6850, %v6836
        %v6852 = vadd.f32 %v6851, %v6837
        %v6853 = vadd.f32 %v6852, %v6838
        %v6854 = vadd.f32 %v6853, %v6839
        %v6855 = vadd.f32 %v6854, %v6840
        %v6856 = vadd.f32 %v6855, %v6841
        %6857 = vadd.xlane.f32.xlu0 %v6856
        %v6858 = vpop.xlane.xlu0 %6857
        %v6859 = vrot.slane %v6858, 4
        %v6860 = vadd.f32 %v6858, %v6859
        %v6861 = vrot.slane %v6860, 2
        %v6862 = vadd.f32 %v6860, %v6861
        %v6863 = vrot.slane %v6862, 1
        %v6864 = vadd.f32 %v6862, %v6863
        %s6865 = vtos %v6864
        %s6866 = smul.f32 %s6865, 6.1035156e-05
        %s6867 = smul.f32 %s6825, %s6825
        %s6868 = ssub.f32 %s6866, %s6867
        %v6869 = vstv %s6825
        %v6870 = vsub.f32 %v1985, %v6869
        %v6871 = vsub.f32 %v1999, %v6869
        %v6872 = vsub.f32 %v1986, %v6869
        %v6873 = vsub.f32 %v2000, %v6869
        %v6874 = vsub.f32 %v3585, %v6869
        %v6875 = vsub.f32 %v3599, %v6869
        %v6876 = vsub.f32 %v3586, %v6869
        %v6877 = vsub.f32 %v3600, %v6869
        %v6878 = vsub.f32 %v5185, %v6869
        %v6879 = vsub.f32 %v5199, %v6869
        %v6880 = vsub.f32 %v5186, %v6869
        %v6881 = vsub.f32 %v5200, %v6869
        %v6882 = vsub.f32 %v6785, %v6869
        %v6883 = vsub.f32 %v6799, %v6869
        %v6884 = vsub.f32 %v6786, %v6869
        %v6885 = vsub.f32 %v6800, %v6869
        %s6886 = sadd.f32 %s6868, 1e-05
        %v6887 = vstv %s6886
        %v6888 = vrsqrt.pop %v6887
        %s6889 = vtos %v6888
        %v6890 = vstv %s6889
        %v6891 = vmul.f32 %v6870, %v6890
        %v6892 = vmul.f32 %v6871, %v6890
        %v6893 = vmul.f32 %v6872, %v6890
        %v6894 = vmul.f32 %v6873, %v6890
        %v6895 = vmul.f32 %v6874, %v6890
        %v6896 = vmul.f32 %v6875, %v6890
        %v6897 = vmul.f32 %v6876, %v6890
        %v6898 = vmul.f32 %v6877, %v6890
        %v6899 = vmul.f32 %v6878, %v6890
        %v6900 = vmul.f32 %v6879, %v6890
        %v6901 = vmul.f32 %v6880, %v6890
        %v6902 = vmul.f32 %v6881, %v6890
        %v6903 = vmul.f32 %v6882, %v6890
        %v6904 = vmul.f32 %v6883, %v6890
        %v6905 = vmul.f32 %v6884, %v6890
        %v6906 = vmul.f32 %v6885, %v6890
        %v6907 = vld [vmem:[%s1] sm:$0xff]
        %v6908 = vld [vmem:[%s1 + $0x8] sm:$0xff]
        %v6909 = vld [vmem:[%s1 + $0x10] sm:$0xff]
        %v6910 = vld [vmem:[%s1 + $0x18] sm:$0xff]
        %v6911 = vld [vmem:[%s1 + $0x20] sm:$0xff]
        %v6912 = vld [vmem:[%s1 + $0x28] sm:$0xff]
        %v6913 = vld [vmem:[%s1 + $0x30] sm:$0xff]
        %v6914 = vld [vmem:[%s1 + $0x38] sm:$0xff]
        %v6915 = vld [vmem:[%s1 + $0x40] sm:$0xff]
        %v6916 = vld [vmem:[%s1 + $0x48] sm:$0xff]
        %v6917 = vld [vmem:[%s1 + $0x50] sm:$0xff]
        %v6918 = vld [vmem:[%s1 + $0x58] sm:$0xff]
        %v6919 = vld [vmem:[%s1 + $0x60] sm:$0xff]
        %v6920 = vld [vmem:[%s1 + $0x68] sm:$0xff]
        %v6921 = vld [vmem:[%s1 + $0x70] sm:$0xff]
        %v6922 = vld [vmem:[%s1 + $0x78] sm:$0xff]
        %v6923 = vmul.f32 %v6891, %v6907
        %v6924 = vmul.f32 %v6892, %v6908
        %v6925 = vmul.f32 %v6893, %v6909
        %v6926 = vmul.f32 %v6894, %v6910
        %v6927 = vmul.f32 %v6895, %v6911
        %v6928 = vmul.f32 %v6896, %v6912
        %v6929 = vmul.f32 %v6897, %v6913
        %v6930 = vmul.f32 %v6898, %v6914
        %v6931 = vmul.f32 %v6899, %v6915
        %v6932 = vmul.f32 %v6900, %v6916
        %v6933 = vmul.f32 %v6901, %v6917
        %v6934 = vmul.f32 %v6902, %v6918
        %v6935 = vmul.f32 %v6903, %v6919
        %v6936 = vmul.f32 %v6904, %v6920
        %v6937 = vmul.f32 %v6905, %v6921
        %v6938 = vmul.f32 %v6906, %v6922
        %v6939 = vld [vmem:[%s2] sm:$0xff]
        %v6940 = vld [vmem:[%s2 + $0x8] sm:$0xff]
        %v6941 = vld [vmem:[%s2 + $0x10] sm:$0xff]
        %v6942 = vld [vmem:[%s2 + $0x18] sm:$0xff]
        %v6943 = vld [vmem:[%s2 + $0x20] sm:$0xff]
        %v6944 = vld [vmem:[%s2 + $0x28] sm:$0xff]
        %v6945 = vld [vmem:[%s2 + $0x30] sm:$0xff]
        %v6946 = vld [vmem:[%s2 + $0x38] sm:$0xff]
        %v6947 = vld [vmem:[%s2 + $0x40] sm:$0xff]
        %v6948 = vld [vmem:[%s2 + $0x48] sm:$0xff]
        %v6949 = vld [vmem:[%s2 + $0x50] sm:$0xff]
        %v6950 = vld [vmem:[%s2 + $0x58] sm:$0xff]
        %v6951 = vld [vmem:[%s2 + $0x60] sm:$0xff]
        %v6952 = vld [vmem:[%s2 + $0x68] sm:$0xff]
        %v6953 = vld [vmem:[%s2 + $0x70] sm:$0xff]
        %v6954 = vld [vmem:[%s2 + $0x78] sm:$0xff]
        %v6955 = vadd.f32 %v6923, %v6939
        %v6956 = vadd.f32 %v6924, %v6940
        %v6957 = vadd.f32 %v6925, %v6941
        %v6958 = vadd.f32 %v6926, %v6942
        %v6959 = vadd.f32 %v6927, %v6943
        %v6960 = vadd.f32 %v6928, %v6944
        %v6961 = vadd.f32 %v6929, %v6945
        %v6962 = vadd.f32 %v6930, %v6946
        %v6963 = vadd.f32 %v6931, %v6947
        %v6964 = vadd.f32 %v6932, %v6948
        %v6965 = vadd.f32 %v6933, %v6949
        %v6966 = vadd.f32 %v6934, %v6950
        %v6967 = vadd.f32 %v6935, %v6951
        %v6968 = vadd.f32 %v6936, %v6952
        %v6969 = vadd.f32 %v6937, %v6953
        %v6970 = vadd.f32 %v6938, %v6954
        %v6971 = vmul.f32 %v6955, 0.5
        %v6972 = vmul.f32 %v6956, 0.5
        %v6973 = vmul.f32 %v6957, 0.5
        %v6974 = vmul.f32 %v6958, 0.5
        %v6975 = vmul.f32 %v6959, 0.5
        %v6976 = vmul.f32 %v6960, 0.5
        %v6977 = vmul.f32 %v6961, 0.5
        %v6978 = vmul.f32 %v6962, 0.5
        %v6979 = vmul.f32 %v6963, 0.5
        %v6980 = vmul.f32 %v6964, 0.5
        %v6981 = vmul.f32 %v6965, 0.5
        %v6982 = vmul.f32 %v6966, 0.5
        %v6983 = vmul.f32 %v6967, 0.5
        %v6984 = vmul.f32 %v6968, 0.5
        %v6985 = vmul.f32 %v6969, 0.5
        %v6986 = vmul.f32 %v6970, 0.5
        %v6987 = vmul.f32 %v6955, 0.70710677
        %v6988 = vmul.f32 %v6956, 0.70710677
        %v6989 = vmul.f32 %v6957, 0.70710677
        %v6990 = vmul.f32 %v6958, 0.70710677
        %v6991 = vmul.f32 %v6959, 0.70710677
        %v6992 = vmul.f32 %v6960, 0.70710677
        %v6993 = vmul.f32 %v6961, 0.70710677
        %v6994 = vmul.f32 %v6962, 0.70710677
        %v6995 = vmul.f32 %v6963, 0.70710677
        %v6996 = vmul.f32 %v6964, 0.70710677
        %v6997 = vmul.f32 %v6965, 0.70710677
        %v6998 = vmul.f32 %v6966, 0.70710677
        %v6999 = vmul.f32 %v6967, 0.70710677
        %v7000 = vmul.f32 %v6968, 0.70710677
        %v7001 = vmul.f32 %v6969, 0.70710677
        %v7002 = vmul.f32 %v6970, 0.70710677
        %v7003 = vand.u32 2147483647, %v6987
        %v7004 = vand.u32 2147483647, %v6988
        %v7005 = vand.u32 2147483647, %v6989
        %v7006 = vand.u32 2147483647, %v6990
        %v7007 = vand.u32 2147483647, %v6991
        %v7008 = vand.u32 2147483647, %v6992
        %v7009 = vand.u32 2147483647, %v6993
        %v7010 = vand.u32 2147483647, %v6994
        %v7011 = vand.u32 2147483647, %v6995
        %v7012 = vand.u32 2147483647, %v6996
        %v7013 = vand.u32 2147483647, %v6997
        %v7014 = vand.u32 2147483647, %v6998
        %v7015 = vand.u32 2147483647, %v6999
        %v7016 = vand.u32 2147483647, %v7000
        %v7017 = vand.u32 2147483647, %v7001
        %v7018 = vand.u32 2147483647, %v7002
        %v7019 = vmul.f32 %v7003, 0.3275911
        %v7020 = vmul.f32 %v7004, 0.3275911
        %v7021 = vmul.f32 %v7005, 0.3275911
        %v7022 = vmul.f32 %v7006, 0.3275911
        %v7023 = vmul.f32 %v7007, 0.3275911
        %v7024 = vmul.f32 %v7008, 0.3275911
        %v7025 = vmul.f32 %v7009, 0.3275911
        %v7026 = vmul.f32 %v7010, 0.3275911
        %v7027 = vmul.f32 %v7011, 0.3275911
        %v7028 = vmul.f32 %v7012, 0.3275911
        %v7029 = vmul.f32 %v7013, 0.3275911
        %v7030 = vmul.f32 %v7014, 0.3275911
        %v7031 = vmul.f32 %v7015, 0.3275911
        %v7032 = vmul.f32 %v7016, 0.3275911
        %v7033 = vmul.f32 %v7017, 0.3275911
        %v7034 = vmul.f32 %v7018, 0.3275911
        %v7035 = vadd.f32 %v7019, 1.0
        %v7036 = vadd.f32 %v7020, 1.0
        %v7037 = vadd.f32 %v7021, 1.0
        %v7038 = vadd.f32 %v7022, 1.0
        %v7039 = vadd.f32 %v7023, 1.0
        %v7040 = vadd.f32 %v7024, 1.0
        %v7041 = vadd.f32 %v7025, 1.0
        %v7042 = vadd.f32 %v7026, 1.0
        %v7043 = vadd.f32 %v7027, 1.0
        %v7044 = vadd.f32 %v7028, 1.0
        %v7045 = vadd.f32 %v7029, 1.0
        %v7046 = vadd.f32 %v7030, 1.0
        %v7047 = vadd.f32 %v7031, 1.0
        %v7048 = vadd.f32 %v7032, 1.0
        %v7049 = vadd.f32 %v7033, 1.0
        %v7050 = vadd.f32 %v7034, 1.0
        %v7051 = vrcp.pop %v7035
        %v7052 = vmul.f32 1.0, %v7051
        %v7053 = vrcp.pop %v7036
        %v7054 = vmul.f32 1.0, %v7053
        %v7055 = vrcp.pop %v7037
        %v7056 = vmul.f32 1.0, %v7055
        %v7057 = vrcp.pop %v7038
        %v7058 = vmul.f32 1.0, %v7057
        %v7059 = vrcp.pop %v7039
        %v7060 = vmul.f32 1.0, %v7059
        %v7061 = vrcp.pop %v7040
        %v7062 = vmul.f32 1.0, %v7061
        %v7063 = vrcp.pop %v7041
        %v7064 = vmul.f32 1.0, %v7063
        %v7065 = vrcp.pop %v7042
        %v7066 = vmul.f32 1.0, %v7065
        %v7067 = vrcp.pop %v7043
        %v7068 = vmul.f32 1.0, %v7067
        %v7069 = vrcp.pop %v7044
        %v7070 = vmul.f32 1.0, %v7069
        %v7071 = vrcp.pop %v7045
        %v7072 = vmul.f32 1.0, %v7071
        %v7073 = vrcp.pop %v7046
        %v7074 = vmul.f32 1.0, %v7073
        %v7075 = vrcp.pop %v7047
        %v7076 = vmul.f32 1.0, %v7075
        %v7077 = vrcp.pop %v7048
        %v7078 = vmul.f32 1.0, %v7077
        %v7079 = vrcp.pop %v7049
        %v7080 = vmul.f32 1.0, %v7079
        %v7081 = vrcp.pop %v7050
        %v7082 = vmul.f32 1.0, %v7081
        %v7083 = vmul.f32 %v7052, 1.0614054
        %v7084 = vmul.f32 %v7054, 1.0614054
        %v7085 = vmul.f32 %v7056, 1.0614054
        %v7086 = vmul.f32 %v7058, 1.0614054
        %v7087 = vmul.f32 %v7060, 1.0614054
        %v7088 = vmul.f32 %v7062, 1.0614054
        %v7089 = vmul.f32 %v7064, 1.0614054
        %v7090 = vmul.f32 %v7066, 1.0614054
        %v7091 = vmul.f32 %v7068, 1.0614054
        %v7092 = vmul.f32 %v7070, 1.0614054
        %v7093 = vmul.f32 %v7072, 1.0614054
        %v7094 = vmul.f32 %v7074, 1.0614054
        %v7095 = vmul.f32 %v7076, 1.0614054
        %v7096 = vmul.f32 %v7078, 1.0614054
        %v7097 = vmul.f32 %v7080, 1.0614054
        %v7098 = vmul.f32 %v7082, 1.0614054
        %v7099 = vadd.f32 %v7083, -1.4531521
        %v7100 = vadd.f32 %v7084, -1.4531521
        %v7101 = vadd.f32 %v7085, -1.4531521
        %v7102 = vadd.f32 %v7086, -1.4531521
        %v7103 = vadd.f32 %v7087, -1.4531521
        %v7104 = vadd.f32 %v7088, -1.4531521
        %v7105 = vadd.f32 %v7089, -1.4531521
        %v7106 = vadd.f32 %v7090, -1.4531521
        %v7107 = vadd.f32 %v7091, -1.4531521
        %v7108 = vadd.f32 %v7092, -1.4531521
        %v7109 = vadd.f32 %v7093, -1.4531521
        %v7110 = vadd.f32 %v7094, -1.4531521
        %v7111 = vadd.f32 %v7095, -1.4531521
        %v7112 = vadd.f32 %v7096, -1.4531521
        %v7113 = vadd.f32 %v7097, -1.4531521
        %v7114 = vadd.f32 %v7098, -1.4531521
        %v7115 = vmul.f32 %v7099, %v7052
        %v7116 = vmul.f32 %v7100, %v7054
        %v7117 = vmul.f32 %v7101, %v7056
        %v7118 = vmul.f32 %v7102, %v7058
        %v7119 = vmul.f32 %v7103, %v7060
        %v7120 = vmul.f32 %v7104, %v7062
        %v7121 = vmul.f32 %v7105, %v7064
        %v7122 = vmul.f32 %v7106, %v7066
        %v7123 = vmul.f32 %v7107, %v7068
        %v7124 = vmul.f32 %v7108, %v7070
        %v7125 = vmul.f32 %v7109, %v7072
        %v7126 = vmul.f32 %v7110, %v7074
        %v7127 = vmul.f32 %v7111, %v7076
        %v7128 = vmul.f32 %v7112, %v7078
        %v7129 = vmul.f32 %v7113, %v7080
        %v7130 = vmul.f32 %v7114, %v7082
        %v7131 = vadd.f32 %v7115, 1.4214138
        %v7132 = vadd.f32 %v7116, 1.4214138
        %v7133 = vadd.f32 %v7117, 1.4214138
        %v7134 = vadd.f32 %v7118, 1.4214138
        %v7135 = vadd.f32 %v7119, 1.4214138
        %v7136 = vadd.f32 %v7120, 1.4214138
        %v7137 = vadd.f32 %v7121, 1.4214138
        %v7138 = vadd.f32 %v7122, 1.4214138
        %v7139 = vadd.f32 %v7123, 1.4214138
        %v7140 = vadd.f32 %v7124, 1.4214138
        %v7141 = vadd.f32 %v7125, 1.4214138
        %v7142 = vadd.f32 %v7126, 1.4214138
        %v7143 = vadd.f32 %v7127, 1.4214138
        %v7144 = vadd.f32 %v7128, 1.4214138
        %v7145 = vadd.f32 %v7129, 1.4214138
        %v7146 = vadd.f32 %v7130, 1.4214138
        %v7147 = vmul.f32 %v7131, %v7052
        %v7148 = vmul.f32 %v7132, %v7054
        %v7149 = vmul.f32 %v7133, %v7056
        %v7150 = vmul.f32 %v7134, %v7058
        %v7151 = vmul.f32 %v7135, %v7060
        %v7152 = vmul.f32 %v7136, %v7062
        %v7153 = vmul.f32 %v7137, %v7064
        %v7154 = vmul.f32 %v7138, %v7066
        %v7155 = vmul.f32 %v7139, %v7068
        %v7156 = vmul.f32 %v7140, %v7070
        %v7157 = vmul.f32 %v7141, %v7072
        %v7158 = vmul.f32 %v7142, %v7074
        %v7159 = vmul.f32 %v7143, %v7076
        %v7160 = vmul.f32 %v7144, %v7078
        %v7161 = vmul.f32 %v7145, %v7080
        %v7162 = vmul.f32 %v7146, %v7082
        %v7163 = vadd.f32 %v7147, -0.28449672
        %v7164 = vadd.f32 %v7148, -0.28449672
        %v7165 = vadd.f32 %v7149, -0.28449672
        %v7166 = vadd.f32 %v7150, -0.28449672
        %v7167 = vadd.f32 %v7151, -0.28449672
        %v7168 = vadd.f32 %v7152, -0.28449672
        %v7169 = vadd.f32 %v7153, -0.28449672
        %v7170 = vadd.f32 %v7154, -0.28449672
        %v7171 = vadd.f32 %v7155, -0.28449672
        %v7172 = vadd.f32 %v7156, -0.28449672
        %v7173 = vadd.f32 %v7157, -0.28449672
        %v7174 = vadd.f32 %v7158, -0.28449672
        %v7175 = vadd.f32 %v7159, -0.28449672
        %v7176 = vadd.f32 %v7160, -0.28449672
        %v7177 = vadd.f32 %v7161, -0.28449672
        %v7178 = vadd.f32 %v7162, -0.28449672
        %v7179 = vmul.f32 %v7163, %v7052
        %v7180 = vmul.f32 %v7164, %v7054
        %v7181 = vmul.f32 %v7165, %v7056
        %v7182 = vmul.f32 %v7166, %v7058
        %v7183 = vmul.f32 %v7167, %v7060
        %v7184 = vmul.f32 %v7168, %v7062
        %v7185 = vmul.f32 %v7169, %v7064
        %v7186 = vmul.f32 %v7170, %v7066
        %v7187 = vmul.f32 %v7171, %v7068
        %v7188 = vmul.f32 %v7172, %v7070
        %v7189 = vmul.f32 %v7173, %v7072
        %v7190 = vmul.f32 %v7174, %v7074
        %v7191 = vmul.f32 %v7175, %v7076
        %v7192 = vmul.f32 %v7176, %v7078
        %v7193 = vmul.f32 %v7177, %v7080
        %v7194 = vmul.f32 %v7178, %v7082
        %v7195 = vadd.f32 %v7179, 0.2548296
        %v7196 = vadd.f32 %v7180, 0.2548296
        %v7197 = vadd.f32 %v7181, 0.2548296
        %v7198 = vadd.f32 %v7182, 0.2548296
        %v7199 = vadd.f32 %v7183, 0.2548296
        %v7200 = vadd.f32 %v7184, 0.2548296
        %v7201 = vadd.f32 %v7185, 0.2548296
        %v7202 = vadd.f32 %v7186, 0.2548296
        %v7203 = vadd.f32 %v7187, 0.2548296
        %v7204 = vadd.f32 %v7188, 0.2548296
        %v7205 = vadd.f32 %v7189, 0.2548296
        %v7206 = vadd.f32 %v7190, 0.2548296
        %v7207 = vadd.f32 %v7191, 0.2548296
        %v7208 = vadd.f32 %v7192, 0.2548296
        %v7209 = vadd.f32 %v7193, 0.2548296
        %v7210 = vadd.f32 %v7194, 0.2548296
        %v7211 = vmul.f32 %v7195, %v7052
        %v7212 = vmul.f32 %v7196, %v7054
        %v7213 = vmul.f32 %v7197, %v7056
        %v7214 = vmul.f32 %v7198, %v7058
        %v7215 = vmul.f32 %v7199, %v7060
        %v7216 = vmul.f32 %v7200, %v7062
        %v7217 = vmul.f32 %v7201, %v7064
        %v7218 = vmul.f32 %v7202, %v7066
        %v7219 = vmul.f32 %v7203, %v7068
        %v7220 = vmul.f32 %v7204, %v7070
        %v7221 = vmul.f32 %v7205, %v7072
        %v7222 = vmul.f32 %v7206, %v7074
        %v7223 = vmul.f32 %v7207, %v7076
        %v7224 = vmul.f32 %v7208, %v7078
        %v7225 = vmul.f32 %v7209, %v7080
        %v7226 = vmul.f32 %v7210, %v7082
        %v7227 = vmul.f32 %v7003, %v7003
        %v7228 = vmul.f32 %v7004, %v7004
        %v7229 = vmul.f32 %v7005, %v7005
        %v7230 = vmul.f32 %v7006, %v7006
        %v7231 = vmul.f32 %v7007, %v7007
        %v7232 = vmul.f32 %v7008, %v7008
        %v7233 = vmul.f32 %v7009, %v7009
        %v7234 = vmul.f32 %v7010, %v7010
        %v7235 = vmul.f32 %v7011, %v7011
        %v7236 = vmul.f32 %v7012, %v7012
        %v7237 = vmul.f32 %v7013, %v7013
        %v7238 = vmul.f32 %v7014, %v7014
        %v7239 = vmul.f32 %v7015, %v7015
        %v7240 = vmul.f32 %v7016, %v7016
        %v7241 = vmul.f32 %v7017, %v7017
        %v7242 = vmul.f32 %v7018, %v7018
        %v7243 = vsub.f32 0.0, %v7227
        %v7244 = vsub.f32 0.0, %v7228
        %v7245 = vsub.f32 0.0, %v7229
        %v7246 = vsub.f32 0.0, %v7230
        %v7247 = vsub.f32 0.0, %v7231
        %v7248 = vsub.f32 0.0, %v7232
        %v7249 = vsub.f32 0.0, %v7233
        %v7250 = vsub.f32 0.0, %v7234
        %v7251 = vsub.f32 0.0, %v7235
        %v7252 = vsub.f32 0.0, %v7236
        %v7253 = vsub.f32 0.0, %v7237
        %v7254 = vsub.f32 0.0, %v7238
        %v7255 = vsub.f32 0.0, %v7239
        %v7256 = vsub.f32 0.0, %v7240
        %v7257 = vsub.f32 0.0, %v7241
        %v7258 = vsub.f32 0.0, %v7242
        %v7259 = vmul.f32 %v7243, 1.442695
        %v7260 = vpow.pop %v7259
        %v7261 = vmul.f32 %v7244, 1.442695
        %v7262 = vpow.pop %v7261
        %v7263 = vmul.f32 %v7245, 1.442695
        %v7264 = vpow.pop %v7263
        %v7265 = vmul.f32 %v7246, 1.442695
        %v7266 = vpow.pop %v7265
        %v7267 = vmul.f32 %v7247, 1.442695
        %v7268 = vpow.pop %v7267
        %v7269 = vmul.f32 %v7248, 1.442695
        %v7270 = vpow.pop %v7269
        %v7271 = vmul.f32 %v7249, 1.442695
        %v7272 = vpow.pop %v7271
        %v7273 = vmul.f32 %v7250, 1.442695
        %v7274 = vpow.pop %v7273
        %v7275 = vmul.f32 %v7251, 1.442695
        %v7276 = vpow.pop %v7275
        %v7277 = vmul.f32 %v7252, 1.442695
        %v7278 = vpow.pop %v7277
        %v7279 = vmul.f32 %v7253, 1.442695
        %v7280 = vpow.pop %v7279
        %v7281 = vmul.f32 %v7254, 1.442695
        %v7282 = vpow.pop %v7281
        %v7283 = vmul.f32 %v7255, 1.442695
        %v7284 = vpow.pop %v7283
        %v7285 = vmul.f32 %v7256, 1.442695
        %v7286 = vpow.pop %v7285
        %v7287 = vmul.f32 %v7257, 1.442695
        %v7288 = vpow.pop %v7287
        %v7289 = vmul.f32 %v7258, 1.442695
        %v7290 = vpow.pop %v7289
        %v7291 = vmul.f32 %v7211, %v7260
        %v7292 = vmul.f32 %v7212, %v7262
        %v7293 = vmul.f32 %v7213, %v7264
        %v7294 = vmul.f32 %v7214, %v7266
        %v7295 = vmul.f32 %v7215, %v7268
        %v7296 = vmul.f32 %v7216, %v7270
        %v7297 = vmul.f32 %v7217, %v7272
        %v7298 = vmul.f32 %v7218, %v7274
        %v7299 = vmul.f32 %v7219, %v7276
        %v7300 = vmul.f32 %v7220, %v7278
        %v7301 = vmul.f32 %v7221, %v7280
        %v7302 = vmul.f32 %v7222, %v7282
        %v7303 = vmul.f32 %v7223, %v7284
        %v7304 = vmul.f32 %v7224, %v7286
        %v7305 = vmul.f32 %v7225, %v7288
        %v7306 = vmul.f32 %v7226, %v7290
        %v7307 = vsub.f32 1.0, %v7291
        %v7308 = vsub.f32 1.0, %v7292
        %v7309 = vsub.f32 1.0, %v7293
        %v7310 = vsub.f32 1.0, %v7294
        %v7311 = vsub.f32 1.0, %v7295
        %v7312 = vsub.f32 1.0, %v7296
        %v7313 = vsub.f32 1.0, %v7297
        %v7314 = vsub.f32 1.0, %v7298
        %v7315 = vsub.f32 1.0, %v7299
        %v7316 = vsub.f32 1.0, %v7300
        %v7317 = vsub.f32 1.0, %v7301
        %v7318 = vsub.f32 1.0, %v7302
        %v7319 = vsub.f32 1.0, %v7303
        %v7320 = vsub.f32 1.0, %v7304
        %v7321 = vsub.f32 1.0, %v7305
        %v7322 = vsub.f32 1.0, %v7306
        %vm7323 = vcmp.ge.f32.partialorder %v6987, 0.0
        %vm7324 = vcmp.ge.f32.partialorder %v6988, 0.0
        %vm7325 = vcmp.ge.f32.partialorder %v6989, 0.0
        %vm7326 = vcmp.ge.f32.partialorder %v6990, 0.0
        %vm7327 = vcmp.ge.f32.partialorder %v6991, 0.0
        %vm7328 = vcmp.ge.f32.partialorder %v6992, 0.0
        %vm7329 = vcmp.ge.f32.partialorder %v6993, 0.0
        %vm7330 = vcmp.ge.f32.partialorder %v6994, 0.0
        %vm7331 = vcmp.ge.f32.partialorder %v6995, 0.0
        %vm7332 = vcmp.ge.f32.partialorder %v6996, 0.0
        %vm7333 = vcmp.ge.f32.partialorder %v6997, 0.0
        %vm7334 = vcmp.ge.f32.partialorder %v6998, 0.0
        %vm7335 = vcmp.ge.f32.partialorder %v6999, 0.0
        %vm7336 = vcmp.ge.f32.partialorder %v7000, 0.0
        %vm7337 = vcmp.ge.f32.partialorder %v7001, 0.0
        %vm7338 = vcmp.ge.f32.partialorder %v7002, 0.0
        %v7339 = vsub.f32 0.0, %v7307
        %v7340 = vsub.f32 0.0, %v7308
        %v7341 = vsub.f32 0.0, %v7309
        %v7342 = vsub.f32 0.0, %v7310
        %v7343 = vsub.f32 0.0, %v7311
        %v7344 = vsub.f32 0.0, %v7312
        %v7345 = vsub.f32 0.0, %v7313
        %v7346 = vsub.f32 0.0, %v7314
        %v7347 = vsub.f32 0.0, %v7315
        %v7348 = vsub.f32 0.0, %v7316
        %v7349 = vsub.f32 0.0, %v7317
        %v7350 = vsub.f32 0.0, %v7318
        %v7351 = vsub.f32 0.0, %v7319
        %v7352 = vsub.f32 0.0, %v7320
        %v7353 = vsub.f32 0.0, %v7321
        %v7354 = vsub.f32 0.0, %v7322
        %v7355 = vsel %vm7323, %v7307, %v7339
        %v7356 = vsel %vm7324, %v7308, %v7340
        %v7357 = vsel %vm7325, %v7309, %v7341
        %v7358 = vsel %vm7326, %v7310, %v7342
        %v7359 = vsel %vm7327, %v7311, %v7343
        %v7360 = vsel %vm7328, %v7312, %v7344
        %v7361 = vsel %vm7329, %v7313, %v7345
        %v7362 = vsel %vm7330, %v7314, %v7346
        %v7363 = vsel %vm7331, %v7315, %v7347
        %v7364 = vsel %vm7332, %v7316, %v7348
        %v7365 = vsel %vm7333, %v7317, %v7349
        %v7366 = vsel %vm7334, %v7318, %v7350
        %v7367 = vsel %vm7335, %v7319, %v7351
        %v7368 = vsel %vm7336, %v7320, %v7352
        %v7369 = vsel %vm7337, %v7321, %v7353
        %v7370 = vsel %vm7338, %v7322, %v7354
        %v7371 = vadd.f32 %v7355, 1.0
        %v7372 = vadd.f32 %v7356, 1.0
        %v7373 = vadd.f32 %v7357, 1.0
        %v7374 = vadd.f32 %v7358, 1.0
        %v7375 = vadd.f32 %v7359, 1.0
        %v7376 = vadd.f32 %v7360, 1.0
        %v7377 = vadd.f32 %v7361, 1.0
        %v7378 = vadd.f32 %v7362, 1.0
        %v7379 = vadd.f32 %v7363, 1.0
        %v7380 = vadd.f32 %v7364, 1.0
        %v7381 = vadd.f32 %v7365, 1.0
        %v7382 = vadd.f32 %v7366, 1.0
        %v7383 = vadd.f32 %v7367, 1.0
        %v7384 = vadd.f32 %v7368, 1.0
        %v7385 = vadd.f32 %v7369, 1.0
        %v7386 = vadd.f32 %v7370, 1.0
        %v7387 = vmul.f32 %v6971, %v7371
        %v7388 = vmul.f32 %v6972, %v7372
        %v7389 = vmul.f32 %v6973, %v7373
        %v7390 = vmul.f32 %v6974, %v7374
        %v7391 = vmul.f32 %v6975, %v7375
        %v7392 = vmul.f32 %v6976, %v7376
        %v7393 = vmul.f32 %v6977, %v7377
        %v7394 = vmul.f32 %v6978, %v7378
        %v7395 = vmul.f32 %v6979, %v7379
        %v7396 = vmul.f32 %v6980, %v7380
        %v7397 = vmul.f32 %v6981, %v7381
        %v7398 = vmul.f32 %v6982, %v7382
        %v7399 = vmul.f32 %v6983, %v7383
        %v7400 = vmul.f32 %v6984, %v7384
        %v7401 = vmul.f32 %v6985, %v7385
        %v7402 = vmul.f32 %v6986, %v7386
        %s7403 = sld [smem:[#allocation7]]
        %v7404 = vstv %s7403
        %v7405 = vmul.f32 %v7387, %v7404
        %v7406 = vmul.f32 %v7388, %v7404
        %v7407 = vmul.f32 %v7389, %v7404
        %v7408 = vmul.f32 %v7390, %v7404
        %s7409 = sld [smem:[#allocation7 + $0x1]]
        %v7410 = vstv %s7409
        %v7411 = vmul.f32 %v7391, %v7410
        %v7412 = vmul.f32 %v7392, %v7410
        %v7413 = vmul.f32 %v7393, %v7410
        %v7414 = vmul.f32 %v7394, %v7410
        %v7415 = vadd.f32 %v7405, %v7411
        %v7416 = vadd.f32 %v7406, %v7412
        %v7417 = vadd.f32 %v7407, %v7413
        %v7418 = vadd.f32 %v7408, %v7414
        %s7419 = sld [smem:[#allocation7 + $0x2]]
        %v7420 = vstv %s7419
        %v7421 = vmul.f32 %v7395, %v7420
        %v7422 = vmul.f32 %v7396, %v7420
        %v7423 = vmul.f32 %v7397, %v7420
        %v7424 = vmul.f32 %v7398, %v7420
        %v7425 = vadd.f32 %v7415, %v7421
        %v7426 = vadd.f32 %v7416, %v7422
        %v7427 = vadd.f32 %v7417, %v7423
        %v7428 = vadd.f32 %v7418, %v7424
        %s7429 = sld [smem:[#allocation7 + $0x3]]
        %v7430 = vstv %s7429
        %v7431 = vmul.f32 %v7399, %v7430
        %v7432 = vmul.f32 %v7400, %v7430
        %v7433 = vmul.f32 %v7401, %v7430
        %v7434 = vmul.f32 %v7402, %v7430
        %v7435 = vadd.f32 %v7425, %v7431
        %v7436 = vadd.f32 %v7426, %v7432
        %v7437 = vadd.f32 %v7427, %v7433
        %v7438 = vadd.f32 %v7428, %v7434
        %s7439 = sld [smem:[#allocation8]]
        %v7440 = vstv %s7439
        %v7441 = vadd.f32 %v7435, %v7440
        %v7442 = vadd.f32 %v7436, %v7440
        %v7443 = vadd.f32 %v7437, %v7440
        %v7444 = vadd.f32 %v7438, %v7440
        %s7445 = sld [smem:[#allocation7 + $0x4]]
        %v7446 = vstv %s7445
        %v7447 = vmul.f32 %v7387, %v7446
        %v7448 = vmul.f32 %v7388, %v7446
        %v7449 = vmul.f32 %v7389, %v7446
        %v7450 = vmul.f32 %v7390, %v7446
        %s7451 = sld [smem:[#allocation7 + $0x5]]
        %v7452 = vstv %s7451
        %v7453 = vmul.f32 %v7391, %v7452
        %v7454 = vmul.f32 %v7392, %v7452
        %v7455 = vmul.f32 %v7393, %v7452
        %v7456 = vmul.f32 %v7394, %v7452
        %v7457 = vadd.f32 %v7447, %v7453
        %v7458 = vadd.f32 %v7448, %v7454
        %v7459 = vadd.f32 %v7449, %v7455
        %v7460 = vadd.f32 %v7450, %v7456
        %s7461 = sld [smem:[#allocation7 + $0x6]]
        %v7462 = vstv %s7461
        %v7463 = vmul.f32 %v7395, %v7462
        %v7464 = vmul.f32 %v7396, %v7462
        %v7465 = vmul.f32 %v7397, %v7462
        %v7466 = vmul.f32 %v7398, %v7462
        %v7467 = vadd.f32 %v7457, %v7463
        %v7468 = vadd.f32 %v7458, %v7464
        %v7469 = vadd.f32 %v7459, %v7465
        %v7470 = vadd.f32 %v7460, %v7466
        %s7471 = sld [smem:[#allocation7 + $0x7]]
        %v7472 = vstv %s7471
        %v7473 = vmul.f32 %v7399, %v7472
        %v7474 = vmul.f32 %v7400, %v7472
        %v7475 = vmul.f32 %v7401, %v7472
        %v7476 = vmul.f32 %v7402, %v7472
        %v7477 = vadd.f32 %v7467, %v7473
        %v7478 = vadd.f32 %v7468, %v7474
        %v7479 = vadd.f32 %v7469, %v7475
        %v7480 = vadd.f32 %v7470, %v7476
        %s7481 = sld [smem:[#allocation8 + $0x1]]
        %v7482 = vstv %s7481
        %v7483 = vadd.f32 %v7477, %v7482
        %v7484 = vadd.f32 %v7478, %v7482
        %v7485 = vadd.f32 %v7479, %v7482
        %v7486 = vadd.f32 %v7480, %v7482
        %s7487 = sld [smem:[#allocation7 + $0x8]]
        %v7488 = vstv %s7487
        %v7489 = vmul.f32 %v7387, %v7488
        %v7490 = vmul.f32 %v7388, %v7488
        %v7491 = vmul.f32 %v7389, %v7488
        %v7492 = vmul.f32 %v7390, %v7488
        %s7493 = sld [smem:[#allocation7 + $0x9]]
        %v7494 = vstv %s7493
        %v7495 = vmul.f32 %v7391, %v7494
        %v7496 = vmul.f32 %v7392, %v7494
        %v7497 = vmul.f32 %v7393, %v7494
        %v7498 = vmul.f32 %v7394, %v7494
        %v7499 = vadd.f32 %v7489, %v7495
        %v7500 = vadd.f32 %v7490, %v7496
        %v7501 = vadd.f32 %v7491, %v7497
        %v7502 = vadd.f32 %v7492, %v7498
        %s7503 = sld [smem:[#allocation7 + $0xa]]
        %v7504 = vstv %s7503
        %v7505 = vmul.f32 %v7395, %v7504
        %v7506 = vmul.f32 %v7396, %v7504
        %v7507 = vmul.f32 %v7397, %v7504
        %v7508 = vmul.f32 %v7398, %v7504
        %v7509 = vadd.f32 %v7499, %v7505
        %v7510 = vadd.f32 %v7500, %v7506
        %v7511 = vadd.f32 %v7501, %v7507
        %v7512 = vadd.f32 %v7502, %v7508
        %s7513 = sld [smem:[#allocation7 + $0xb]]
        %v7514 = vstv %s7513
        %v7515 = vmul.f32 %v7399, %v7514
        %v7516 = vmul.f32 %v7400, %v7514
        %v7517 = vmul.f32 %v7401, %v7514
        %v7518 = vmul.f32 %v7402, %v7514
        %v7519 = vadd.f32 %v7509, %v7515
        %v7520 = vadd.f32 %v7510, %v7516
        %v7521 = vadd.f32 %v7511, %v7517
        %v7522 = vadd.f32 %v7512, %v7518
        %s7523 = sld [smem:[#allocation8 + $0x2]]
        %v7524 = vstv %s7523
        %v7525 = vadd.f32 %v7519, %v7524
        %v7526 = vadd.f32 %v7520, %v7524
        %v7527 = vadd.f32 %v7521, %v7524
        %v7528 = vadd.f32 %v7522, %v7524
        %s7529 = sld [smem:[#allocation7 + $0xc]]
        %v7530 = vstv %s7529
        %v7531 = vmul.f32 %v7387, %v7530
        %v7532 = vmul.f32 %v7388, %v7530
        %v7533 = vmul.f32 %v7389, %v7530
        %v7534 = vmul.f32 %v7390, %v7530
        %s7535 = sld [smem:[#allocation7 + $0xd]]
        %v7536 = vstv %s7535
        %v7537 = vmul.f32 %v7391, %v7536
        %v7538 = vmul.f32 %v7392, %v7536
        %v7539 = vmul.f32 %v7393, %v7536
        %v7540 = vmul.f32 %v7394, %v7536
        %v7541 = vadd.f32 %v7531, %v7537
        %v7542 = vadd.f32 %v7532, %v7538
        %v7543 = vadd.f32 %v7533, %v7539
        %v7544 = vadd.f32 %v7534, %v7540
        %s7545 = sld [smem:[#allocation7 + $0xe]]
        %v7546 = vstv %s7545
        %v7547 = vmul.f32 %v7395, %v7546
        %v7548 = vmul.f32 %v7396, %v7546
        %v7549 = vmul.f32 %v7397, %v7546
        %v7550 = vmul.f32 %v7398, %v7546
        %v7551 = vadd.f32 %v7541, %v7547
        %v7552 = vadd.f32 %v7542, %v7548
        %v7553 = vadd.f32 %v7543, %v7549
        %v7554 = vadd.f32 %v7544, %v7550
        %s7555 = sld [smem:[#allocation7 + $0xf]]
        %v7556 = vstv %s7555
        %v7557 = vmul.f32 %v7399, %v7556
        %v7558 = vmul.f32 %v7400, %v7556
        %v7559 = vmul.f32 %v7401, %v7556
        %v7560 = vmul.f32 %v7402, %v7556
        %v7561 = vadd.f32 %v7551, %v7557
        %v7562 = vadd.f32 %v7552, %v7558
        %v7563 = vadd.f32 %v7553, %v7559
        %v7564 = vadd.f32 %v7554, %v7560
        %s7565 = sld [smem:[#allocation8 + $0x3]]
        %v7566 = vstv %s7565
        %v7567 = vadd.f32 %v7561, %v7566
        %v7568 = vadd.f32 %v7562, %v7566
        %v7569 = vadd.f32 %v7563, %v7566
        %v7570 = vadd.f32 %v7564, %v7566
        %s7571 = sld [smem:[#allocation7 + $0x10]]
        %v7572 = vstv %s7571
        %v7573 = vmul.f32 %v7387, %v7572
        %v7574 = vmul.f32 %v7388, %v7572
        %v7575 = vmul.f32 %v7389, %v7572
        %v7576 = vmul.f32 %v7390, %v7572
        %s7577 = sld [smem:[#allocation7 + $0x11]]
        %v7578 = vstv %s7577
        %v7579 = vmul.f32 %v7391, %v7578
        %v7580 = vmul.f32 %v7392, %v7578
        %v7581 = vmul.f32 %v7393, %v7578
        %v7582 = vmul.f32 %v7394, %v7578
        %v7583 = vadd.f32 %v7573, %v7579
        %v7584 = vadd.f32 %v7574, %v7580
        %v7585 = vadd.f32 %v7575, %v7581
        %v7586 = vadd.f32 %v7576, %v7582
        %s7587 = sld [smem:[#allocation7 + $0x12]]
        %v7588 = vstv %s7587
        %v7589 = vmul.f32 %v7395, %v7588
        %v7590 = vmul.f32 %v7396, %v7588
        %v7591 = vmul.f32 %v7397, %v7588
        %v7592 = vmul.f32 %v7398, %v7588
        %v7593 = vadd.f32 %v7583, %v7589
        %v7594 = vadd.f32 %v7584, %v7590
        %v7595 = vadd.f32 %v7585, %v7591
        %v7596 = vadd.f32 %v7586, %v7592
        %s7597 = sld [smem:[#allocation7 + $0x13]]
        %v7598 = vstv %s7597
        %v7599 = vmul.f32 %v7399, %v7598
        %v7600 = vmul.f32 %v7400, %v7598
        %v7601 = vmul.f32 %v7401, %v7598
        %v7602 = vmul.f32 %v7402, %v7598
        %v7603 = vadd.f32 %v7593, %v7599
        %v7604 = vadd.f32 %v7594, %v7600
        %v7605 = vadd.f32 %v7595, %v7601
        %v7606 = vadd.f32 %v7596, %v7602
        %s7607 = sld [smem:[#allocation8 + $0x4]]
        %v7608 = vstv %s7607
        %v7609 = vadd.f32 %v7603, %v7608
        %v7610 = vadd.f32 %v7604, %v7608
        %v7611 = vadd.f32 %v7605, %v7608
        %v7612 = vadd.f32 %v7606, %v7608
        %s7613 = sld [smem:[#allocation7 + $0x14]]
        %v7614 = vstv %s7613
        %v7615 = vmul.f32 %v7387, %v7614
        %v7616 = vmul.f32 %v7388, %v7614
        %v7617 = vmul.f32 %v7389, %v7614
        %v7618 = vmul.f32 %v7390, %v7614
        %s7619 = sld [smem:[#allocation7 + $0x15]]
        %v7620 = vstv %s7619
        %v7621 = vmul.f32 %v7391, %v7620
        %v7622 = vmul.f32 %v7392, %v7620
        %v7623 = vmul.f32 %v7393, %v7620
        %v7624 = vmul.f32 %v7394, %v7620
        %v7625 = vadd.f32 %v7615, %v7621
        %v7626 = vadd.f32 %v7616, %v7622
        %v7627 = vadd.f32 %v7617, %v7623
        %v7628 = vadd.f32 %v7618, %v7624
        %s7629 = sld [smem:[#allocation7 + $0x16]]
        %v7630 = vstv %s7629
        %v7631 = vmul.f32 %v7395, %v7630
        %v7632 = vmul.f32 %v7396, %v7630
        %v7633 = vmul.f32 %v7397, %v7630
        %v7634 = vmul.f32 %v7398, %v7630
        %v7635 = vadd.f32 %v7625, %v7631
        %v7636 = vadd.f32 %v7626, %v7632
        %v7637 = vadd.f32 %v7627, %v7633
        %v7638 = vadd.f32 %v7628, %v7634
        %s7639 = sld [smem:[#allocation7 + $0x17]]
        %v7640 = vstv %s7639
        %v7641 = vmul.f32 %v7399, %v7640
        %v7642 = vmul.f32 %v7400, %v7640
        %v7643 = vmul.f32 %v7401, %v7640
        %v7644 = vmul.f32 %v7402, %v7640
        %v7645 = vadd.f32 %v7635, %v7641
        %v7646 = vadd.f32 %v7636, %v7642
        %v7647 = vadd.f32 %v7637, %v7643
        %v7648 = vadd.f32 %v7638, %v7644
        %s7649 = sld [smem:[#allocation8 + $0x5]]
        %v7650 = vstv %s7649
        %v7651 = vadd.f32 %v7645, %v7650
        %v7652 = vadd.f32 %v7646, %v7650
        %v7653 = vadd.f32 %v7647, %v7650
        %v7654 = vadd.f32 %v7648, %v7650
        %s7655 = sld [smem:[#allocation7 + $0x18]]
        %v7656 = vstv %s7655
        %v7657 = vmul.f32 %v7387, %v7656
        %v7658 = vmul.f32 %v7388, %v7656
        %v7659 = vmul.f32 %v7389, %v7656
        %v7660 = vmul.f32 %v7390, %v7656
        %s7661 = sld [smem:[#allocation7 + $0x19]]
        %v7662 = vstv %s7661
        %v7663 = vmul.f32 %v7391, %v7662
        %v7664 = vmul.f32 %v7392, %v7662
        %v7665 = vmul.f32 %v7393, %v7662
        %v7666 = vmul.f32 %v7394, %v7662
        %v7667 = vadd.f32 %v7657, %v7663
        %v7668 = vadd.f32 %v7658, %v7664
        %v7669 = vadd.f32 %v7659, %v7665
        %v7670 = vadd.f32 %v7660, %v7666
        %s7671 = sld [smem:[#allocation7 + $0x1a]]
        %v7672 = vstv %s7671
        %v7673 = vmul.f32 %v7395, %v7672
        %v7674 = vmul.f32 %v7396, %v7672
        %v7675 = vmul.f32 %v7397, %v7672
        %v7676 = vmul.f32 %v7398, %v7672
        %v7677 = vadd.f32 %v7667, %v7673
        %v7678 = vadd.f32 %v7668, %v7674
        %v7679 = vadd.f32 %v7669, %v7675
        %v7680 = vadd.f32 %v7670, %v7676
        %s7681 = sld [smem:[#allocation7 + $0x1b]]
        %v7682 = vstv %s7681
        %v7683 = vmul.f32 %v7399, %v7682
        %v7684 = vmul.f32 %v7400, %v7682
        %v7685 = vmul.f32 %v7401, %v7682
        %v7686 = vmul.f32 %v7402, %v7682
        %v7687 = vadd.f32 %v7677, %v7683
        %v7688 = vadd.f32 %v7678, %v7684
        %v7689 = vadd.f32 %v7679, %v7685
        %v7690 = vadd.f32 %v7680, %v7686
        %s7691 = sld [smem:[#allocation8 + $0x6]]
        %v7692 = vstv %s7691
        %v7693 = vadd.f32 %v7687, %v7692
        %v7694 = vadd.f32 %v7688, %v7692
        %v7695 = vadd.f32 %v7689, %v7692
        %v7696 = vadd.f32 %v7690, %v7692
        %s7697 = sld [smem:[#allocation7 + $0x1c]]
        %v7698 = vstv %s7697
        %v7699 = vmul.f32 %v7387, %v7698
        %v7700 = vmul.f32 %v7388, %v7698
        %v7701 = vmul.f32 %v7389, %v7698
        %v7702 = vmul.f32 %v7390, %v7698
        %s7703 = sld [smem:[#allocation7 + $0x1d]]
        %v7704 = vstv %s7703
        %v7705 = vmul.f32 %v7391, %v7704
        %v7706 = vmul.f32 %v7392, %v7704
        %v7707 = vmul.f32 %v7393, %v7704
        %v7708 = vmul.f32 %v7394, %v7704
        %v7709 = vadd.f32 %v7699, %v7705
        %v7710 = vadd.f32 %v7700, %v7706
        %v7711 = vadd.f32 %v7701, %v7707
        %v7712 = vadd.f32 %v7702, %v7708
        %s7713 = sld [smem:[#allocation7 + $0x1e]]
        %v7714 = vstv %s7713
        %v7715 = vmul.f32 %v7395, %v7714
        %v7716 = vmul.f32 %v7396, %v7714
        %v7717 = vmul.f32 %v7397, %v7714
        %v7718 = vmul.f32 %v7398, %v7714
        %v7719 = vadd.f32 %v7709, %v7715
        %v7720 = vadd.f32 %v7710, %v7716
        %v7721 = vadd.f32 %v7711, %v7717
        %v7722 = vadd.f32 %v7712, %v7718
        %s7723 = sld [smem:[#allocation7 + $0x1f]]
        %v7724 = vstv %s7723
        %v7725 = vmul.f32 %v7399, %v7724
        %v7726 = vmul.f32 %v7400, %v7724
        %v7727 = vmul.f32 %v7401, %v7724
        %v7728 = vmul.f32 %v7402, %v7724
        %v7729 = vadd.f32 %v7719, %v7725
        %v7730 = vadd.f32 %v7720, %v7726
        %v7731 = vadd.f32 %v7721, %v7727
        %v7732 = vadd.f32 %v7722, %v7728
        %s7733 = sld [smem:[#allocation8 + $0x7]]
        %v7734 = vstv %s7733
        %v7735 = vadd.f32 %v7729, %v7734
        %v7736 = vadd.f32 %v7730, %v7734
        %v7737 = vadd.f32 %v7731, %v7734
        %v7738 = vadd.f32 %v7732, %v7734
        %v7739 = vadd.f32 %v7441, %v7442
        %v7740 = vadd.f32 %v7739, %v7443
        %v7741 = vadd.f32 %v7740, %v7444
        %v7742 = vadd.f32 %v7741, %v7483
        %v7743 = vadd.f32 %v7742, %v7484
        %v7744 = vadd.f32 %v7743, %v7485
        %v7745 = vadd.f32 %v7744, %v7486
        %v7746 = vadd.f32 %v7745, %v7525
        %v7747 = vadd.f32 %v7746, %v7526
        %v7748 = vadd.f32 %v7747, %v7527
        %v7749 = vadd.f32 %v7748, %v7528
        %v7750 = vadd.f32 %v7749, %v7567
        %v7751 = vadd.f32 %v7750, %v7568
        %v7752 = vadd.f32 %v7751, %v7569
        %v7753 = vadd.f32 %v7752, %v7570
        %v7754 = vadd.f32 %v7753, %v7609
        %v7755 = vadd.f32 %v7754, %v7610
        %v7756 = vadd.f32 %v7755, %v7611
        %v7757 = vadd.f32 %v7756, %v7612
        %v7758 = vadd.f32 %v7757, %v7651
        %v7759 = vadd.f32 %v7758, %v7652
        %v7760 = vadd.f32 %v7759, %v7653
        %v7761 = vadd.f32 %v7760, %v7654
        %v7762 = vadd.f32 %v7761, %v7693
        %v7763 = vadd.f32 %v7762, %v7694
        %v7764 = vadd.f32 %v7763, %v7695
        %v7765 = vadd.f32 %v7764, %v7696
        %v7766 = vadd.f32 %v7765, %v7735
        %v7767 = vadd.f32 %v7766, %v7736
        %v7768 = vadd.f32 %v7767, %v7737
        %v7769 = vadd.f32 %v7768, %v7738
        %7770 = vadd.xlane.f32.xlu0 %v7769
        %v7771 = vpop.xlane.xlu0 %7770
        %v7772 = vrot.slane %v7771, 4
        %v7773 = vadd.f32 %v7771, %v7772
        %v7774 = vrot.slane %v7773, 2
        %v7775 = vadd.f32 %v7773, %v7774
        %v7776 = vrot.slane %v7775, 1
        %v7777 = vadd.f32 %v7775, %v7776
        %s7778 = vtos %v7777
        %s7779 = smul.f32 %s7778, 3.0517578e-05
        %v7780 = vmul.f32 %v7441, %v7441
        %v7781 = vmul.f32 %v7442, %v7442
        %v7782 = vmul.f32 %v7443, %v7443
        %v7783 = vmul.f32 %v7444, %v7444
        %v7784 = vmul.f32 %v7483, %v7483
        %v7785 = vmul.f32 %v7484, %v7484
        %v7786 = vmul.f32 %v7485, %v7485
        %v7787 = vmul.f32 %v7486, %v7486
        %v7788 = vmul.f32 %v7525, %v7525
        %v7789 = vmul.f32 %v7526, %v7526
        %v7790 = vmul.f32 %v7527, %v7527
        %v7791 = vmul.f32 %v7528, %v7528
        %v7792 = vmul.f32 %v7567, %v7567
        %v7793 = vmul.f32 %v7568, %v7568
        %v7794 = vmul.f32 %v7569, %v7569
        %v7795 = vmul.f32 %v7570, %v7570
        %v7796 = vmul.f32 %v7609, %v7609
        %v7797 = vmul.f32 %v7610, %v7610
        %v7798 = vmul.f32 %v7611, %v7611
        %v7799 = vmul.f32 %v7612, %v7612
        %v7800 = vmul.f32 %v7651, %v7651
        %v7801 = vmul.f32 %v7652, %v7652
        %v7802 = vmul.f32 %v7653, %v7653
        %v7803 = vmul.f32 %v7654, %v7654
        %v7804 = vmul.f32 %v7693, %v7693
        %v7805 = vmul.f32 %v7694, %v7694
        %v7806 = vmul.f32 %v7695, %v7695
        %v7807 = vmul.f32 %v7696, %v7696
        %v7808 = vmul.f32 %v7735, %v7735
        %v7809 = vmul.f32 %v7736, %v7736
        %v7810 = vmul.f32 %v7737, %v7737
        %v7811 = vmul.f32 %v7738, %v7738
        %v7812 = vadd.f32 %v7780, %v7781
        %v7813 = vadd.f32 %v7812, %v7782
        %v7814 = vadd.f32 %v7813, %v7783
        %v7815 = vadd.f32 %v7814, %v7784
        %v7816 = vadd.f32 %v7815, %v7785
        %v7817 = vadd.f32 %v7816, %v7786
        %v7818 = vadd.f32 %v7817, %v7787
        %v7819 = vadd.f32 %v7818, %v7788
        %v7820 = vadd.f32 %v7819, %v7789
        %v7821 = vadd.f32 %v7820, %v7790
        %v7822 = vadd.f32 %v7821, %v7791
        %v7823 = vadd.f32 %v7822, %v7792
        %v7824 = vadd.f32 %v7823, %v7793
        %v7825 = vadd.f32 %v7824, %v7794
        %v7826 = vadd.f32 %v7825, %v7795
        %v7827 = vadd.f32 %v7826, %v7796
        %v7828 = vadd.f32 %v7827, %v7797
        %v7829 = vadd.f32 %v7828, %v7798
        %v7830 = vadd.f32 %v7829, %v7799
        %v7831 = vadd.f32 %v7830, %v7800
        %v7832 = vadd.f32 %v7831, %v7801
        %v7833 = vadd.f32 %v7832, %v7802
        %v7834 = vadd.f32 %v7833, %v7803
        %v7835 = vadd.f32 %v7834, %v7804
        %v7836 = vadd.f32 %v7835, %v7805
        %v7837 = vadd.f32 %v7836, %v7806
        %v7838 = vadd.f32 %v7837, %v7807
        %v7839 = vadd.f32 %v7838, %v7808
        %v7840 = vadd.f32 %v7839, %v7809
        %v7841 = vadd.f32 %v7840, %v7810
        %v7842 = vadd.f32 %v7841, %v7811
        %7843 = vadd.xlane.f32.xlu0 %v7842
        %v7844 = vpop.xlane.xlu0 %7843
        %v7845 = vrot.slane %v7844, 4
        %v7846 = vadd.f32 %v7844, %v7845
        %v7847 = vrot.slane %v7846, 2
        %v7848 = vadd.f32 %v7846, %v7847
        %v7849 = vrot.slane %v7848, 1
        %v7850 = vadd.f32 %v7848, %v7849
        %s7851 = vtos %v7850
        %s7852 = smul.f32 %s7851, 3.0517578e-05
        %s7853 = smul.f32 %s7779, %s7779
        %s7854 = ssub.f32 %s7852, %s7853
        %v7855 = vstv %s7779
        %v7856 = vsub.f32 %v7441, %v7855
        %v7857 = vsub.f32 %v7442, %v7855
        %v7858 = vsub.f32 %v7443, %v7855
        %v7859 = vsub.f32 %v7444, %v7855
        %v7860 = vsub.f32 %v7483, %v7855
        %v7861 = vsub.f32 %v7484, %v7855
        %v7862 = vsub.f32 %v7485, %v7855
        %v7863 = vsub.f32 %v7486, %v7855
        %v7864 = vsub.f32 %v7525, %v7855
        %v7865 = vsub.f32 %v7526, %v7855
        %v7866 = vsub.f32 %v7527, %v7855
        %v7867 = vsub.f32 %v7528, %v7855
        %v7868 = vsub.f32 %v7567, %v7855
        %v7869 = vsub.f32 %v7568, %v7855
        %v7870 = vsub.f32 %v7569, %v7855
        %v7871 = vsub.f32 %v7570, %v7855
        %v7872 = vsub.f32 %v7609, %v7855
        %v7873 = vsub.f32 %v7610, %v7855
        %v7874 = vsub.f32 %v7611, %v7855
        %v7875 = vsub.f32 %v7612, %v7855
        %v7876 = vsub.f32 %v7651, %v7855
        %v7877 = vsub.f32 %v7652, %v7855
        %v7878 = vsub.f32 %v7653, %v7855
        %v7879 = vsub.f32 %v7654, %v7855
        %v7880 = vsub.f32 %v7693, %v7855
        %v7881 = vsub.f32 %v7694, %v7855
        %v7882 = vsub.f32 %v7695, %v7855
        %v7883 = vsub.f32 %v7696, %v7855
        %v7884 = vsub.f32 %v7735, %v7855
        %v7885 = vsub.f32 %v7736, %v7855
        %v7886 = vsub.f32 %v7737, %v7855
        %v7887 = vsub.f32 %v7738, %v7855
        %s7888 = sadd.f32 %s7854, 1e-05
        %v7889 = vstv %s7888
        %v7890 = vrsqrt.pop %v7889
        %s7891 = vtos %v7890
        %v7892 = vstv %s7891
        %v7893 = vmul.f32 %v7856, %v7892
        %v7894 = vmul.f32 %v7857, %v7892
        %v7895 = vmul.f32 %v7858, %v7892
        %v7896 = vmul.f32 %v7859, %v7892
        %v7897 = vmul.f32 %v7860, %v7892
        %v7898 = vmul.f32 %v7861, %v7892
        %v7899 = vmul.f32 %v7862, %v7892
        %v7900 = vmul.f32 %v7863, %v7892
        %v7901 = vmul.f32 %v7864, %v7892
        %v7902 = vmul.f32 %v7865, %v7892
        %v7903 = vmul.f32 %v7866, %v7892
        %v7904 = vmul.f32 %v7867, %v7892
        %v7905 = vmul.f32 %v7868, %v7892
        %v7906 = vmul.f32 %v7869, %v7892
        %v7907 = vmul.f32 %v7870, %v7892
        %v7908 = vmul.f32 %v7871, %v7892
        %v7909 = vmul.f32 %v7872, %v7892
        %v7910 = vmul.f32 %v7873, %v7892
        %v7911 = vmul.f32 %v7874, %v7892
        %v7912 = vmul.f32 %v7875, %v7892
        %v7913 = vmul.f32 %v7876, %v7892
        %v7914 = vmul.f32 %v7877, %v7892
        %v7915 = vmul.f32 %v7878, %v7892
        %v7916 = vmul.f32 %v7879, %v7892
        %v7917 = vmul.f32 %v7880, %v7892
        %v7918 = vmul.f32 %v7881, %v7892
        %v7919 = vmul.f32 %v7882, %v7892
        %v7920 = vmul.f32 %v7883, %v7892
        %v7921 = vmul.f32 %v7884, %v7892
        %v7922 = vmul.f32 %v7885, %v7892
        %v7923 = vmul.f32 %v7886, %v7892
        %v7924 = vmul.f32 %v7887, %v7892
        %v7925 = vld [vmem:[%s3] sm:$0xff]
        %v7926 = vld [vmem:[%s3 + $0x8] sm:$0xff]
        %v7927 = vld [vmem:[%s3 + $0x10] sm:$0xff]
        %v7928 = vld [vmem:[%s3 + $0x18] sm:$0xff]
        %v7929 = vld [vmem:[%s3 + $0x20] sm:$0xff]
        %v7930 = vld [vmem:[%s3 + $0x28] sm:$0xff]
        %v7931 = vld [vmem:[%s3 + $0x30] sm:$0xff]
        %v7932 = vld [vmem:[%s3 + $0x38] sm:$0xff]
        %v7933 = vld [vmem:[%s3 + $0x40] sm:$0xff]
        %v7934 = vld [vmem:[%s3 + $0x48] sm:$0xff]
        %v7935 = vld [vmem:[%s3 + $0x50] sm:$0xff]
        %v7936 = vld [vmem:[%s3 + $0x58] sm:$0xff]
        %v7937 = vld [vmem:[%s3 + $0x60] sm:$0xff]
        %v7938 = vld [vmem:[%s3 + $0x68] sm:$0xff]
        %v7939 = vld [vmem:[%s3 + $0x70] sm:$0xff]
        %v7940 = vld [vmem:[%s3 + $0x78] sm:$0xff]
        %v7941 = vld [vmem:[%s3 + $0x80] sm:$0xff]
        %v7942 = vld [vmem:[%s3 + $0x88] sm:$0xff]
        %v7943 = vld [vmem:[%s3 + $0x90] sm:$0xff]
        %v7944 = vld [vmem:[%s3 + $0x98] sm:$0xff]
        %v7945 = vld [vmem:[%s3 + $0xa0] sm:$0xff]
        %v7946 = vld [vmem:[%s3 + $0xa8] sm:$0xff]
        %v7947 = vld [vmem:[%s3 + $0xb0] sm:$0xff]
        %v7948 = vld [vmem:[%s3 + $0xb8] sm:$0xff]
        %v7949 = vld [vmem:[%s3 + $0xc0] sm:$0xff]
        %v7950 = vld [vmem:[%s3 + $0xc8] sm:$0xff]
        %v7951 = vld [vmem:[%s3 + $0xd0] sm:$0xff]
        %v7952 = vld [vmem:[%s3 + $0xd8] sm:$0xff]
        %v7953 = vld [vmem:[%s3 + $0xe0] sm:$0xff]
        %v7954 = vld [vmem:[%s3 + $0xe8] sm:$0xff]
        %v7955 = vld [vmem:[%s3 + $0xf0] sm:$0xff]
        %v7956 = vld [vmem:[%s3 + $0xf8] sm:$0xff]
        %v7957 = vmul.f32 %v7893, %v7925
        %v7958 = vmul.f32 %v7894, %v7926
        %v7959 = vmul.f32 %v7895, %v7927
        %v7960 = vmul.f32 %v7896, %v7928
        %v7961 = vmul.f32 %v7897, %v7929
        %v7962 = vmul.f32 %v7898, %v7930
        %v7963 = vmul.f32 %v7899, %v7931
        %v7964 = vmul.f32 %v7900, %v7932
        %v7965 = vmul.f32 %v7901, %v7933
        %v7966 = vmul.f32 %v7902, %v7934
        %v7967 = vmul.f32 %v7903, %v7935
        %v7968 = vmul.f32 %v7904, %v7936
        %v7969 = vmul.f32 %v7905, %v7937
        %v7970 = vmul.f32 %v7906, %v7938
        %v7971 = vmul.f32 %v7907, %v7939
        %v7972 = vmul.f32 %v7908, %v7940
        %v7973 = vmul.f32 %v7909, %v7941
        %v7974 = vmul.f32 %v7910, %v7942
        %v7975 = vmul.f32 %v7911, %v7943
        %v7976 = vmul.f32 %v7912, %v7944
        %v7977 = vmul.f32 %v7913, %v7945
        %v7978 = vmul.f32 %v7914, %v7946
        %v7979 = vmul.f32 %v7915, %v7947
        %v7980 = vmul.f32 %v7916, %v7948
        %v7981 = vmul.f32 %v7917, %v7949
        %v7982 = vmul.f32 %v7918, %v7950
        %v7983 = vmul.f32 %v7919, %v7951
        %v7984 = vmul.f32 %v7920, %v7952
        %v7985 = vmul.f32 %v7921, %v7953
        %v7986 = vmul.f32 %v7922, %v7954
        %v7987 = vmul.f32 %v7923, %v7955
        %v7988 = vmul.f32 %v7924, %v7956
        %v7989 = vld [vmem:[%s4] sm:$0xff]
        %v7990 = vld [vmem:[%s4 + $0x8] sm:$0xff]
        %v7991 = vld [vmem:[%s4 + $0x10] sm:$0xff]
        %v7992 = vld [vmem:[%s4 + $0x18] sm:$0xff]
        %v7993 = vld [vmem:[%s4 + $0x20] sm:$0xff]
        %v7994 = vld [vmem:[%s4 + $0x28] sm:$0xff]
        %v7995 = vld [vmem:[%s4 + $0x30] sm:$0xff]
        %v7996 = vld [vmem:[%s4 + $0x38] sm:$0xff]
        %v7997 = vld [vmem:[%s4 + $0x40] sm:$0xff]
        %v7998 = vld [vmem:[%s4 + $0x48] sm:$0xff]
        %v7999 = vld [vmem:[%s4 + $0x50] sm:$0xff]
        %v8000 = vld [vmem:[%s4 + $0x58] sm:$0xff]
        %v8001 = vld [vmem:[%s4 + $0x60] sm:$0xff]
        %v8002 = vld [vmem:[%s4 + $0x68] sm:$0xff]
        %v8003 = vld [vmem:[%s4 + $0x70] sm:$0xff]
        %v8004 = vld [vmem:[%s4 + $0x78] sm:$0xff]
        %v8005 = vld [vmem:[%s4 + $0x80] sm:$0xff]
        %v8006 = vld [vmem:[%s4 + $0x88] sm:$0xff]
        %v8007 = vld [vmem:[%s4 + $0x90] sm:$0xff]
        %v8008 = vld [vmem:[%s4 + $0x98] sm:$0xff]
        %v8009 = vld [vmem:[%s4 + $0xa0] sm:$0xff]
        %v8010 = vld [vmem:[%s4 + $0xa8] sm:$0xff]
        %v8011 = vld [vmem:[%s4 + $0xb0] sm:$0xff]
        %v8012 = vld [vmem:[%s4 + $0xb8] sm:$0xff]
        %v8013 = vld [vmem:[%s4 + $0xc0] sm:$0xff]
        %v8014 = vld [vmem:[%s4 + $0xc8] sm:$0xff]
        %v8015 = vld [vmem:[%s4 + $0xd0] sm:$0xff]
        %v8016 = vld [vmem:[%s4 + $0xd8] sm:$0xff]
        %v8017 = vld [vmem:[%s4 + $0xe0] sm:$0xff]
        %v8018 = vld [vmem:[%s4 + $0xe8] sm:$0xff]
        %v8019 = vld [vmem:[%s4 + $0xf0] sm:$0xff]
        %v8020 = vld [vmem:[%s4 + $0xf8] sm:$0xff]
        %v8021 = vadd.f32 %v7957, %v7989
        %v8022 = vadd.f32 %v7958, %v7990
        %v8023 = vadd.f32 %v7959, %v7991
        %v8024 = vadd.f32 %v7960, %v7992
        %v8025 = vadd.f32 %v7961, %v7993
        %v8026 = vadd.f32 %v7962, %v7994
        %v8027 = vadd.f32 %v7963, %v7995
        %v8028 = vadd.f32 %v7964, %v7996
        %v8029 = vadd.f32 %v7965, %v7997
        %v8030 = vadd.f32 %v7966, %v7998
        %v8031 = vadd.f32 %v7967, %v7999
        %v8032 = vadd.f32 %v7968, %v8000
        %v8033 = vadd.f32 %v7969, %v8001
        %v8034 = vadd.f32 %v7970, %v8002
        %v8035 = vadd.f32 %v7971, %v8003
        %v8036 = vadd.f32 %v7972, %v8004
        %v8037 = vadd.f32 %v7973, %v8005
        %v8038 = vadd.f32 %v7974, %v8006
        %v8039 = vadd.f32 %v7975, %v8007
        %v8040 = vadd.f32 %v7976, %v8008
        %v8041 = vadd.f32 %v7977, %v8009
        %v8042 = vadd.f32 %v7978, %v8010
        %v8043 = vadd.f32 %v7979, %v8011
        %v8044 = vadd.f32 %v7980, %v8012
        %v8045 = vadd.f32 %v7981, %v8013
        %v8046 = vadd.f32 %v7982, %v8014
        %v8047 = vadd.f32 %v7983, %v8015
        %v8048 = vadd.f32 %v7984, %v8016
        %v8049 = vadd.f32 %v7985, %v8017
        %v8050 = vadd.f32 %v7986, %v8018
        %v8051 = vadd.f32 %v7987, %v8019
        %v8052 = vadd.f32 %v7988, %v8020
        %v8053 = vmul.f32 %v8021, 0.5
        %v8054 = vmul.f32 %v8022, 0.5
        %v8055 = vmul.f32 %v8023, 0.5
        %v8056 = vmul.f32 %v8024, 0.5
        %v8057 = vmul.f32 %v8025, 0.5
        %v8058 = vmul.f32 %v8026, 0.5
        %v8059 = vmul.f32 %v8027, 0.5
        %v8060 = vmul.f32 %v8028, 0.5
        %v8061 = vmul.f32 %v8029, 0.5
        %v8062 = vmul.f32 %v8030, 0.5
        %v8063 = vmul.f32 %v8031, 0.5
        %v8064 = vmul.f32 %v8032, 0.5
        %v8065 = vmul.f32 %v8033, 0.5
        %v8066 = vmul.f32 %v8034, 0.5
        %v8067 = vmul.f32 %v8035, 0.5
        %v8068 = vmul.f32 %v8036, 0.5
        %v8069 = vmul.f32 %v8037, 0.5
        %v8070 = vmul.f32 %v8038, 0.5
        %v8071 = vmul.f32 %v8039, 0.5
        %v8072 = vmul.f32 %v8040, 0.5
        %v8073 = vmul.f32 %v8041, 0.5
        %v8074 = vmul.f32 %v8042, 0.5
        %v8075 = vmul.f32 %v8043, 0.5
        %v8076 = vmul.f32 %v8044, 0.5
        %v8077 = vmul.f32 %v8045, 0.5
        %v8078 = vmul.f32 %v8046, 0.5
        %v8079 = vmul.f32 %v8047, 0.5
        %v8080 = vmul.f32 %v8048, 0.5
        %v8081 = vmul.f32 %v8049, 0.5
        %v8082 = vmul.f32 %v8050, 0.5
        %v8083 = vmul.f32 %v8051, 0.5
        %v8084 = vmul.f32 %v8052, 0.5
        %v8085 = vmul.f32 %v8021, 0.70710677
        %v8086 = vmul.f32 %v8022, 0.70710677
        %v8087 = vmul.f32 %v8023, 0.70710677
        %v8088 = vmul.f32 %v8024, 0.70710677
        %v8089 = vmul.f32 %v8025, 0.70710677
        %v8090 = vmul.f32 %v8026, 0.70710677
        %v8091 = vmul.f32 %v8027, 0.70710677
        %v8092 = vmul.f32 %v8028, 0.70710677
        %v8093 = vmul.f32 %v8029, 0.70710677
        %v8094 = vmul.f32 %v8030, 0.70710677
        %v8095 = vmul.f32 %v8031, 0.70710677
        %v8096 = vmul.f32 %v8032, 0.70710677
        %v8097 = vmul.f32 %v8033, 0.70710677
        %v8098 = vmul.f32 %v8034, 0.70710677
        %v8099 = vmul.f32 %v8035, 0.70710677
        %v8100 = vmul.f32 %v8036, 0.70710677
        %v8101 = vmul.f32 %v8037, 0.70710677
        %v8102 = vmul.f32 %v8038, 0.70710677
        %v8103 = vmul.f32 %v8039, 0.70710677
        %v8104 = vmul.f32 %v8040, 0.70710677
        %v8105 = vmul.f32 %v8041, 0.70710677
        %v8106 = vmul.f32 %v8042, 0.70710677
        %v8107 = vmul.f32 %v8043, 0.70710677
        %v8108 = vmul.f32 %v8044, 0.70710677
        %v8109 = vmul.f32 %v8045, 0.70710677
        %v8110 = vmul.f32 %v8046, 0.70710677
        %v8111 = vmul.f32 %v8047, 0.70710677
        %v8112 = vmul.f32 %v8048, 0.70710677
        %v8113 = vmul.f32 %v8049, 0.70710677
        %v8114 = vmul.f32 %v8050, 0.70710677
        %v8115 = vmul.f32 %v8051, 0.70710677
        %v8116 = vmul.f32 %v8052, 0.70710677
        %v8117 = vand.u32 2147483647, %v8085
        %v8118 = vand.u32 2147483647, %v8086
        %v8119 = vand.u32 2147483647, %v8087
        %v8120 = vand.u32 2147483647, %v8088
        %v8121 = vand.u32 2147483647, %v8089
        %v8122 = vand.u32 2147483647, %v8090
        %v8123 = vand.u32 2147483647, %v8091
        %v8124 = vand.u32 2147483647, %v8092
        %v8125 = vand.u32 2147483647, %v8093
        %v8126 = vand.u32 2147483647, %v8094
        %v8127 = vand.u32 2147483647, %v8095
        %v8128 = vand.u32 2147483647, %v8096
        %v8129 = vand.u32 2147483647, %v8097
        %v8130 = vand.u32 2147483647, %v8098
        %v8131 = vand.u32 2147483647, %v8099
        %v8132 = vand.u32 2147483647, %v8100
        %v8133 = vand.u32 2147483647, %v8101
        %v8134 = vand.u32 2147483647, %v8102
        %v8135 = vand.u32 2147483647, %v8103
        %v8136 = vand.u32 2147483647, %v8104
        %v8137 = vand.u32 2147483647, %v8105
        %v8138 = vand.u32 2147483647, %v8106
        %v8139 = vand.u32 2147483647, %v8107
        %v8140 = vand.u32 2147483647, %v8108
        %v8141 = vand.u32 2147483647, %v8109
        %v8142 = vand.u32 2147483647, %v8110
        %v8143 = vand.u32 2147483647, %v8111
        %v8144 = vand.u32 2147483647, %v8112
        %v8145 = vand.u32 2147483647, %v8113
        %v8146 = vand.u32 2147483647, %v8114
        %v8147 = vand.u32 2147483647, %v8115
        %v8148 = vand.u32 2147483647, %v8116
        %v8149 = vmul.f32 %v8117, 0.3275911
        %v8150 = vmul.f32 %v8118, 0.3275911
        %v8151 = vmul.f32 %v8119, 0.3275911
        %v8152 = vmul.f32 %v8120, 0.3275911
        %v8153 = vmul.f32 %v8121, 0.3275911
        %v8154 = vmul.f32 %v8122, 0.3275911
        %v8155 = vmul.f32 %v8123, 0.3275911
        %v8156 = vmul.f32 %v8124, 0.3275911
        %v8157 = vmul.f32 %v8125, 0.3275911
        %v8158 = vmul.f32 %v8126, 0.3275911
        %v8159 = vmul.f32 %v8127, 0.3275911
        %v8160 = vmul.f32 %v8128, 0.3275911
        %v8161 = vmul.f32 %v8129, 0.3275911
        %v8162 = vmul.f32 %v8130, 0.3275911
        %v8163 = vmul.f32 %v8131, 0.3275911
        %v8164 = vmul.f32 %v8132, 0.3275911
        %v8165 = vmul.f32 %v8133, 0.3275911
        %v8166 = vmul.f32 %v8134, 0.3275911
        %v8167 = vmul.f32 %v8135, 0.3275911
        %v8168 = vmul.f32 %v8136, 0.3275911
        %v8169 = vmul.f32 %v8137, 0.3275911
        %v8170 = vmul.f32 %v8138, 0.3275911
        %v8171 = vmul.f32 %v8139, 0.3275911
        %v8172 = vmul.f32 %v8140, 0.3275911
        %v8173 = vmul.f32 %v8141, 0.3275911
        %v8174 = vmul.f32 %v8142, 0.3275911
        %v8175 = vmul.f32 %v8143, 0.3275911
        %v8176 = vmul.f32 %v8144, 0.3275911
        %v8177 = vmul.f32 %v8145, 0.3275911
        %v8178 = vmul.f32 %v8146, 0.3275911
        %v8179 = vmul.f32 %v8147, 0.3275911
        %v8180 = vmul.f32 %v8148, 0.3275911
        %v8181 = vadd.f32 %v8149, 1.0
        %v8182 = vadd.f32 %v8150, 1.0
        %v8183 = vadd.f32 %v8151, 1.0
        %v8184 = vadd.f32 %v8152, 1.0
        %v8185 = vadd.f32 %v8153, 1.0
        %v8186 = vadd.f32 %v8154, 1.0
        %v8187 = vadd.f32 %v8155, 1.0
        %v8188 = vadd.f32 %v8156, 1.0
        %v8189 = vadd.f32 %v8157, 1.0
        %v8190 = vadd.f32 %v8158, 1.0
        %v8191 = vadd.f32 %v8159, 1.0
        %v8192 = vadd.f32 %v8160, 1.0
        %v8193 = vadd.f32 %v8161, 1.0
        %v8194 = vadd.f32 %v8162, 1.0
        %v8195 = vadd.f32 %v8163, 1.0
        %v8196 = vadd.f32 %v8164, 1.0
        %v8197 = vadd.f32 %v8165, 1.0
        %v8198 = vadd.f32 %v8166, 1.0
        %v8199 = vadd.f32 %v8167, 1.0
        %v8200 = vadd.f32 %v8168, 1.0
        %v8201 = vadd.f32 %v8169, 1.0
        %v8202 = vadd.f32 %v8170, 1.0
        %v8203 = vadd.f32 %v8171, 1.0
        %v8204 = vadd.f32 %v8172, 1.0
        %v8205 = vadd.f32 %v8173, 1.0
        %v8206 = vadd.f32 %v8174, 1.0
        %v8207 = vadd.f32 %v8175, 1.0
        %v8208 = vadd.f32 %v8176, 1.0
        %v8209 = vadd.f32 %v8177, 1.0
        %v8210 = vadd.f32 %v8178, 1.0
        %v8211 = vadd.f32 %v8179, 1.0
        %v8212 = vadd.f32 %v8180, 1.0
        %v8213 = vrcp.pop %v8181
        %v8214 = vmul.f32 1.0, %v8213
        %v8215 = vrcp.pop %v8182
        %v8216 = vmul.f32 1.0, %v8215
        %v8217 = vrcp.pop %v8183
        %v8218 = vmul.f32 1.0, %v8217
        %v8219 = vrcp.pop %v8184
        %v8220 = vmul.f32 1.0, %v8219
        %v8221 = vrcp.pop %v8185
        %v8222 = vmul.f32 1.0, %v8221
        %v8223 = vrcp.pop %v8186
        %v8224 = vmul.f32 1.0, %v8223
        %v8225 = vrcp.pop %v8187
        %v8226 = vmul.f32 1.0, %v8225
        %v8227 = vrcp.pop %v8188
        %v8228 = vmul.f32 1.0, %v8227
        %v8229 = vrcp.pop %v8189
        %v8230 = vmul.f32 1.0, %v8229
        %v8231 = vrcp.pop %v8190
        %v8232 = vmul.f32 1.0, %v8231
        %v8233 = vrcp.pop %v8191
        %v8234 = vmul.f32 1.0, %v8233
        %v8235 = vrcp.pop %v8192
        %v8236 = vmul.f32 1.0, %v8235
        %v8237 = vrcp.pop %v8193
        %v8238 = vmul.f32 1.0, %v8237
        %v8239 = vrcp.pop %v8194
        %v8240 = vmul.f32 1.0, %v8239
        %v8241 = vrcp.pop %v8195
        %v8242 = vmul.f32 1.0, %v8241
        %v8243 = vrcp.pop %v8196
        %v8244 = vmul.f32 1.0, %v8243
        %v8245 = vrcp.pop %v8197
        %v8246 = vmul.f32 1.0, %v8245
        %v8247 = vrcp.pop %v8198
        %v8248 = vmul.f32 1.0, %v8247
        %v8249 = vrcp.pop %v8199
        %v8250 = vmul.f32 1.0, %v8249
        %v8251 = vrcp.pop %v8200
        %v8252 = vmul.f32 1.0, %v8251
        %v8253 = vrcp.pop %v8201
        %v8254 = vmul.f32 1.0, %v8253
        %v8255 = vrcp.pop %v8202
        %v8256 = vmul.f32 1.0, %v8255
        %v8257 = vrcp.pop %v8203
        %v8258 = vmul.f32 1.0, %v8257
        %v8259 = vrcp.pop %v8204
        %v8260 = vmul.f32 1.0, %v8259
        %v8261 = vrcp.pop %v8205
        %v8262 = vmul.f32 1.0, %v8261
        %v8263 = vrcp.pop %v8206
        %v8264 = vmul.f32 1.0, %v8263
        %v8265 = vrcp.pop %v8207
        %v8266 = vmul.f32 1.0, %v8265
        %v8267 = vrcp.pop %v8208
        %v8268 = vmul.f32 1.0, %v8267
        %v8269 = vrcp.pop %v8209
        %v8270 = vmul.f32 1.0, %v8269
        %v8271 = vrcp.pop %v8210
        %v8272 = vmul.f32 1.0, %v8271
        %v8273 = vrcp.pop %v8211
        %v8274 = vmul.f32 1.0, %v8273
        %v8275 = vrcp.pop %v8212
        %v8276 = vmul.f32 1.0, %v8275
        %v8277 = vmul.f32 %v8214, 1.0614054
        %v8278 = vmul.f32 %v8216, 1.0614054
        %v8279 = vmul.f32 %v8218, 1.0614054
        %v8280 = vmul.f32 %v8220, 1.0614054
        %v8281 = vmul.f32 %v8222, 1.0614054
        %v8282 = vmul.f32 %v8224, 1.0614054
        %v8283 = vmul.f32 %v8226, 1.0614054
        %v8284 = vmul.f32 %v8228, 1.0614054
        %v8285 = vmul.f32 %v8230, 1.0614054
        %v8286 = vmul.f32 %v8232, 1.0614054
        %v8287 = vmul.f32 %v8234, 1.0614054
        %v8288 = vmul.f32 %v8236, 1.0614054
        %v8289 = vmul.f32 %v8238, 1.0614054
        %v8290 = vmul.f32 %v8240, 1.0614054
        %v8291 = vmul.f32 %v8242, 1.0614054
        %v8292 = vmul.f32 %v8244, 1.0614054
        %v8293 = vmul.f32 %v8246, 1.0614054
        %v8294 = vmul.f32 %v8248, 1.0614054
        %v8295 = vmul.f32 %v8250, 1.0614054
        %v8296 = vmul.f32 %v8252, 1.0614054
        %v8297 = vmul.f32 %v8254, 1.0614054
        %v8298 = vmul.f32 %v8256, 1.0614054
        %v8299 = vmul.f32 %v8258, 1.0614054
        %v8300 = vmul.f32 %v8260, 1.0614054
        %v8301 = vmul.f32 %v8262, 1.0614054
        %v8302 = vmul.f32 %v8264, 1.0614054
        %v8303 = vmul.f32 %v8266, 1.0614054
        %v8304 = vmul.f32 %v8268, 1.0614054
        %v8305 = vmul.f32 %v8270, 1.0614054
        %v8306 = vmul.f32 %v8272, 1.0614054
        %v8307 = vmul.f32 %v8274, 1.0614054
        %v8308 = vmul.f32 %v8276, 1.0614054
        %v8309 = vadd.f32 %v8277, -1.4531521
        %v8310 = vadd.f32 %v8278, -1.4531521
        %v8311 = vadd.f32 %v8279, -1.4531521
        %v8312 = vadd.f32 %v8280, -1.4531521
        %v8313 = vadd.f32 %v8281, -1.4531521
        %v8314 = vadd.f32 %v8282, -1.4531521
        %v8315 = vadd.f32 %v8283, -1.4531521
        %v8316 = vadd.f32 %v8284, -1.4531521
        %v8317 = vadd.f32 %v8285, -1.4531521
        %v8318 = vadd.f32 %v8286, -1.4531521
        %v8319 = vadd.f32 %v8287, -1.4531521
        %v8320 = vadd.f32 %v8288, -1.4531521
        %v8321 = vadd.f32 %v8289, -1.4531521
        %v8322 = vadd.f32 %v8290, -1.4531521
        %v8323 = vadd.f32 %v8291, -1.4531521
        %v8324 = vadd.f32 %v8292, -1.4531521
        %v8325 = vadd.f32 %v8293, -1.4531521
        %v8326 = vadd.f32 %v8294, -1.4531521
        %v8327 = vadd.f32 %v8295, -1.4531521
        %v8328 = vadd.f32 %v8296, -1.4531521
        %v8329 = vadd.f32 %v8297, -1.4531521
        %v8330 = vadd.f32 %v8298, -1.4531521
        %v8331 = vadd.f32 %v8299, -1.4531521
        %v8332 = vadd.f32 %v8300, -1.4531521
        %v8333 = vadd.f32 %v8301, -1.4531521
        %v8334 = vadd.f32 %v8302, -1.4531521
        %v8335 = vadd.f32 %v8303, -1.4531521
        %v8336 = vadd.f32 %v8304, -1.4531521
        %v8337 = vadd.f32 %v8305, -1.4531521
        %v8338 = vadd.f32 %v8306, -1.4531521
        %v8339 = vadd.f32 %v8307, -1.4531521
        %v8340 = vadd.f32 %v8308, -1.4531521
        %v8341 = vmul.f32 %v8309, %v8214
        %v8342 = vmul.f32 %v8310, %v8216
        %v8343 = vmul.f32 %v8311, %v8218
        %v8344 = vmul.f32 %v8312, %v8220
        %v8345 = vmul.f32 %v8313, %v8222
        %v8346 = vmul.f32 %v8314, %v8224
        %v8347 = vmul.f32 %v8315, %v8226
        %v8348 = vmul.f32 %v8316, %v8228
        %v8349 = vmul.f32 %v8317, %v8230
        %v8350 = vmul.f32 %v8318, %v8232
        %v8351 = vmul.f32 %v8319, %v8234
        %v8352 = vmul.f32 %v8320, %v8236
        %v8353 = vmul.f32 %v8321, %v8238
        %v8354 = vmul.f32 %v8322, %v8240
        %v8355 = vmul.f32 %v8323, %v8242
        %v8356 = vmul.f32 %v8324, %v8244
        %v8357 = vmul.f32 %v8325, %v8246
        %v8358 = vmul.f32 %v8326, %v8248
        %v8359 = vmul.f32 %v8327, %v8250
        %v8360 = vmul.f32 %v8328, %v8252
        %v8361 = vmul.f32 %v8329, %v8254
        %v8362 = vmul.f32 %v8330, %v8256
        %v8363 = vmul.f32 %v8331, %v8258
        %v8364 = vmul.f32 %v8332, %v8260
        %v8365 = vmul.f32 %v8333, %v8262
        %v8366 = vmul.f32 %v8334, %v8264
        %v8367 = vmul.f32 %v8335, %v8266
        %v8368 = vmul.f32 %v8336, %v8268
        %v8369 = vmul.f32 %v8337, %v8270
        %v8370 = vmul.f32 %v8338, %v8272
        %v8371 = vmul.f32 %v8339, %v8274
        %v8372 = vmul.f32 %v8340, %v8276
        %v8373 = vadd.f32 %v8341, 1.4214138
        %v8374 = vadd.f32 %v8342, 1.4214138
        %v8375 = vadd.f32 %v8343, 1.4214138
        %v8376 = vadd.f32 %v8344, 1.4214138
        %v8377 = vadd.f32 %v8345, 1.4214138
        %v8378 = vadd.f32 %v8346, 1.4214138
        %v8379 = vadd.f32 %v8347, 1.4214138
        %v8380 = vadd.f32 %v8348, 1.4214138
        %v8381 = vadd.f32 %v8349, 1.4214138
        %v8382 = vadd.f32 %v8350, 1.4214138
        %v8383 = vadd.f32 %v8351, 1.4214138
        %v8384 = vadd.f32 %v8352, 1.4214138
        %v8385 = vadd.f32 %v8353, 1.4214138
        %v8386 = vadd.f32 %v8354, 1.4214138
        %v8387 = vadd.f32 %v8355, 1.4214138
        %v8388 = vadd.f32 %v8356, 1.4214138
        %v8389 = vadd.f32 %v8357, 1.4214138
        %v8390 = vadd.f32 %v8358, 1.4214138
        %v8391 = vadd.f32 %v8359, 1.4214138
        %v8392 = vadd.f32 %v8360, 1.4214138
        %v8393 = vadd.f32 %v8361, 1.4214138
        %v8394 = vadd.f32 %v8362, 1.4214138
        %v8395 = vadd.f32 %v8363, 1.4214138
        %v8396 = vadd.f32 %v8364, 1.4214138
        %v8397 = vadd.f32 %v8365, 1.4214138
        %v8398 = vadd.f32 %v8366, 1.4214138
        %v8399 = vadd.f32 %v8367, 1.4214138
        %v8400 = vadd.f32 %v8368, 1.4214138
        %v8401 = vadd.f32 %v8369, 1.4214138
        %v8402 = vadd.f32 %v8370, 1.4214138
        %v8403 = vadd.f32 %v8371, 1.4214138
        %v8404 = vadd.f32 %v8372, 1.4214138
        %v8405 = vmul.f32 %v8373, %v8214
        %v8406 = vmul.f32 %v8374, %v8216
        %v8407 = vmul.f32 %v8375, %v8218
        %v8408 = vmul.f32 %v8376, %v8220
        %v8409 = vmul.f32 %v8377, %v8222
        %v8410 = vmul.f32 %v8378, %v8224
        %v8411 = vmul.f32 %v8379, %v8226
        %v8412 = vmul.f32 %v8380, %v8228
        %v8413 = vmul.f32 %v8381, %v8230
        %v8414 = vmul.f32 %v8382, %v8232
        %v8415 = vmul.f32 %v8383, %v8234
        %v8416 = vmul.f32 %v8384, %v8236
        %v8417 = vmul.f32 %v8385, %v8238
        %v8418 = vmul.f32 %v8386, %v8240
        %v8419 = vmul.f32 %v8387, %v8242
        %v8420 = vmul.f32 %v8388, %v8244
        %v8421 = vmul.f32 %v8389, %v8246
        %v8422 = vmul.f32 %v8390, %v8248
        %v8423 = vmul.f32 %v8391, %v8250
        %v8424 = vmul.f32 %v8392, %v8252
        %v8425 = vmul.f32 %v8393, %v8254
        %v8426 = vmul.f32 %v8394, %v8256
        %v8427 = vmul.f32 %v8395, %v8258
        %v8428 = vmul.f32 %v8396, %v8260
        %v8429 = vmul.f32 %v8397, %v8262
        %v8430 = vmul.f32 %v8398, %v8264
        %v8431 = vmul.f32 %v8399, %v8266
        %v8432 = vmul.f32 %v8400, %v8268
        %v8433 = vmul.f32 %v8401, %v8270
        %v8434 = vmul.f32 %v8402, %v8272
        %v8435 = vmul.f32 %v8403, %v8274
        %v8436 = vmul.f32 %v8404, %v8276
        %v8437 = vadd.f32 %v8405, -0.28449672
        %v8438 = vadd.f32 %v8406, -0.28449672
        %v8439 = vadd.f32 %v8407, -0.28449672
        %v8440 = vadd.f32 %v8408, -0.28449672
        %v8441 = vadd.f32 %v8409, -0.28449672
        %v8442 = vadd.f32 %v8410, -0.28449672
        %v8443 = vadd.f32 %v8411, -0.28449672
        %v8444 = vadd.f32 %v8412, -0.28449672
        %v8445 = vadd.f32 %v8413, -0.28449672
        %v8446 = vadd.f32 %v8414, -0.28449672
        %v8447 = vadd.f32 %v8415, -0.28449672
        %v8448 = vadd.f32 %v8416, -0.28449672
        %v8449 = vadd.f32 %v8417, -0.28449672
        %v8450 = vadd.f32 %v8418, -0.28449672
        %v8451 = vadd.f32 %v8419, -0.28449672
        %v8452 = vadd.f32 %v8420, -0.28449672
        %v8453 = vadd.f32 %v8421, -0.28449672
        %v8454 = vadd.f32 %v8422, -0.28449672
        %v8455 = vadd.f32 %v8423, -0.28449672
        %v8456 = vadd.f32 %v8424, -0.28449672
        %v8457 = vadd.f32 %v8425, -0.28449672
        %v8458 = vadd.f32 %v8426, -0.28449672
        %v8459 = vadd.f32 %v8427, -0.28449672
        %v8460 = vadd.f32 %v8428, -0.28449672
        %v8461 = vadd.f32 %v8429, -0.28449672
        %v8462 = vadd.f32 %v8430, -0.28449672
        %v8463 = vadd.f32 %v8431, -0.28449672
        %v8464 = vadd.f32 %v8432, -0.28449672
        %v8465 = vadd.f32 %v8433, -0.28449672
        %v8466 = vadd.f32 %v8434, -0.28449672
        %v8467 = vadd.f32 %v8435, -0.28449672
        %v8468 = vadd.f32 %v8436, -0.28449672
        %v8469 = vmul.f32 %v8437, %v8214
        %v8470 = vmul.f32 %v8438, %v8216
        %v8471 = vmul.f32 %v8439, %v8218
        %v8472 = vmul.f32 %v8440, %v8220
        %v8473 = vmul.f32 %v8441, %v8222
        %v8474 = vmul.f32 %v8442, %v8224
        %v8475 = vmul.f32 %v8443, %v8226
        %v8476 = vmul.f32 %v8444, %v8228
        %v8477 = vmul.f32 %v8445, %v8230
        %v8478 = vmul.f32 %v8446, %v8232
        %v8479 = vmul.f32 %v8447, %v8234
        %v8480 = vmul.f32 %v8448, %v8236
        %v8481 = vmul.f32 %v8449, %v8238
        %v8482 = vmul.f32 %v8450, %v8240
        %v8483 = vmul.f32 %v8451, %v8242
        %v8484 = vmul.f32 %v8452, %v8244
        %v8485 = vmul.f32 %v8453, %v8246
        %v8486 = vmul.f32 %v8454, %v8248
        %v8487 = vmul.f32 %v8455, %v8250
        %v8488 = vmul.f32 %v8456, %v8252
        %v8489 = vmul.f32 %v8457, %v8254
        %v8490 = vmul.f32 %v8458, %v8256
        %v8491 = vmul.f32 %v8459, %v8258
        %v8492 = vmul.f32 %v8460, %v8260
        %v8493 = vmul.f32 %v8461, %v8262
        %v8494 = vmul.f32 %v8462, %v8264
        %v8495 = vmul.f32 %v8463, %v8266
        %v8496 = vmul.f32 %v8464, %v8268
        %v8497 = vmul.f32 %v8465, %v8270
        %v8498 = vmul.f32 %v8466, %v8272
        %v8499 = vmul.f32 %v8467, %v8274
        %v8500 = vmul.f32 %v8468, %v8276
        %v8501 = vadd.f32 %v8469, 0.2548296
        %v8502 = vadd.f32 %v8470, 0.2548296
        %v8503 = vadd.f32 %v8471, 0.2548296
        %v8504 = vadd.f32 %v8472, 0.2548296
        %v8505 = vadd.f32 %v8473, 0.2548296
        %v8506 = vadd.f32 %v8474, 0.2548296
        %v8507 = vadd.f32 %v8475, 0.2548296
        %v8508 = vadd.f32 %v8476, 0.2548296
        %v8509 = vadd.f32 %v8477, 0.2548296
        %v8510 = vadd.f32 %v8478, 0.2548296
        %v8511 = vadd.f32 %v8479, 0.2548296
        %v8512 = vadd.f32 %v8480, 0.2548296
        %v8513 = vadd.f32 %v8481, 0.2548296
        %v8514 = vadd.f32 %v8482, 0.2548296
        %v8515 = vadd.f32 %v8483, 0.2548296
        %v8516 = vadd.f32 %v8484, 0.2548296
        %v8517 = vadd.f32 %v8485, 0.2548296
        %v8518 = vadd.f32 %v8486, 0.2548296
        %v8519 = vadd.f32 %v8487, 0.2548296
        %v8520 = vadd.f32 %v8488, 0.2548296
        %v8521 = vadd.f32 %v8489, 0.2548296
        %v8522 = vadd.f32 %v8490, 0.2548296
        %v8523 = vadd.f32 %v8491, 0.2548296
        %v8524 = vadd.f32 %v8492, 0.2548296
        %v8525 = vadd.f32 %v8493, 0.2548296
        %v8526 = vadd.f32 %v8494, 0.2548296
        %v8527 = vadd.f32 %v8495, 0.2548296
        %v8528 = vadd.f32 %v8496, 0.2548296
        %v8529 = vadd.f32 %v8497, 0.2548296
        %v8530 = vadd.f32 %v8498, 0.2548296
        %v8531 = vadd.f32 %v8499, 0.2548296
        %v8532 = vadd.f32 %v8500, 0.2548296
        %v8533 = vmul.f32 %v8501, %v8214
        %v8534 = vmul.f32 %v8502, %v8216
        %v8535 = vmul.f32 %v8503, %v8218
        %v8536 = vmul.f32 %v8504, %v8220
        %v8537 = vmul.f32 %v8505, %v8222
        %v8538 = vmul.f32 %v8506, %v8224
        %v8539 = vmul.f32 %v8507, %v8226
        %v8540 = vmul.f32 %v8508, %v8228
        %v8541 = vmul.f32 %v8509, %v8230
        %v8542 = vmul.f32 %v8510, %v8232
        %v8543 = vmul.f32 %v8511, %v8234
        %v8544 = vmul.f32 %v8512, %v8236
        %v8545 = vmul.f32 %v8513, %v8238
        %v8546 = vmul.f32 %v8514, %v8240
        %v8547 = vmul.f32 %v8515, %v8242
        %v8548 = vmul.f32 %v8516, %v8244
        %v8549 = vmul.f32 %v8517, %v8246
        %v8550 = vmul.f32 %v8518, %v8248
        %v8551 = vmul.f32 %v8519, %v8250
        %v8552 = vmul.f32 %v8520, %v8252
        %v8553 = vmul.f32 %v8521, %v8254
        %v8554 = vmul.f32 %v8522, %v8256
        %v8555 = vmul.f32 %v8523, %v8258
        %v8556 = vmul.f32 %v8524, %v8260
        %v8557 = vmul.f32 %v8525, %v8262
        %v8558 = vmul.f32 %v8526, %v8264
        %v8559 = vmul.f32 %v8527, %v8266
        %v8560 = vmul.f32 %v8528, %v8268
        %v8561 = vmul.f32 %v8529, %v8270
        %v8562 = vmul.f32 %v8530, %v8272
        %v8563 = vmul.f32 %v8531, %v8274
        %v8564 = vmul.f32 %v8532, %v8276
        %v8565 = vmul.f32 %v8117, %v8117
        %v8566 = vmul.f32 %v8118, %v8118
        %v8567 = vmul.f32 %v8119, %v8119
        %v8568 = vmul.f32 %v8120, %v8120
        %v8569 = vmul.f32 %v8121, %v8121
        %v8570 = vmul.f32 %v8122, %v8122
        %v8571 = vmul.f32 %v8123, %v8123
        %v8572 = vmul.f32 %v8124, %v8124
        %v8573 = vmul.f32 %v8125, %v8125
        %v8574 = vmul.f32 %v8126, %v8126
        %v8575 = vmul.f32 %v8127, %v8127
        %v8576 = vmul.f32 %v8128, %v8128
        %v8577 = vmul.f32 %v8129, %v8129
        %v8578 = vmul.f32 %v8130, %v8130
        %v8579 = vmul.f32 %v8131, %v8131
        %v8580 = vmul.f32 %v8132, %v8132
        %v8581 = vmul.f32 %v8133, %v8133
        %v8582 = vmul.f32 %v8134, %v8134
        %v8583 = vmul.f32 %v8135, %v8135
        %v8584 = vmul.f32 %v8136, %v8136
        %v8585 = vmul.f32 %v8137, %v8137
        %v8586 = vmul.f32 %v8138, %v8138
        %v8587 = vmul.f32 %v8139, %v8139
        %v8588 = vmul.f32 %v8140, %v8140
        %v8589 = vmul.f32 %v8141, %v8141
        %v8590 = vmul.f32 %v8142, %v8142
        %v8591 = vmul.f32 %v8143, %v8143
        %v8592 = vmul.f32 %v8144, %v8144
        %v8593 = vmul.f32 %v8145, %v8145
        %v8594 = vmul.f32 %v8146, %v8146
        %v8595 = vmul.f32 %v8147, %v8147
        %v8596 = vmul.f32 %v8148, %v8148
        %v8597 = vsub.f32 0.0, %v8565
        %v8598 = vsub.f32 0.0, %v8566
        %v8599 = vsub.f32 0.0, %v8567
        %v8600 = vsub.f32 0.0, %v8568
        %v8601 = vsub.f32 0.0, %v8569
        %v8602 = vsub.f32 0.0, %v8570
        %v8603 = vsub.f32 0.0, %v8571
        %v8604 = vsub.f32 0.0, %v8572
        %v8605 = vsub.f32 0.0, %v8573
        %v8606 = vsub.f32 0.0, %v8574
        %v8607 = vsub.f32 0.0, %v8575
        %v8608 = vsub.f32 0.0, %v8576
        %v8609 = vsub.f32 0.0, %v8577
        %v8610 = vsub.f32 0.0, %v8578
        %v8611 = vsub.f32 0.0, %v8579
        %v8612 = vsub.f32 0.0, %v8580
        %v8613 = vsub.f32 0.0, %v8581
        %v8614 = vsub.f32 0.0, %v8582
        %v8615 = vsub.f32 0.0, %v8583
        %v8616 = vsub.f32 0.0, %v8584
        %v8617 = vsub.f32 0.0, %v8585
        %v8618 = vsub.f32 0.0, %v8586
        %v8619 = vsub.f32 0.0, %v8587
        %v8620 = vsub.f32 0.0, %v8588
        %v8621 = vsub.f32 0.0, %v8589
        %v8622 = vsub.f32 0.0, %v8590
        %v8623 = vsub.f32 0.0, %v8591
        %v8624 = vsub.f32 0.0, %v8592
        %v8625 = vsub.f32 0.0, %v8593
        %v8626 = vsub.f32 0.0, %v8594
        %v8627 = vsub.f32 0.0, %v8595
        %v8628 = vsub.f32 0.0, %v8596
        %v8629 = vmul.f32 %v8597, 1.442695
        %v8630 = vpow.pop %v8629
        %v8631 = vmul.f32 %v8598, 1.442695
        %v8632 = vpow.pop %v8631
        %v8633 = vmul.f32 %v8599, 1.442695
        %v8634 = vpow.pop %v8633
        %v8635 = vmul.f32 %v8600, 1.442695
        %v8636 = vpow.pop %v8635
        %v8637 = vmul.f32 %v8601, 1.442695
        %v8638 = vpow.pop %v8637
        %v8639 = vmul.f32 %v8602, 1.442695
        %v8640 = vpow.pop %v8639
        %v8641 = vmul.f32 %v8603, 1.442695
        %v8642 = vpow.pop %v8641
        %v8643 = vmul.f32 %v8604, 1.442695
        %v8644 = vpow.pop %v8643
        %v8645 = vmul.f32 %v8605, 1.442695
        %v8646 = vpow.pop %v8645
        %v8647 = vmul.f32 %v8606, 1.442695
        %v8648 = vpow.pop %v8647
        %v8649 = vmul.f32 %v8607, 1.442695
        %v8650 = vpow.pop %v8649
        %v8651 = vmul.f32 %v8608, 1.442695
        %v8652 = vpow.pop %v8651
        %v8653 = vmul.f32 %v8609, 1.442695
        %v8654 = vpow.pop %v8653
        %v8655 = vmul.f32 %v8610, 1.442695
        %v8656 = vpow.pop %v8655
        %v8657 = vmul.f32 %v8611, 1.442695
        %v8658 = vpow.pop %v8657
        %v8659 = vmul.f32 %v8612, 1.442695
        %v8660 = vpow.pop %v8659
        %v8661 = vmul.f32 %v8613, 1.442695
        %v8662 = vpow.pop %v8661
        %v8663 = vmul.f32 %v8614, 1.442695
        %v8664 = vpow.pop %v8663
        %v8665 = vmul.f32 %v8615, 1.442695
        %v8666 = vpow.pop %v8665
        %v8667 = vmul.f32 %v8616, 1.442695
        %v8668 = vpow.pop %v8667
        %v8669 = vmul.f32 %v8617, 1.442695
        %v8670 = vpow.pop %v8669
        %v8671 = vmul.f32 %v8618, 1.442695
        %v8672 = vpow.pop %v8671
        %v8673 = vmul.f32 %v8619, 1.442695
        %v8674 = vpow.pop %v8673
        %v8675 = vmul.f32 %v8620, 1.442695
        %v8676 = vpow.pop %v8675
        %v8677 = vmul.f32 %v8621, 1.442695
        %v8678 = vpow.pop %v8677
        %v8679 = vmul.f32 %v8622, 1.442695
        %v8680 = vpow.pop %v8679
        %v8681 = vmul.f32 %v8623, 1.442695
        %v8682 = vpow.pop %v8681
        %v8683 = vmul.f32 %v8624, 1.442695
        %v8684 = vpow.pop %v8683
        %v8685 = vmul.f32 %v8625, 1.442695
        %v8686 = vpow.pop %v8685
        %v8687 = vmul.f32 %v8626, 1.442695
        %v8688 = vpow.pop %v8687
        %v8689 = vmul.f32 %v8627, 1.442695
        %v8690 = vpow.pop %v8689
        %v8691 = vmul.f32 %v8628, 1.442695
        %v8692 = vpow.pop %v8691
        %v8693 = vmul.f32 %v8533, %v8630
        %v8694 = vmul.f32 %v8534, %v8632
        %v8695 = vmul.f32 %v8535, %v8634
        %v8696 = vmul.f32 %v8536, %v8636
        %v8697 = vmul.f32 %v8537, %v8638
        %v8698 = vmul.f32 %v8538, %v8640
        %v8699 = vmul.f32 %v8539, %v8642
        %v8700 = vmul.f32 %v8540, %v8644
        %v8701 = vmul.f32 %v8541, %v8646
        %v8702 = vmul.f32 %v8542, %v8648
        %v8703 = vmul.f32 %v8543, %v8650
        %v8704 = vmul.f32 %v8544, %v8652
        %v8705 = vmul.f32 %v8545, %v8654
        %v8706 = vmul.f32 %v8546, %v8656
        %v8707 = vmul.f32 %v8547, %v8658
        %v8708 = vmul.f32 %v8548, %v8660
        %v8709 = vmul.f32 %v8549, %v8662
        %v8710 = vmul.f32 %v8550, %v8664
        %v8711 = vmul.f32 %v8551, %v8666
        %v8712 = vmul.f32 %v8552, %v8668
        %v8713 = vmul.f32 %v8553, %v8670
        %v8714 = vmul.f32 %v8554, %v8672
        %v8715 = vmul.f32 %v8555, %v8674
        %v8716 = vmul.f32 %v8556, %v8676
        %v8717 = vmul.f32 %v8557, %v8678
        %v8718 = vmul.f32 %v8558, %v8680
        %v8719 = vmul.f32 %v8559, %v8682
        %v8720 = vmul.f32 %v8560, %v8684
        %v8721 = vmul.f32 %v8561, %v8686
        %v8722 = vmul.f32 %v8562, %v8688
        %v8723 = vmul.f32 %v8563, %v8690
        %v8724 = vmul.f32 %v8564, %v8692
        %v8725 = vsub.f32 1.0, %v8693
        %v8726 = vsub.f32 1.0, %v8694
        %v8727 = vsub.f32 1.0, %v8695
        %v8728 = vsub.f32 1.0, %v8696
        %v8729 = vsub.f32 1.0, %v8697
        %v8730 = vsub.f32 1.0, %v8698
        %v8731 = vsub.f32 1.0, %v8699
        %v8732 = vsub.f32 1.0, %v8700
        %v8733 = vsub.f32 1.0, %v8701
        %v8734 = vsub.f32 1.0, %v8702
        %v8735 = vsub.f32 1.0, %v8703
        %v8736 = vsub.f32 1.0, %v8704
        %v8737 = vsub.f32 1.0, %v8705
        %v8738 = vsub.f32 1.0, %v8706
        %v8739 = vsub.f32 1.0, %v8707
        %v8740 = vsub.f32 1.0, %v8708
        %v8741 = vsub.f32 1.0, %v8709
        %v8742 = vsub.f32 1.0, %v8710
        %v8743 = vsub.f32 1.0, %v8711
        %v8744 = vsub.f32 1.0, %v8712
        %v8745 = vsub.f32 1.0, %v8713
        %v8746 = vsub.f32 1.0, %v8714
        %v8747 = vsub.f32 1.0, %v8715
        %v8748 = vsub.f32 1.0, %v8716
        %v8749 = vsub.f32 1.0, %v8717
        %v8750 = vsub.f32 1.0, %v8718
        %v8751 = vsub.f32 1.0, %v8719
        %v8752 = vsub.f32 1.0, %v8720
        %v8753 = vsub.f32 1.0, %v8721
        %v8754 = vsub.f32 1.0, %v8722
        %v8755 = vsub.f32 1.0, %v8723
        %v8756 = vsub.f32 1.0, %v8724
        %vm8757 = vcmp.ge.f32.partialorder %v8085, 0.0
        %vm8758 = vcmp.ge.f32.partialorder %v8086, 0.0
        %vm8759 = vcmp.ge.f32.partialorder %v8087, 0.0
        %vm8760 = vcmp.ge.f32.partialorder %v8088, 0.0
        %vm8761 = vcmp.ge.f32.partialorder %v8089, 0.0
        %vm8762 = vcmp.ge.f32.partialorder %v8090, 0.0
        %vm8763 = vcmp.ge.f32.partialorder %v8091, 0.0
        %vm8764 = vcmp.ge.f32.partialorder %v8092, 0.0
        %vm8765 = vcmp.ge.f32.partialorder %v8093, 0.0
        %vm8766 = vcmp.ge.f32.partialorder %v8094, 0.0
        %vm8767 = vcmp.ge.f32.partialorder %v8095, 0.0
        %vm8768 = vcmp.ge.f32.partialorder %v8096, 0.0
        %vm8769 = vcmp.ge.f32.partialorder %v8097, 0.0
        %vm8770 = vcmp.ge.f32.partialorder %v8098, 0.0
        %vm8771 = vcmp.ge.f32.partialorder %v8099, 0.0
        %vm8772 = vcmp.ge.f32.partialorder %v8100, 0.0
        %vm8773 = vcmp.ge.f32.partialorder %v8101, 0.0
        %vm8774 = vcmp.ge.f32.partialorder %v8102, 0.0
        %vm8775 = vcmp.ge.f32.partialorder %v8103, 0.0
        %vm8776 = vcmp.ge.f32.partialorder %v8104, 0.0
        %vm8777 = vcmp.ge.f32.partialorder %v8105, 0.0
        %vm8778 = vcmp.ge.f32.partialorder %v8106, 0.0
        %vm8779 = vcmp.ge.f32.partialorder %v8107, 0.0
        %vm8780 = vcmp.ge.f32.partialorder %v8108, 0.0
        %vm8781 = vcmp.ge.f32.partialorder %v8109, 0.0
        %vm8782 = vcmp.ge.f32.partialorder %v8110, 0.0
        %vm8783 = vcmp.ge.f32.partialorder %v8111, 0.0
        %vm8784 = vcmp.ge.f32.partialorder %v8112, 0.0
        %vm8785 = vcmp.ge.f32.partialorder %v8113, 0.0
        %vm8786 = vcmp.ge.f32.partialorder %v8114, 0.0
        %vm8787 = vcmp.ge.f32.partialorder %v8115, 0.0
        %vm8788 = vcmp.ge.f32.partialorder %v8116, 0.0
        %v8789 = vsub.f32 0.0, %v8725
        %v8790 = vsub.f32 0.0, %v8726
        %v8791 = vsub.f32 0.0, %v8727
        %v8792 = vsub.f32 0.0, %v8728
        %v8793 = vsub.f32 0.0, %v8729
        %v8794 = vsub.f32 0.0, %v8730
        %v8795 = vsub.f32 0.0, %v8731
        %v8796 = vsub.f32 0.0, %v8732
        %v8797 = vsub.f32 0.0, %v8733
        %v8798 = vsub.f32 0.0, %v8734
        %v8799 = vsub.f32 0.0, %v8735
        %v8800 = vsub.f32 0.0, %v8736
        %v8801 = vsub.f32 0.0, %v8737
        %v8802 = vsub.f32 0.0, %v8738
        %v8803 = vsub.f32 0.0, %v8739
        %v8804 = vsub.f32 0.0, %v8740
        %v8805 = vsub.f32 0.0, %v8741
        %v8806 = vsub.f32 0.0, %v8742
        %v8807 = vsub.f32 0.0, %v8743
        %v8808 = vsub.f32 0.0, %v8744
        %v8809 = vsub.f32 0.0, %v8745
        %v8810 = vsub.f32 0.0, %v8746
        %v8811 = vsub.f32 0.0, %v8747
        %v8812 = vsub.f32 0.0, %v8748
        %v8813 = vsub.f32 0.0, %v8749
        %v8814 = vsub.f32 0.0, %v8750
        %v8815 = vsub.f32 0.0, %v8751
        %v8816 = vsub.f32 0.0, %v8752
        %v8817 = vsub.f32 0.0, %v8753
        %v8818 = vsub.f32 0.0, %v8754
        %v8819 = vsub.f32 0.0, %v8755
        %v8820 = vsub.f32 0.0, %v8756
        %v8821 = vsel %vm8757, %v8725, %v8789
        %v8822 = vsel %vm8758, %v8726, %v8790
        %v8823 = vsel %vm8759, %v8727, %v8791
        %v8824 = vsel %vm8760, %v8728, %v8792
        %v8825 = vsel %vm8761, %v8729, %v8793
        %v8826 = vsel %vm8762, %v8730, %v8794
        %v8827 = vsel %vm8763, %v8731, %v8795
        %v8828 = vsel %vm8764, %v8732, %v8796
        %v8829 = vsel %vm8765, %v8733, %v8797
        %v8830 = vsel %vm8766, %v8734, %v8798
        %v8831 = vsel %vm8767, %v8735, %v8799
        %v8832 = vsel %vm8768, %v8736, %v8800
        %v8833 = vsel %vm8769, %v8737, %v8801
        %v8834 = vsel %vm8770, %v8738, %v8802
        %v8835 = vsel %vm8771, %v8739, %v8803
        %v8836 = vsel %vm8772, %v8740, %v8804
        %v8837 = vsel %vm8773, %v8741, %v8805
        %v8838 = vsel %vm8774, %v8742, %v8806
        %v8839 = vsel %vm8775, %v8743, %v8807
        %v8840 = vsel %vm8776, %v8744, %v8808
        %v8841 = vsel %vm8777, %v8745, %v8809
        %v8842 = vsel %vm8778, %v8746, %v8810
        %v8843 = vsel %vm8779, %v8747, %v8811
        %v8844 = vsel %vm8780, %v8748, %v8812
        %v8845 = vsel %vm8781, %v8749, %v8813
        %v8846 = vsel %vm8782, %v8750, %v8814
        %v8847 = vsel %vm8783, %v8751, %v8815
        %v8848 = vsel %vm8784, %v8752, %v8816
        %v8849 = vsel %vm8785, %v8753, %v8817
        %v8850 = vsel %vm8786, %v8754, %v8818
        %v8851 = vsel %vm8787, %v8755, %v8819
        %v8852 = vsel %vm8788, %v8756, %v8820
        %v8853 = vadd.f32 %v8821, 1.0
        %v8854 = vadd.f32 %v8822, 1.0
        %v8855 = vadd.f32 %v8823, 1.0
        %v8856 = vadd.f32 %v8824, 1.0
        %v8857 = vadd.f32 %v8825, 1.0
        %v8858 = vadd.f32 %v8826, 1.0
        %v8859 = vadd.f32 %v8827, 1.0
        %v8860 = vadd.f32 %v8828, 1.0
        %v8861 = vadd.f32 %v8829, 1.0
        %v8862 = vadd.f32 %v8830, 1.0
        %v8863 = vadd.f32 %v8831, 1.0
        %v8864 = vadd.f32 %v8832, 1.0
        %v8865 = vadd.f32 %v8833, 1.0
        %v8866 = vadd.f32 %v8834, 1.0
        %v8867 = vadd.f32 %v8835, 1.0
        %v8868 = vadd.f32 %v8836, 1.0
        %v8869 = vadd.f32 %v8837, 1.0
        %v8870 = vadd.f32 %v8838, 1.0
        %v8871 = vadd.f32 %v8839, 1.0
        %v8872 = vadd.f32 %v8840, 1.0
        %v8873 = vadd.f32 %v8841, 1.0
        %v8874 = vadd.f32 %v8842, 1.0
        %v8875 = vadd.f32 %v8843, 1.0
        %v8876 = vadd.f32 %v8844, 1.0
        %v8877 = vadd.f32 %v8845, 1.0
        %v8878 = vadd.f32 %v8846, 1.0
        %v8879 = vadd.f32 %v8847, 1.0
        %v8880 = vadd.f32 %v8848, 1.0
        %v8881 = vadd.f32 %v8849, 1.0
        %v8882 = vadd.f32 %v8850, 1.0
        %v8883 = vadd.f32 %v8851, 1.0
        %v8884 = vadd.f32 %v8852, 1.0
        %v8885 = vmul.f32 %v8053, %v8853
        %v8886 = vmul.f32 %v8054, %v8854
        %v8887 = vmul.f32 %v8055, %v8855
        %v8888 = vmul.f32 %v8056, %v8856
        %v8889 = vmul.f32 %v8057, %v8857
        %v8890 = vmul.f32 %v8058, %v8858
        %v8891 = vmul.f32 %v8059, %v8859
        %v8892 = vmul.f32 %v8060, %v8860
        %v8893 = vmul.f32 %v8061, %v8861
        %v8894 = vmul.f32 %v8062, %v8862
        %v8895 = vmul.f32 %v8063, %v8863
        %v8896 = vmul.f32 %v8064, %v8864
        %v8897 = vmul.f32 %v8065, %v8865
        %v8898 = vmul.f32 %v8066, %v8866
        %v8899 = vmul.f32 %v8067, %v8867
        %v8900 = vmul.f32 %v8068, %v8868
        %v8901 = vmul.f32 %v8069, %v8869
        %v8902 = vmul.f32 %v8070, %v8870
        %v8903 = vmul.f32 %v8071, %v8871
        %v8904 = vmul.f32 %v8072, %v8872
        %v8905 = vmul.f32 %v8073, %v8873
        %v8906 = vmul.f32 %v8074, %v8874
        %v8907 = vmul.f32 %v8075, %v8875
        %v8908 = vmul.f32 %v8076, %v8876
        %v8909 = vmul.f32 %v8077, %v8877
        %v8910 = vmul.f32 %v8078, %v8878
        %v8911 = vmul.f32 %v8079, %v8879
        %v8912 = vmul.f32 %v8080, %v8880
        %v8913 = vmul.f32 %v8081, %v8881
        %v8914 = vmul.f32 %v8082, %v8882
        %v8915 = vmul.f32 %v8083, %v8883
        %v8916 = vmul.f32 %v8084, %v8884
        %8917 = vst [vmem:[%s377] sm:$0xff] %v8885
        %8918 = vst [vmem:[%s377 + $0x8] sm:$0xff] %v8886
        %8919 = vst [vmem:[%s377 + $0x10] sm:$0xff] %v8887
        %8920 = vst [vmem:[%s377 + $0x18] sm:$0xff] %v8888
        %8921 = vst [vmem:[%s377 + $0x20] sm:$0xff] %v8889
        %8922 = vst [vmem:[%s377 + $0x28] sm:$0xff] %v8890
        %8923 = vst [vmem:[%s377 + $0x30] sm:$0xff] %v8891
        %8924 = vst [vmem:[%s377 + $0x38] sm:$0xff] %v8892
        %8925 = vst [vmem:[%s377 + $0x40] sm:$0xff] %v8893
        %8926 = vst [vmem:[%s377 + $0x48] sm:$0xff] %v8894
        %8927 = vst [vmem:[%s377 + $0x50] sm:$0xff] %v8895
        %8928 = vst [vmem:[%s377 + $0x58] sm:$0xff] %v8896
        %8929 = vst [vmem:[%s377 + $0x60] sm:$0xff] %v8897
        %8930 = vst [vmem:[%s377 + $0x68] sm:$0xff] %v8898
        %8931 = vst [vmem:[%s377 + $0x70] sm:$0xff] %v8899
        %8932 = vst [vmem:[%s377 + $0x78] sm:$0xff] %v8900
        %8933 = vst [vmem:[%s377 + $0x80] sm:$0xff] %v8901
        %8934 = vst [vmem:[%s377 + $0x88] sm:$0xff] %v8902
        %8935 = vst [vmem:[%s377 + $0x90] sm:$0xff] %v8903
        %8936 = vst [vmem:[%s377 + $0x98] sm:$0xff] %v8904
        %8937 = vst [vmem:[%s377 + $0xa0] sm:$0xff] %v8905
        %8938 = vst [vmem:[%s377 + $0xa8] sm:$0xff] %v8906
        %8939 = vst [vmem:[%s377 + $0xb0] sm:$0xff] %v8907
        %8940 = vst [vmem:[%s377 + $0xb8] sm:$0xff] %v8908
        %8941 = vst [vmem:[%s377 + $0xc0] sm:$0xff] %v8909
        %8942 = vst [vmem:[%s377 + $0xc8] sm:$0xff] %v8910
        %8943 = vst [vmem:[%s377 + $0xd0] sm:$0xff] %v8911
        %8944 = vst [vmem:[%s377 + $0xd8] sm:$0xff] %v8912
        %8945 = vst [vmem:[%s377 + $0xe0] sm:$0xff] %v8913
        %8946 = vst [vmem:[%s377 + $0xe8] sm:$0xff] %v8914
        %8947 = vst [vmem:[%s377 + $0xf0] sm:$0xff] %v8915
        %8948 = vst [vmem:[%s377 + $0xf8] sm:$0xff] %v8916
        %s8949 = sand.u32 %s228, 1
        %s8950 = scalar_lea.sflag [#allocation3], %s8949
        %s8951 = sand.u32 %s228, 1
        %s8952 = smul.addr %s8951, 256
        %s8953 = scalar_lea.vmem [#allocation10], %s8952
        // Predicated region
        $region73: #{tpu_custom_call.1} parent=55 // pred_check
          %p8954 = pneg %p238
        $region74: #{tpu_custom_call.1} parent=55 // pred_check_branch
          %8956 = sbr.rel (%p8954) target = $region76
        $region75: #{tpu_custom_call.1} parent=55 // pred_region
          %s8958 = ssub.s32 4096, 4096
          %8959 = vsyncadd %s8950, %s8958
          %s8960 = smul.addr %s26, 32
          %s8961 = smul.addr %s8960, 128
          %s8962 = scalar_lea.hbm %s9, %s8961
          %s8963 = sshll.u32 %s8953, 4
          %s8964 = int_to_ptr.vmem [resolvable:$true] %s8963
          %8969 = dma.vmem_to_hbm [thread:$0]  %s8964, 4096, %s8962, %s8950, 256, 256, 16
        $region76: #{tpu_custom_call.1} parent=55 // pred_fallthru
          _
      $region56: #{tpu_custom_call.1} parent=5 // pred_fallthru
        _
      %p8970 = scmp.le.s32.totalorder 2, %s21
      // Predicated region
      $region77: #{tpu_custom_call.1} parent=5 // pred_check
        %p8971 = pneg %p8970
      $region78: #{tpu_custom_call.1} parent=5 // pred_check_branch
        %8973 = sbr.rel (%p8971) target = $region80
      $region79: #{tpu_custom_call.1} parent=5 // pred_region
        %s8974 = ssub.s32 %s21, 2
        // Predicated region
        $region81: #{tpu_custom_call.1} parent=79 // pred_check
          %p8975 = pneg %p244
        $region82: #{tpu_custom_call.1} parent=79 // pred_check_branch
          %8977 = sbr.rel (%p8975) target = $region84
        $region83: #{tpu_custom_call.1} parent=79 // pred_region
          %s8978 = sand.u32 %s229, 1
          %s8979 = scalar_lea.sflag [#allocation3], %s8978
          %s8980 = sand.u32 %s229, 1
          %s8981 = smul.addr %s8980, 256
          %s8982 = scalar_lea.vmem [#allocation10], %s8981
          %8983 = dma.done %s8979, 4096
        $region84: #{tpu_custom_call.1} parent=79 // pred_fallthru
          _
      $region80: #{tpu_custom_call.1} parent=5 // pred_fallthru
        _
    $region6: #{tpu_custom_call.1} parent=1 // loop_footer
      %s25 = sadd.s32 1, %s21
    $region7: #{tpu_custom_call.1} parent=1 // loop_footer_branch
      %20 = sbr.rel target = $region3
    $region8: #{tpu_custom_call.1} parent=1 // loop_exit
      _
    %8984 = vsyncpa [#allocation3], 1
    %s8985 = scalar_lea.sflag [#allocation3], 1
    %8986 = vsyncpa %s8985, 1
    %8987 = vsyncpa [#allocation4], 1
    %s8988 = scalar_lea.sflag [#allocation4], 1
    %8989 = vsyncpa %s8988, 1
    %8990 = vsyncpa [#allocation6], 1
    %8991 = vsyncpa [#allocation9], 1

</llo_original>
